<compile_context>
chip_gen: v5e
topology: v5e:2x2
jax: 0.10.0
libtpu: 0.0.40
codegen_flags: <defaults>
</compile_context>

<pallas_src>
from typing import Dict, List

import jax
import jax.numpy as jnp
from jax.experimental import pallas as pl
from jax.experimental.pallas import tpu as pltpu

BERT_VOCAB_SIZE = 30522


# ----------------------------- Pallas kernel ------------------------------ #
def _agg_kernel(w_ref, s_ref, o_ref):
    # w_ref: SMEM (B, P)   f32 per-example prompt weights (scalars)
    # s_ref: VMEM (B*P, V) bf16 packed prompt score rows (example-major)
    # o_ref: VMEM (B, V)   f32 aggregated output
    B, P = w_ref.shape
    rows = []
    for b in range(B):                     # B, P are tiny -> full static unroll
        k = b * P
        # f32 accumulate; one bf16 row is upcast only as it is consumed.
        acc = w_ref[b, 0] * s_ref[k : k + 1, :].astype(jnp.float32)
        for p in range(1, P):
            acc = acc + w_ref[b, p] * s_ref[k + p : k + p + 1, :].astype(jnp.float32)
        rows.append(acc)
    o_ref[...] = jnp.concatenate(rows, axis=0).astype(o_ref.dtype)


def aggregate_prompt_scores(weights: jnp.ndarray, scores: jnp.ndarray) -> jnp.ndarray:
    """output[b, v] = sum_p weights[b, p] * scores[b, p, v]   (v = BERT vocab)."""
    B, P, V = scores.shape
    assert weights.shape == (B, P)
    BP = B * P

    # Free reshape for contiguous row-major scores (collapses leading dims, no
    # data movement): (B, P, V) -> (B*P, V) so score loads use full 8-sublane
    # vregs.  If lm_scores ever arrives transposed/sharded, fix the producer
    # layout instead of paying an XLA copy here.
    scores2d = scores.reshape(BP, V)
    w_f32 = weights.astype(jnp.float32)

    in_bytes = BP * V * scores2d.dtype.itemsize + B * P * 4
    out_bytes = B * V * 4
    cost = pl.CostEstimate(
        flops=2 * B * P * V,
        transcendentals=0,
        bytes_accessed=in_bytes + out_bytes,
    )

    out = pl.pallas_call(
        _agg_kernel,
        out_shape=jax.ShapeDtypeStruct((B, V), jnp.float32),
        in_specs=[
            pl.BlockSpec(memory_space=pltpu.MemorySpace.SMEM),   # weights (scalars)
            pl.BlockSpec(memory_space=pltpu.MemorySpace.VMEM),   # packed scores
        ],
        out_specs=pl.BlockSpec(memory_space=pltpu.MemorySpace.VMEM),
        cost_estimate=cost,
    )(w_f32, scores2d)
    return out


# --------------------- synthetic "PromptModel" setup ----------------------- #
RELATIONS: List[str] = ["P19", "P20", "P27"]
PROMPTS_PER_RELATION = 4  # relation_size[category][rel] for every rel (synthetic)


def make_parameters(key) -> Dict[str, jnp.ndarray]:
    """nn.ParameterDict: one randn weight vector per relation (deterministic)."""
    params = {}
    for i, rel in enumerate(RELATIONS):
        params[rel] = jax.random.normal(
            jax.random.fold_in(key, i), (PROMPTS_PER_RELATION,), dtype=jnp.float32
        )
    return params


def prompt_model_forward(params, rels: List[str], lm_scores: jnp.ndarray) -> jnp.ndarray:
    """Mirror of PromptModel.forward: weighted aggregation of per-prompt scores.

    lm_scores: (B, P, VOCAB) bf16/f32 — stand-in for
               prompts_to_scores(language_model(all_prompts)).
    """
    # TODO(synk): the HuggingFace fill-mask pipeline + string prompt generation
    # (generate_prompts / prompts_to_scores) has no Pallas equivalent; its
    # dense output is taken as a kernel input instead.
    weights = jnp.stack([params[r] for r in rels], axis=0)  # (B, P)
    return aggregate_prompt_scores(weights, lm_scores)


# --------------------------------- main ------------------------------------ #
if __name__ == "__main__":
    key = jax.random.PRNGKey(0)
    k_params, k_scores = jax.random.split(key)

    params = make_parameters(k_params)

    # Two (subject, relation) pairs, as in forward(subjects, rels).
    rels = ["P19", "P27"]
    B = len(rels)

    # Synthetic language-model token scores for every generated prompt,
    # provided in bfloat16 (halves the dominant HBM read of this kernel).
    lm_scores = jax.random.uniform(
        k_scores, (B, PROMPTS_PER_RELATION, BERT_VOCAB_SIZE), dtype=jnp.float32
    ).astype(jnp.bfloat16)

    out = prompt_model_forward(params, rels, lm_scores)
    out = jax.block_until_ready(out)

    # Pure-JAX reference (explicit f32 multiply+sum so the reference itself
    # is not subject to TPU default matmul precision).
    weights_ref = jnp.stack([params[r] for r in rels], axis=0)           # (B, P)
    scores_f32 = lm_scores.astype(jnp.float32)
    ref = jnp.sum(weights_ref[:, :, None] * scores_f32, axis=1)          # (B, V)

    assert out.shape == (B, BERT_VOCAB_SIZE), out.shape
    assert jnp.allclose(out, ref, rtol=1e-5, atol=1e-5), "mismatch vs reference"

    print("KERNEL_OK")
</pallas_src>

<mosaic_0001>
module attributes {stable_mosaic.version = 11 : i64} {
  func.func @_agg_kernel(%arg0: memref<2x4xf32, #tpu.memory_space<smem>>, %arg1: memref<8x30522xbf16, #tpu.memory_space<vmem>>, %arg2: memref<2x30522xf32, #tpu.memory_space<vmem>>) attributes {dimension_semantics = [], scalar_prefetch = 0 : i64, scratch_operands = 0 : i64, tpu.core_type = #tpu.core_type<tc>} {
    %c0 = arith.constant 0 : index
    %c0_0 = arith.constant 0 : index
    %0 = memref.load %arg0[%c0, %c0_0] : memref<2x4xf32, #tpu.memory_space<smem>>
    %c0_1 = arith.constant 0 : index
    %c0_2 = arith.constant 0 : index
    %1 = vector.load %arg1[%c0_1, %c0_2] : memref<8x30522xbf16, #tpu.memory_space<vmem>>, vector<1x30522xbf16>
    %2 = arith.extf %1 : vector<1x30522xbf16> to vector<1x30522xf32>
    %3 = vector.broadcast %0 : f32 to vector<1x30522xf32>
    %4 = arith.mulf %3, %2 : vector<1x30522xf32>
    %c0_3 = arith.constant 0 : index
    %c1 = arith.constant 1 : index
    %5 = memref.load %arg0[%c0_3, %c1] : memref<2x4xf32, #tpu.memory_space<smem>>
    %c1_4 = arith.constant 1 : index
    %c0_5 = arith.constant 0 : index
    %6 = vector.load %arg1[%c1_4, %c0_5] : memref<8x30522xbf16, #tpu.memory_space<vmem>>, vector<1x30522xbf16>
    %7 = arith.extf %6 : vector<1x30522xbf16> to vector<1x30522xf32>
    %8 = vector.broadcast %5 : f32 to vector<1x30522xf32>
    %9 = arith.mulf %8, %7 : vector<1x30522xf32>
    %10 = arith.addf %4, %9 : vector<1x30522xf32>
    %c0_6 = arith.constant 0 : index
    %c2 = arith.constant 2 : index
    %11 = memref.load %arg0[%c0_6, %c2] : memref<2x4xf32, #tpu.memory_space<smem>>
    %c2_7 = arith.constant 2 : index
    %c0_8 = arith.constant 0 : index
    %12 = vector.load %arg1[%c2_7, %c0_8] : memref<8x30522xbf16, #tpu.memory_space<vmem>>, vector<1x30522xbf16>
    %13 = arith.extf %12 : vector<1x30522xbf16> to vector<1x30522xf32>
    %14 = vector.broadcast %11 : f32 to vector<1x30522xf32>
    %15 = arith.mulf %14, %13 : vector<1x30522xf32>
    %16 = arith.addf %10, %15 : vector<1x30522xf32>
    %c0_9 = arith.constant 0 : index
    %c3 = arith.constant 3 : index
    %17 = memref.load %arg0[%c0_9, %c3] : memref<2x4xf32, #tpu.memory_space<smem>>
    %c3_10 = arith.constant 3 : index
    %c0_11 = arith.constant 0 : index
    %18 = vector.load %arg1[%c3_10, %c0_11] : memref<8x30522xbf16, #tpu.memory_space<vmem>>, vector<1x30522xbf16>
    %19 = arith.extf %18 : vector<1x30522xbf16> to vector<1x30522xf32>
    %20 = vector.broadcast %17 : f32 to vector<1x30522xf32>
    %21 = arith.mulf %20, %19 : vector<1x30522xf32>
    %22 = arith.addf %16, %21 : vector<1x30522xf32>
    %c1_12 = arith.constant 1 : index
    %c0_13 = arith.constant 0 : index
    %23 = memref.load %arg0[%c1_12, %c0_13] : memref<2x4xf32, #tpu.memory_space<smem>>
    %c4 = arith.constant 4 : index
    %c0_14 = arith.constant 0 : index
    %24 = vector.load %arg1[%c4, %c0_14] : memref<8x30522xbf16, #tpu.memory_space<vmem>>, vector<1x30522xbf16>
    %25 = arith.extf %24 : vector<1x30522xbf16> to vector<1x30522xf32>
    %26 = vector.broadcast %23 : f32 to vector<1x30522xf32>
    %27 = arith.mulf %26, %25 : vector<1x30522xf32>
    %c1_15 = arith.constant 1 : index
    %c1_16 = arith.constant 1 : index
    %28 = memref.load %arg0[%c1_15, %c1_16] : memref<2x4xf32, #tpu.memory_space<smem>>
    %c5 = arith.constant 5 : index
    %c0_17 = arith.constant 0 : index
    %29 = vector.load %arg1[%c5, %c0_17] : memref<8x30522xbf16, #tpu.memory_space<vmem>>, vector<1x30522xbf16>
    %30 = arith.extf %29 : vector<1x30522xbf16> to vector<1x30522xf32>
    %31 = vector.broadcast %28 : f32 to vector<1x30522xf32>
    %32 = arith.mulf %31, %30 : vector<1x30522xf32>
    %33 = arith.addf %27, %32 : vector<1x30522xf32>
    %c1_18 = arith.constant 1 : index
    %c2_19 = arith.constant 2 : index
    %34 = memref.load %arg0[%c1_18, %c2_19] : memref<2x4xf32, #tpu.memory_space<smem>>
    %c6 = arith.constant 6 : index
    %c0_20 = arith.constant 0 : index
    %35 = vector.load %arg1[%c6, %c0_20] : memref<8x30522xbf16, #tpu.memory_space<vmem>>, vector<1x30522xbf16>
    %36 = arith.extf %35 : vector<1x30522xbf16> to vector<1x30522xf32>
    %37 = vector.broadcast %34 : f32 to vector<1x30522xf32>
    %38 = arith.mulf %37, %36 : vector<1x30522xf32>
    %39 = arith.addf %33, %38 : vector<1x30522xf32>
    %c1_21 = arith.constant 1 : index
    %c3_22 = arith.constant 3 : index
    %40 = memref.load %arg0[%c1_21, %c3_22] : memref<2x4xf32, #tpu.memory_space<smem>>
    %c7 = arith.constant 7 : index
    %c0_23 = arith.constant 0 : index
    %41 = vector.load %arg1[%c7, %c0_23] : memref<8x30522xbf16, #tpu.memory_space<vmem>>, vector<1x30522xbf16>
    %42 = arith.extf %41 : vector<1x30522xbf16> to vector<1x30522xf32>
    %43 = vector.broadcast %40 : f32 to vector<1x30522xf32>
    %44 = arith.mulf %43, %42 : vector<1x30522xf32>
    %45 = arith.addf %39, %44 : vector<1x30522xf32>
    %46 = tpu.concatenate %22, %45 in 0 : vector<1x30522xf32>, vector<1x30522xf32> -> vector<2x30522xf32>
    %c0_24 = arith.constant 0 : index
    %c0_25 = arith.constant 0 : index
    %47 = vector.load %arg2[%c0_24, %c0_25] : memref<2x30522xf32, #tpu.memory_space<vmem>>, vector<2x30522xf32>
    tpu.vector_store %arg2[%c0_24, %c0_25], %46 {strides = array<i32>} : memref<2x30522xf32, #tpu.memory_space<vmem>>, vector<2x30522xf32>,
    return
  }
}

</mosaic_0001>

<llo_original>
// kernel: tpu_custom_call.1
$region0: #{tpu_custom_call.1}
  #allocation0 [shape = 'u32[]', space=smem, size = 0x4, offset = 0x4, fixed_abs, tag = 'smem constant byte address 0x4 - core index']
  #allocation1 [shape = 'u32[72,128]{1,0:T(1,128)}', space=vmem, size = 0x9000, scoped, tag = 'internal scratch']
  %s0 = inlined_call_operand.hbm [shape: f32[2,4], index: 0, kind: input, shape index: {}]
  %s1 = inlined_call_operand.hbm [shape: bf16[8,30522], index: 1, kind: input, shape index: {}]
  %s2 = inlined_call_operand.hbm [shape: f32[2,30522], index: 2, kind: output, shape index: {}]
  %s3 = sld [smem:[#allocation0]]
  $region26: #{tpu_custom_call.1} parent=0
    _
  %s5 = ssub.s32 1, %s3
  %s6 = scalar_select 0, %s5, %s3
  $region1: #{tpu_custom_call.1} parent=0
    #allocation2 [shape = 'u8[1024]{0}', space=smem, size = 0x400, scoped, tag = 'input window, operand 0, single buffered']
    #allocation3 [shape = 's32[1]{0}', space=sflag, size = 0x4, scoped, tag = 'scoped memory for tpu_custom_call.1']
    #allocation4 [shape = 's32[1]{0}', space=sflag, size = 0x4, scoped, tag = 'scoped memory for tpu_custom_call.1']
    #allocation5 [shape = 's32[1]{0}', space=sflag, size = 0x4, scoped, tag = 'scoped memory for tpu_custom_call.1']
    #allocation6 [shape = 'u8[489472]{0}', space=vmem, size = 0x77800, scoped, tag = 'input window, operand 1, single buffered']
    #allocation7 [shape = 'u8[244736]{0}', space=vmem, size = 0x3bc00, scoped, tag = 'output window, operand 0, single buffered']
    %7 = vsyncpa [#allocation5], 0
    %8 = vsyncpa [#allocation3], 0
    %9 = vsyncpa [#allocation4], 0
    // Predicated region
    $region2: #{tpu_custom_call.1} parent=1 // pred_check
      _
    $region3: #{tpu_custom_call.1} parent=1 // pred_check_branch
      %11 = sbr.rel (0) target = $region5
    $region4: #{tpu_custom_call.1} parent=1 // pred_region
      %13 = vsyncadd [#allocation5], 0
      %s15 = sshll.u32 %s0, 4
      %s16 = int_to_ptr.hbm [resolvable:$true] %s15
      %18 = dma.hbm_to_smem %s16, 32, [#allocation2], [#allocation5]
    $region5: #{tpu_custom_call.1} parent=1 // pred_fallthru
      _
    // Predicated region
    $region6: #{tpu_custom_call.1} parent=1 // pred_check
      _
    $region7: #{tpu_custom_call.1} parent=1 // pred_check_branch
      %20 = sbr.rel (0) target = $region9
    $region8: #{tpu_custom_call.1} parent=1 // pred_region
      %22 = vsyncadd [#allocation3], 0
      %s24 = sshll.u32 %s1, 4
      %s25 = int_to_ptr.hbm [resolvable:$true] %s24
      %s26 = sshll.u32 [#allocation6], 4
      %s27 = int_to_ptr.vmem [resolvable:$true] %s26
      %29 = dma.hbm_to_vmem [thread:$0]  %s25, 15296, %s27, [#allocation3]
    $region9: #{tpu_custom_call.1} parent=1 // pred_fallthru
      _
    // Predicated region
    $region10: #{tpu_custom_call.1} parent=1 // pred_check
      _
    $region11: #{tpu_custom_call.1} parent=1 // pred_check_branch
      %31 = sbr.rel (0) target = $region13
    $region12: #{tpu_custom_call.1} parent=1 // pred_region
      %33 = dma.done [#allocation5], 32
    $region13: #{tpu_custom_call.1} parent=1 // pred_fallthru
      _
    // Predicated region
    $region14: #{tpu_custom_call.1} parent=1 // pred_check
      _
    $region15: #{tpu_custom_call.1} parent=1 // pred_check_branch
      %35 = sbr.rel (0) target = $region17
    $region16: #{tpu_custom_call.1} parent=1 // pred_region
      %37 = dma.done [#allocation3], 15296
    $region17: #{tpu_custom_call.1} parent=1 // pred_fallthru
      _
    %38 = sfence
    %s39 = sld [smem:[#allocation2]]
    %v40 = vld [vmem:[#allocation6] sm:$0x11]
    %v41 = vld [vmem:[#allocation6 + $0x8] sm:$0x11]
    %v42 = vld [vmem:[#allocation6 + $0x10] sm:$0x11]
    %v43 = vld [vmem:[#allocation6 + $0x18] sm:$0x11]
    %v44 = vld [vmem:[#allocation6 + $0x20] sm:$0x11]
    %v45 = vld [vmem:[#allocation6 + $0x28] sm:$0x11]
    %v46 = vld [vmem:[#allocation6 + $0x30] sm:$0x11]
    %v47 = vld [vmem:[#allocation6 + $0x38] sm:$0x11]
    %v48 = vld [vmem:[#allocation6 + $0x40] sm:$0x11]
    %v49 = vld [vmem:[#allocation6 + $0x48] sm:$0x11]
    %v50 = vld [vmem:[#allocation6 + $0x50] sm:$0x11]
    %v51 = vld [vmem:[#allocation6 + $0x58] sm:$0x11]
    %v52 = vld [vmem:[#allocation6 + $0x60] sm:$0x11]
    %v53 = vld [vmem:[#allocation6 + $0x68] sm:$0x11]
    %v54 = vld [vmem:[#allocation6 + $0x70] sm:$0x11]
    %v55 = vld [vmem:[#allocation6 + $0x78] sm:$0x11]
    %v56 = vld [vmem:[#allocation6 + $0x80] sm:$0x11]
    %v57 = vld [vmem:[#allocation6 + $0x88] sm:$0x11]
    %v58 = vld [vmem:[#allocation6 + $0x90] sm:$0x11]
    %v59 = vld [vmem:[#allocation6 + $0x98] sm:$0x11]
    %v60 = vld [vmem:[#allocation6 + $0xa0] sm:$0x11]
    %v61 = vld [vmem:[#allocation6 + $0xa8] sm:$0x11]
    %v62 = vld [vmem:[#allocation6 + $0xb0] sm:$0x11]
    %v63 = vld [vmem:[#allocation6 + $0xb8] sm:$0x11]
    %v64 = vld [vmem:[#allocation6 + $0xc0] sm:$0x11]
    %v65 = vld [vmem:[#allocation6 + $0xc8] sm:$0x11]
    %v66 = vld [vmem:[#allocation6 + $0xd0] sm:$0x11]
    %v67 = vld [vmem:[#allocation6 + $0xd8] sm:$0x11]
    %v68 = vld [vmem:[#allocation6 + $0xe0] sm:$0x11]
    %v69 = vld [vmem:[#allocation6 + $0xe8] sm:$0x11]
    %v70 = vld [vmem:[#allocation6 + $0xf0] sm:$0x11]
    %v71 = vld [vmem:[#allocation6 + $0xf8] sm:$0x11]
    %v72 = vld [vmem:[#allocation6 + $0x100] sm:$0x11]
    %v73 = vld [vmem:[#allocation6 + $0x108] sm:$0x11]
    %v74 = vld [vmem:[#allocation6 + $0x110] sm:$0x11]
    %v75 = vld [vmem:[#allocation6 + $0x118] sm:$0x11]
    %v76 = vld [vmem:[#allocation6 + $0x120] sm:$0x11]
    %v77 = vld [vmem:[#allocation6 + $0x128] sm:$0x11]
    %v78 = vld [vmem:[#allocation6 + $0x130] sm:$0x11]
    %v79 = vld [vmem:[#allocation6 + $0x138] sm:$0x11]
    %v80 = vld [vmem:[#allocation6 + $0x140] sm:$0x11]
    %v81 = vld [vmem:[#allocation6 + $0x148] sm:$0x11]
    %v82 = vld [vmem:[#allocation6 + $0x150] sm:$0x11]
    %v83 = vld [vmem:[#allocation6 + $0x158] sm:$0x11]
    %v84 = vld [vmem:[#allocation6 + $0x160] sm:$0x11]
    %v85 = vld [vmem:[#allocation6 + $0x168] sm:$0x11]
    %v86 = vld [vmem:[#allocation6 + $0x170] sm:$0x11]
    %v87 = vld [vmem:[#allocation6 + $0x178] sm:$0x11]
    %v88 = vld [vmem:[#allocation6 + $0x180] sm:$0x11]
    %v89 = vld [vmem:[#allocation6 + $0x188] sm:$0x11]
    %v90 = vld [vmem:[#allocation6 + $0x190] sm:$0x11]
    %v91 = vld [vmem:[#allocation6 + $0x198] sm:$0x11]
    %v92 = vld [vmem:[#allocation6 + $0x1a0] sm:$0x11]
    %v93 = vld [vmem:[#allocation6 + $0x1a8] sm:$0x11]
    %v94 = vld [vmem:[#allocation6 + $0x1b0] sm:$0x11]
    %v95 = vld [vmem:[#allocation6 + $0x1b8] sm:$0x11]
    %v96 = vld [vmem:[#allocation6 + $0x1c0] sm:$0x11]
    %v97 = vld [vmem:[#allocation6 + $0x1c8] sm:$0x11]
    %v98 = vld [vmem:[#allocation6 + $0x1d0] sm:$0x11]
    %v99 = vld [vmem:[#allocation6 + $0x1d8] sm:$0x11]
    %v100 = vld [vmem:[#allocation6 + $0x1e0] sm:$0x11]
    %v101 = vld [vmem:[#allocation6 + $0x1e8] sm:$0x11]
    %v102 = vld [vmem:[#allocation6 + $0x1f0] sm:$0x11]
    %v103 = vld [vmem:[#allocation6 + $0x1f8] sm:$0x11]
    %v104 = vld [vmem:[#allocation6 + $0x200] sm:$0x11]
    %v105 = vld [vmem:[#allocation6 + $0x208] sm:$0x11]
    %v106 = vld [vmem:[#allocation6 + $0x210] sm:$0x11]
    %v107 = vld [vmem:[#allocation6 + $0x218] sm:$0x11]
    %v108 = vld [vmem:[#allocation6 + $0x220] sm:$0x11]
    %v109 = vld [vmem:[#allocation6 + $0x228] sm:$0x11]
    %v110 = vld [vmem:[#allocation6 + $0x230] sm:$0x11]
    %v111 = vld [vmem:[#allocation6 + $0x238] sm:$0x11]
    %v112 = vld [vmem:[#allocation6 + $0x240] sm:$0x11]
    %v113 = vld [vmem:[#allocation6 + $0x248] sm:$0x11]
    %v114 = vld [vmem:[#allocation6 + $0x250] sm:$0x11]
    %v115 = vld [vmem:[#allocation6 + $0x258] sm:$0x11]
    %v116 = vld [vmem:[#allocation6 + $0x260] sm:$0x11]
    %v117 = vld [vmem:[#allocation6 + $0x268] sm:$0x11]
    %v118 = vld [vmem:[#allocation6 + $0x270] sm:$0x11]
    %v119 = vld [vmem:[#allocation6 + $0x278] sm:$0x11]
    %v120 = vld [vmem:[#allocation6 + $0x280] sm:$0x11]
    %v121 = vld [vmem:[#allocation6 + $0x288] sm:$0x11]
    %v122 = vld [vmem:[#allocation6 + $0x290] sm:$0x11]
    %v123 = vld [vmem:[#allocation6 + $0x298] sm:$0x11]
    %v124 = vld [vmem:[#allocation6 + $0x2a0] sm:$0x11]
    %v125 = vld [vmem:[#allocation6 + $0x2a8] sm:$0x11]
    %v126 = vld [vmem:[#allocation6 + $0x2b0] sm:$0x11]
    %v127 = vld [vmem:[#allocation6 + $0x2b8] sm:$0x11]
    %v128 = vld [vmem:[#allocation6 + $0x2c0] sm:$0x11]
    %v129 = vld [vmem:[#allocation6 + $0x2c8] sm:$0x11]
    %v130 = vld [vmem:[#allocation6 + $0x2d0] sm:$0x11]
    %v131 = vld [vmem:[#allocation6 + $0x2d8] sm:$0x11]
    %v132 = vld [vmem:[#allocation6 + $0x2e0] sm:$0x11]
    %v133 = vld [vmem:[#allocation6 + $0x2e8] sm:$0x11]
    %v134 = vld [vmem:[#allocation6 + $0x2f0] sm:$0x11]
    %v135 = vld [vmem:[#allocation6 + $0x2f8] sm:$0x11]
    %v136 = vld [vmem:[#allocation6 + $0x300] sm:$0x11]
    %v137 = vld [vmem:[#allocation6 + $0x308] sm:$0x11]
    %v138 = vld [vmem:[#allocation6 + $0x310] sm:$0x11]
    %v139 = vld [vmem:[#allocation6 + $0x318] sm:$0x11]
    %v140 = vld [vmem:[#allocation6 + $0x320] sm:$0x11]
    %v141 = vld [vmem:[#allocation6 + $0x328] sm:$0x11]
    %v142 = vld [vmem:[#allocation6 + $0x330] sm:$0x11]
    %v143 = vld [vmem:[#allocation6 + $0x338] sm:$0x11]
    %v144 = vld [vmem:[#allocation6 + $0x340] sm:$0x11]
    %v145 = vld [vmem:[#allocation6 + $0x348] sm:$0x11]
    %v146 = vld [vmem:[#allocation6 + $0x350] sm:$0x11]
    %v147 = vld [vmem:[#allocation6 + $0x358] sm:$0x11]
    %v148 = vld [vmem:[#allocation6 + $0x360] sm:$0x11]
    %v149 = vld [vmem:[#allocation6 + $0x368] sm:$0x11]
    %v150 = vld [vmem:[#allocation6 + $0x370] sm:$0x11]
    %v151 = vld [vmem:[#allocation6 + $0x378] sm:$0x11]
    %v152 = vld [vmem:[#allocation6 + $0x380] sm:$0x11]
    %v153 = vld [vmem:[#allocation6 + $0x388] sm:$0x11]
    %v154 = vld [vmem:[#allocation6 + $0x390] sm:$0x11]
    %v155 = vld [vmem:[#allocation6 + $0x398] sm:$0x11]
    %v156 = vld [vmem:[#allocation6 + $0x3a0] sm:$0x11]
    %v157 = vld [vmem:[#allocation6 + $0x3a8] sm:$0x11]
    %v158 = vld [vmem:[#allocation6 + $0x3b0] sm:$0x11]
    %v159 = vld [vmem:[#allocation6 + $0x3b8] sm:$0x1]
    %v160 = vunpack.c.l.bf16 %v40
    %v161 = vunpack.c.h.bf16 %v40
    %v162 = vunpack.c.l.bf16 %v41
    %v163 = vunpack.c.h.bf16 %v41
    %v164 = vunpack.c.l.bf16 %v42
    %v165 = vunpack.c.h.bf16 %v42
    %v166 = vunpack.c.l.bf16 %v43
    %v167 = vunpack.c.h.bf16 %v43
    %v168 = vunpack.c.l.bf16 %v44
    %v169 = vunpack.c.h.bf16 %v44
    %v170 = vunpack.c.l.bf16 %v45
    %v171 = vunpack.c.h.bf16 %v45
    %v172 = vunpack.c.l.bf16 %v46
    %v173 = vunpack.c.h.bf16 %v46
    %v174 = vunpack.c.l.bf16 %v47
    %v175 = vunpack.c.h.bf16 %v47
    %v176 = vunpack.c.l.bf16 %v48
    %v177 = vunpack.c.h.bf16 %v48
    %v178 = vunpack.c.l.bf16 %v49
    %v179 = vunpack.c.h.bf16 %v49
    %v180 = vunpack.c.l.bf16 %v50
    %v181 = vunpack.c.h.bf16 %v50
    %v182 = vunpack.c.l.bf16 %v51
    %v183 = vunpack.c.h.bf16 %v51
    %v184 = vunpack.c.l.bf16 %v52
    %v185 = vunpack.c.h.bf16 %v52
    %v186 = vunpack.c.l.bf16 %v53
    %v187 = vunpack.c.h.bf16 %v53
    %v188 = vunpack.c.l.bf16 %v54
    %v189 = vunpack.c.h.bf16 %v54
    %v190 = vunpack.c.l.bf16 %v55
    %v191 = vunpack.c.h.bf16 %v55
    %v192 = vunpack.c.l.bf16 %v56
    %v193 = vunpack.c.h.bf16 %v56
    %v194 = vunpack.c.l.bf16 %v57
    %v195 = vunpack.c.h.bf16 %v57
    %v196 = vunpack.c.l.bf16 %v58
    %v197 = vunpack.c.h.bf16 %v58
    %v198 = vunpack.c.l.bf16 %v59
    %v199 = vunpack.c.h.bf16 %v59
    %v200 = vunpack.c.l.bf16 %v60
    %v201 = vunpack.c.h.bf16 %v60
    %v202 = vunpack.c.l.bf16 %v61
    %v203 = vunpack.c.h.bf16 %v61
    %v204 = vunpack.c.l.bf16 %v62
    %v205 = vunpack.c.h.bf16 %v62
    %v206 = vunpack.c.l.bf16 %v63
    %v207 = vunpack.c.h.bf16 %v63
    %v208 = vunpack.c.l.bf16 %v64
    %v209 = vunpack.c.h.bf16 %v64
    %v210 = vunpack.c.l.bf16 %v65
    %v211 = vunpack.c.h.bf16 %v65
    %v212 = vunpack.c.l.bf16 %v66
    %v213 = vunpack.c.h.bf16 %v66
    %v214 = vunpack.c.l.bf16 %v67
    %v215 = vunpack.c.h.bf16 %v67
    %v216 = vunpack.c.l.bf16 %v68
    %v217 = vunpack.c.h.bf16 %v68
    %v218 = vunpack.c.l.bf16 %v69
    %v219 = vunpack.c.h.bf16 %v69
    %v220 = vunpack.c.l.bf16 %v70
    %v221 = vunpack.c.h.bf16 %v70
    %v222 = vunpack.c.l.bf16 %v71
    %v223 = vunpack.c.h.bf16 %v71
    %v224 = vunpack.c.l.bf16 %v72
    %v225 = vunpack.c.h.bf16 %v72
    %v226 = vunpack.c.l.bf16 %v73
    %v227 = vunpack.c.h.bf16 %v73
    %v228 = vunpack.c.l.bf16 %v74
    %v229 = vunpack.c.h.bf16 %v74
    %v230 = vunpack.c.l.bf16 %v75
    %v231 = vunpack.c.h.bf16 %v75
    %v232 = vunpack.c.l.bf16 %v76
    %v233 = vunpack.c.h.bf16 %v76
    %v234 = vunpack.c.l.bf16 %v77
    %v235 = vunpack.c.h.bf16 %v77
    %v236 = vunpack.c.l.bf16 %v78
    %v237 = vunpack.c.h.bf16 %v78
    %v238 = vunpack.c.l.bf16 %v79
    %v239 = vunpack.c.h.bf16 %v79
    %v240 = vunpack.c.l.bf16 %v80
    %v241 = vunpack.c.h.bf16 %v80
    %v242 = vunpack.c.l.bf16 %v81
    %v243 = vunpack.c.h.bf16 %v81
    %v244 = vunpack.c.l.bf16 %v82
    %v245 = vunpack.c.h.bf16 %v82
    %v246 = vunpack.c.l.bf16 %v83
    %v247 = vunpack.c.h.bf16 %v83
    %v248 = vunpack.c.l.bf16 %v84
    %v249 = vunpack.c.h.bf16 %v84
    %v250 = vunpack.c.l.bf16 %v85
    %v251 = vunpack.c.h.bf16 %v85
    %v252 = vunpack.c.l.bf16 %v86
    %v253 = vunpack.c.h.bf16 %v86
    %v254 = vunpack.c.l.bf16 %v87
    %v255 = vunpack.c.h.bf16 %v87
    %v256 = vunpack.c.l.bf16 %v88
    %v257 = vunpack.c.h.bf16 %v88
    %v258 = vunpack.c.l.bf16 %v89
    %v259 = vunpack.c.h.bf16 %v89
    %v260 = vunpack.c.l.bf16 %v90
    %v261 = vunpack.c.h.bf16 %v90
    %v262 = vunpack.c.l.bf16 %v91
    %v263 = vunpack.c.h.bf16 %v91
    %v264 = vunpack.c.l.bf16 %v92
    %v265 = vunpack.c.h.bf16 %v92
    %v266 = vunpack.c.l.bf16 %v93
    %v267 = vunpack.c.h.bf16 %v93
    %v268 = vunpack.c.l.bf16 %v94
    %v269 = vunpack.c.h.bf16 %v94
    %v270 = vunpack.c.l.bf16 %v95
    %v271 = vunpack.c.h.bf16 %v95
    %v272 = vunpack.c.l.bf16 %v96
    %v273 = vunpack.c.h.bf16 %v96
    %v274 = vunpack.c.l.bf16 %v97
    %v275 = vunpack.c.h.bf16 %v97
    %v276 = vunpack.c.l.bf16 %v98
    %v277 = vunpack.c.h.bf16 %v98
    %v278 = vunpack.c.l.bf16 %v99
    %v279 = vunpack.c.h.bf16 %v99
    %v280 = vunpack.c.l.bf16 %v100
    %v281 = vunpack.c.h.bf16 %v100
    %v282 = vunpack.c.l.bf16 %v101
    %v283 = vunpack.c.h.bf16 %v101
    %v284 = vunpack.c.l.bf16 %v102
    %v285 = vunpack.c.h.bf16 %v102
    %v286 = vunpack.c.l.bf16 %v103
    %v287 = vunpack.c.h.bf16 %v103
    %v288 = vunpack.c.l.bf16 %v104
    %v289 = vunpack.c.h.bf16 %v104
    %v290 = vunpack.c.l.bf16 %v105
    %v291 = vunpack.c.h.bf16 %v105
    %v292 = vunpack.c.l.bf16 %v106
    %v293 = vunpack.c.h.bf16 %v106
    %v294 = vunpack.c.l.bf16 %v107
    %v295 = vunpack.c.h.bf16 %v107
    %v296 = vunpack.c.l.bf16 %v108
    %v297 = vunpack.c.h.bf16 %v108
    %v298 = vunpack.c.l.bf16 %v109
    %v299 = vunpack.c.h.bf16 %v109
    %v300 = vunpack.c.l.bf16 %v110
    %v301 = vunpack.c.h.bf16 %v110
    %v302 = vunpack.c.l.bf16 %v111
    %v303 = vunpack.c.h.bf16 %v111
    %v304 = vunpack.c.l.bf16 %v112
    %v305 = vunpack.c.h.bf16 %v112
    %v306 = vunpack.c.l.bf16 %v113
    %v307 = vunpack.c.h.bf16 %v113
    %v308 = vunpack.c.l.bf16 %v114
    %v309 = vunpack.c.h.bf16 %v114
    %v310 = vunpack.c.l.bf16 %v115
    %v311 = vunpack.c.h.bf16 %v115
    %v312 = vunpack.c.l.bf16 %v116
    %v313 = vunpack.c.h.bf16 %v116
    %v314 = vunpack.c.l.bf16 %v117
    %v315 = vunpack.c.h.bf16 %v117
    %v316 = vunpack.c.l.bf16 %v118
    %v317 = vunpack.c.h.bf16 %v118
    %v318 = vunpack.c.l.bf16 %v119
    %v319 = vunpack.c.h.bf16 %v119
    %v320 = vunpack.c.l.bf16 %v120
    %v321 = vunpack.c.h.bf16 %v120
    %v322 = vunpack.c.l.bf16 %v121
    %v323 = vunpack.c.h.bf16 %v121
    %v324 = vunpack.c.l.bf16 %v122
    %v325 = vunpack.c.h.bf16 %v122
    %v326 = vunpack.c.l.bf16 %v123
    %v327 = vunpack.c.h.bf16 %v123
    %v328 = vunpack.c.l.bf16 %v124
    %v329 = vunpack.c.h.bf16 %v124
    %v330 = vunpack.c.l.bf16 %v125
    %v331 = vunpack.c.h.bf16 %v125
    %v332 = vunpack.c.l.bf16 %v126
    %v333 = vunpack.c.h.bf16 %v126
    %v334 = vunpack.c.l.bf16 %v127
    %v335 = vunpack.c.h.bf16 %v127
    %v336 = vunpack.c.l.bf16 %v128
    %v337 = vunpack.c.h.bf16 %v128
    %v338 = vunpack.c.l.bf16 %v129
    %v339 = vunpack.c.h.bf16 %v129
    %v340 = vunpack.c.l.bf16 %v130
    %v341 = vunpack.c.h.bf16 %v130
    %v342 = vunpack.c.l.bf16 %v131
    %v343 = vunpack.c.h.bf16 %v131
    %v344 = vunpack.c.l.bf16 %v132
    %v345 = vunpack.c.h.bf16 %v132
    %v346 = vunpack.c.l.bf16 %v133
    %v347 = vunpack.c.h.bf16 %v133
    %v348 = vunpack.c.l.bf16 %v134
    %v349 = vunpack.c.h.bf16 %v134
    %v350 = vunpack.c.l.bf16 %v135
    %v351 = vunpack.c.h.bf16 %v135
    %v352 = vunpack.c.l.bf16 %v136
    %v353 = vunpack.c.h.bf16 %v136
    %v354 = vunpack.c.l.bf16 %v137
    %v355 = vunpack.c.h.bf16 %v137
    %v356 = vunpack.c.l.bf16 %v138
    %v357 = vunpack.c.h.bf16 %v138
    %v358 = vunpack.c.l.bf16 %v139
    %v359 = vunpack.c.h.bf16 %v139
    %v360 = vunpack.c.l.bf16 %v140
    %v361 = vunpack.c.h.bf16 %v140
    %v362 = vunpack.c.l.bf16 %v141
    %v363 = vunpack.c.h.bf16 %v141
    %v364 = vunpack.c.l.bf16 %v142
    %v365 = vunpack.c.h.bf16 %v142
    %v366 = vunpack.c.l.bf16 %v143
    %v367 = vunpack.c.h.bf16 %v143
    %v368 = vunpack.c.l.bf16 %v144
    %v369 = vunpack.c.h.bf16 %v144
    %v370 = vunpack.c.l.bf16 %v145
    %v371 = vunpack.c.h.bf16 %v145
    %v372 = vunpack.c.l.bf16 %v146
    %v373 = vunpack.c.h.bf16 %v146
    %v374 = vunpack.c.l.bf16 %v147
    %v375 = vunpack.c.h.bf16 %v147
    %v376 = vunpack.c.l.bf16 %v148
    %v377 = vunpack.c.h.bf16 %v148
    %v378 = vunpack.c.l.bf16 %v149
    %v379 = vunpack.c.h.bf16 %v149
    %v380 = vunpack.c.l.bf16 %v150
    %v381 = vunpack.c.h.bf16 %v150
    %v382 = vunpack.c.l.bf16 %v151
    %v383 = vunpack.c.h.bf16 %v151
    %v384 = vunpack.c.l.bf16 %v152
    %v385 = vunpack.c.h.bf16 %v152
    %v386 = vunpack.c.l.bf16 %v153
    %v387 = vunpack.c.h.bf16 %v153
    %v388 = vunpack.c.l.bf16 %v154
    %v389 = vunpack.c.h.bf16 %v154
    %v390 = vunpack.c.l.bf16 %v155
    %v391 = vunpack.c.h.bf16 %v155
    %v392 = vunpack.c.l.bf16 %v156
    %v393 = vunpack.c.h.bf16 %v156
    %v394 = vunpack.c.l.bf16 %v157
    %v395 = vunpack.c.h.bf16 %v157
    %v396 = vunpack.c.l.bf16 %v158
    %v397 = vunpack.c.h.bf16 %v158
    %v398 = vunpack.c.l.bf16 %v159
    %v399 = vstv %s39
    %v400 = vmul.f32 %v399, %v160
    %v401 = vmul.f32 %v399, %v161
    %v402 = vmul.f32 %v399, %v162
    %v403 = vmul.f32 %v399, %v163
    %v404 = vmul.f32 %v399, %v164
    %v405 = vmul.f32 %v399, %v165
    %v406 = vmul.f32 %v399, %v166
    %v407 = vmul.f32 %v399, %v167
    %v408 = vmul.f32 %v399, %v168
    %v409 = vmul.f32 %v399, %v169
    %v410 = vmul.f32 %v399, %v170
    %v411 = vmul.f32 %v399, %v171
    %v412 = vmul.f32 %v399, %v172
    %v413 = vmul.f32 %v399, %v173
    %v414 = vmul.f32 %v399, %v174
    %v415 = vmul.f32 %v399, %v175
    %v416 = vmul.f32 %v399, %v176
    %v417 = vmul.f32 %v399, %v177
    %v418 = vmul.f32 %v399, %v178
    %v419 = vmul.f32 %v399, %v179
    %v420 = vmul.f32 %v399, %v180
    %v421 = vmul.f32 %v399, %v181
    %v422 = vmul.f32 %v399, %v182
    %v423 = vmul.f32 %v399, %v183
    %v424 = vmul.f32 %v399, %v184
    %v425 = vmul.f32 %v399, %v185
    %v426 = vmul.f32 %v399, %v186
    %v427 = vmul.f32 %v399, %v187
    %v428 = vmul.f32 %v399, %v188
    %v429 = vmul.f32 %v399, %v189
    %v430 = vmul.f32 %v399, %v190
    %v431 = vmul.f32 %v399, %v191
    %v432 = vmul.f32 %v399, %v192
    %v433 = vmul.f32 %v399, %v193
    %v434 = vmul.f32 %v399, %v194
    %v435 = vmul.f32 %v399, %v195
    %v436 = vmul.f32 %v399, %v196
    %v437 = vmul.f32 %v399, %v197
    %v438 = vmul.f32 %v399, %v198
    %v439 = vmul.f32 %v399, %v199
    %v440 = vmul.f32 %v399, %v200
    %v441 = vmul.f32 %v399, %v201
    %v442 = vmul.f32 %v399, %v202
    %v443 = vmul.f32 %v399, %v203
    %v444 = vmul.f32 %v399, %v204
    %v445 = vmul.f32 %v399, %v205
    %v446 = vmul.f32 %v399, %v206
    %v447 = vmul.f32 %v399, %v207
    %v448 = vmul.f32 %v399, %v208
    %v449 = vmul.f32 %v399, %v209
    %v450 = vmul.f32 %v399, %v210
    %v451 = vmul.f32 %v399, %v211
    %v452 = vmul.f32 %v399, %v212
    %v453 = vmul.f32 %v399, %v213
    %v454 = vmul.f32 %v399, %v214
    %v455 = vmul.f32 %v399, %v215
    %v456 = vmul.f32 %v399, %v216
    %v457 = vmul.f32 %v399, %v217
    %v458 = vmul.f32 %v399, %v218
    %v459 = vmul.f32 %v399, %v219
    %v460 = vmul.f32 %v399, %v220
    %v461 = vmul.f32 %v399, %v221
    %v462 = vmul.f32 %v399, %v222
    %v463 = vmul.f32 %v399, %v223
    %v464 = vmul.f32 %v399, %v224
    %v465 = vmul.f32 %v399, %v225
    %v466 = vmul.f32 %v399, %v226
    %v467 = vmul.f32 %v399, %v227
    %v468 = vmul.f32 %v399, %v228
    %v469 = vmul.f32 %v399, %v229
    %v470 = vmul.f32 %v399, %v230
    %v471 = vmul.f32 %v399, %v231
    %v472 = vmul.f32 %v399, %v232
    %v473 = vmul.f32 %v399, %v233
    %v474 = vmul.f32 %v399, %v234
    %v475 = vmul.f32 %v399, %v235
    %v476 = vmul.f32 %v399, %v236
    %v477 = vmul.f32 %v399, %v237
    %v478 = vmul.f32 %v399, %v238
    %v479 = vmul.f32 %v399, %v239
    %v480 = vmul.f32 %v399, %v240
    %v481 = vmul.f32 %v399, %v241
    %v482 = vmul.f32 %v399, %v242
    %v483 = vmul.f32 %v399, %v243
    %v484 = vmul.f32 %v399, %v244
    %v485 = vmul.f32 %v399, %v245
    %v486 = vmul.f32 %v399, %v246
    %v487 = vmul.f32 %v399, %v247
    %v488 = vmul.f32 %v399, %v248
    %v489 = vmul.f32 %v399, %v249
    %v490 = vmul.f32 %v399, %v250
    %v491 = vmul.f32 %v399, %v251
    %v492 = vmul.f32 %v399, %v252
    %v493 = vmul.f32 %v399, %v253
    %v494 = vmul.f32 %v399, %v254
    %v495 = vmul.f32 %v399, %v255
    %v496 = vmul.f32 %v399, %v256
    %v497 = vmul.f32 %v399, %v257
    %v498 = vmul.f32 %v399, %v258
    %v499 = vmul.f32 %v399, %v259
    %v500 = vmul.f32 %v399, %v260
    %v501 = vmul.f32 %v399, %v261
    %v502 = vmul.f32 %v399, %v262
    %v503 = vmul.f32 %v399, %v263
    %v504 = vmul.f32 %v399, %v264
    %v505 = vmul.f32 %v399, %v265
    %v506 = vmul.f32 %v399, %v266
    %v507 = vmul.f32 %v399, %v267
    %v508 = vmul.f32 %v399, %v268
    %v509 = vmul.f32 %v399, %v269
    %v510 = vmul.f32 %v399, %v270
    %v511 = vmul.f32 %v399, %v271
    %v512 = vmul.f32 %v399, %v272
    %v513 = vmul.f32 %v399, %v273
    %v514 = vmul.f32 %v399, %v274
    %v515 = vmul.f32 %v399, %v275
    %v516 = vmul.f32 %v399, %v276
    %v517 = vmul.f32 %v399, %v277
    %v518 = vmul.f32 %v399, %v278
    %v519 = vmul.f32 %v399, %v279
    %v520 = vmul.f32 %v399, %v280
    %v521 = vmul.f32 %v399, %v281
    %v522 = vmul.f32 %v399, %v282
    %v523 = vmul.f32 %v399, %v283
    %v524 = vmul.f32 %v399, %v284
    %v525 = vmul.f32 %v399, %v285
    %v526 = vmul.f32 %v399, %v286
    %v527 = vmul.f32 %v399, %v287
    %v528 = vmul.f32 %v399, %v288
    %v529 = vmul.f32 %v399, %v289
    %v530 = vmul.f32 %v399, %v290
    %v531 = vmul.f32 %v399, %v291
    %v532 = vmul.f32 %v399, %v292
    %v533 = vmul.f32 %v399, %v293
    %v534 = vmul.f32 %v399, %v294
    %v535 = vmul.f32 %v399, %v295
    %v536 = vmul.f32 %v399, %v296
    %v537 = vmul.f32 %v399, %v297
    %v538 = vmul.f32 %v399, %v298
    %v539 = vmul.f32 %v399, %v299
    %v540 = vmul.f32 %v399, %v300
    %v541 = vmul.f32 %v399, %v301
    %v542 = vmul.f32 %v399, %v302
    %v543 = vmul.f32 %v399, %v303
    %v544 = vmul.f32 %v399, %v304
    %v545 = vmul.f32 %v399, %v305
    %v546 = vmul.f32 %v399, %v306
    %v547 = vmul.f32 %v399, %v307
    %v548 = vmul.f32 %v399, %v308
    %v549 = vmul.f32 %v399, %v309
    %v550 = vmul.f32 %v399, %v310
    %v551 = vmul.f32 %v399, %v311
    %v552 = vmul.f32 %v399, %v312
    %v553 = vmul.f32 %v399, %v313
    %v554 = vmul.f32 %v399, %v314
    %v555 = vmul.f32 %v399, %v315
    %v556 = vmul.f32 %v399, %v316
    %v557 = vmul.f32 %v399, %v317
    %v558 = vmul.f32 %v399, %v318
    %v559 = vmul.f32 %v399, %v319
    %v560 = vmul.f32 %v399, %v320
    %v561 = vmul.f32 %v399, %v321
    %v562 = vmul.f32 %v399, %v322
    %v563 = vmul.f32 %v399, %v323
    %v564 = vmul.f32 %v399, %v324
    %v565 = vmul.f32 %v399, %v325
    %v566 = vmul.f32 %v399, %v326
    %v567 = vmul.f32 %v399, %v327
    %v568 = vmul.f32 %v399, %v328
    %v569 = vmul.f32 %v399, %v329
    %v570 = vmul.f32 %v399, %v330
    %v571 = vmul.f32 %v399, %v331
    %v572 = vmul.f32 %v399, %v332
    %v573 = vmul.f32 %v399, %v333
    %v574 = vmul.f32 %v399, %v334
    %v575 = vmul.f32 %v399, %v335
    %v576 = vmul.f32 %v399, %v336
    %v577 = vmul.f32 %v399, %v337
    %v578 = vmul.f32 %v399, %v338
    %v579 = vmul.f32 %v399, %v339
    %v580 = vmul.f32 %v399, %v340
    %v581 = vmul.f32 %v399, %v341
    %v582 = vmul.f32 %v399, %v342
    %v583 = vmul.f32 %v399, %v343
    %v584 = vmul.f32 %v399, %v344
    %v585 = vmul.f32 %v399, %v345
    %v586 = vmul.f32 %v399, %v346
    %v587 = vmul.f32 %v399, %v347
    %v588 = vmul.f32 %v399, %v348
    %v589 = vmul.f32 %v399, %v349
    %v590 = vmul.f32 %v399, %v350
    %v591 = vmul.f32 %v399, %v351
    %v592 = vmul.f32 %v399, %v352
    %v593 = vmul.f32 %v399, %v353
    %v594 = vmul.f32 %v399, %v354
    %v595 = vmul.f32 %v399, %v355
    %v596 = vmul.f32 %v399, %v356
    %v597 = vmul.f32 %v399, %v357
    %v598 = vmul.f32 %v399, %v358
    %v599 = vmul.f32 %v399, %v359
    %v600 = vmul.f32 %v399, %v360
    %v601 = vmul.f32 %v399, %v361
    %v602 = vmul.f32 %v399, %v362
    %v603 = vmul.f32 %v399, %v363
    %v604 = vmul.f32 %v399, %v364
    %v605 = vmul.f32 %v399, %v365
    %v606 = vmul.f32 %v399, %v366
    %v607 = vmul.f32 %v399, %v367
    %v608 = vmul.f32 %v399, %v368
    %v609 = vmul.f32 %v399, %v369
    %v610 = vmul.f32 %v399, %v370
    %v611 = vmul.f32 %v399, %v371
    %v612 = vmul.f32 %v399, %v372
    %v613 = vmul.f32 %v399, %v373
    %v614 = vmul.f32 %v399, %v374
    %v615 = vmul.f32 %v399, %v375
    %v616 = vmul.f32 %v399, %v376
    %v617 = vmul.f32 %v399, %v377
    %v618 = vmul.f32 %v399, %v378
    %v619 = vmul.f32 %v399, %v379
    %v620 = vmul.f32 %v399, %v380
    %v621 = vmul.f32 %v399, %v381
    %v622 = vmul.f32 %v399, %v382
    %v623 = vmul.f32 %v399, %v383
    %v624 = vmul.f32 %v399, %v384
    %v625 = vmul.f32 %v399, %v385
    %v626 = vmul.f32 %v399, %v386
    %v627 = vmul.f32 %v399, %v387
    %v628 = vmul.f32 %v399, %v388
    %v629 = vmul.f32 %v399, %v389
    %v630 = vmul.f32 %v399, %v390
    %v631 = vmul.f32 %v399, %v391
    %v632 = vmul.f32 %v399, %v392
    %v633 = vmul.f32 %v399, %v393
    %v634 = vmul.f32 %v399, %v394
    %v635 = vmul.f32 %v399, %v395
    %v636 = vmul.f32 %v399, %v396
    %v637 = vmul.f32 %v399, %v397
    %v638 = vmul.f32 %v399, %v398
    %s639 = sld [smem:[#allocation2 + $0x1]]
    %v640 = vstv %s639
    %v641 = vmul.f32 %v640, %v160
    %v642 = vmul.f32 %v640, %v161
    %v643 = vmul.f32 %v640, %v162
    %v644 = vmul.f32 %v640, %v163
    %v645 = vmul.f32 %v640, %v164
    %v646 = vmul.f32 %v640, %v165
    %v647 = vmul.f32 %v640, %v166
    %v648 = vmul.f32 %v640, %v167
    %v649 = vmul.f32 %v640, %v168
    %v650 = vmul.f32 %v640, %v169
    %v651 = vmul.f32 %v640, %v170
    %v652 = vmul.f32 %v640, %v171
    %v653 = vmul.f32 %v640, %v172
    %v654 = vmul.f32 %v640, %v173
    %v655 = vmul.f32 %v640, %v174
    %v656 = vmul.f32 %v640, %v175
    %v657 = vmul.f32 %v640, %v176
    %v658 = vmul.f32 %v640, %v177
    %v659 = vmul.f32 %v640, %v178
    %v660 = vmul.f32 %v640, %v179
    %v661 = vmul.f32 %v640, %v180
    %v662 = vmul.f32 %v640, %v181
    %v663 = vmul.f32 %v640, %v182
    %v664 = vmul.f32 %v640, %v183
    %v665 = vmul.f32 %v640, %v184
    %v666 = vmul.f32 %v640, %v185
    %v667 = vmul.f32 %v640, %v186
    %v668 = vmul.f32 %v640, %v187
    %v669 = vmul.f32 %v640, %v188
    %v670 = vmul.f32 %v640, %v189
    %v671 = vmul.f32 %v640, %v190
    %v672 = vmul.f32 %v640, %v191
    %v673 = vmul.f32 %v640, %v192
    %v674 = vmul.f32 %v640, %v193
    %v675 = vmul.f32 %v640, %v194
    %v676 = vmul.f32 %v640, %v195
    %v677 = vmul.f32 %v640, %v196
    %v678 = vmul.f32 %v640, %v197
    %v679 = vmul.f32 %v640, %v198
    %v680 = vmul.f32 %v640, %v199
    %v681 = vmul.f32 %v640, %v200
    %v682 = vmul.f32 %v640, %v201
    %v683 = vmul.f32 %v640, %v202
    %v684 = vmul.f32 %v640, %v203
    %v685 = vmul.f32 %v640, %v204
    %v686 = vmul.f32 %v640, %v205
    %v687 = vmul.f32 %v640, %v206
    %v688 = vmul.f32 %v640, %v207
    %v689 = vmul.f32 %v640, %v208
    %v690 = vmul.f32 %v640, %v209
    %v691 = vmul.f32 %v640, %v210
    %v692 = vmul.f32 %v640, %v211
    %v693 = vmul.f32 %v640, %v212
    %v694 = vmul.f32 %v640, %v213
    %v695 = vmul.f32 %v640, %v214
    %v696 = vmul.f32 %v640, %v215
    %v697 = vmul.f32 %v640, %v216
    %v698 = vmul.f32 %v640, %v217
    %v699 = vmul.f32 %v640, %v218
    %v700 = vmul.f32 %v640, %v219
    %v701 = vmul.f32 %v640, %v220
    %v702 = vmul.f32 %v640, %v221
    %v703 = vmul.f32 %v640, %v222
    %v704 = vmul.f32 %v640, %v223
    %v705 = vmul.f32 %v640, %v224
    %v706 = vmul.f32 %v640, %v225
    %v707 = vmul.f32 %v640, %v226
    %v708 = vmul.f32 %v640, %v227
    %v709 = vmul.f32 %v640, %v228
    %v710 = vmul.f32 %v640, %v229
    %v711 = vmul.f32 %v640, %v230
    %v712 = vmul.f32 %v640, %v231
    %v713 = vmul.f32 %v640, %v232
    %v714 = vmul.f32 %v640, %v233
    %v715 = vmul.f32 %v640, %v234
    %v716 = vmul.f32 %v640, %v235
    %v717 = vmul.f32 %v640, %v236
    %v718 = vmul.f32 %v640, %v237
    %v719 = vmul.f32 %v640, %v238
    %v720 = vmul.f32 %v640, %v239
    %v721 = vmul.f32 %v640, %v240
    %v722 = vmul.f32 %v640, %v241
    %v723 = vmul.f32 %v640, %v242
    %v724 = vmul.f32 %v640, %v243
    %v725 = vmul.f32 %v640, %v244
    %v726 = vmul.f32 %v640, %v245
    %v727 = vmul.f32 %v640, %v246
    %v728 = vmul.f32 %v640, %v247
    %v729 = vmul.f32 %v640, %v248
    %v730 = vmul.f32 %v640, %v249
    %v731 = vmul.f32 %v640, %v250
    %v732 = vmul.f32 %v640, %v251
    %v733 = vmul.f32 %v640, %v252
    %v734 = vmul.f32 %v640, %v253
    %v735 = vmul.f32 %v640, %v254
    %v736 = vmul.f32 %v640, %v255
    %v737 = vmul.f32 %v640, %v256
    %v738 = vmul.f32 %v640, %v257
    %v739 = vmul.f32 %v640, %v258
    %v740 = vmul.f32 %v640, %v259
    %v741 = vmul.f32 %v640, %v260
    %v742 = vmul.f32 %v640, %v261
    %v743 = vmul.f32 %v640, %v262
    %v744 = vmul.f32 %v640, %v263
    %v745 = vmul.f32 %v640, %v264
    %v746 = vmul.f32 %v640, %v265
    %v747 = vmul.f32 %v640, %v266
    %v748 = vmul.f32 %v640, %v267
    %v749 = vmul.f32 %v640, %v268
    %v750 = vmul.f32 %v640, %v269
    %v751 = vmul.f32 %v640, %v270
    %v752 = vmul.f32 %v640, %v271
    %v753 = vmul.f32 %v640, %v272
    %v754 = vmul.f32 %v640, %v273
    %v755 = vmul.f32 %v640, %v274
    %v756 = vmul.f32 %v640, %v275
    %v757 = vmul.f32 %v640, %v276
    %v758 = vmul.f32 %v640, %v277
    %v759 = vmul.f32 %v640, %v278
    %v760 = vmul.f32 %v640, %v279
    %v761 = vmul.f32 %v640, %v280
    %v762 = vmul.f32 %v640, %v281
    %v763 = vmul.f32 %v640, %v282
    %v764 = vmul.f32 %v640, %v283
    %v765 = vmul.f32 %v640, %v284
    %v766 = vmul.f32 %v640, %v285
    %v767 = vmul.f32 %v640, %v286
    %v768 = vmul.f32 %v640, %v287
    %v769 = vmul.f32 %v640, %v288
    %v770 = vmul.f32 %v640, %v289
    %v771 = vmul.f32 %v640, %v290
    %v772 = vmul.f32 %v640, %v291
    %v773 = vmul.f32 %v640, %v292
    %v774 = vmul.f32 %v640, %v293
    %v775 = vmul.f32 %v640, %v294
    %v776 = vmul.f32 %v640, %v295
    %v777 = vmul.f32 %v640, %v296
    %v778 = vmul.f32 %v640, %v297
    %v779 = vmul.f32 %v640, %v298
    %v780 = vmul.f32 %v640, %v299
    %v781 = vmul.f32 %v640, %v300
    %v782 = vmul.f32 %v640, %v301
    %v783 = vmul.f32 %v640, %v302
    %v784 = vmul.f32 %v640, %v303
    %v785 = vmul.f32 %v640, %v304
    %v786 = vmul.f32 %v640, %v305
    %v787 = vmul.f32 %v640, %v306
    %v788 = vmul.f32 %v640, %v307
    %v789 = vmul.f32 %v640, %v308
    %v790 = vmul.f32 %v640, %v309
    %v791 = vmul.f32 %v640, %v310
    %v792 = vmul.f32 %v640, %v311
    %v793 = vmul.f32 %v640, %v312
    %v794 = vmul.f32 %v640, %v313
    %v795 = vmul.f32 %v640, %v314
    %v796 = vmul.f32 %v640, %v315
    %v797 = vmul.f32 %v640, %v316
    %v798 = vmul.f32 %v640, %v317
    %v799 = vmul.f32 %v640, %v318
    %v800 = vmul.f32 %v640, %v319
    %v801 = vmul.f32 %v640, %v320
    %v802 = vmul.f32 %v640, %v321
    %v803 = vmul.f32 %v640, %v322
    %v804 = vmul.f32 %v640, %v323
    %v805 = vmul.f32 %v640, %v324
    %v806 = vmul.f32 %v640, %v325
    %v807 = vmul.f32 %v640, %v326
    %v808 = vmul.f32 %v640, %v327
    %v809 = vmul.f32 %v640, %v328
    %v810 = vmul.f32 %v640, %v329
    %v811 = vmul.f32 %v640, %v330
    %v812 = vmul.f32 %v640, %v331
    %v813 = vmul.f32 %v640, %v332
    %v814 = vmul.f32 %v640, %v333
    %v815 = vmul.f32 %v640, %v334
    %v816 = vmul.f32 %v640, %v335
    %v817 = vmul.f32 %v640, %v336
    %v818 = vmul.f32 %v640, %v337
    %v819 = vmul.f32 %v640, %v338
    %v820 = vmul.f32 %v640, %v339
    %v821 = vmul.f32 %v640, %v340
    %v822 = vmul.f32 %v640, %v341
    %v823 = vmul.f32 %v640, %v342
    %v824 = vmul.f32 %v640, %v343
    %v825 = vmul.f32 %v640, %v344
    %v826 = vmul.f32 %v640, %v345
    %v827 = vmul.f32 %v640, %v346
    %v828 = vmul.f32 %v640, %v347
    %v829 = vmul.f32 %v640, %v348
    %v830 = vmul.f32 %v640, %v349
    %v831 = vmul.f32 %v640, %v350
    %v832 = vmul.f32 %v640, %v351
    %v833 = vmul.f32 %v640, %v352
    %v834 = vmul.f32 %v640, %v353
    %v835 = vmul.f32 %v640, %v354
    %v836 = vmul.f32 %v640, %v355
    %v837 = vmul.f32 %v640, %v356
    %v838 = vmul.f32 %v640, %v357
    %v839 = vmul.f32 %v640, %v358
    %v840 = vmul.f32 %v640, %v359
    %v841 = vmul.f32 %v640, %v360
    %v842 = vmul.f32 %v640, %v361
    %v843 = vmul.f32 %v640, %v362
    %v844 = vmul.f32 %v640, %v363
    %v845 = vmul.f32 %v640, %v364
    %v846 = vmul.f32 %v640, %v365
    %v847 = vmul.f32 %v640, %v366
    %v848 = vmul.f32 %v640, %v367
    %v849 = vmul.f32 %v640, %v368
    %v850 = vmul.f32 %v640, %v369
    %v851 = vmul.f32 %v640, %v370
    %v852 = vmul.f32 %v640, %v371
    %v853 = vmul.f32 %v640, %v372
    %v854 = vmul.f32 %v640, %v373
    %v855 = vmul.f32 %v640, %v374
    %v856 = vmul.f32 %v640, %v375
    %v857 = vmul.f32 %v640, %v376
    %v858 = vmul.f32 %v640, %v377
    %v859 = vmul.f32 %v640, %v378
    %v860 = vmul.f32 %v640, %v379
    %v861 = vmul.f32 %v640, %v380
    %v862 = vmul.f32 %v640, %v381
    %v863 = vmul.f32 %v640, %v382
    %v864 = vmul.f32 %v640, %v383
    %v865 = vmul.f32 %v640, %v384
    %v866 = vmul.f32 %v640, %v385
    %v867 = vmul.f32 %v640, %v386
    %v868 = vmul.f32 %v640, %v387
    %v869 = vmul.f32 %v640, %v388
    %v870 = vmul.f32 %v640, %v389
    %v871 = vmul.f32 %v640, %v390
    %v872 = vmul.f32 %v640, %v391
    %v873 = vmul.f32 %v640, %v392
    %v874 = vmul.f32 %v640, %v393
    %v875 = vmul.f32 %v640, %v394
    %v876 = vmul.f32 %v640, %v395
    %v877 = vmul.f32 %v640, %v396
    %v878 = vmul.f32 %v640, %v397
    %v879 = vmul.f32 %v640, %v398
    %v1119 = vrot.slane %v641, 1
    %v1120 = vrot.slane %v642, 1
    %v1121 = vrot.slane %v643, 1
    %v1122 = vrot.slane %v644, 1
    %v1123 = vrot.slane %v645, 1
    %v1124 = vrot.slane %v646, 1
    %v1125 = vrot.slane %v647, 1
    %v1126 = vrot.slane %v648, 1
    %v1127 = vrot.slane %v649, 1
    %v1128 = vrot.slane %v650, 1
    %v1129 = vrot.slane %v651, 1
    %v1130 = vrot.slane %v652, 1
    %v1131 = vrot.slane %v653, 1
    %v1132 = vrot.slane %v654, 1
    %v1133 = vrot.slane %v655, 1
    %v1134 = vrot.slane %v656, 1
    %v1135 = vrot.slane %v657, 1
    %v1136 = vrot.slane %v658, 1
    %v1137 = vrot.slane %v659, 1
    %v1138 = vrot.slane %v660, 1
    %v1139 = vrot.slane %v661, 1
    %v1140 = vrot.slane %v662, 1
    %v1141 = vrot.slane %v663, 1
    %v1142 = vrot.slane %v664, 1
    %v1143 = vrot.slane %v665, 1
    %v1144 = vrot.slane %v666, 1
    %v1145 = vrot.slane %v667, 1
    %v1146 = vrot.slane %v668, 1
    %v1147 = vrot.slane %v669, 1
    %v1148 = vrot.slane %v670, 1
    %v1149 = vrot.slane %v671, 1
    %v1150 = vrot.slane %v672, 1
    %v1151 = vrot.slane %v673, 1
    %v1152 = vrot.slane %v674, 1
    %v1153 = vrot.slane %v675, 1
    %v1154 = vrot.slane %v676, 1
    %v1155 = vrot.slane %v677, 1
    %v1156 = vrot.slane %v678, 1
    %v1157 = vrot.slane %v679, 1
    %v1158 = vrot.slane %v680, 1
    %v1159 = vrot.slane %v681, 1
    %v1160 = vrot.slane %v682, 1
    %v1161 = vrot.slane %v683, 1
    %v1162 = vrot.slane %v684, 1
    %v1163 = vrot.slane %v685, 1
    %v1164 = vrot.slane %v686, 1
    %v1165 = vrot.slane %v687, 1
    %v1166 = vrot.slane %v688, 1
    %v1167 = vrot.slane %v689, 1
    %v1168 = vrot.slane %v690, 1
    %v1169 = vrot.slane %v691, 1
    %v1170 = vrot.slane %v692, 1
    %v1171 = vrot.slane %v693, 1
    %v1172 = vrot.slane %v694, 1
    %v1173 = vrot.slane %v695, 1
    %v1174 = vrot.slane %v696, 1
    %v1175 = vrot.slane %v697, 1
    %v1176 = vrot.slane %v698, 1
    %v1177 = vrot.slane %v699, 1
    %v1178 = vrot.slane %v700, 1
    %v1179 = vrot.slane %v701, 1
    %v1180 = vrot.slane %v702, 1
    %v1181 = vrot.slane %v703, 1
    %v1182 = vrot.slane %v704, 1
    %v1183 = vrot.slane %v705, 1
    %v1184 = vrot.slane %v706, 1
    %v1185 = vrot.slane %v707, 1
    %v1186 = vrot.slane %v708, 1
    %v1187 = vrot.slane %v709, 1
    %v1188 = vrot.slane %v710, 1
    %v1189 = vrot.slane %v711, 1
    %v1190 = vrot.slane %v712, 1
    %v1191 = vrot.slane %v713, 1
    %v1192 = vrot.slane %v714, 1
    %v1193 = vrot.slane %v715, 1
    %v1194 = vrot.slane %v716, 1
    %v1195 = vrot.slane %v717, 1
    %v1196 = vrot.slane %v718, 1
    %v1197 = vrot.slane %v719, 1
    %v1198 = vrot.slane %v720, 1
    %v1199 = vrot.slane %v721, 1
    %v1200 = vrot.slane %v722, 1
    %v1201 = vrot.slane %v723, 1
    %v1202 = vrot.slane %v724, 1
    %v1203 = vrot.slane %v725, 1
    %v1204 = vrot.slane %v726, 1
    %v1205 = vrot.slane %v727, 1
    %v1206 = vrot.slane %v728, 1
    %v1207 = vrot.slane %v729, 1
    %v1208 = vrot.slane %v730, 1
    %v1209 = vrot.slane %v731, 1
    %v1210 = vrot.slane %v732, 1
    %v1211 = vrot.slane %v733, 1
    %v1212 = vrot.slane %v734, 1
    %v1213 = vrot.slane %v735, 1
    %v1214 = vrot.slane %v736, 1
    %v1215 = vrot.slane %v737, 1
    %v1216 = vrot.slane %v738, 1
    %v1217 = vrot.slane %v739, 1
    %v1218 = vrot.slane %v740, 1
    %v1219 = vrot.slane %v741, 1
    %v1220 = vrot.slane %v742, 1
    %v1221 = vrot.slane %v743, 1
    %v1222 = vrot.slane %v744, 1
    %v1223 = vrot.slane %v745, 1
    %v1224 = vrot.slane %v746, 1
    %v1225 = vrot.slane %v747, 1
    %v1226 = vrot.slane %v748, 1
    %v1227 = vrot.slane %v749, 1
    %v1228 = vrot.slane %v750, 1
    %v1229 = vrot.slane %v751, 1
    %v1230 = vrot.slane %v752, 1
    %v1231 = vrot.slane %v753, 1
    %v1232 = vrot.slane %v754, 1
    %v1233 = vrot.slane %v755, 1
    %v1234 = vrot.slane %v756, 1
    %v1235 = vrot.slane %v757, 1
    %v1236 = vrot.slane %v758, 1
    %v1237 = vrot.slane %v759, 1
    %v1238 = vrot.slane %v760, 1
    %v1239 = vrot.slane %v761, 1
    %v1240 = vrot.slane %v762, 1
    %v1241 = vrot.slane %v763, 1
    %v1242 = vrot.slane %v764, 1
    %v1243 = vrot.slane %v765, 1
    %v1244 = vrot.slane %v766, 1
    %v1245 = vrot.slane %v767, 1
    %v1246 = vrot.slane %v768, 1
    %v1247 = vrot.slane %v769, 1
    %v1248 = vrot.slane %v770, 1
    %v1249 = vrot.slane %v771, 1
    %v1250 = vrot.slane %v772, 1
    %v1251 = vrot.slane %v773, 1
    %v1252 = vrot.slane %v774, 1
    %v1253 = vrot.slane %v775, 1
    %v1254 = vrot.slane %v776, 1
    %v1255 = vrot.slane %v777, 1
    %v1256 = vrot.slane %v778, 1
    %v1257 = vrot.slane %v779, 1
    %v1258 = vrot.slane %v780, 1
    %v1259 = vrot.slane %v781, 1
    %v1260 = vrot.slane %v782, 1
    %v1261 = vrot.slane %v783, 1
    %v1262 = vrot.slane %v784, 1
    %v1263 = vrot.slane %v785, 1
    %v1264 = vrot.slane %v786, 1
    %v1265 = vrot.slane %v787, 1
    %v1266 = vrot.slane %v788, 1
    %v1267 = vrot.slane %v789, 1
    %v1268 = vrot.slane %v790, 1
    %v1269 = vrot.slane %v791, 1
    %v1270 = vrot.slane %v792, 1
    %v1271 = vrot.slane %v793, 1
    %v1272 = vrot.slane %v794, 1
    %v1273 = vrot.slane %v795, 1
    %v1274 = vrot.slane %v796, 1
    %v1275 = vrot.slane %v797, 1
    %v1276 = vrot.slane %v798, 1
    %v1277 = vrot.slane %v799, 1
    %v1278 = vrot.slane %v800, 1
    %v1279 = vrot.slane %v801, 1
    %v1280 = vrot.slane %v802, 1
    %v1281 = vrot.slane %v803, 1
    %v1282 = vrot.slane %v804, 1
    %v1283 = vrot.slane %v805, 1
    %v1284 = vrot.slane %v806, 1
    %v1285 = vrot.slane %v807, 1
    %v1286 = vrot.slane %v808, 1
    %v1287 = vrot.slane %v809, 1
    %v1288 = vrot.slane %v810, 1
    %v1289 = vrot.slane %v811, 1
    %v1290 = vrot.slane %v812, 1
    %v1291 = vrot.slane %v813, 1
    %v1292 = vrot.slane %v814, 1
    %v1293 = vrot.slane %v815, 1
    %v1294 = vrot.slane %v816, 1
    %v1295 = vrot.slane %v817, 1
    %v1296 = vrot.slane %v818, 1
    %v1297 = vrot.slane %v819, 1
    %v1298 = vrot.slane %v820, 1
    %v1299 = vrot.slane %v821, 1
    %v1300 = vrot.slane %v822, 1
    %v1301 = vrot.slane %v823, 1
    %v1302 = vrot.slane %v824, 1
    %v1303 = vrot.slane %v825, 1
    %v1304 = vrot.slane %v826, 1
    %v1305 = vrot.slane %v827, 1
    %v1306 = vrot.slane %v828, 1
    %v1307 = vrot.slane %v829, 1
    %v1308 = vrot.slane %v830, 1
    %v1309 = vrot.slane %v831, 1
    %v1310 = vrot.slane %v832, 1
    %v1311 = vrot.slane %v833, 1
    %v1312 = vrot.slane %v834, 1
    %v1313 = vrot.slane %v835, 1
    %v1314 = vrot.slane %v836, 1
    %v1315 = vrot.slane %v837, 1
    %v1316 = vrot.slane %v838, 1
    %v1317 = vrot.slane %v839, 1
    %v1318 = vrot.slane %v840, 1
    %v1319 = vrot.slane %v841, 1
    %v1320 = vrot.slane %v842, 1
    %v1321 = vrot.slane %v843, 1
    %v1322 = vrot.slane %v844, 1
    %v1323 = vrot.slane %v845, 1
    %v1324 = vrot.slane %v846, 1
    %v1325 = vrot.slane %v847, 1
    %v1326 = vrot.slane %v848, 1
    %v1327 = vrot.slane %v849, 1
    %v1328 = vrot.slane %v850, 1
    %v1329 = vrot.slane %v851, 1
    %v1330 = vrot.slane %v852, 1
    %v1331 = vrot.slane %v853, 1
    %v1332 = vrot.slane %v854, 1
    %v1333 = vrot.slane %v855, 1
    %v1334 = vrot.slane %v856, 1
    %v1335 = vrot.slane %v857, 1
    %v1336 = vrot.slane %v858, 1
    %v1337 = vrot.slane %v859, 1
    %v1338 = vrot.slane %v860, 1
    %v1339 = vrot.slane %v861, 1
    %v1340 = vrot.slane %v862, 1
    %v1341 = vrot.slane %v863, 1
    %v1342 = vrot.slane %v864, 1
    %v1343 = vrot.slane %v865, 1
    %v1344 = vrot.slane %v866, 1
    %v1345 = vrot.slane %v867, 1
    %v1346 = vrot.slane %v868, 1
    %v1347 = vrot.slane %v869, 1
    %v1348 = vrot.slane %v870, 1
    %v1349 = vrot.slane %v871, 1
    %v1350 = vrot.slane %v872, 1
    %v1351 = vrot.slane %v873, 1
    %v1352 = vrot.slane %v874, 1
    %v1353 = vrot.slane %v875, 1
    %v1354 = vrot.slane %v876, 1
    %v1355 = vrot.slane %v877, 1
    %v1356 = vrot.slane %v878, 1
    %v1357 = vrot.slane %v879, 1
    %v1597 = vadd.f32 %v400, %v1119
    %v1598 = vadd.f32 %v401, %v1120
    %v1599 = vadd.f32 %v402, %v1121
    %v1600 = vadd.f32 %v403, %v1122
    %v1601 = vadd.f32 %v404, %v1123
    %v1602 = vadd.f32 %v405, %v1124
    %v1603 = vadd.f32 %v406, %v1125
    %v1604 = vadd.f32 %v407, %v1126
    %v1605 = vadd.f32 %v408, %v1127
    %v1606 = vadd.f32 %v409, %v1128
    %v1607 = vadd.f32 %v410, %v1129
    %v1608 = vadd.f32 %v411, %v1130
    %v1609 = vadd.f32 %v412, %v1131
    %v1610 = vadd.f32 %v413, %v1132
    %v1611 = vadd.f32 %v414, %v1133
    %v1612 = vadd.f32 %v415, %v1134
    %v1613 = vadd.f32 %v416, %v1135
    %v1614 = vadd.f32 %v417, %v1136
    %v1615 = vadd.f32 %v418, %v1137
    %v1616 = vadd.f32 %v419, %v1138
    %v1617 = vadd.f32 %v420, %v1139
    %v1618 = vadd.f32 %v421, %v1140
    %v1619 = vadd.f32 %v422, %v1141
    %v1620 = vadd.f32 %v423, %v1142
    %v1621 = vadd.f32 %v424, %v1143
    %v1622 = vadd.f32 %v425, %v1144
    %v1623 = vadd.f32 %v426, %v1145
    %v1624 = vadd.f32 %v427, %v1146
    %v1625 = vadd.f32 %v428, %v1147
    %v1626 = vadd.f32 %v429, %v1148
    %v1627 = vadd.f32 %v430, %v1149
    %v1628 = vadd.f32 %v431, %v1150
    %v1629 = vadd.f32 %v432, %v1151
    %v1630 = vadd.f32 %v433, %v1152
    %v1631 = vadd.f32 %v434, %v1153
    %v1632 = vadd.f32 %v435, %v1154
    %v1633 = vadd.f32 %v436, %v1155
    %v1634 = vadd.f32 %v437, %v1156
    %v1635 = vadd.f32 %v438, %v1157
    %v1636 = vadd.f32 %v439, %v1158
    %v1637 = vadd.f32 %v440, %v1159
    %v1638 = vadd.f32 %v441, %v1160
    %v1639 = vadd.f32 %v442, %v1161
    %v1640 = vadd.f32 %v443, %v1162
    %v1641 = vadd.f32 %v444, %v1163
    %v1642 = vadd.f32 %v445, %v1164
    %v1643 = vadd.f32 %v446, %v1165
    %v1644 = vadd.f32 %v447, %v1166
    %v1645 = vadd.f32 %v448, %v1167
    %v1646 = vadd.f32 %v449, %v1168
    %v1647 = vadd.f32 %v450, %v1169
    %v1648 = vadd.f32 %v451, %v1170
    %v1649 = vadd.f32 %v452, %v1171
    %v1650 = vadd.f32 %v453, %v1172
    %v1651 = vadd.f32 %v454, %v1173
    %v1652 = vadd.f32 %v455, %v1174
    %v1653 = vadd.f32 %v456, %v1175
    %v1654 = vadd.f32 %v457, %v1176
    %v1655 = vadd.f32 %v458, %v1177
    %v1656 = vadd.f32 %v459, %v1178
    %v1657 = vadd.f32 %v460, %v1179
    %v1658 = vadd.f32 %v461, %v1180
    %v1659 = vadd.f32 %v462, %v1181
    %v1660 = vadd.f32 %v463, %v1182
    %v1661 = vadd.f32 %v464, %v1183
    %v1662 = vadd.f32 %v465, %v1184
    %v1663 = vadd.f32 %v466, %v1185
    %v1664 = vadd.f32 %v467, %v1186
    %v1665 = vadd.f32 %v468, %v1187
    %v1666 = vadd.f32 %v469, %v1188
    %v1667 = vadd.f32 %v470, %v1189
    %v1668 = vadd.f32 %v471, %v1190
    %v1669 = vadd.f32 %v472, %v1191
    %v1670 = vadd.f32 %v473, %v1192
    %v1671 = vadd.f32 %v474, %v1193
    %v1672 = vadd.f32 %v475, %v1194
    %v1673 = vadd.f32 %v476, %v1195
    %v1674 = vadd.f32 %v477, %v1196
    %v1675 = vadd.f32 %v478, %v1197
    %v1676 = vadd.f32 %v479, %v1198
    %v1677 = vadd.f32 %v480, %v1199
    %v1678 = vadd.f32 %v481, %v1200
    %v1679 = vadd.f32 %v482, %v1201
    %v1680 = vadd.f32 %v483, %v1202
    %v1681 = vadd.f32 %v484, %v1203
    %v1682 = vadd.f32 %v485, %v1204
    %v1683 = vadd.f32 %v486, %v1205
    %v1684 = vadd.f32 %v487, %v1206
    %v1685 = vadd.f32 %v488, %v1207
    %v1686 = vadd.f32 %v489, %v1208
    %v1687 = vadd.f32 %v490, %v1209
    %v1688 = vadd.f32 %v491, %v1210
    %v1689 = vadd.f32 %v492, %v1211
    %v1690 = vadd.f32 %v493, %v1212
    %v1691 = vadd.f32 %v494, %v1213
    %v1692 = vadd.f32 %v495, %v1214
    %v1693 = vadd.f32 %v496, %v1215
    %v1694 = vadd.f32 %v497, %v1216
    %v1695 = vadd.f32 %v498, %v1217
    %v1696 = vadd.f32 %v499, %v1218
    %v1697 = vadd.f32 %v500, %v1219
    %v1698 = vadd.f32 %v501, %v1220
    %v1699 = vadd.f32 %v502, %v1221
    %v1700 = vadd.f32 %v503, %v1222
    %v1701 = vadd.f32 %v504, %v1223
    %v1702 = vadd.f32 %v505, %v1224
    %v1703 = vadd.f32 %v506, %v1225
    %v1704 = vadd.f32 %v507, %v1226
    %v1705 = vadd.f32 %v508, %v1227
    %v1706 = vadd.f32 %v509, %v1228
    %v1707 = vadd.f32 %v510, %v1229
    %v1708 = vadd.f32 %v511, %v1230
    %v1709 = vadd.f32 %v512, %v1231
    %v1710 = vadd.f32 %v513, %v1232
    %v1711 = vadd.f32 %v514, %v1233
    %v1712 = vadd.f32 %v515, %v1234
    %v1713 = vadd.f32 %v516, %v1235
    %v1714 = vadd.f32 %v517, %v1236
    %v1715 = vadd.f32 %v518, %v1237
    %v1716 = vadd.f32 %v519, %v1238
    %v1717 = vadd.f32 %v520, %v1239
    %v1718 = vadd.f32 %v521, %v1240
    %v1719 = vadd.f32 %v522, %v1241
    %v1720 = vadd.f32 %v523, %v1242
    %v1721 = vadd.f32 %v524, %v1243
    %v1722 = vadd.f32 %v525, %v1244
    %v1723 = vadd.f32 %v526, %v1245
    %v1724 = vadd.f32 %v527, %v1246
    %v1725 = vadd.f32 %v528, %v1247
    %v1726 = vadd.f32 %v529, %v1248
    %v1727 = vadd.f32 %v530, %v1249
    %v1728 = vadd.f32 %v531, %v1250
    %v1729 = vadd.f32 %v532, %v1251
    %v1730 = vadd.f32 %v533, %v1252
    %v1731 = vadd.f32 %v534, %v1253
    %v1732 = vadd.f32 %v535, %v1254
    %v1733 = vadd.f32 %v536, %v1255
    %v1734 = vadd.f32 %v537, %v1256
    %v1735 = vadd.f32 %v538, %v1257
    %v1736 = vadd.f32 %v539, %v1258
    %v1737 = vadd.f32 %v540, %v1259
    %v1738 = vadd.f32 %v541, %v1260
    %v1739 = vadd.f32 %v542, %v1261
    %v1740 = vadd.f32 %v543, %v1262
    %v1741 = vadd.f32 %v544, %v1263
    %v1742 = vadd.f32 %v545, %v1264
    %v1743 = vadd.f32 %v546, %v1265
    %v1744 = vadd.f32 %v547, %v1266
    %v1745 = vadd.f32 %v548, %v1267
    %v1746 = vadd.f32 %v549, %v1268
    %v1747 = vadd.f32 %v550, %v1269
    %v1748 = vadd.f32 %v551, %v1270
    %v1749 = vadd.f32 %v552, %v1271
    %v1750 = vadd.f32 %v553, %v1272
    %v1751 = vadd.f32 %v554, %v1273
    %v1752 = vadd.f32 %v555, %v1274
    %v1753 = vadd.f32 %v556, %v1275
    %v1754 = vadd.f32 %v557, %v1276
    %v1755 = vadd.f32 %v558, %v1277
    %v1756 = vadd.f32 %v559, %v1278
    %v1757 = vadd.f32 %v560, %v1279
    %v1758 = vadd.f32 %v561, %v1280
    %v1759 = vadd.f32 %v562, %v1281
    %v1760 = vadd.f32 %v563, %v1282
    %v1761 = vadd.f32 %v564, %v1283
    %v1762 = vadd.f32 %v565, %v1284
    %v1763 = vadd.f32 %v566, %v1285
    %v1764 = vadd.f32 %v567, %v1286
    %v1765 = vadd.f32 %v568, %v1287
    %v1766 = vadd.f32 %v569, %v1288
    %v1767 = vadd.f32 %v570, %v1289
    %v1768 = vadd.f32 %v571, %v1290
    %v1769 = vadd.f32 %v572, %v1291
    %v1770 = vadd.f32 %v573, %v1292
    %v1771 = vadd.f32 %v574, %v1293
    %v1772 = vadd.f32 %v575, %v1294
    %v1773 = vadd.f32 %v576, %v1295
    %v1774 = vadd.f32 %v577, %v1296
    %v1775 = vadd.f32 %v578, %v1297
    %v1776 = vadd.f32 %v579, %v1298
    %v1777 = vadd.f32 %v580, %v1299
    %v1778 = vadd.f32 %v581, %v1300
    %v1779 = vadd.f32 %v582, %v1301
    %v1780 = vadd.f32 %v583, %v1302
    %v1781 = vadd.f32 %v584, %v1303
    %v1782 = vadd.f32 %v585, %v1304
    %v1783 = vadd.f32 %v586, %v1305
    %v1784 = vadd.f32 %v587, %v1306
    %v1785 = vadd.f32 %v588, %v1307
    %v1786 = vadd.f32 %v589, %v1308
    %v1787 = vadd.f32 %v590, %v1309
    %v1788 = vadd.f32 %v591, %v1310
    %v1789 = vadd.f32 %v592, %v1311
    %v1790 = vadd.f32 %v593, %v1312
    %v1791 = vadd.f32 %v594, %v1313
    %v1792 = vadd.f32 %v595, %v1314
    %v1793 = vadd.f32 %v596, %v1315
    %v1794 = vadd.f32 %v597, %v1316
    %v1795 = vadd.f32 %v598, %v1317
    %v1796 = vadd.f32 %v599, %v1318
    %v1797 = vadd.f32 %v600, %v1319
    %v1798 = vadd.f32 %v601, %v1320
    %v1799 = vadd.f32 %v602, %v1321
    %v1800 = vadd.f32 %v603, %v1322
    %v1801 = vadd.f32 %v604, %v1323
    %v1802 = vadd.f32 %v605, %v1324
    %v1803 = vadd.f32 %v606, %v1325
    %v1804 = vadd.f32 %v607, %v1326
    %v1805 = vadd.f32 %v608, %v1327
    %v1806 = vadd.f32 %v609, %v1328
    %v1807 = vadd.f32 %v610, %v1329
    %v1808 = vadd.f32 %v611, %v1330
    %v1809 = vadd.f32 %v612, %v1331
    %v1810 = vadd.f32 %v613, %v1332
    %v1811 = vadd.f32 %v614, %v1333
    %v1812 = vadd.f32 %v615, %v1334
    %v1813 = vadd.f32 %v616, %v1335
    %v1814 = vadd.f32 %v617, %v1336
    %v1815 = vadd.f32 %v618, %v1337
    %v1816 = vadd.f32 %v619, %v1338
    %v1817 = vadd.f32 %v620, %v1339
    %v1818 = vadd.f32 %v621, %v1340
    %v1819 = vadd.f32 %v622, %v1341
    %v1820 = vadd.f32 %v623, %v1342
    %v1821 = vadd.f32 %v624, %v1343
    %v1822 = vadd.f32 %v625, %v1344
    %v1823 = vadd.f32 %v626, %v1345
    %v1824 = vadd.f32 %v627, %v1346
    %v1825 = vadd.f32 %v628, %v1347
    %v1826 = vadd.f32 %v629, %v1348
    %v1827 = vadd.f32 %v630, %v1349
    %v1828 = vadd.f32 %v631, %v1350
    %v1829 = vadd.f32 %v632, %v1351
    %v1830 = vadd.f32 %v633, %v1352
    %v1831 = vadd.f32 %v634, %v1353
    %v1832 = vadd.f32 %v635, %v1354
    %v1833 = vadd.f32 %v636, %v1355
    %v1834 = vadd.f32 %v637, %v1356
    %v1835 = vadd.f32 %v638, %v1357
    %s1836 = sld [smem:[#allocation2 + $0x2]]
    %v1837 = vld [vmem:[#allocation6] sm:$0x22]
    %v1838 = vld [vmem:[#allocation6 + $0x8] sm:$0x22]
    %v1839 = vld [vmem:[#allocation6 + $0x10] sm:$0x22]
    %v1840 = vld [vmem:[#allocation6 + $0x18] sm:$0x22]
    %v1841 = vld [vmem:[#allocation6 + $0x20] sm:$0x22]
    %v1842 = vld [vmem:[#allocation6 + $0x28] sm:$0x22]
    %v1843 = vld [vmem:[#allocation6 + $0x30] sm:$0x22]
    %v1844 = vld [vmem:[#allocation6 + $0x38] sm:$0x22]
    %v1845 = vld [vmem:[#allocation6 + $0x40] sm:$0x22]
    %v1846 = vld [vmem:[#allocation6 + $0x48] sm:$0x22]
    %v1847 = vld [vmem:[#allocation6 + $0x50] sm:$0x22]
    %v1848 = vld [vmem:[#allocation6 + $0x58] sm:$0x22]
    %v1849 = vld [vmem:[#allocation6 + $0x60] sm:$0x22]
    %v1850 = vld [vmem:[#allocation6 + $0x68] sm:$0x22]
    %v1851 = vld [vmem:[#allocation6 + $0x70] sm:$0x22]
    %v1852 = vld [vmem:[#allocation6 + $0x78] sm:$0x22]
    %v1853 = vld [vmem:[#allocation6 + $0x80] sm:$0x22]
    %v1854 = vld [vmem:[#allocation6 + $0x88] sm:$0x22]
    %v1855 = vld [vmem:[#allocation6 + $0x90] sm:$0x22]
    %v1856 = vld [vmem:[#allocation6 + $0x98] sm:$0x22]
    %v1857 = vld [vmem:[#allocation6 + $0xa0] sm:$0x22]
    %v1858 = vld [vmem:[#allocation6 + $0xa8] sm:$0x22]
    %v1859 = vld [vmem:[#allocation6 + $0xb0] sm:$0x22]
    %v1860 = vld [vmem:[#allocation6 + $0xb8] sm:$0x22]
    %v1861 = vld [vmem:[#allocation6 + $0xc0] sm:$0x22]
    %v1862 = vld [vmem:[#allocation6 + $0xc8] sm:$0x22]
    %v1863 = vld [vmem:[#allocation6 + $0xd0] sm:$0x22]
    %v1864 = vld [vmem:[#allocation6 + $0xd8] sm:$0x22]
    %v1865 = vld [vmem:[#allocation6 + $0xe0] sm:$0x22]
    %v1866 = vld [vmem:[#allocation6 + $0xe8] sm:$0x22]
    %v1867 = vld [vmem:[#allocation6 + $0xf0] sm:$0x22]
    %v1868 = vld [vmem:[#allocation6 + $0xf8] sm:$0x22]
    %v1869 = vld [vmem:[#allocation6 + $0x100] sm:$0x22]
    %v1870 = vld [vmem:[#allocation6 + $0x108] sm:$0x22]
    %v1871 = vld [vmem:[#allocation6 + $0x110] sm:$0x22]
    %v1872 = vld [vmem:[#allocation6 + $0x118] sm:$0x22]
    %v1873 = vld [vmem:[#allocation6 + $0x120] sm:$0x22]
    %v1874 = vld [vmem:[#allocation6 + $0x128] sm:$0x22]
    %v1875 = vld [vmem:[#allocation6 + $0x130] sm:$0x22]
    %v1876 = vld [vmem:[#allocation6 + $0x138] sm:$0x22]
    %v1877 = vld [vmem:[#allocation6 + $0x140] sm:$0x22]
    %v1878 = vld [vmem:[#allocation6 + $0x148] sm:$0x22]
    %v1879 = vld [vmem:[#allocation6 + $0x150] sm:$0x22]
    %v1880 = vld [vmem:[#allocation6 + $0x158] sm:$0x22]
    %v1881 = vld [vmem:[#allocation6 + $0x160] sm:$0x22]
    %v1882 = vld [vmem:[#allocation6 + $0x168] sm:$0x22]
    %v1883 = vld [vmem:[#allocation6 + $0x170] sm:$0x22]
    %v1884 = vld [vmem:[#allocation6 + $0x178] sm:$0x22]
    %v1885 = vld [vmem:[#allocation6 + $0x180] sm:$0x22]
    %v1886 = vld [vmem:[#allocation6 + $0x188] sm:$0x22]
    %v1887 = vld [vmem:[#allocation6 + $0x190] sm:$0x22]
    %v1888 = vld [vmem:[#allocation6 + $0x198] sm:$0x22]
    %v1889 = vld [vmem:[#allocation6 + $0x1a0] sm:$0x22]
    %v1890 = vld [vmem:[#allocation6 + $0x1a8] sm:$0x22]
    %v1891 = vld [vmem:[#allocation6 + $0x1b0] sm:$0x22]
    %v1892 = vld [vmem:[#allocation6 + $0x1b8] sm:$0x22]
    %v1893 = vld [vmem:[#allocation6 + $0x1c0] sm:$0x22]
    %v1894 = vld [vmem:[#allocation6 + $0x1c8] sm:$0x22]
    %v1895 = vld [vmem:[#allocation6 + $0x1d0] sm:$0x22]
    %v1896 = vld [vmem:[#allocation6 + $0x1d8] sm:$0x22]
    %v1897 = vld [vmem:[#allocation6 + $0x1e0] sm:$0x22]
    %v1898 = vld [vmem:[#allocation6 + $0x1e8] sm:$0x22]
    %v1899 = vld [vmem:[#allocation6 + $0x1f0] sm:$0x22]
    %v1900 = vld [vmem:[#allocation6 + $0x1f8] sm:$0x22]
    %v1901 = vld [vmem:[#allocation6 + $0x200] sm:$0x22]
    %v1902 = vld [vmem:[#allocation6 + $0x208] sm:$0x22]
    %v1903 = vld [vmem:[#allocation6 + $0x210] sm:$0x22]
    %v1904 = vld [vmem:[#allocation6 + $0x218] sm:$0x22]
    %v1905 = vld [vmem:[#allocation6 + $0x220] sm:$0x22]
    %v1906 = vld [vmem:[#allocation6 + $0x228] sm:$0x22]
    %v1907 = vld [vmem:[#allocation6 + $0x230] sm:$0x22]
    %v1908 = vld [vmem:[#allocation6 + $0x238] sm:$0x22]
    %v1909 = vld [vmem:[#allocation6 + $0x240] sm:$0x22]
    %v1910 = vld [vmem:[#allocation6 + $0x248] sm:$0x22]
    %v1911 = vld [vmem:[#allocation6 + $0x250] sm:$0x22]
    %v1912 = vld [vmem:[#allocation6 + $0x258] sm:$0x22]
    %v1913 = vld [vmem:[#allocation6 + $0x260] sm:$0x22]
    %v1914 = vld [vmem:[#allocation6 + $0x268] sm:$0x22]
    %v1915 = vld [vmem:[#allocation6 + $0x270] sm:$0x22]
    %v1916 = vld [vmem:[#allocation6 + $0x278] sm:$0x22]
    %v1917 = vld [vmem:[#allocation6 + $0x280] sm:$0x22]
    %v1918 = vld [vmem:[#allocation6 + $0x288] sm:$0x22]
    %v1919 = vld [vmem:[#allocation6 + $0x290] sm:$0x22]
    %v1920 = vld [vmem:[#allocation6 + $0x298] sm:$0x22]
    %v1921 = vld [vmem:[#allocation6 + $0x2a0] sm:$0x22]
    %v1922 = vld [vmem:[#allocation6 + $0x2a8] sm:$0x22]
    %v1923 = vld [vmem:[#allocation6 + $0x2b0] sm:$0x22]
    %v1924 = vld [vmem:[#allocation6 + $0x2b8] sm:$0x22]
    %v1925 = vld [vmem:[#allocation6 + $0x2c0] sm:$0x22]
    %v1926 = vld [vmem:[#allocation6 + $0x2c8] sm:$0x22]
    %v1927 = vld [vmem:[#allocation6 + $0x2d0] sm:$0x22]
    %v1928 = vld [vmem:[#allocation6 + $0x2d8] sm:$0x22]
    %v1929 = vld [vmem:[#allocation6 + $0x2e0] sm:$0x22]
    %v1930 = vld [vmem:[#allocation6 + $0x2e8] sm:$0x22]
    %v1931 = vld [vmem:[#allocation6 + $0x2f0] sm:$0x22]
    %v1932 = vld [vmem:[#allocation6 + $0x2f8] sm:$0x22]
    %v1933 = vld [vmem:[#allocation6 + $0x300] sm:$0x22]
    %v1934 = vld [vmem:[#allocation6 + $0x308] sm:$0x22]
    %v1935 = vld [vmem:[#allocation6 + $0x310] sm:$0x22]
    %v1936 = vld [vmem:[#allocation6 + $0x318] sm:$0x22]
    %v1937 = vld [vmem:[#allocation6 + $0x320] sm:$0x22]
    %v1938 = vld [vmem:[#allocation6 + $0x328] sm:$0x22]
    %v1939 = vld [vmem:[#allocation6 + $0x330] sm:$0x22]
    %v1940 = vld [vmem:[#allocation6 + $0x338] sm:$0x22]
    %v1941 = vld [vmem:[#allocation6 + $0x340] sm:$0x22]
    %v1942 = vld [vmem:[#allocation6 + $0x348] sm:$0x22]
    %v1943 = vld [vmem:[#allocation6 + $0x350] sm:$0x22]
    %v1944 = vld [vmem:[#allocation6 + $0x358] sm:$0x22]
    %v1945 = vld [vmem:[#allocation6 + $0x360] sm:$0x22]
    %v1946 = vld [vmem:[#allocation6 + $0x368] sm:$0x22]
    %v1947 = vld [vmem:[#allocation6 + $0x370] sm:$0x22]
    %v1948 = vld [vmem:[#allocation6 + $0x378] sm:$0x22]
    %v1949 = vld [vmem:[#allocation6 + $0x380] sm:$0x22]
    %v1950 = vld [vmem:[#allocation6 + $0x388] sm:$0x22]
    %v1951 = vld [vmem:[#allocation6 + $0x390] sm:$0x22]
    %v1952 = vld [vmem:[#allocation6 + $0x398] sm:$0x22]
    %v1953 = vld [vmem:[#allocation6 + $0x3a0] sm:$0x22]
    %v1954 = vld [vmem:[#allocation6 + $0x3a8] sm:$0x22]
    %v1955 = vld [vmem:[#allocation6 + $0x3b0] sm:$0x22]
    %v1956 = vld [vmem:[#allocation6 + $0x3b8] sm:$0x2]
    %v1957 = vunpack.c.l.bf16 %v1837
    %v1958 = vunpack.c.h.bf16 %v1837
    %v1959 = vunpack.c.l.bf16 %v1838
    %v1960 = vunpack.c.h.bf16 %v1838
    %v1961 = vunpack.c.l.bf16 %v1839
    %v1962 = vunpack.c.h.bf16 %v1839
    %v1963 = vunpack.c.l.bf16 %v1840
    %v1964 = vunpack.c.h.bf16 %v1840
    %v1965 = vunpack.c.l.bf16 %v1841
    %v1966 = vunpack.c.h.bf16 %v1841
    %v1967 = vunpack.c.l.bf16 %v1842
    %v1968 = vunpack.c.h.bf16 %v1842
    %v1969 = vunpack.c.l.bf16 %v1843
    %v1970 = vunpack.c.h.bf16 %v1843
    %v1971 = vunpack.c.l.bf16 %v1844
    %v1972 = vunpack.c.h.bf16 %v1844
    %v1973 = vunpack.c.l.bf16 %v1845
    %v1974 = vunpack.c.h.bf16 %v1845
    %v1975 = vunpack.c.l.bf16 %v1846
    %v1976 = vunpack.c.h.bf16 %v1846
    %v1977 = vunpack.c.l.bf16 %v1847
    %v1978 = vunpack.c.h.bf16 %v1847
    %v1979 = vunpack.c.l.bf16 %v1848
    %v1980 = vunpack.c.h.bf16 %v1848
    %v1981 = vunpack.c.l.bf16 %v1849
    %v1982 = vunpack.c.h.bf16 %v1849
    %v1983 = vunpack.c.l.bf16 %v1850
    %v1984 = vunpack.c.h.bf16 %v1850
    %v1985 = vunpack.c.l.bf16 %v1851
    %v1986 = vunpack.c.h.bf16 %v1851
    %v1987 = vunpack.c.l.bf16 %v1852
    %v1988 = vunpack.c.h.bf16 %v1852
    %v1989 = vunpack.c.l.bf16 %v1853
    %v1990 = vunpack.c.h.bf16 %v1853
    %v1991 = vunpack.c.l.bf16 %v1854
    %v1992 = vunpack.c.h.bf16 %v1854
    %v1993 = vunpack.c.l.bf16 %v1855
    %v1994 = vunpack.c.h.bf16 %v1855
    %v1995 = vunpack.c.l.bf16 %v1856
    %v1996 = vunpack.c.h.bf16 %v1856
    %v1997 = vunpack.c.l.bf16 %v1857
    %v1998 = vunpack.c.h.bf16 %v1857
    %v1999 = vunpack.c.l.bf16 %v1858
    %v2000 = vunpack.c.h.bf16 %v1858
    %v2001 = vunpack.c.l.bf16 %v1859
    %v2002 = vunpack.c.h.bf16 %v1859
    %v2003 = vunpack.c.l.bf16 %v1860
    %v2004 = vunpack.c.h.bf16 %v1860
    %v2005 = vunpack.c.l.bf16 %v1861
    %v2006 = vunpack.c.h.bf16 %v1861
    %v2007 = vunpack.c.l.bf16 %v1862
    %v2008 = vunpack.c.h.bf16 %v1862
    %v2009 = vunpack.c.l.bf16 %v1863
    %v2010 = vunpack.c.h.bf16 %v1863
    %v2011 = vunpack.c.l.bf16 %v1864
    %v2012 = vunpack.c.h.bf16 %v1864
    %v2013 = vunpack.c.l.bf16 %v1865
    %v2014 = vunpack.c.h.bf16 %v1865
    %v2015 = vunpack.c.l.bf16 %v1866
    %v2016 = vunpack.c.h.bf16 %v1866
    %v2017 = vunpack.c.l.bf16 %v1867
    %v2018 = vunpack.c.h.bf16 %v1867
    %v2019 = vunpack.c.l.bf16 %v1868
    %v2020 = vunpack.c.h.bf16 %v1868
    %v2021 = vunpack.c.l.bf16 %v1869
    %v2022 = vunpack.c.h.bf16 %v1869
    %v2023 = vunpack.c.l.bf16 %v1870
    %v2024 = vunpack.c.h.bf16 %v1870
    %v2025 = vunpack.c.l.bf16 %v1871
    %v2026 = vunpack.c.h.bf16 %v1871
    %v2027 = vunpack.c.l.bf16 %v1872
    %v2028 = vunpack.c.h.bf16 %v1872
    %v2029 = vunpack.c.l.bf16 %v1873
    %v2030 = vunpack.c.h.bf16 %v1873
    %v2031 = vunpack.c.l.bf16 %v1874
    %v2032 = vunpack.c.h.bf16 %v1874
    %v2033 = vunpack.c.l.bf16 %v1875
    %v2034 = vunpack.c.h.bf16 %v1875
    %v2035 = vunpack.c.l.bf16 %v1876
    %v2036 = vunpack.c.h.bf16 %v1876
    %v2037 = vunpack.c.l.bf16 %v1877
    %v2038 = vunpack.c.h.bf16 %v1877
    %v2039 = vunpack.c.l.bf16 %v1878
    %v2040 = vunpack.c.h.bf16 %v1878
    %v2041 = vunpack.c.l.bf16 %v1879
    %v2042 = vunpack.c.h.bf16 %v1879
    %v2043 = vunpack.c.l.bf16 %v1880
    %v2044 = vunpack.c.h.bf16 %v1880
    %v2045 = vunpack.c.l.bf16 %v1881
    %v2046 = vunpack.c.h.bf16 %v1881
    %v2047 = vunpack.c.l.bf16 %v1882
    %v2048 = vunpack.c.h.bf16 %v1882
    %v2049 = vunpack.c.l.bf16 %v1883
    %v2050 = vunpack.c.h.bf16 %v1883
    %v2051 = vunpack.c.l.bf16 %v1884
    %v2052 = vunpack.c.h.bf16 %v1884
    %v2053 = vunpack.c.l.bf16 %v1885
    %v2054 = vunpack.c.h.bf16 %v1885
    %v2055 = vunpack.c.l.bf16 %v1886
    %v2056 = vunpack.c.h.bf16 %v1886
    %v2057 = vunpack.c.l.bf16 %v1887
    %v2058 = vunpack.c.h.bf16 %v1887
    %v2059 = vunpack.c.l.bf16 %v1888
    %v2060 = vunpack.c.h.bf16 %v1888
    %v2061 = vunpack.c.l.bf16 %v1889
    %v2062 = vunpack.c.h.bf16 %v1889
    %v2063 = vunpack.c.l.bf16 %v1890
    %v2064 = vunpack.c.h.bf16 %v1890
    %v2065 = vunpack.c.l.bf16 %v1891
    %v2066 = vunpack.c.h.bf16 %v1891
    %v2067 = vunpack.c.l.bf16 %v1892
    %v2068 = vunpack.c.h.bf16 %v1892
    %v2069 = vunpack.c.l.bf16 %v1893
    %v2070 = vunpack.c.h.bf16 %v1893
    %v2071 = vunpack.c.l.bf16 %v1894
    %v2072 = vunpack.c.h.bf16 %v1894
    %v2073 = vunpack.c.l.bf16 %v1895
    %v2074 = vunpack.c.h.bf16 %v1895
    %v2075 = vunpack.c.l.bf16 %v1896
    %v2076 = vunpack.c.h.bf16 %v1896
    %v2077 = vunpack.c.l.bf16 %v1897
    %v2078 = vunpack.c.h.bf16 %v1897
    %v2079 = vunpack.c.l.bf16 %v1898
    %v2080 = vunpack.c.h.bf16 %v1898
    %v2081 = vunpack.c.l.bf16 %v1899
    %v2082 = vunpack.c.h.bf16 %v1899
    %v2083 = vunpack.c.l.bf16 %v1900
    %v2084 = vunpack.c.h.bf16 %v1900
    %v2085 = vunpack.c.l.bf16 %v1901
    %v2086 = vunpack.c.h.bf16 %v1901
    %v2087 = vunpack.c.l.bf16 %v1902
    %v2088 = vunpack.c.h.bf16 %v1902
    %v2089 = vunpack.c.l.bf16 %v1903
    %v2090 = vunpack.c.h.bf16 %v1903
    %v2091 = vunpack.c.l.bf16 %v1904
    %v2092 = vunpack.c.h.bf16 %v1904
    %v2093 = vunpack.c.l.bf16 %v1905
    %v2094 = vunpack.c.h.bf16 %v1905
    %v2095 = vunpack.c.l.bf16 %v1906
    %v2096 = vunpack.c.h.bf16 %v1906
    %v2097 = vunpack.c.l.bf16 %v1907
    %v2098 = vunpack.c.h.bf16 %v1907
    %v2099 = vunpack.c.l.bf16 %v1908
    %v2100 = vunpack.c.h.bf16 %v1908
    %v2101 = vunpack.c.l.bf16 %v1909
    %v2102 = vunpack.c.h.bf16 %v1909
    %v2103 = vunpack.c.l.bf16 %v1910
    %v2104 = vunpack.c.h.bf16 %v1910
    %v2105 = vunpack.c.l.bf16 %v1911
    %v2106 = vunpack.c.h.bf16 %v1911
    %v2107 = vunpack.c.l.bf16 %v1912
    %v2108 = vunpack.c.h.bf16 %v1912
    %v2109 = vunpack.c.l.bf16 %v1913
    %v2110 = vunpack.c.h.bf16 %v1913
    %v2111 = vunpack.c.l.bf16 %v1914
    %v2112 = vunpack.c.h.bf16 %v1914
    %v2113 = vunpack.c.l.bf16 %v1915
    %v2114 = vunpack.c.h.bf16 %v1915
    %v2115 = vunpack.c.l.bf16 %v1916
    %v2116 = vunpack.c.h.bf16 %v1916
    %v2117 = vunpack.c.l.bf16 %v1917
    %v2118 = vunpack.c.h.bf16 %v1917
    %v2119 = vunpack.c.l.bf16 %v1918
    %v2120 = vunpack.c.h.bf16 %v1918
    %v2121 = vunpack.c.l.bf16 %v1919
    %v2122 = vunpack.c.h.bf16 %v1919
    %v2123 = vunpack.c.l.bf16 %v1920
    %v2124 = vunpack.c.h.bf16 %v1920
    %v2125 = vunpack.c.l.bf16 %v1921
    %v2126 = vunpack.c.h.bf16 %v1921
    %v2127 = vunpack.c.l.bf16 %v1922
    %v2128 = vunpack.c.h.bf16 %v1922
    %v2129 = vunpack.c.l.bf16 %v1923
    %v2130 = vunpack.c.h.bf16 %v1923
    %v2131 = vunpack.c.l.bf16 %v1924
    %v2132 = vunpack.c.h.bf16 %v1924
    %v2133 = vunpack.c.l.bf16 %v1925
    %v2134 = vunpack.c.h.bf16 %v1925
    %v2135 = vunpack.c.l.bf16 %v1926
    %v2136 = vunpack.c.h.bf16 %v1926
    %v2137 = vunpack.c.l.bf16 %v1927
    %v2138 = vunpack.c.h.bf16 %v1927
    %v2139 = vunpack.c.l.bf16 %v1928
    %v2140 = vunpack.c.h.bf16 %v1928
    %v2141 = vunpack.c.l.bf16 %v1929
    %v2142 = vunpack.c.h.bf16 %v1929
    %v2143 = vunpack.c.l.bf16 %v1930
    %v2144 = vunpack.c.h.bf16 %v1930
    %v2145 = vunpack.c.l.bf16 %v1931
    %v2146 = vunpack.c.h.bf16 %v1931
    %v2147 = vunpack.c.l.bf16 %v1932
    %v2148 = vunpack.c.h.bf16 %v1932
    %v2149 = vunpack.c.l.bf16 %v1933
    %v2150 = vunpack.c.h.bf16 %v1933
    %v2151 = vunpack.c.l.bf16 %v1934
    %v2152 = vunpack.c.h.bf16 %v1934
    %v2153 = vunpack.c.l.bf16 %v1935
    %v2154 = vunpack.c.h.bf16 %v1935
    %v2155 = vunpack.c.l.bf16 %v1936
    %v2156 = vunpack.c.h.bf16 %v1936
    %v2157 = vunpack.c.l.bf16 %v1937
    %v2158 = vunpack.c.h.bf16 %v1937
    %v2159 = vunpack.c.l.bf16 %v1938
    %v2160 = vunpack.c.h.bf16 %v1938
    %v2161 = vunpack.c.l.bf16 %v1939
    %v2162 = vunpack.c.h.bf16 %v1939
    %v2163 = vunpack.c.l.bf16 %v1940
    %v2164 = vunpack.c.h.bf16 %v1940
    %v2165 = vunpack.c.l.bf16 %v1941
    %v2166 = vunpack.c.h.bf16 %v1941
    %v2167 = vunpack.c.l.bf16 %v1942
    %v2168 = vunpack.c.h.bf16 %v1942
    %v2169 = vunpack.c.l.bf16 %v1943
    %v2170 = vunpack.c.h.bf16 %v1943
    %v2171 = vunpack.c.l.bf16 %v1944
    %v2172 = vunpack.c.h.bf16 %v1944
    %v2173 = vunpack.c.l.bf16 %v1945
    %v2174 = vunpack.c.h.bf16 %v1945
    %v2175 = vunpack.c.l.bf16 %v1946
    %v2176 = vunpack.c.h.bf16 %v1946
    %v2177 = vunpack.c.l.bf16 %v1947
    %v2178 = vunpack.c.h.bf16 %v1947
    %v2179 = vunpack.c.l.bf16 %v1948
    %v2180 = vunpack.c.h.bf16 %v1948
    %v2181 = vunpack.c.l.bf16 %v1949
    %v2182 = vunpack.c.h.bf16 %v1949
    %v2183 = vunpack.c.l.bf16 %v1950
    %v2184 = vunpack.c.h.bf16 %v1950
    %v2185 = vunpack.c.l.bf16 %v1951
    %v2186 = vunpack.c.h.bf16 %v1951
    %v2187 = vunpack.c.l.bf16 %v1952
    %v2188 = vunpack.c.h.bf16 %v1952
    %v2189 = vunpack.c.l.bf16 %v1953
    %v2190 = vunpack.c.h.bf16 %v1953
    %v2191 = vunpack.c.l.bf16 %v1954
    %v2192 = vunpack.c.h.bf16 %v1954
    %v2193 = vunpack.c.l.bf16 %v1955
    %v2194 = vunpack.c.h.bf16 %v1955
    %v2195 = vunpack.c.l.bf16 %v1956
    %v2196 = vstv %s1836
    %v2197 = vmul.f32 %v2196, %v1957
    %v2198 = vmul.f32 %v2196, %v1958
    %v2199 = vmul.f32 %v2196, %v1959
    %v2200 = vmul.f32 %v2196, %v1960
    %v2201 = vmul.f32 %v2196, %v1961
    %v2202 = vmul.f32 %v2196, %v1962
    %v2203 = vmul.f32 %v2196, %v1963
    %v2204 = vmul.f32 %v2196, %v1964
    %v2205 = vmul.f32 %v2196, %v1965
    %v2206 = vmul.f32 %v2196, %v1966
    %v2207 = vmul.f32 %v2196, %v1967
    %v2208 = vmul.f32 %v2196, %v1968
    %v2209 = vmul.f32 %v2196, %v1969
    %v2210 = vmul.f32 %v2196, %v1970
    %v2211 = vmul.f32 %v2196, %v1971
    %v2212 = vmul.f32 %v2196, %v1972
    %v2213 = vmul.f32 %v2196, %v1973
    %v2214 = vmul.f32 %v2196, %v1974
    %v2215 = vmul.f32 %v2196, %v1975
    %v2216 = vmul.f32 %v2196, %v1976
    %v2217 = vmul.f32 %v2196, %v1977
    %v2218 = vmul.f32 %v2196, %v1978
    %v2219 = vmul.f32 %v2196, %v1979
    %v2220 = vmul.f32 %v2196, %v1980
    %v2221 = vmul.f32 %v2196, %v1981
    %v2222 = vmul.f32 %v2196, %v1982
    %v2223 = vmul.f32 %v2196, %v1983
    %v2224 = vmul.f32 %v2196, %v1984
    %v2225 = vmul.f32 %v2196, %v1985
    %v2226 = vmul.f32 %v2196, %v1986
    %v2227 = vmul.f32 %v2196, %v1987
    %v2228 = vmul.f32 %v2196, %v1988
    %v2229 = vmul.f32 %v2196, %v1989
    %v2230 = vmul.f32 %v2196, %v1990
    %v2231 = vmul.f32 %v2196, %v1991
    %v2232 = vmul.f32 %v2196, %v1992
    %v2233 = vmul.f32 %v2196, %v1993
    %v2234 = vmul.f32 %v2196, %v1994
    %v2235 = vmul.f32 %v2196, %v1995
    %v2236 = vmul.f32 %v2196, %v1996
    %v2237 = vmul.f32 %v2196, %v1997
    %v2238 = vmul.f32 %v2196, %v1998
    %v2239 = vmul.f32 %v2196, %v1999
    %v2240 = vmul.f32 %v2196, %v2000
    %v2241 = vmul.f32 %v2196, %v2001
    %v2242 = vmul.f32 %v2196, %v2002
    %v2243 = vmul.f32 %v2196, %v2003
    %v2244 = vmul.f32 %v2196, %v2004
    %v2245 = vmul.f32 %v2196, %v2005
    %v2246 = vmul.f32 %v2196, %v2006
    %v2247 = vmul.f32 %v2196, %v2007
    %v2248 = vmul.f32 %v2196, %v2008
    %v2249 = vmul.f32 %v2196, %v2009
    %v2250 = vmul.f32 %v2196, %v2010
    %v2251 = vmul.f32 %v2196, %v2011
    %v2252 = vmul.f32 %v2196, %v2012
    %v2253 = vmul.f32 %v2196, %v2013
    %v2254 = vmul.f32 %v2196, %v2014
    %v2255 = vmul.f32 %v2196, %v2015
    %v2256 = vmul.f32 %v2196, %v2016
    %v2257 = vmul.f32 %v2196, %v2017
    %v2258 = vmul.f32 %v2196, %v2018
    %v2259 = vmul.f32 %v2196, %v2019
    %v2260 = vmul.f32 %v2196, %v2020
    %v2261 = vmul.f32 %v2196, %v2021
    %v2262 = vmul.f32 %v2196, %v2022
    %v2263 = vmul.f32 %v2196, %v2023
    %v2264 = vmul.f32 %v2196, %v2024
    %v2265 = vmul.f32 %v2196, %v2025
    %v2266 = vmul.f32 %v2196, %v2026
    %v2267 = vmul.f32 %v2196, %v2027
    %v2268 = vmul.f32 %v2196, %v2028
    %v2269 = vmul.f32 %v2196, %v2029
    %v2270 = vmul.f32 %v2196, %v2030
    %v2271 = vmul.f32 %v2196, %v2031
    %v2272 = vmul.f32 %v2196, %v2032
    %v2273 = vmul.f32 %v2196, %v2033
    %v2274 = vmul.f32 %v2196, %v2034
    %v2275 = vmul.f32 %v2196, %v2035
    %v2276 = vmul.f32 %v2196, %v2036
    %v2277 = vmul.f32 %v2196, %v2037
    %v2278 = vmul.f32 %v2196, %v2038
    %v2279 = vmul.f32 %v2196, %v2039
    %v2280 = vmul.f32 %v2196, %v2040
    %v2281 = vmul.f32 %v2196, %v2041
    %v2282 = vmul.f32 %v2196, %v2042
    %v2283 = vmul.f32 %v2196, %v2043
    %v2284 = vmul.f32 %v2196, %v2044
    %v2285 = vmul.f32 %v2196, %v2045
    %v2286 = vmul.f32 %v2196, %v2046
    %v2287 = vmul.f32 %v2196, %v2047
    %v2288 = vmul.f32 %v2196, %v2048
    %v2289 = vmul.f32 %v2196, %v2049
    %v2290 = vmul.f32 %v2196, %v2050
    %v2291 = vmul.f32 %v2196, %v2051
    %v2292 = vmul.f32 %v2196, %v2052
    %v2293 = vmul.f32 %v2196, %v2053
    %v2294 = vmul.f32 %v2196, %v2054
    %v2295 = vmul.f32 %v2196, %v2055
    %v2296 = vmul.f32 %v2196, %v2056
    %v2297 = vmul.f32 %v2196, %v2057
    %v2298 = vmul.f32 %v2196, %v2058
    %v2299 = vmul.f32 %v2196, %v2059
    %v2300 = vmul.f32 %v2196, %v2060
    %v2301 = vmul.f32 %v2196, %v2061
    %v2302 = vmul.f32 %v2196, %v2062
    %v2303 = vmul.f32 %v2196, %v2063
    %v2304 = vmul.f32 %v2196, %v2064
    %v2305 = vmul.f32 %v2196, %v2065
    %v2306 = vmul.f32 %v2196, %v2066
    %v2307 = vmul.f32 %v2196, %v2067
    %v2308 = vmul.f32 %v2196, %v2068
    %v2309 = vmul.f32 %v2196, %v2069
    %v2310 = vmul.f32 %v2196, %v2070
    %v2311 = vmul.f32 %v2196, %v2071
    %v2312 = vmul.f32 %v2196, %v2072
    %v2313 = vmul.f32 %v2196, %v2073
    %v2314 = vmul.f32 %v2196, %v2074
    %v2315 = vmul.f32 %v2196, %v2075
    %v2316 = vmul.f32 %v2196, %v2076
    %v2317 = vmul.f32 %v2196, %v2077
    %v2318 = vmul.f32 %v2196, %v2078
    %v2319 = vmul.f32 %v2196, %v2079
    %v2320 = vmul.f32 %v2196, %v2080
    %v2321 = vmul.f32 %v2196, %v2081
    %v2322 = vmul.f32 %v2196, %v2082
    %v2323 = vmul.f32 %v2196, %v2083
    %v2324 = vmul.f32 %v2196, %v2084
    %v2325 = vmul.f32 %v2196, %v2085
    %v2326 = vmul.f32 %v2196, %v2086
    %v2327 = vmul.f32 %v2196, %v2087
    %v2328 = vmul.f32 %v2196, %v2088
    %v2329 = vmul.f32 %v2196, %v2089
    %v2330 = vmul.f32 %v2196, %v2090
    %v2331 = vmul.f32 %v2196, %v2091
    %v2332 = vmul.f32 %v2196, %v2092
    %v2333 = vmul.f32 %v2196, %v2093
    %v2334 = vmul.f32 %v2196, %v2094
    %v2335 = vmul.f32 %v2196, %v2095
    %v2336 = vmul.f32 %v2196, %v2096
    %v2337 = vmul.f32 %v2196, %v2097
    %v2338 = vmul.f32 %v2196, %v2098
    %v2339 = vmul.f32 %v2196, %v2099
    %v2340 = vmul.f32 %v2196, %v2100
    %v2341 = vmul.f32 %v2196, %v2101
    %v2342 = vmul.f32 %v2196, %v2102
    %v2343 = vmul.f32 %v2196, %v2103
    %v2344 = vmul.f32 %v2196, %v2104
    %v2345 = vmul.f32 %v2196, %v2105
    %v2346 = vmul.f32 %v2196, %v2106
    %v2347 = vmul.f32 %v2196, %v2107
    %v2348 = vmul.f32 %v2196, %v2108
    %v2349 = vmul.f32 %v2196, %v2109
    %v2350 = vmul.f32 %v2196, %v2110
    %v2351 = vmul.f32 %v2196, %v2111
    %v2352 = vmul.f32 %v2196, %v2112
    %v2353 = vmul.f32 %v2196, %v2113
    %v2354 = vmul.f32 %v2196, %v2114
    %v2355 = vmul.f32 %v2196, %v2115
    %v2356 = vmul.f32 %v2196, %v2116
    %v2357 = vmul.f32 %v2196, %v2117
    %v2358 = vmul.f32 %v2196, %v2118
    %v2359 = vmul.f32 %v2196, %v2119
    %v2360 = vmul.f32 %v2196, %v2120
    %v2361 = vmul.f32 %v2196, %v2121
    %v2362 = vmul.f32 %v2196, %v2122
    %v2363 = vmul.f32 %v2196, %v2123
    %v2364 = vmul.f32 %v2196, %v2124
    %v2365 = vmul.f32 %v2196, %v2125
    %v2366 = vmul.f32 %v2196, %v2126
    %v2367 = vmul.f32 %v2196, %v2127
    %v2368 = vmul.f32 %v2196, %v2128
    %v2369 = vmul.f32 %v2196, %v2129
    %v2370 = vmul.f32 %v2196, %v2130
    %v2371 = vmul.f32 %v2196, %v2131
    %v2372 = vmul.f32 %v2196, %v2132
    %v2373 = vmul.f32 %v2196, %v2133
    %v2374 = vmul.f32 %v2196, %v2134
    %v2375 = vmul.f32 %v2196, %v2135
    %v2376 = vmul.f32 %v2196, %v2136
    %v2377 = vmul.f32 %v2196, %v2137
    %v2378 = vmul.f32 %v2196, %v2138
    %v2379 = vmul.f32 %v2196, %v2139
    %v2380 = vmul.f32 %v2196, %v2140
    %v2381 = vmul.f32 %v2196, %v2141
    %v2382 = vmul.f32 %v2196, %v2142
    %v2383 = vmul.f32 %v2196, %v2143
    %v2384 = vmul.f32 %v2196, %v2144
    %v2385 = vmul.f32 %v2196, %v2145
    %v2386 = vmul.f32 %v2196, %v2146
    %v2387 = vmul.f32 %v2196, %v2147
    %v2388 = vmul.f32 %v2196, %v2148
    %v2389 = vmul.f32 %v2196, %v2149
    %v2390 = vmul.f32 %v2196, %v2150
    %v2391 = vmul.f32 %v2196, %v2151
    %v2392 = vmul.f32 %v2196, %v2152
    %v2393 = vmul.f32 %v2196, %v2153
    %v2394 = vmul.f32 %v2196, %v2154
    %v2395 = vmul.f32 %v2196, %v2155
    %v2396 = vmul.f32 %v2196, %v2156
    %v2397 = vmul.f32 %v2196, %v2157
    %v2398 = vmul.f32 %v2196, %v2158
    %v2399 = vmul.f32 %v2196, %v2159
    %v2400 = vmul.f32 %v2196, %v2160
    %v2401 = vmul.f32 %v2196, %v2161
    %v2402 = vmul.f32 %v2196, %v2162
    %v2403 = vmul.f32 %v2196, %v2163
    %v2404 = vmul.f32 %v2196, %v2164
    %v2405 = vmul.f32 %v2196, %v2165
    %v2406 = vmul.f32 %v2196, %v2166
    %v2407 = vmul.f32 %v2196, %v2167
    %v2408 = vmul.f32 %v2196, %v2168
    %v2409 = vmul.f32 %v2196, %v2169
    %v2410 = vmul.f32 %v2196, %v2170
    %v2411 = vmul.f32 %v2196, %v2171
    %v2412 = vmul.f32 %v2196, %v2172
    %v2413 = vmul.f32 %v2196, %v2173
    %v2414 = vmul.f32 %v2196, %v2174
    %v2415 = vmul.f32 %v2196, %v2175
    %v2416 = vmul.f32 %v2196, %v2176
    %v2417 = vmul.f32 %v2196, %v2177
    %v2418 = vmul.f32 %v2196, %v2178
    %v2419 = vmul.f32 %v2196, %v2179
    %v2420 = vmul.f32 %v2196, %v2180
    %v2421 = vmul.f32 %v2196, %v2181
    %v2422 = vmul.f32 %v2196, %v2182
    %v2423 = vmul.f32 %v2196, %v2183
    %v2424 = vmul.f32 %v2196, %v2184
    %v2425 = vmul.f32 %v2196, %v2185
    %v2426 = vmul.f32 %v2196, %v2186
    %v2427 = vmul.f32 %v2196, %v2187
    %v2428 = vmul.f32 %v2196, %v2188
    %v2429 = vmul.f32 %v2196, %v2189
    %v2430 = vmul.f32 %v2196, %v2190
    %v2431 = vmul.f32 %v2196, %v2191
    %v2432 = vmul.f32 %v2196, %v2192
    %v2433 = vmul.f32 %v2196, %v2193
    %v2434 = vmul.f32 %v2196, %v2194
    %v2435 = vmul.f32 %v2196, %v2195
    %v2675 = vrot.slane %v2197, 2
    %v2676 = vrot.slane %v2198, 2
    %v2677 = vrot.slane %v2199, 2
    %v2678 = vrot.slane %v2200, 2
    %v2679 = vrot.slane %v2201, 2
    %v2680 = vrot.slane %v2202, 2
    %v2681 = vrot.slane %v2203, 2
    %v2682 = vrot.slane %v2204, 2
    %v2683 = vrot.slane %v2205, 2
    %v2684 = vrot.slane %v2206, 2
    %v2685 = vrot.slane %v2207, 2
    %v2686 = vrot.slane %v2208, 2
    %v2687 = vrot.slane %v2209, 2
    %v2688 = vrot.slane %v2210, 2
    %v2689 = vrot.slane %v2211, 2
    %v2690 = vrot.slane %v2212, 2
    %v2691 = vrot.slane %v2213, 2
    %v2692 = vrot.slane %v2214, 2
    %v2693 = vrot.slane %v2215, 2
    %v2694 = vrot.slane %v2216, 2
    %v2695 = vrot.slane %v2217, 2
    %v2696 = vrot.slane %v2218, 2
    %v2697 = vrot.slane %v2219, 2
    %v2698 = vrot.slane %v2220, 2
    %v2699 = vrot.slane %v2221, 2
    %v2700 = vrot.slane %v2222, 2
    %v2701 = vrot.slane %v2223, 2
    %v2702 = vrot.slane %v2224, 2
    %v2703 = vrot.slane %v2225, 2
    %v2704 = vrot.slane %v2226, 2
    %v2705 = vrot.slane %v2227, 2
    %v2706 = vrot.slane %v2228, 2
    %v2707 = vrot.slane %v2229, 2
    %v2708 = vrot.slane %v2230, 2
    %v2709 = vrot.slane %v2231, 2
    %v2710 = vrot.slane %v2232, 2
    %v2711 = vrot.slane %v2233, 2
    %v2712 = vrot.slane %v2234, 2
    %v2713 = vrot.slane %v2235, 2
    %v2714 = vrot.slane %v2236, 2
    %v2715 = vrot.slane %v2237, 2
    %v2716 = vrot.slane %v2238, 2
    %v2717 = vrot.slane %v2239, 2
    %v2718 = vrot.slane %v2240, 2
    %v2719 = vrot.slane %v2241, 2
    %v2720 = vrot.slane %v2242, 2
    %v2721 = vrot.slane %v2243, 2
    %v2722 = vrot.slane %v2244, 2
    %v2723 = vrot.slane %v2245, 2
    %v2724 = vrot.slane %v2246, 2
    %v2725 = vrot.slane %v2247, 2
    %v2726 = vrot.slane %v2248, 2
    %v2727 = vrot.slane %v2249, 2
    %v2728 = vrot.slane %v2250, 2
    %v2729 = vrot.slane %v2251, 2
    %v2730 = vrot.slane %v2252, 2
    %v2731 = vrot.slane %v2253, 2
    %v2732 = vrot.slane %v2254, 2
    %v2733 = vrot.slane %v2255, 2
    %v2734 = vrot.slane %v2256, 2
    %v2735 = vrot.slane %v2257, 2
    %v2736 = vrot.slane %v2258, 2
    %v2737 = vrot.slane %v2259, 2
    %v2738 = vrot.slane %v2260, 2
    %v2739 = vrot.slane %v2261, 2
    %v2740 = vrot.slane %v2262, 2
    %v2741 = vrot.slane %v2263, 2
    %v2742 = vrot.slane %v2264, 2
    %v2743 = vrot.slane %v2265, 2
    %v2744 = vrot.slane %v2266, 2
    %v2745 = vrot.slane %v2267, 2
    %v2746 = vrot.slane %v2268, 2
    %v2747 = vrot.slane %v2269, 2
    %v2748 = vrot.slane %v2270, 2
    %v2749 = vrot.slane %v2271, 2
    %v2750 = vrot.slane %v2272, 2
    %v2751 = vrot.slane %v2273, 2
    %v2752 = vrot.slane %v2274, 2
    %v2753 = vrot.slane %v2275, 2
    %v2754 = vrot.slane %v2276, 2
    %v2755 = vrot.slane %v2277, 2
    %v2756 = vrot.slane %v2278, 2
    %v2757 = vrot.slane %v2279, 2
    %v2758 = vrot.slane %v2280, 2
    %v2759 = vrot.slane %v2281, 2
    %v2760 = vrot.slane %v2282, 2
    %v2761 = vrot.slane %v2283, 2
    %v2762 = vrot.slane %v2284, 2
    %v2763 = vrot.slane %v2285, 2
    %v2764 = vrot.slane %v2286, 2
    %v2765 = vrot.slane %v2287, 2
    %v2766 = vrot.slane %v2288, 2
    %v2767 = vrot.slane %v2289, 2
    %v2768 = vrot.slane %v2290, 2
    %v2769 = vrot.slane %v2291, 2
    %v2770 = vrot.slane %v2292, 2
    %v2771 = vrot.slane %v2293, 2
    %v2772 = vrot.slane %v2294, 2
    %v2773 = vrot.slane %v2295, 2
    %v2774 = vrot.slane %v2296, 2
    %v2775 = vrot.slane %v2297, 2
    %v2776 = vrot.slane %v2298, 2
    %v2777 = vrot.slane %v2299, 2
    %v2778 = vrot.slane %v2300, 2
    %v2779 = vrot.slane %v2301, 2
    %v2780 = vrot.slane %v2302, 2
    %v2781 = vrot.slane %v2303, 2
    %v2782 = vrot.slane %v2304, 2
    %v2783 = vrot.slane %v2305, 2
    %v2784 = vrot.slane %v2306, 2
    %v2785 = vrot.slane %v2307, 2
    %v2786 = vrot.slane %v2308, 2
    %v2787 = vrot.slane %v2309, 2
    %v2788 = vrot.slane %v2310, 2
    %v2789 = vrot.slane %v2311, 2
    %v2790 = vrot.slane %v2312, 2
    %v2791 = vrot.slane %v2313, 2
    %v2792 = vrot.slane %v2314, 2
    %v2793 = vrot.slane %v2315, 2
    %v2794 = vrot.slane %v2316, 2
    %v2795 = vrot.slane %v2317, 2
    %v2796 = vrot.slane %v2318, 2
    %v2797 = vrot.slane %v2319, 2
    %v2798 = vrot.slane %v2320, 2
    %v2799 = vrot.slane %v2321, 2
    %v2800 = vrot.slane %v2322, 2
    %v2801 = vrot.slane %v2323, 2
    %v2802 = vrot.slane %v2324, 2
    %v2803 = vrot.slane %v2325, 2
    %v2804 = vrot.slane %v2326, 2
    %v2805 = vrot.slane %v2327, 2
    %v2806 = vrot.slane %v2328, 2
    %v2807 = vrot.slane %v2329, 2
    %v2808 = vrot.slane %v2330, 2
    %v2809 = vrot.slane %v2331, 2
    %v2810 = vrot.slane %v2332, 2
    %v2811 = vrot.slane %v2333, 2
    %v2812 = vrot.slane %v2334, 2
    %v2813 = vrot.slane %v2335, 2
    %v2814 = vrot.slane %v2336, 2
    %v2815 = vrot.slane %v2337, 2
    %v2816 = vrot.slane %v2338, 2
    %v2817 = vrot.slane %v2339, 2
    %v2818 = vrot.slane %v2340, 2
    %v2819 = vrot.slane %v2341, 2
    %v2820 = vrot.slane %v2342, 2
    %v2821 = vrot.slane %v2343, 2
    %v2822 = vrot.slane %v2344, 2
    %v2823 = vrot.slane %v2345, 2
    %v2824 = vrot.slane %v2346, 2
    %v2825 = vrot.slane %v2347, 2
    %v2826 = vrot.slane %v2348, 2
    %v2827 = vrot.slane %v2349, 2
    %v2828 = vrot.slane %v2350, 2
    %v2829 = vrot.slane %v2351, 2
    %v2830 = vrot.slane %v2352, 2
    %v2831 = vrot.slane %v2353, 2
    %v2832 = vrot.slane %v2354, 2
    %v2833 = vrot.slane %v2355, 2
    %v2834 = vrot.slane %v2356, 2
    %v2835 = vrot.slane %v2357, 2
    %v2836 = vrot.slane %v2358, 2
    %v2837 = vrot.slane %v2359, 2
    %v2838 = vrot.slane %v2360, 2
    %v2839 = vrot.slane %v2361, 2
    %v2840 = vrot.slane %v2362, 2
    %v2841 = vrot.slane %v2363, 2
    %v2842 = vrot.slane %v2364, 2
    %v2843 = vrot.slane %v2365, 2
    %v2844 = vrot.slane %v2366, 2
    %v2845 = vrot.slane %v2367, 2
    %v2846 = vrot.slane %v2368, 2
    %v2847 = vrot.slane %v2369, 2
    %v2848 = vrot.slane %v2370, 2
    %v2849 = vrot.slane %v2371, 2
    %v2850 = vrot.slane %v2372, 2
    %v2851 = vrot.slane %v2373, 2
    %v2852 = vrot.slane %v2374, 2
    %v2853 = vrot.slane %v2375, 2
    %v2854 = vrot.slane %v2376, 2
    %v2855 = vrot.slane %v2377, 2
    %v2856 = vrot.slane %v2378, 2
    %v2857 = vrot.slane %v2379, 2
    %v2858 = vrot.slane %v2380, 2
    %v2859 = vrot.slane %v2381, 2
    %v2860 = vrot.slane %v2382, 2
    %v2861 = vrot.slane %v2383, 2
    %v2862 = vrot.slane %v2384, 2
    %v2863 = vrot.slane %v2385, 2
    %v2864 = vrot.slane %v2386, 2
    %v2865 = vrot.slane %v2387, 2
    %v2866 = vrot.slane %v2388, 2
    %v2867 = vrot.slane %v2389, 2
    %v2868 = vrot.slane %v2390, 2
    %v2869 = vrot.slane %v2391, 2
    %v2870 = vrot.slane %v2392, 2
    %v2871 = vrot.slane %v2393, 2
    %v2872 = vrot.slane %v2394, 2
    %v2873 = vrot.slane %v2395, 2
    %v2874 = vrot.slane %v2396, 2
    %v2875 = vrot.slane %v2397, 2
    %v2876 = vrot.slane %v2398, 2
    %v2877 = vrot.slane %v2399, 2
    %v2878 = vrot.slane %v2400, 2
    %v2879 = vrot.slane %v2401, 2
    %v2880 = vrot.slane %v2402, 2
    %v2881 = vrot.slane %v2403, 2
    %v2882 = vrot.slane %v2404, 2
    %v2883 = vrot.slane %v2405, 2
    %v2884 = vrot.slane %v2406, 2
    %v2885 = vrot.slane %v2407, 2
    %v2886 = vrot.slane %v2408, 2
    %v2887 = vrot.slane %v2409, 2
    %v2888 = vrot.slane %v2410, 2
    %v2889 = vrot.slane %v2411, 2
    %v2890 = vrot.slane %v2412, 2
    %v2891 = vrot.slane %v2413, 2
    %v2892 = vrot.slane %v2414, 2
    %v2893 = vrot.slane %v2415, 2
    %v2894 = vrot.slane %v2416, 2
    %v2895 = vrot.slane %v2417, 2
    %v2896 = vrot.slane %v2418, 2
    %v2897 = vrot.slane %v2419, 2
    %v2898 = vrot.slane %v2420, 2
    %v2899 = vrot.slane %v2421, 2
    %v2900 = vrot.slane %v2422, 2
    %v2901 = vrot.slane %v2423, 2
    %v2902 = vrot.slane %v2424, 2
    %v2903 = vrot.slane %v2425, 2
    %v2904 = vrot.slane %v2426, 2
    %v2905 = vrot.slane %v2427, 2
    %v2906 = vrot.slane %v2428, 2
    %v2907 = vrot.slane %v2429, 2
    %v2908 = vrot.slane %v2430, 2
    %v2909 = vrot.slane %v2431, 2
    %v2910 = vrot.slane %v2432, 2
    %v2911 = vrot.slane %v2433, 2
    %v2912 = vrot.slane %v2434, 2
    %v2913 = vrot.slane %v2435, 2
    %v3153 = vadd.f32 %v1597, %v2675
    %v3154 = vadd.f32 %v1598, %v2676
    %v3155 = vadd.f32 %v1599, %v2677
    %v3156 = vadd.f32 %v1600, %v2678
    %v3157 = vadd.f32 %v1601, %v2679
    %v3158 = vadd.f32 %v1602, %v2680
    %v3159 = vadd.f32 %v1603, %v2681
    %v3160 = vadd.f32 %v1604, %v2682
    %v3161 = vadd.f32 %v1605, %v2683
    %v3162 = vadd.f32 %v1606, %v2684
    %v3163 = vadd.f32 %v1607, %v2685
    %v3164 = vadd.f32 %v1608, %v2686
    %v3165 = vadd.f32 %v1609, %v2687
    %v3166 = vadd.f32 %v1610, %v2688
    %v3167 = vadd.f32 %v1611, %v2689
    %v3168 = vadd.f32 %v1612, %v2690
    %v3169 = vadd.f32 %v1613, %v2691
    %v3170 = vadd.f32 %v1614, %v2692
    %v3171 = vadd.f32 %v1615, %v2693
    %v3172 = vadd.f32 %v1616, %v2694
    %v3173 = vadd.f32 %v1617, %v2695
    %v3174 = vadd.f32 %v1618, %v2696
    %v3175 = vadd.f32 %v1619, %v2697
    %v3176 = vadd.f32 %v1620, %v2698
    %v3177 = vadd.f32 %v1621, %v2699
    %v3178 = vadd.f32 %v1622, %v2700
    %v3179 = vadd.f32 %v1623, %v2701
    %v3180 = vadd.f32 %v1624, %v2702
    %v3181 = vadd.f32 %v1625, %v2703
    %v3182 = vadd.f32 %v1626, %v2704
    %v3183 = vadd.f32 %v1627, %v2705
    %v3184 = vadd.f32 %v1628, %v2706
    %v3185 = vadd.f32 %v1629, %v2707
    %v3186 = vadd.f32 %v1630, %v2708
    %v3187 = vadd.f32 %v1631, %v2709
    %v3188 = vadd.f32 %v1632, %v2710
    %v3189 = vadd.f32 %v1633, %v2711
    %v3190 = vadd.f32 %v1634, %v2712
    %v3191 = vadd.f32 %v1635, %v2713
    %v3192 = vadd.f32 %v1636, %v2714
    %v3193 = vadd.f32 %v1637, %v2715
    %v3194 = vadd.f32 %v1638, %v2716
    %v3195 = vadd.f32 %v1639, %v2717
    %v3196 = vadd.f32 %v1640, %v2718
    %v3197 = vadd.f32 %v1641, %v2719
    %v3198 = vadd.f32 %v1642, %v2720
    %v3199 = vadd.f32 %v1643, %v2721
    %v3200 = vadd.f32 %v1644, %v2722
    %v3201 = vadd.f32 %v1645, %v2723
    %v3202 = vadd.f32 %v1646, %v2724
    %v3203 = vadd.f32 %v1647, %v2725
    %v3204 = vadd.f32 %v1648, %v2726
    %v3205 = vadd.f32 %v1649, %v2727
    %v3206 = vadd.f32 %v1650, %v2728
    %v3207 = vadd.f32 %v1651, %v2729
    %v3208 = vadd.f32 %v1652, %v2730
    %v3209 = vadd.f32 %v1653, %v2731
    %v3210 = vadd.f32 %v1654, %v2732
    %v3211 = vadd.f32 %v1655, %v2733
    %v3212 = vadd.f32 %v1656, %v2734
    %v3213 = vadd.f32 %v1657, %v2735
    %v3214 = vadd.f32 %v1658, %v2736
    %v3215 = vadd.f32 %v1659, %v2737
    %v3216 = vadd.f32 %v1660, %v2738
    %v3217 = vadd.f32 %v1661, %v2739
    %v3218 = vadd.f32 %v1662, %v2740
    %v3219 = vadd.f32 %v1663, %v2741
    %v3220 = vadd.f32 %v1664, %v2742
    %v3221 = vadd.f32 %v1665, %v2743
    %v3222 = vadd.f32 %v1666, %v2744
    %v3223 = vadd.f32 %v1667, %v2745
    %v3224 = vadd.f32 %v1668, %v2746
    %v3225 = vadd.f32 %v1669, %v2747
    %v3226 = vadd.f32 %v1670, %v2748
    %v3227 = vadd.f32 %v1671, %v2749
    %v3228 = vadd.f32 %v1672, %v2750
    %v3229 = vadd.f32 %v1673, %v2751
    %v3230 = vadd.f32 %v1674, %v2752
    %v3231 = vadd.f32 %v1675, %v2753
    %v3232 = vadd.f32 %v1676, %v2754
    %v3233 = vadd.f32 %v1677, %v2755
    %v3234 = vadd.f32 %v1678, %v2756
    %v3235 = vadd.f32 %v1679, %v2757
    %v3236 = vadd.f32 %v1680, %v2758
    %v3237 = vadd.f32 %v1681, %v2759
    %v3238 = vadd.f32 %v1682, %v2760
    %v3239 = vadd.f32 %v1683, %v2761
    %v3240 = vadd.f32 %v1684, %v2762
    %v3241 = vadd.f32 %v1685, %v2763
    %v3242 = vadd.f32 %v1686, %v2764
    %v3243 = vadd.f32 %v1687, %v2765
    %v3244 = vadd.f32 %v1688, %v2766
    %v3245 = vadd.f32 %v1689, %v2767
    %v3246 = vadd.f32 %v1690, %v2768
    %v3247 = vadd.f32 %v1691, %v2769
    %v3248 = vadd.f32 %v1692, %v2770
    %v3249 = vadd.f32 %v1693, %v2771
    %v3250 = vadd.f32 %v1694, %v2772
    %v3251 = vadd.f32 %v1695, %v2773
    %v3252 = vadd.f32 %v1696, %v2774
    %v3253 = vadd.f32 %v1697, %v2775
    %v3254 = vadd.f32 %v1698, %v2776
    %v3255 = vadd.f32 %v1699, %v2777
    %v3256 = vadd.f32 %v1700, %v2778
    %v3257 = vadd.f32 %v1701, %v2779
    %v3258 = vadd.f32 %v1702, %v2780
    %v3259 = vadd.f32 %v1703, %v2781
    %v3260 = vadd.f32 %v1704, %v2782
    %v3261 = vadd.f32 %v1705, %v2783
    %v3262 = vadd.f32 %v1706, %v2784
    %v3263 = vadd.f32 %v1707, %v2785
    %v3264 = vadd.f32 %v1708, %v2786
    %v3265 = vadd.f32 %v1709, %v2787
    %v3266 = vadd.f32 %v1710, %v2788
    %v3267 = vadd.f32 %v1711, %v2789
    %v3268 = vadd.f32 %v1712, %v2790
    %v3269 = vadd.f32 %v1713, %v2791
    %v3270 = vadd.f32 %v1714, %v2792
    %v3271 = vadd.f32 %v1715, %v2793
    %v3272 = vadd.f32 %v1716, %v2794
    %v3273 = vadd.f32 %v1717, %v2795
    %v3274 = vadd.f32 %v1718, %v2796
    %v3275 = vadd.f32 %v1719, %v2797
    %v3276 = vadd.f32 %v1720, %v2798
    %v3277 = vadd.f32 %v1721, %v2799
    %v3278 = vadd.f32 %v1722, %v2800
    %v3279 = vadd.f32 %v1723, %v2801
    %v3280 = vadd.f32 %v1724, %v2802
    %v3281 = vadd.f32 %v1725, %v2803
    %v3282 = vadd.f32 %v1726, %v2804
    %v3283 = vadd.f32 %v1727, %v2805
    %v3284 = vadd.f32 %v1728, %v2806
    %v3285 = vadd.f32 %v1729, %v2807
    %v3286 = vadd.f32 %v1730, %v2808
    %v3287 = vadd.f32 %v1731, %v2809
    %v3288 = vadd.f32 %v1732, %v2810
    %v3289 = vadd.f32 %v1733, %v2811
    %v3290 = vadd.f32 %v1734, %v2812
    %v3291 = vadd.f32 %v1735, %v2813
    %v3292 = vadd.f32 %v1736, %v2814
    %v3293 = vadd.f32 %v1737, %v2815
    %v3294 = vadd.f32 %v1738, %v2816
    %v3295 = vadd.f32 %v1739, %v2817
    %v3296 = vadd.f32 %v1740, %v2818
    %v3297 = vadd.f32 %v1741, %v2819
    %v3298 = vadd.f32 %v1742, %v2820
    %v3299 = vadd.f32 %v1743, %v2821
    %v3300 = vadd.f32 %v1744, %v2822
    %v3301 = vadd.f32 %v1745, %v2823
    %v3302 = vadd.f32 %v1746, %v2824
    %v3303 = vadd.f32 %v1747, %v2825
    %v3304 = vadd.f32 %v1748, %v2826
    %v3305 = vadd.f32 %v1749, %v2827
    %v3306 = vadd.f32 %v1750, %v2828
    %v3307 = vadd.f32 %v1751, %v2829
    %v3308 = vadd.f32 %v1752, %v2830
    %v3309 = vadd.f32 %v1753, %v2831
    %v3310 = vadd.f32 %v1754, %v2832
    %v3311 = vadd.f32 %v1755, %v2833
    %v3312 = vadd.f32 %v1756, %v2834
    %v3313 = vadd.f32 %v1757, %v2835
    %v3314 = vadd.f32 %v1758, %v2836
    %v3315 = vadd.f32 %v1759, %v2837
    %v3316 = vadd.f32 %v1760, %v2838
    %v3317 = vadd.f32 %v1761, %v2839
    %v3318 = vadd.f32 %v1762, %v2840
    %v3319 = vadd.f32 %v1763, %v2841
    %v3320 = vadd.f32 %v1764, %v2842
    %v3321 = vadd.f32 %v1765, %v2843
    %v3322 = vadd.f32 %v1766, %v2844
    %v3323 = vadd.f32 %v1767, %v2845
    %v3324 = vadd.f32 %v1768, %v2846
    %v3325 = vadd.f32 %v1769, %v2847
    %v3326 = vadd.f32 %v1770, %v2848
    %v3327 = vadd.f32 %v1771, %v2849
    %v3328 = vadd.f32 %v1772, %v2850
    %v3329 = vadd.f32 %v1773, %v2851
    %v3330 = vadd.f32 %v1774, %v2852
    %v3331 = vadd.f32 %v1775, %v2853
    %v3332 = vadd.f32 %v1776, %v2854
    %v3333 = vadd.f32 %v1777, %v2855
    %v3334 = vadd.f32 %v1778, %v2856
    %v3335 = vadd.f32 %v1779, %v2857
    %v3336 = vadd.f32 %v1780, %v2858
    %v3337 = vadd.f32 %v1781, %v2859
    %v3338 = vadd.f32 %v1782, %v2860
    %v3339 = vadd.f32 %v1783, %v2861
    %v3340 = vadd.f32 %v1784, %v2862
    %v3341 = vadd.f32 %v1785, %v2863
    %v3342 = vadd.f32 %v1786, %v2864
    %v3343 = vadd.f32 %v1787, %v2865
    %v3344 = vadd.f32 %v1788, %v2866
    %v3345 = vadd.f32 %v1789, %v2867
    %v3346 = vadd.f32 %v1790, %v2868
    %v3347 = vadd.f32 %v1791, %v2869
    %v3348 = vadd.f32 %v1792, %v2870
    %v3349 = vadd.f32 %v1793, %v2871
    %v3350 = vadd.f32 %v1794, %v2872
    %v3351 = vadd.f32 %v1795, %v2873
    %v3352 = vadd.f32 %v1796, %v2874
    %v3353 = vadd.f32 %v1797, %v2875
    %v3354 = vadd.f32 %v1798, %v2876
    %v3355 = vadd.f32 %v1799, %v2877
    %v3356 = vadd.f32 %v1800, %v2878
    %v3357 = vadd.f32 %v1801, %v2879
    %v3358 = vadd.f32 %v1802, %v2880
    %v3359 = vadd.f32 %v1803, %v2881
    %v3360 = vadd.f32 %v1804, %v2882
    %v3361 = vadd.f32 %v1805, %v2883
    %v3362 = vadd.f32 %v1806, %v2884
    %v3363 = vadd.f32 %v1807, %v2885
    %v3364 = vadd.f32 %v1808, %v2886
    %v3365 = vadd.f32 %v1809, %v2887
    %v3366 = vadd.f32 %v1810, %v2888
    %v3367 = vadd.f32 %v1811, %v2889
    %v3368 = vadd.f32 %v1812, %v2890
    %v3369 = vadd.f32 %v1813, %v2891
    %v3370 = vadd.f32 %v1814, %v2892
    %v3371 = vadd.f32 %v1815, %v2893
    %v3372 = vadd.f32 %v1816, %v2894
    %v3373 = vadd.f32 %v1817, %v2895
    %v3374 = vadd.f32 %v1818, %v2896
    %v3375 = vadd.f32 %v1819, %v2897
    %v3376 = vadd.f32 %v1820, %v2898
    %v3377 = vadd.f32 %v1821, %v2899
    %v3378 = vadd.f32 %v1822, %v2900
    %v3379 = vadd.f32 %v1823, %v2901
    %v3380 = vadd.f32 %v1824, %v2902
    %v3381 = vadd.f32 %v1825, %v2903
    %v3382 = vadd.f32 %v1826, %v2904
    %v3383 = vadd.f32 %v1827, %v2905
    %v3384 = vadd.f32 %v1828, %v2906
    %v3385 = vadd.f32 %v1829, %v2907
    %v3386 = vadd.f32 %v1830, %v2908
    %v3387 = vadd.f32 %v1831, %v2909
    %v3388 = vadd.f32 %v1832, %v2910
    %v3389 = vadd.f32 %v1833, %v2911
    %v3390 = vadd.f32 %v1834, %v2912
    %v3391 = vadd.f32 %v1835, %v2913
    %s3392 = sld [smem:[#allocation2 + $0x3]]
    %v3393 = vstv %s3392
    %v3394 = vmul.f32 %v3393, %v1957
    %v3395 = vmul.f32 %v3393, %v1958
    %v3396 = vmul.f32 %v3393, %v1959
    %v3397 = vmul.f32 %v3393, %v1960
    %v3398 = vmul.f32 %v3393, %v1961
    %v3399 = vmul.f32 %v3393, %v1962
    %v3400 = vmul.f32 %v3393, %v1963
    %v3401 = vmul.f32 %v3393, %v1964
    %v3402 = vmul.f32 %v3393, %v1965
    %v3403 = vmul.f32 %v3393, %v1966
    %v3404 = vmul.f32 %v3393, %v1967
    %v3405 = vmul.f32 %v3393, %v1968
    %v3406 = vmul.f32 %v3393, %v1969
    %v3407 = vmul.f32 %v3393, %v1970
    %v3408 = vmul.f32 %v3393, %v1971
    %v3409 = vmul.f32 %v3393, %v1972
    %v3410 = vmul.f32 %v3393, %v1973
    %v3411 = vmul.f32 %v3393, %v1974
    %v3412 = vmul.f32 %v3393, %v1975
    %v3413 = vmul.f32 %v3393, %v1976
    %v3414 = vmul.f32 %v3393, %v1977
    %v3415 = vmul.f32 %v3393, %v1978
    %v3416 = vmul.f32 %v3393, %v1979
    %v3417 = vmul.f32 %v3393, %v1980
    %v3418 = vmul.f32 %v3393, %v1981
    %v3419 = vmul.f32 %v3393, %v1982
    %v3420 = vmul.f32 %v3393, %v1983
    %v3421 = vmul.f32 %v3393, %v1984
    %v3422 = vmul.f32 %v3393, %v1985
    %v3423 = vmul.f32 %v3393, %v1986
    %v3424 = vmul.f32 %v3393, %v1987
    %v3425 = vmul.f32 %v3393, %v1988
    %v3426 = vmul.f32 %v3393, %v1989
    %v3427 = vmul.f32 %v3393, %v1990
    %v3428 = vmul.f32 %v3393, %v1991
    %v3429 = vmul.f32 %v3393, %v1992
    %v3430 = vmul.f32 %v3393, %v1993
    %v3431 = vmul.f32 %v3393, %v1994
    %v3432 = vmul.f32 %v3393, %v1995
    %v3433 = vmul.f32 %v3393, %v1996
    %v3434 = vmul.f32 %v3393, %v1997
    %v3435 = vmul.f32 %v3393, %v1998
    %v3436 = vmul.f32 %v3393, %v1999
    %v3437 = vmul.f32 %v3393, %v2000
    %v3438 = vmul.f32 %v3393, %v2001
    %v3439 = vmul.f32 %v3393, %v2002
    %v3440 = vmul.f32 %v3393, %v2003
    %v3441 = vmul.f32 %v3393, %v2004
    %v3442 = vmul.f32 %v3393, %v2005
    %v3443 = vmul.f32 %v3393, %v2006
    %v3444 = vmul.f32 %v3393, %v2007
    %v3445 = vmul.f32 %v3393, %v2008
    %v3446 = vmul.f32 %v3393, %v2009
    %v3447 = vmul.f32 %v3393, %v2010
    %v3448 = vmul.f32 %v3393, %v2011
    %v3449 = vmul.f32 %v3393, %v2012
    %v3450 = vmul.f32 %v3393, %v2013
    %v3451 = vmul.f32 %v3393, %v2014
    %v3452 = vmul.f32 %v3393, %v2015
    %v3453 = vmul.f32 %v3393, %v2016
    %v3454 = vmul.f32 %v3393, %v2017
    %v3455 = vmul.f32 %v3393, %v2018
    %v3456 = vmul.f32 %v3393, %v2019
    %v3457 = vmul.f32 %v3393, %v2020
    %v3458 = vmul.f32 %v3393, %v2021
    %v3459 = vmul.f32 %v3393, %v2022
    %v3460 = vmul.f32 %v3393, %v2023
    %v3461 = vmul.f32 %v3393, %v2024
    %v3462 = vmul.f32 %v3393, %v2025
    %v3463 = vmul.f32 %v3393, %v2026
    %v3464 = vmul.f32 %v3393, %v2027
    %v3465 = vmul.f32 %v3393, %v2028
    %v3466 = vmul.f32 %v3393, %v2029
    %v3467 = vmul.f32 %v3393, %v2030
    %v3468 = vmul.f32 %v3393, %v2031
    %v3469 = vmul.f32 %v3393, %v2032
    %v3470 = vmul.f32 %v3393, %v2033
    %v3471 = vmul.f32 %v3393, %v2034
    %v3472 = vmul.f32 %v3393, %v2035
    %v3473 = vmul.f32 %v3393, %v2036
    %v3474 = vmul.f32 %v3393, %v2037
    %v3475 = vmul.f32 %v3393, %v2038
    %v3476 = vmul.f32 %v3393, %v2039
    %v3477 = vmul.f32 %v3393, %v2040
    %v3478 = vmul.f32 %v3393, %v2041
    %v3479 = vmul.f32 %v3393, %v2042
    %v3480 = vmul.f32 %v3393, %v2043
    %v3481 = vmul.f32 %v3393, %v2044
    %v3482 = vmul.f32 %v3393, %v2045
    %v3483 = vmul.f32 %v3393, %v2046
    %v3484 = vmul.f32 %v3393, %v2047
    %v3485 = vmul.f32 %v3393, %v2048
    %v3486 = vmul.f32 %v3393, %v2049
    %v3487 = vmul.f32 %v3393, %v2050
    %v3488 = vmul.f32 %v3393, %v2051
    %v3489 = vmul.f32 %v3393, %v2052
    %v3490 = vmul.f32 %v3393, %v2053
    %v3491 = vmul.f32 %v3393, %v2054
    %v3492 = vmul.f32 %v3393, %v2055
    %v3493 = vmul.f32 %v3393, %v2056
    %v3494 = vmul.f32 %v3393, %v2057
    %v3495 = vmul.f32 %v3393, %v2058
    %v3496 = vmul.f32 %v3393, %v2059
    %v3497 = vmul.f32 %v3393, %v2060
    %v3498 = vmul.f32 %v3393, %v2061
    %v3499 = vmul.f32 %v3393, %v2062
    %v3500 = vmul.f32 %v3393, %v2063
    %v3501 = vmul.f32 %v3393, %v2064
    %v3502 = vmul.f32 %v3393, %v2065
    %v3503 = vmul.f32 %v3393, %v2066
    %v3504 = vmul.f32 %v3393, %v2067
    %v3505 = vmul.f32 %v3393, %v2068
    %v3506 = vmul.f32 %v3393, %v2069
    %v3507 = vmul.f32 %v3393, %v2070
    %v3508 = vmul.f32 %v3393, %v2071
    %v3509 = vmul.f32 %v3393, %v2072
    %v3510 = vmul.f32 %v3393, %v2073
    %v3511 = vmul.f32 %v3393, %v2074
    %v3512 = vmul.f32 %v3393, %v2075
    %v3513 = vmul.f32 %v3393, %v2076
    %v3514 = vmul.f32 %v3393, %v2077
    %v3515 = vmul.f32 %v3393, %v2078
    %v3516 = vmul.f32 %v3393, %v2079
    %v3517 = vmul.f32 %v3393, %v2080
    %v3518 = vmul.f32 %v3393, %v2081
    %v3519 = vmul.f32 %v3393, %v2082
    %v3520 = vmul.f32 %v3393, %v2083
    %v3521 = vmul.f32 %v3393, %v2084
    %v3522 = vmul.f32 %v3393, %v2085
    %v3523 = vmul.f32 %v3393, %v2086
    %v3524 = vmul.f32 %v3393, %v2087
    %v3525 = vmul.f32 %v3393, %v2088
    %v3526 = vmul.f32 %v3393, %v2089
    %v3527 = vmul.f32 %v3393, %v2090
    %v3528 = vmul.f32 %v3393, %v2091
    %v3529 = vmul.f32 %v3393, %v2092
    %v3530 = vmul.f32 %v3393, %v2093
    %v3531 = vmul.f32 %v3393, %v2094
    %v3532 = vmul.f32 %v3393, %v2095
    %v3533 = vmul.f32 %v3393, %v2096
    %v3534 = vmul.f32 %v3393, %v2097
    %v3535 = vmul.f32 %v3393, %v2098
    %v3536 = vmul.f32 %v3393, %v2099
    %v3537 = vmul.f32 %v3393, %v2100
    %v3538 = vmul.f32 %v3393, %v2101
    %v3539 = vmul.f32 %v3393, %v2102
    %v3540 = vmul.f32 %v3393, %v2103
    %v3541 = vmul.f32 %v3393, %v2104
    %v3542 = vmul.f32 %v3393, %v2105
    %v3543 = vmul.f32 %v3393, %v2106
    %v3544 = vmul.f32 %v3393, %v2107
    %v3545 = vmul.f32 %v3393, %v2108
    %v3546 = vmul.f32 %v3393, %v2109
    %v3547 = vmul.f32 %v3393, %v2110
    %v3548 = vmul.f32 %v3393, %v2111
    %v3549 = vmul.f32 %v3393, %v2112
    %v3550 = vmul.f32 %v3393, %v2113
    %v3551 = vmul.f32 %v3393, %v2114
    %v3552 = vmul.f32 %v3393, %v2115
    %v3553 = vmul.f32 %v3393, %v2116
    %v3554 = vmul.f32 %v3393, %v2117
    %v3555 = vmul.f32 %v3393, %v2118
    %v3556 = vmul.f32 %v3393, %v2119
    %v3557 = vmul.f32 %v3393, %v2120
    %v3558 = vmul.f32 %v3393, %v2121
    %v3559 = vmul.f32 %v3393, %v2122
    %v3560 = vmul.f32 %v3393, %v2123
    %v3561 = vmul.f32 %v3393, %v2124
    %v3562 = vmul.f32 %v3393, %v2125
    %v3563 = vmul.f32 %v3393, %v2126
    %v3564 = vmul.f32 %v3393, %v2127
    %v3565 = vmul.f32 %v3393, %v2128
    %v3566 = vmul.f32 %v3393, %v2129
    %v3567 = vmul.f32 %v3393, %v2130
    %v3568 = vmul.f32 %v3393, %v2131
    %v3569 = vmul.f32 %v3393, %v2132
    %v3570 = vmul.f32 %v3393, %v2133
    %v3571 = vmul.f32 %v3393, %v2134
    %v3572 = vmul.f32 %v3393, %v2135
    %v3573 = vmul.f32 %v3393, %v2136
    %v3574 = vmul.f32 %v3393, %v2137
    %v3575 = vmul.f32 %v3393, %v2138
    %v3576 = vmul.f32 %v3393, %v2139
    %v3577 = vmul.f32 %v3393, %v2140
    %v3578 = vmul.f32 %v3393, %v2141
    %v3579 = vmul.f32 %v3393, %v2142
    %v3580 = vmul.f32 %v3393, %v2143
    %v3581 = vmul.f32 %v3393, %v2144
    %v3582 = vmul.f32 %v3393, %v2145
    %v3583 = vmul.f32 %v3393, %v2146
    %v3584 = vmul.f32 %v3393, %v2147
    %v3585 = vmul.f32 %v3393, %v2148
    %v3586 = vmul.f32 %v3393, %v2149
    %v3587 = vmul.f32 %v3393, %v2150
    %v3588 = vmul.f32 %v3393, %v2151
    %v3589 = vmul.f32 %v3393, %v2152
    %v3590 = vmul.f32 %v3393, %v2153
    %v3591 = vmul.f32 %v3393, %v2154
    %v3592 = vmul.f32 %v3393, %v2155
    %v3593 = vmul.f32 %v3393, %v2156
    %v3594 = vmul.f32 %v3393, %v2157
    %v3595 = vmul.f32 %v3393, %v2158
    %v3596 = vmul.f32 %v3393, %v2159
    %v3597 = vmul.f32 %v3393, %v2160
    %v3598 = vmul.f32 %v3393, %v2161
    %v3599 = vmul.f32 %v3393, %v2162
    %v3600 = vmul.f32 %v3393, %v2163
    %v3601 = vmul.f32 %v3393, %v2164
    %v3602 = vmul.f32 %v3393, %v2165
    %v3603 = vmul.f32 %v3393, %v2166
    %v3604 = vmul.f32 %v3393, %v2167
    %v3605 = vmul.f32 %v3393, %v2168
    %v3606 = vmul.f32 %v3393, %v2169
    %v3607 = vmul.f32 %v3393, %v2170
    %v3608 = vmul.f32 %v3393, %v2171
    %v3609 = vmul.f32 %v3393, %v2172
    %v3610 = vmul.f32 %v3393, %v2173
    %v3611 = vmul.f32 %v3393, %v2174
    %v3612 = vmul.f32 %v3393, %v2175
    %v3613 = vmul.f32 %v3393, %v2176
    %v3614 = vmul.f32 %v3393, %v2177
    %v3615 = vmul.f32 %v3393, %v2178
    %v3616 = vmul.f32 %v3393, %v2179
    %v3617 = vmul.f32 %v3393, %v2180
    %v3618 = vmul.f32 %v3393, %v2181
    %v3619 = vmul.f32 %v3393, %v2182
    %v3620 = vmul.f32 %v3393, %v2183
    %v3621 = vmul.f32 %v3393, %v2184
    %v3622 = vmul.f32 %v3393, %v2185
    %v3623 = vmul.f32 %v3393, %v2186
    %v3624 = vmul.f32 %v3393, %v2187
    %v3625 = vmul.f32 %v3393, %v2188
    %v3626 = vmul.f32 %v3393, %v2189
    %v3627 = vmul.f32 %v3393, %v2190
    %v3628 = vmul.f32 %v3393, %v2191
    %v3629 = vmul.f32 %v3393, %v2192
    %v3630 = vmul.f32 %v3393, %v2193
    %v3631 = vmul.f32 %v3393, %v2194
    %v3632 = vmul.f32 %v3393, %v2195
    %v3872 = vrot.slane %v3394, 3
    %v3873 = vrot.slane %v3395, 3
    %v3874 = vrot.slane %v3396, 3
    %v3875 = vrot.slane %v3397, 3
    %v3876 = vrot.slane %v3398, 3
    %v3877 = vrot.slane %v3399, 3
    %v3878 = vrot.slane %v3400, 3
    %v3879 = vrot.slane %v3401, 3
    %v3880 = vrot.slane %v3402, 3
    %v3881 = vrot.slane %v3403, 3
    %v3882 = vrot.slane %v3404, 3
    %v3883 = vrot.slane %v3405, 3
    %v3884 = vrot.slane %v3406, 3
    %v3885 = vrot.slane %v3407, 3
    %v3886 = vrot.slane %v3408, 3
    %v3887 = vrot.slane %v3409, 3
    %v3888 = vrot.slane %v3410, 3
    %v3889 = vrot.slane %v3411, 3
    %v3890 = vrot.slane %v3412, 3
    %v3891 = vrot.slane %v3413, 3
    %v3892 = vrot.slane %v3414, 3
    %v3893 = vrot.slane %v3415, 3
    %v3894 = vrot.slane %v3416, 3
    %v3895 = vrot.slane %v3417, 3
    %v3896 = vrot.slane %v3418, 3
    %v3897 = vrot.slane %v3419, 3
    %v3898 = vrot.slane %v3420, 3
    %v3899 = vrot.slane %v3421, 3
    %v3900 = vrot.slane %v3422, 3
    %v3901 = vrot.slane %v3423, 3
    %v3902 = vrot.slane %v3424, 3
    %v3903 = vrot.slane %v3425, 3
    %v3904 = vrot.slane %v3426, 3
    %v3905 = vrot.slane %v3427, 3
    %v3906 = vrot.slane %v3428, 3
    %v3907 = vrot.slane %v3429, 3
    %v3908 = vrot.slane %v3430, 3
    %v3909 = vrot.slane %v3431, 3
    %v3910 = vrot.slane %v3432, 3
    %v3911 = vrot.slane %v3433, 3
    %v3912 = vrot.slane %v3434, 3
    %v3913 = vrot.slane %v3435, 3
    %v3914 = vrot.slane %v3436, 3
    %v3915 = vrot.slane %v3437, 3
    %v3916 = vrot.slane %v3438, 3
    %v3917 = vrot.slane %v3439, 3
    %v3918 = vrot.slane %v3440, 3
    %v3919 = vrot.slane %v3441, 3
    %v3920 = vrot.slane %v3442, 3
    %v3921 = vrot.slane %v3443, 3
    %v3922 = vrot.slane %v3444, 3
    %v3923 = vrot.slane %v3445, 3
    %v3924 = vrot.slane %v3446, 3
    %v3925 = vrot.slane %v3447, 3
    %v3926 = vrot.slane %v3448, 3
    %v3927 = vrot.slane %v3449, 3
    %v3928 = vrot.slane %v3450, 3
    %v3929 = vrot.slane %v3451, 3
    %v3930 = vrot.slane %v3452, 3
    %v3931 = vrot.slane %v3453, 3
    %v3932 = vrot.slane %v3454, 3
    %v3933 = vrot.slane %v3455, 3
    %v3934 = vrot.slane %v3456, 3
    %v3935 = vrot.slane %v3457, 3
    %v3936 = vrot.slane %v3458, 3
    %v3937 = vrot.slane %v3459, 3
    %v3938 = vrot.slane %v3460, 3
    %v3939 = vrot.slane %v3461, 3
    %v3940 = vrot.slane %v3462, 3
    %v3941 = vrot.slane %v3463, 3
    %v3942 = vrot.slane %v3464, 3
    %v3943 = vrot.slane %v3465, 3
    %v3944 = vrot.slane %v3466, 3
    %v3945 = vrot.slane %v3467, 3
    %v3946 = vrot.slane %v3468, 3
    %v3947 = vrot.slane %v3469, 3
    %v3948 = vrot.slane %v3470, 3
    %v3949 = vrot.slane %v3471, 3
    %v3950 = vrot.slane %v3472, 3
    %v3951 = vrot.slane %v3473, 3
    %v3952 = vrot.slane %v3474, 3
    %v3953 = vrot.slane %v3475, 3
    %v3954 = vrot.slane %v3476, 3
    %v3955 = vrot.slane %v3477, 3
    %v3956 = vrot.slane %v3478, 3
    %v3957 = vrot.slane %v3479, 3
    %v3958 = vrot.slane %v3480, 3
    %v3959 = vrot.slane %v3481, 3
    %v3960 = vrot.slane %v3482, 3
    %v3961 = vrot.slane %v3483, 3
    %v3962 = vrot.slane %v3484, 3
    %v3963 = vrot.slane %v3485, 3
    %v3964 = vrot.slane %v3486, 3
    %v3965 = vrot.slane %v3487, 3
    %v3966 = vrot.slane %v3488, 3
    %v3967 = vrot.slane %v3489, 3
    %v3968 = vrot.slane %v3490, 3
    %v3969 = vrot.slane %v3491, 3
    %v3970 = vrot.slane %v3492, 3
    %v3971 = vrot.slane %v3493, 3
    %v3972 = vrot.slane %v3494, 3
    %v3973 = vrot.slane %v3495, 3
    %v3974 = vrot.slane %v3496, 3
    %v3975 = vrot.slane %v3497, 3
    %v3976 = vrot.slane %v3498, 3
    %v3977 = vrot.slane %v3499, 3
    %v3978 = vrot.slane %v3500, 3
    %v3979 = vrot.slane %v3501, 3
    %v3980 = vrot.slane %v3502, 3
    %v3981 = vrot.slane %v3503, 3
    %v3982 = vrot.slane %v3504, 3
    %v3983 = vrot.slane %v3505, 3
    %v3984 = vrot.slane %v3506, 3
    %v3985 = vrot.slane %v3507, 3
    %v3986 = vrot.slane %v3508, 3
    %v3987 = vrot.slane %v3509, 3
    %v3988 = vrot.slane %v3510, 3
    %v3989 = vrot.slane %v3511, 3
    %v3990 = vrot.slane %v3512, 3
    %v3991 = vrot.slane %v3513, 3
    %v3992 = vrot.slane %v3514, 3
    %v3993 = vrot.slane %v3515, 3
    %v3994 = vrot.slane %v3516, 3
    %v3995 = vrot.slane %v3517, 3
    %v3996 = vrot.slane %v3518, 3
    %v3997 = vrot.slane %v3519, 3
    %v3998 = vrot.slane %v3520, 3
    %v3999 = vrot.slane %v3521, 3
    %v4000 = vrot.slane %v3522, 3
    %v4001 = vrot.slane %v3523, 3
    %v4002 = vrot.slane %v3524, 3
    %v4003 = vrot.slane %v3525, 3
    %v4004 = vrot.slane %v3526, 3
    %v4005 = vrot.slane %v3527, 3
    %v4006 = vrot.slane %v3528, 3
    %v4007 = vrot.slane %v3529, 3
    %v4008 = vrot.slane %v3530, 3
    %v4009 = vrot.slane %v3531, 3
    %v4010 = vrot.slane %v3532, 3
    %v4011 = vrot.slane %v3533, 3
    %v4012 = vrot.slane %v3534, 3
    %v4013 = vrot.slane %v3535, 3
    %v4014 = vrot.slane %v3536, 3
    %v4015 = vrot.slane %v3537, 3
    %v4016 = vrot.slane %v3538, 3
    %v4017 = vrot.slane %v3539, 3
    %v4018 = vrot.slane %v3540, 3
    %v4019 = vrot.slane %v3541, 3
    %v4020 = vrot.slane %v3542, 3
    %v4021 = vrot.slane %v3543, 3
    %v4022 = vrot.slane %v3544, 3
    %v4023 = vrot.slane %v3545, 3
    %v4024 = vrot.slane %v3546, 3
    %v4025 = vrot.slane %v3547, 3
    %v4026 = vrot.slane %v3548, 3
    %v4027 = vrot.slane %v3549, 3
    %v4028 = vrot.slane %v3550, 3
    %v4029 = vrot.slane %v3551, 3
    %v4030 = vrot.slane %v3552, 3
    %v4031 = vrot.slane %v3553, 3
    %v4032 = vrot.slane %v3554, 3
    %v4033 = vrot.slane %v3555, 3
    %v4034 = vrot.slane %v3556, 3
    %v4035 = vrot.slane %v3557, 3
    %v4036 = vrot.slane %v3558, 3
    %v4037 = vrot.slane %v3559, 3
    %v4038 = vrot.slane %v3560, 3
    %v4039 = vrot.slane %v3561, 3
    %v4040 = vrot.slane %v3562, 3
    %v4041 = vrot.slane %v3563, 3
    %v4042 = vrot.slane %v3564, 3
    %v4043 = vrot.slane %v3565, 3
    %v4044 = vrot.slane %v3566, 3
    %v4045 = vrot.slane %v3567, 3
    %v4046 = vrot.slane %v3568, 3
    %v4047 = vrot.slane %v3569, 3
    %v4048 = vrot.slane %v3570, 3
    %v4049 = vrot.slane %v3571, 3
    %v4050 = vrot.slane %v3572, 3
    %v4051 = vrot.slane %v3573, 3
    %v4052 = vrot.slane %v3574, 3
    %v4053 = vrot.slane %v3575, 3
    %v4054 = vrot.slane %v3576, 3
    %v4055 = vrot.slane %v3577, 3
    %v4056 = vrot.slane %v3578, 3
    %v4057 = vrot.slane %v3579, 3
    %v4058 = vrot.slane %v3580, 3
    %v4059 = vrot.slane %v3581, 3
    %v4060 = vrot.slane %v3582, 3
    %v4061 = vrot.slane %v3583, 3
    %v4062 = vrot.slane %v3584, 3
    %v4063 = vrot.slane %v3585, 3
    %v4064 = vrot.slane %v3586, 3
    %v4065 = vrot.slane %v3587, 3
    %v4066 = vrot.slane %v3588, 3
    %v4067 = vrot.slane %v3589, 3
    %v4068 = vrot.slane %v3590, 3
    %v4069 = vrot.slane %v3591, 3
    %v4070 = vrot.slane %v3592, 3
    %v4071 = vrot.slane %v3593, 3
    %v4072 = vrot.slane %v3594, 3
    %v4073 = vrot.slane %v3595, 3
    %v4074 = vrot.slane %v3596, 3
    %v4075 = vrot.slane %v3597, 3
    %v4076 = vrot.slane %v3598, 3
    %v4077 = vrot.slane %v3599, 3
    %v4078 = vrot.slane %v3600, 3
    %v4079 = vrot.slane %v3601, 3
    %v4080 = vrot.slane %v3602, 3
    %v4081 = vrot.slane %v3603, 3
    %v4082 = vrot.slane %v3604, 3
    %v4083 = vrot.slane %v3605, 3
    %v4084 = vrot.slane %v3606, 3
    %v4085 = vrot.slane %v3607, 3
    %v4086 = vrot.slane %v3608, 3
    %v4087 = vrot.slane %v3609, 3
    %v4088 = vrot.slane %v3610, 3
    %v4089 = vrot.slane %v3611, 3
    %v4090 = vrot.slane %v3612, 3
    %v4091 = vrot.slane %v3613, 3
    %v4092 = vrot.slane %v3614, 3
    %v4093 = vrot.slane %v3615, 3
    %v4094 = vrot.slane %v3616, 3
    %v4095 = vrot.slane %v3617, 3
    %v4096 = vrot.slane %v3618, 3
    %v4097 = vrot.slane %v3619, 3
    %v4098 = vrot.slane %v3620, 3
    %v4099 = vrot.slane %v3621, 3
    %v4100 = vrot.slane %v3622, 3
    %v4101 = vrot.slane %v3623, 3
    %v4102 = vrot.slane %v3624, 3
    %v4103 = vrot.slane %v3625, 3
    %v4104 = vrot.slane %v3626, 3
    %v4105 = vrot.slane %v3627, 3
    %v4106 = vrot.slane %v3628, 3
    %v4107 = vrot.slane %v3629, 3
    %v4108 = vrot.slane %v3630, 3
    %v4109 = vrot.slane %v3631, 3
    %v4110 = vrot.slane %v3632, 3
    %v4350 = vadd.f32 %v3153, %v3872
    %v4351 = vadd.f32 %v3154, %v3873
    %v4352 = vadd.f32 %v3155, %v3874
    %v4353 = vadd.f32 %v3156, %v3875
    %v4354 = vadd.f32 %v3157, %v3876
    %v4355 = vadd.f32 %v3158, %v3877
    %v4356 = vadd.f32 %v3159, %v3878
    %v4357 = vadd.f32 %v3160, %v3879
    %v4358 = vadd.f32 %v3161, %v3880
    %v4359 = vadd.f32 %v3162, %v3881
    %v4360 = vadd.f32 %v3163, %v3882
    %v4361 = vadd.f32 %v3164, %v3883
    %v4362 = vadd.f32 %v3165, %v3884
    %v4363 = vadd.f32 %v3166, %v3885
    %v4364 = vadd.f32 %v3167, %v3886
    %v4365 = vadd.f32 %v3168, %v3887
    %v4366 = vadd.f32 %v3169, %v3888
    %v4367 = vadd.f32 %v3170, %v3889
    %v4368 = vadd.f32 %v3171, %v3890
    %v4369 = vadd.f32 %v3172, %v3891
    %v4370 = vadd.f32 %v3173, %v3892
    %v4371 = vadd.f32 %v3174, %v3893
    %v4372 = vadd.f32 %v3175, %v3894
    %v4373 = vadd.f32 %v3176, %v3895
    %v4374 = vadd.f32 %v3177, %v3896
    %v4375 = vadd.f32 %v3178, %v3897
    %v4376 = vadd.f32 %v3179, %v3898
    %v4377 = vadd.f32 %v3180, %v3899
    %v4378 = vadd.f32 %v3181, %v3900
    %v4379 = vadd.f32 %v3182, %v3901
    %v4380 = vadd.f32 %v3183, %v3902
    %v4381 = vadd.f32 %v3184, %v3903
    %v4382 = vadd.f32 %v3185, %v3904
    %v4383 = vadd.f32 %v3186, %v3905
    %v4384 = vadd.f32 %v3187, %v3906
    %v4385 = vadd.f32 %v3188, %v3907
    %v4386 = vadd.f32 %v3189, %v3908
    %v4387 = vadd.f32 %v3190, %v3909
    %v4388 = vadd.f32 %v3191, %v3910
    %v4389 = vadd.f32 %v3192, %v3911
    %v4390 = vadd.f32 %v3193, %v3912
    %v4391 = vadd.f32 %v3194, %v3913
    %v4392 = vadd.f32 %v3195, %v3914
    %v4393 = vadd.f32 %v3196, %v3915
    %v4394 = vadd.f32 %v3197, %v3916
    %v4395 = vadd.f32 %v3198, %v3917
    %v4396 = vadd.f32 %v3199, %v3918
    %v4397 = vadd.f32 %v3200, %v3919
    %v4398 = vadd.f32 %v3201, %v3920
    %v4399 = vadd.f32 %v3202, %v3921
    %v4400 = vadd.f32 %v3203, %v3922
    %v4401 = vadd.f32 %v3204, %v3923
    %v4402 = vadd.f32 %v3205, %v3924
    %v4403 = vadd.f32 %v3206, %v3925
    %v4404 = vadd.f32 %v3207, %v3926
    %v4405 = vadd.f32 %v3208, %v3927
    %v4406 = vadd.f32 %v3209, %v3928
    %v4407 = vadd.f32 %v3210, %v3929
    %v4408 = vadd.f32 %v3211, %v3930
    %v4409 = vadd.f32 %v3212, %v3931
    %v4410 = vadd.f32 %v3213, %v3932
    %v4411 = vadd.f32 %v3214, %v3933
    %v4412 = vadd.f32 %v3215, %v3934
    %v4413 = vadd.f32 %v3216, %v3935
    %v4414 = vadd.f32 %v3217, %v3936
    %v4415 = vadd.f32 %v3218, %v3937
    %v4416 = vadd.f32 %v3219, %v3938
    %v4417 = vadd.f32 %v3220, %v3939
    %v4418 = vadd.f32 %v3221, %v3940
    %v4419 = vadd.f32 %v3222, %v3941
    %v4420 = vadd.f32 %v3223, %v3942
    %v4421 = vadd.f32 %v3224, %v3943
    %v4422 = vadd.f32 %v3225, %v3944
    %v4423 = vadd.f32 %v3226, %v3945
    %v4424 = vadd.f32 %v3227, %v3946
    %v4425 = vadd.f32 %v3228, %v3947
    %v4426 = vadd.f32 %v3229, %v3948
    %v4427 = vadd.f32 %v3230, %v3949
    %v4428 = vadd.f32 %v3231, %v3950
    %v4429 = vadd.f32 %v3232, %v3951
    %v4430 = vadd.f32 %v3233, %v3952
    %v4431 = vadd.f32 %v3234, %v3953
    %v4432 = vadd.f32 %v3235, %v3954
    %v4433 = vadd.f32 %v3236, %v3955
    %v4434 = vadd.f32 %v3237, %v3956
    %v4435 = vadd.f32 %v3238, %v3957
    %v4436 = vadd.f32 %v3239, %v3958
    %v4437 = vadd.f32 %v3240, %v3959
    %v4438 = vadd.f32 %v3241, %v3960
    %v4439 = vadd.f32 %v3242, %v3961
    %v4440 = vadd.f32 %v3243, %v3962
    %v4441 = vadd.f32 %v3244, %v3963
    %v4442 = vadd.f32 %v3245, %v3964
    %v4443 = vadd.f32 %v3246, %v3965
    %v4444 = vadd.f32 %v3247, %v3966
    %v4445 = vadd.f32 %v3248, %v3967
    %v4446 = vadd.f32 %v3249, %v3968
    %v4447 = vadd.f32 %v3250, %v3969
    %v4448 = vadd.f32 %v3251, %v3970
    %v4449 = vadd.f32 %v3252, %v3971
    %v4450 = vadd.f32 %v3253, %v3972
    %v4451 = vadd.f32 %v3254, %v3973
    %v4452 = vadd.f32 %v3255, %v3974
    %v4453 = vadd.f32 %v3256, %v3975
    %v4454 = vadd.f32 %v3257, %v3976
    %v4455 = vadd.f32 %v3258, %v3977
    %v4456 = vadd.f32 %v3259, %v3978
    %v4457 = vadd.f32 %v3260, %v3979
    %v4458 = vadd.f32 %v3261, %v3980
    %v4459 = vadd.f32 %v3262, %v3981
    %v4460 = vadd.f32 %v3263, %v3982
    %v4461 = vadd.f32 %v3264, %v3983
    %v4462 = vadd.f32 %v3265, %v3984
    %v4463 = vadd.f32 %v3266, %v3985
    %v4464 = vadd.f32 %v3267, %v3986
    %v4465 = vadd.f32 %v3268, %v3987
    %v4466 = vadd.f32 %v3269, %v3988
    %v4467 = vadd.f32 %v3270, %v3989
    %v4468 = vadd.f32 %v3271, %v3990
    %v4469 = vadd.f32 %v3272, %v3991
    %v4470 = vadd.f32 %v3273, %v3992
    %v4471 = vadd.f32 %v3274, %v3993
    %v4472 = vadd.f32 %v3275, %v3994
    %v4473 = vadd.f32 %v3276, %v3995
    %v4474 = vadd.f32 %v3277, %v3996
    %v4475 = vadd.f32 %v3278, %v3997
    %v4476 = vadd.f32 %v3279, %v3998
    %v4477 = vadd.f32 %v3280, %v3999
    %v4478 = vadd.f32 %v3281, %v4000
    %v4479 = vadd.f32 %v3282, %v4001
    %v4480 = vadd.f32 %v3283, %v4002
    %v4481 = vadd.f32 %v3284, %v4003
    %v4482 = vadd.f32 %v3285, %v4004
    %v4483 = vadd.f32 %v3286, %v4005
    %v4484 = vadd.f32 %v3287, %v4006
    %v4485 = vadd.f32 %v3288, %v4007
    %v4486 = vadd.f32 %v3289, %v4008
    %v4487 = vadd.f32 %v3290, %v4009
    %v4488 = vadd.f32 %v3291, %v4010
    %v4489 = vadd.f32 %v3292, %v4011
    %v4490 = vadd.f32 %v3293, %v4012
    %v4491 = vadd.f32 %v3294, %v4013
    %v4492 = vadd.f32 %v3295, %v4014
    %v4493 = vadd.f32 %v3296, %v4015
    %v4494 = vadd.f32 %v3297, %v4016
    %v4495 = vadd.f32 %v3298, %v4017
    %v4496 = vadd.f32 %v3299, %v4018
    %v4497 = vadd.f32 %v3300, %v4019
    %v4498 = vadd.f32 %v3301, %v4020
    %v4499 = vadd.f32 %v3302, %v4021
    %v4500 = vadd.f32 %v3303, %v4022
    %v4501 = vadd.f32 %v3304, %v4023
    %v4502 = vadd.f32 %v3305, %v4024
    %v4503 = vadd.f32 %v3306, %v4025
    %v4504 = vadd.f32 %v3307, %v4026
    %v4505 = vadd.f32 %v3308, %v4027
    %v4506 = vadd.f32 %v3309, %v4028
    %v4507 = vadd.f32 %v3310, %v4029
    %v4508 = vadd.f32 %v3311, %v4030
    %v4509 = vadd.f32 %v3312, %v4031
    %v4510 = vadd.f32 %v3313, %v4032
    %v4511 = vadd.f32 %v3314, %v4033
    %v4512 = vadd.f32 %v3315, %v4034
    %v4513 = vadd.f32 %v3316, %v4035
    %v4514 = vadd.f32 %v3317, %v4036
    %v4515 = vadd.f32 %v3318, %v4037
    %v4516 = vadd.f32 %v3319, %v4038
    %v4517 = vadd.f32 %v3320, %v4039
    %v4518 = vadd.f32 %v3321, %v4040
    %v4519 = vadd.f32 %v3322, %v4041
    %v4520 = vadd.f32 %v3323, %v4042
    %v4521 = vadd.f32 %v3324, %v4043
    %v4522 = vadd.f32 %v3325, %v4044
    %v4523 = vadd.f32 %v3326, %v4045
    %v4524 = vadd.f32 %v3327, %v4046
    %v4525 = vadd.f32 %v3328, %v4047
    %v4526 = vadd.f32 %v3329, %v4048
    %v4527 = vadd.f32 %v3330, %v4049
    %v4528 = vadd.f32 %v3331, %v4050
    %v4529 = vadd.f32 %v3332, %v4051
    %v4530 = vadd.f32 %v3333, %v4052
    %v4531 = vadd.f32 %v3334, %v4053
    %v4532 = vadd.f32 %v3335, %v4054
    %v4533 = vadd.f32 %v3336, %v4055
    %v4534 = vadd.f32 %v3337, %v4056
    %v4535 = vadd.f32 %v3338, %v4057
    %v4536 = vadd.f32 %v3339, %v4058
    %v4537 = vadd.f32 %v3340, %v4059
    %v4538 = vadd.f32 %v3341, %v4060
    %v4539 = vadd.f32 %v3342, %v4061
    %v4540 = vadd.f32 %v3343, %v4062
    %v4541 = vadd.f32 %v3344, %v4063
    %v4542 = vadd.f32 %v3345, %v4064
    %v4543 = vadd.f32 %v3346, %v4065
    %v4544 = vadd.f32 %v3347, %v4066
    %v4545 = vadd.f32 %v3348, %v4067
    %v4546 = vadd.f32 %v3349, %v4068
    %v4547 = vadd.f32 %v3350, %v4069
    %v4548 = vadd.f32 %v3351, %v4070
    %v4549 = vadd.f32 %v3352, %v4071
    %v4550 = vadd.f32 %v3353, %v4072
    %v4551 = vadd.f32 %v3354, %v4073
    %v4552 = vadd.f32 %v3355, %v4074
    %v4553 = vadd.f32 %v3356, %v4075
    %v4554 = vadd.f32 %v3357, %v4076
    %v4555 = vadd.f32 %v3358, %v4077
    %v4556 = vadd.f32 %v3359, %v4078
    %v4557 = vadd.f32 %v3360, %v4079
    %v4558 = vadd.f32 %v3361, %v4080
    %v4559 = vadd.f32 %v3362, %v4081
    %v4560 = vadd.f32 %v3363, %v4082
    %v4561 = vadd.f32 %v3364, %v4083
    %v4562 = vadd.f32 %v3365, %v4084
    %v4563 = vadd.f32 %v3366, %v4085
    %v4564 = vadd.f32 %v3367, %v4086
    %v4565 = vadd.f32 %v3368, %v4087
    %v4566 = vadd.f32 %v3369, %v4088
    %v4567 = vadd.f32 %v3370, %v4089
    %v4568 = vadd.f32 %v3371, %v4090
    %v4569 = vadd.f32 %v3372, %v4091
    %v4570 = vadd.f32 %v3373, %v4092
    %v4571 = vadd.f32 %v3374, %v4093
    %v4572 = vadd.f32 %v3375, %v4094
    %v4573 = vadd.f32 %v3376, %v4095
    %v4574 = vadd.f32 %v3377, %v4096
    %v4575 = vadd.f32 %v3378, %v4097
    %v4576 = vadd.f32 %v3379, %v4098
    %v4577 = vadd.f32 %v3380, %v4099
    %v4578 = vadd.f32 %v3381, %v4100
    %v4579 = vadd.f32 %v3382, %v4101
    %v4580 = vadd.f32 %v3383, %v4102
    %v4581 = vadd.f32 %v3384, %v4103
    %v4582 = vadd.f32 %v3385, %v4104
    %v4583 = vadd.f32 %v3386, %v4105
    %v4584 = vadd.f32 %v3387, %v4106
    %v4585 = vadd.f32 %v3388, %v4107
    %v4586 = vadd.f32 %v3389, %v4108
    %v4587 = vadd.f32 %v3390, %v4109
    %v4588 = vadd.f32 %v3391, %v4110
    %s4589 = sld [smem:[#allocation2 + $0x80]]
    %v4590 = vld [vmem:[#allocation6] sm:$0x44]
    %v4591 = vld [vmem:[#allocation6 + $0x8] sm:$0x44]
    %v4592 = vld [vmem:[#allocation6 + $0x10] sm:$0x44]
    %v4593 = vld [vmem:[#allocation6 + $0x18] sm:$0x44]
    %v4594 = vld [vmem:[#allocation6 + $0x20] sm:$0x44]
    %v4595 = vld [vmem:[#allocation6 + $0x28] sm:$0x44]
    %v4596 = vld [vmem:[#allocation6 + $0x30] sm:$0x44]
    %v4597 = vld [vmem:[#allocation6 + $0x38] sm:$0x44]
    %v4598 = vld [vmem:[#allocation6 + $0x40] sm:$0x44]
    %v4599 = vld [vmem:[#allocation6 + $0x48] sm:$0x44]
    %v4600 = vld [vmem:[#allocation6 + $0x50] sm:$0x44]
    %v4601 = vld [vmem:[#allocation6 + $0x58] sm:$0x44]
    %v4602 = vld [vmem:[#allocation6 + $0x60] sm:$0x44]
    %v4603 = vld [vmem:[#allocation6 + $0x68] sm:$0x44]
    %v4604 = vld [vmem:[#allocation6 + $0x70] sm:$0x44]
    %v4605 = vld [vmem:[#allocation6 + $0x78] sm:$0x44]
    %v4606 = vld [vmem:[#allocation6 + $0x80] sm:$0x44]
    %v4607 = vld [vmem:[#allocation6 + $0x88] sm:$0x44]
    %v4608 = vld [vmem:[#allocation6 + $0x90] sm:$0x44]
    %v4609 = vld [vmem:[#allocation6 + $0x98] sm:$0x44]
    %v4610 = vld [vmem:[#allocation6 + $0xa0] sm:$0x44]
    %v4611 = vld [vmem:[#allocation6 + $0xa8] sm:$0x44]
    %v4612 = vld [vmem:[#allocation6 + $0xb0] sm:$0x44]
    %v4613 = vld [vmem:[#allocation6 + $0xb8] sm:$0x44]
    %v4614 = vld [vmem:[#allocation6 + $0xc0] sm:$0x44]
    %v4615 = vld [vmem:[#allocation6 + $0xc8] sm:$0x44]
    %v4616 = vld [vmem:[#allocation6 + $0xd0] sm:$0x44]
    %v4617 = vld [vmem:[#allocation6 + $0xd8] sm:$0x44]
    %v4618 = vld [vmem:[#allocation6 + $0xe0] sm:$0x44]
    %v4619 = vld [vmem:[#allocation6 + $0xe8] sm:$0x44]
    %v4620 = vld [vmem:[#allocation6 + $0xf0] sm:$0x44]
    %v4621 = vld [vmem:[#allocation6 + $0xf8] sm:$0x44]
    %v4622 = vld [vmem:[#allocation6 + $0x100] sm:$0x44]
    %v4623 = vld [vmem:[#allocation6 + $0x108] sm:$0x44]
    %v4624 = vld [vmem:[#allocation6 + $0x110] sm:$0x44]
    %v4625 = vld [vmem:[#allocation6 + $0x118] sm:$0x44]
    %v4626 = vld [vmem:[#allocation6 + $0x120] sm:$0x44]
    %v4627 = vld [vmem:[#allocation6 + $0x128] sm:$0x44]
    %v4628 = vld [vmem:[#allocation6 + $0x130] sm:$0x44]
    %v4629 = vld [vmem:[#allocation6 + $0x138] sm:$0x44]
    %v4630 = vld [vmem:[#allocation6 + $0x140] sm:$0x44]
    %v4631 = vld [vmem:[#allocation6 + $0x148] sm:$0x44]
    %v4632 = vld [vmem:[#allocation6 + $0x150] sm:$0x44]
    %v4633 = vld [vmem:[#allocation6 + $0x158] sm:$0x44]
    %v4634 = vld [vmem:[#allocation6 + $0x160] sm:$0x44]
    %v4635 = vld [vmem:[#allocation6 + $0x168] sm:$0x44]
    %v4636 = vld [vmem:[#allocation6 + $0x170] sm:$0x44]
    %v4637 = vld [vmem:[#allocation6 + $0x178] sm:$0x44]
    %v4638 = vld [vmem:[#allocation6 + $0x180] sm:$0x44]
    %v4639 = vld [vmem:[#allocation6 + $0x188] sm:$0x44]
    %v4640 = vld [vmem:[#allocation6 + $0x190] sm:$0x44]
    %v4641 = vld [vmem:[#allocation6 + $0x198] sm:$0x44]
    %v4642 = vld [vmem:[#allocation6 + $0x1a0] sm:$0x44]
    %v4643 = vld [vmem:[#allocation6 + $0x1a8] sm:$0x44]
    %v4644 = vld [vmem:[#allocation6 + $0x1b0] sm:$0x44]
    %v4645 = vld [vmem:[#allocation6 + $0x1b8] sm:$0x44]
    %v4646 = vld [vmem:[#allocation6 + $0x1c0] sm:$0x44]
    %v4647 = vld [vmem:[#allocation6 + $0x1c8] sm:$0x44]
    %v4648 = vld [vmem:[#allocation6 + $0x1d0] sm:$0x44]
    %v4649 = vld [vmem:[#allocation6 + $0x1d8] sm:$0x44]
    %v4650 = vld [vmem:[#allocation6 + $0x1e0] sm:$0x44]
    %v4651 = vld [vmem:[#allocation6 + $0x1e8] sm:$0x44]
    %v4652 = vld [vmem:[#allocation6 + $0x1f0] sm:$0x44]
    %v4653 = vld [vmem:[#allocation6 + $0x1f8] sm:$0x44]
    %v4654 = vld [vmem:[#allocation6 + $0x200] sm:$0x44]
    %v4655 = vld [vmem:[#allocation6 + $0x208] sm:$0x44]
    %v4656 = vld [vmem:[#allocation6 + $0x210] sm:$0x44]
    %v4657 = vld [vmem:[#allocation6 + $0x218] sm:$0x44]
    %v4658 = vld [vmem:[#allocation6 + $0x220] sm:$0x44]
    %v4659 = vld [vmem:[#allocation6 + $0x228] sm:$0x44]
    %v4660 = vld [vmem:[#allocation6 + $0x230] sm:$0x44]
    %v4661 = vld [vmem:[#allocation6 + $0x238] sm:$0x44]
    %v4662 = vld [vmem:[#allocation6 + $0x240] sm:$0x44]
    %v4663 = vld [vmem:[#allocation6 + $0x248] sm:$0x44]
    %v4664 = vld [vmem:[#allocation6 + $0x250] sm:$0x44]
    %v4665 = vld [vmem:[#allocation6 + $0x258] sm:$0x44]
    %v4666 = vld [vmem:[#allocation6 + $0x260] sm:$0x44]
    %v4667 = vld [vmem:[#allocation6 + $0x268] sm:$0x44]
    %v4668 = vld [vmem:[#allocation6 + $0x270] sm:$0x44]
    %v4669 = vld [vmem:[#allocation6 + $0x278] sm:$0x44]
    %v4670 = vld [vmem:[#allocation6 + $0x280] sm:$0x44]
    %v4671 = vld [vmem:[#allocation6 + $0x288] sm:$0x44]
    %v4672 = vld [vmem:[#allocation6 + $0x290] sm:$0x44]
    %v4673 = vld [vmem:[#allocation6 + $0x298] sm:$0x44]
    %v4674 = vld [vmem:[#allocation6 + $0x2a0] sm:$0x44]
    %v4675 = vld [vmem:[#allocation6 + $0x2a8] sm:$0x44]
    %v4676 = vld [vmem:[#allocation6 + $0x2b0] sm:$0x44]
    %v4677 = vld [vmem:[#allocation6 + $0x2b8] sm:$0x44]
    %v4678 = vld [vmem:[#allocation6 + $0x2c0] sm:$0x44]
    %v4679 = vld [vmem:[#allocation6 + $0x2c8] sm:$0x44]
    %v4680 = vld [vmem:[#allocation6 + $0x2d0] sm:$0x44]
    %v4681 = vld [vmem:[#allocation6 + $0x2d8] sm:$0x44]
    %v4682 = vld [vmem:[#allocation6 + $0x2e0] sm:$0x44]
    %v4683 = vld [vmem:[#allocation6 + $0x2e8] sm:$0x44]
    %v4684 = vld [vmem:[#allocation6 + $0x2f0] sm:$0x44]
    %v4685 = vld [vmem:[#allocation6 + $0x2f8] sm:$0x44]
    %v4686 = vld [vmem:[#allocation6 + $0x300] sm:$0x44]
    %v4687 = vld [vmem:[#allocation6 + $0x308] sm:$0x44]
    %v4688 = vld [vmem:[#allocation6 + $0x310] sm:$0x44]
    %v4689 = vld [vmem:[#allocation6 + $0x318] sm:$0x44]
    %v4690 = vld [vmem:[#allocation6 + $0x320] sm:$0x44]
    %v4691 = vld [vmem:[#allocation6 + $0x328] sm:$0x44]
    %v4692 = vld [vmem:[#allocation6 + $0x330] sm:$0x44]
    %v4693 = vld [vmem:[#allocation6 + $0x338] sm:$0x44]
    %v4694 = vld [vmem:[#allocation6 + $0x340] sm:$0x44]
    %v4695 = vld [vmem:[#allocation6 + $0x348] sm:$0x44]
    %v4696 = vld [vmem:[#allocation6 + $0x350] sm:$0x44]
    %v4697 = vld [vmem:[#allocation6 + $0x358] sm:$0x44]
    %v4698 = vld [vmem:[#allocation6 + $0x360] sm:$0x44]
    %v4699 = vld [vmem:[#allocation6 + $0x368] sm:$0x44]
    %v4700 = vld [vmem:[#allocation6 + $0x370] sm:$0x44]
    %v4701 = vld [vmem:[#allocation6 + $0x378] sm:$0x44]
    %v4702 = vld [vmem:[#allocation6 + $0x380] sm:$0x44]
    %v4703 = vld [vmem:[#allocation6 + $0x388] sm:$0x44]
    %v4704 = vld [vmem:[#allocation6 + $0x390] sm:$0x44]
    %v4705 = vld [vmem:[#allocation6 + $0x398] sm:$0x44]
    %v4706 = vld [vmem:[#allocation6 + $0x3a0] sm:$0x44]
    %v4707 = vld [vmem:[#allocation6 + $0x3a8] sm:$0x44]
    %v4708 = vld [vmem:[#allocation6 + $0x3b0] sm:$0x44]
    %v4709 = vld [vmem:[#allocation6 + $0x3b8] sm:$0x4]
    %v4710 = vunpack.c.l.bf16 %v4590
    %v4711 = vunpack.c.h.bf16 %v4590
    %v4712 = vunpack.c.l.bf16 %v4591
    %v4713 = vunpack.c.h.bf16 %v4591
    %v4714 = vunpack.c.l.bf16 %v4592
    %v4715 = vunpack.c.h.bf16 %v4592
    %v4716 = vunpack.c.l.bf16 %v4593
    %v4717 = vunpack.c.h.bf16 %v4593
    %v4718 = vunpack.c.l.bf16 %v4594
    %v4719 = vunpack.c.h.bf16 %v4594
    %v4720 = vunpack.c.l.bf16 %v4595
    %v4721 = vunpack.c.h.bf16 %v4595
    %v4722 = vunpack.c.l.bf16 %v4596
    %v4723 = vunpack.c.h.bf16 %v4596
    %v4724 = vunpack.c.l.bf16 %v4597
    %v4725 = vunpack.c.h.bf16 %v4597
    %v4726 = vunpack.c.l.bf16 %v4598
    %v4727 = vunpack.c.h.bf16 %v4598
    %v4728 = vunpack.c.l.bf16 %v4599
    %v4729 = vunpack.c.h.bf16 %v4599
    %v4730 = vunpack.c.l.bf16 %v4600
    %v4731 = vunpack.c.h.bf16 %v4600
    %v4732 = vunpack.c.l.bf16 %v4601
    %v4733 = vunpack.c.h.bf16 %v4601
    %v4734 = vunpack.c.l.bf16 %v4602
    %v4735 = vunpack.c.h.bf16 %v4602
    %v4736 = vunpack.c.l.bf16 %v4603
    %v4737 = vunpack.c.h.bf16 %v4603
    %v4738 = vunpack.c.l.bf16 %v4604
    %v4739 = vunpack.c.h.bf16 %v4604
    %v4740 = vunpack.c.l.bf16 %v4605
    %v4741 = vunpack.c.h.bf16 %v4605
    %v4742 = vunpack.c.l.bf16 %v4606
    %v4743 = vunpack.c.h.bf16 %v4606
    %v4744 = vunpack.c.l.bf16 %v4607
    %v4745 = vunpack.c.h.bf16 %v4607
    %v4746 = vunpack.c.l.bf16 %v4608
    %v4747 = vunpack.c.h.bf16 %v4608
    %v4748 = vunpack.c.l.bf16 %v4609
    %v4749 = vunpack.c.h.bf16 %v4609
    %v4750 = vunpack.c.l.bf16 %v4610
    %v4751 = vunpack.c.h.bf16 %v4610
    %v4752 = vunpack.c.l.bf16 %v4611
    %v4753 = vunpack.c.h.bf16 %v4611
    %v4754 = vunpack.c.l.bf16 %v4612
    %v4755 = vunpack.c.h.bf16 %v4612
    %v4756 = vunpack.c.l.bf16 %v4613
    %v4757 = vunpack.c.h.bf16 %v4613
    %v4758 = vunpack.c.l.bf16 %v4614
    %v4759 = vunpack.c.h.bf16 %v4614
    %v4760 = vunpack.c.l.bf16 %v4615
    %v4761 = vunpack.c.h.bf16 %v4615
    %v4762 = vunpack.c.l.bf16 %v4616
    %v4763 = vunpack.c.h.bf16 %v4616
    %v4764 = vunpack.c.l.bf16 %v4617
    %v4765 = vunpack.c.h.bf16 %v4617
    %v4766 = vunpack.c.l.bf16 %v4618
    %v4767 = vunpack.c.h.bf16 %v4618
    %v4768 = vunpack.c.l.bf16 %v4619
    %v4769 = vunpack.c.h.bf16 %v4619
    %v4770 = vunpack.c.l.bf16 %v4620
    %v4771 = vunpack.c.h.bf16 %v4620
    %v4772 = vunpack.c.l.bf16 %v4621
    %v4773 = vunpack.c.h.bf16 %v4621
    %v4774 = vunpack.c.l.bf16 %v4622
    %v4775 = vunpack.c.h.bf16 %v4622
    %v4776 = vunpack.c.l.bf16 %v4623
    %v4777 = vunpack.c.h.bf16 %v4623
    %v4778 = vunpack.c.l.bf16 %v4624
    %v4779 = vunpack.c.h.bf16 %v4624
    %v4780 = vunpack.c.l.bf16 %v4625
    %v4781 = vunpack.c.h.bf16 %v4625
    %v4782 = vunpack.c.l.bf16 %v4626
    %v4783 = vunpack.c.h.bf16 %v4626
    %v4784 = vunpack.c.l.bf16 %v4627
    %v4785 = vunpack.c.h.bf16 %v4627
    %v4786 = vunpack.c.l.bf16 %v4628
    %v4787 = vunpack.c.h.bf16 %v4628
    %v4788 = vunpack.c.l.bf16 %v4629
    %v4789 = vunpack.c.h.bf16 %v4629
    %v4790 = vunpack.c.l.bf16 %v4630
    %v4791 = vunpack.c.h.bf16 %v4630
    %v4792 = vunpack.c.l.bf16 %v4631
    %v4793 = vunpack.c.h.bf16 %v4631
    %v4794 = vunpack.c.l.bf16 %v4632
    %v4795 = vunpack.c.h.bf16 %v4632
    %v4796 = vunpack.c.l.bf16 %v4633
    %v4797 = vunpack.c.h.bf16 %v4633
    %v4798 = vunpack.c.l.bf16 %v4634
    %v4799 = vunpack.c.h.bf16 %v4634
    %v4800 = vunpack.c.l.bf16 %v4635
    %v4801 = vunpack.c.h.bf16 %v4635
    %v4802 = vunpack.c.l.bf16 %v4636
    %v4803 = vunpack.c.h.bf16 %v4636
    %v4804 = vunpack.c.l.bf16 %v4637
    %v4805 = vunpack.c.h.bf16 %v4637
    %v4806 = vunpack.c.l.bf16 %v4638
    %v4807 = vunpack.c.h.bf16 %v4638
    %v4808 = vunpack.c.l.bf16 %v4639
    %v4809 = vunpack.c.h.bf16 %v4639
    %v4810 = vunpack.c.l.bf16 %v4640
    %v4811 = vunpack.c.h.bf16 %v4640
    %v4812 = vunpack.c.l.bf16 %v4641
    %v4813 = vunpack.c.h.bf16 %v4641
    %v4814 = vunpack.c.l.bf16 %v4642
    %v4815 = vunpack.c.h.bf16 %v4642
    %v4816 = vunpack.c.l.bf16 %v4643
    %v4817 = vunpack.c.h.bf16 %v4643
    %v4818 = vunpack.c.l.bf16 %v4644
    %v4819 = vunpack.c.h.bf16 %v4644
    %v4820 = vunpack.c.l.bf16 %v4645
    %v4821 = vunpack.c.h.bf16 %v4645
    %v4822 = vunpack.c.l.bf16 %v4646
    %v4823 = vunpack.c.h.bf16 %v4646
    %v4824 = vunpack.c.l.bf16 %v4647
    %v4825 = vunpack.c.h.bf16 %v4647
    %v4826 = vunpack.c.l.bf16 %v4648
    %v4827 = vunpack.c.h.bf16 %v4648
    %v4828 = vunpack.c.l.bf16 %v4649
    %v4829 = vunpack.c.h.bf16 %v4649
    %v4830 = vunpack.c.l.bf16 %v4650
    %v4831 = vunpack.c.h.bf16 %v4650
    %v4832 = vunpack.c.l.bf16 %v4651
    %v4833 = vunpack.c.h.bf16 %v4651
    %v4834 = vunpack.c.l.bf16 %v4652
    %v4835 = vunpack.c.h.bf16 %v4652
    %v4836 = vunpack.c.l.bf16 %v4653
    %v4837 = vunpack.c.h.bf16 %v4653
    %v4838 = vunpack.c.l.bf16 %v4654
    %v4839 = vunpack.c.h.bf16 %v4654
    %v4840 = vunpack.c.l.bf16 %v4655
    %v4841 = vunpack.c.h.bf16 %v4655
    %v4842 = vunpack.c.l.bf16 %v4656
    %v4843 = vunpack.c.h.bf16 %v4656
    %v4844 = vunpack.c.l.bf16 %v4657
    %v4845 = vunpack.c.h.bf16 %v4657
    %v4846 = vunpack.c.l.bf16 %v4658
    %v4847 = vunpack.c.h.bf16 %v4658
    %v4848 = vunpack.c.l.bf16 %v4659
    %v4849 = vunpack.c.h.bf16 %v4659
    %v4850 = vunpack.c.l.bf16 %v4660
    %v4851 = vunpack.c.h.bf16 %v4660
    %v4852 = vunpack.c.l.bf16 %v4661
    %v4853 = vunpack.c.h.bf16 %v4661
    %v4854 = vunpack.c.l.bf16 %v4662
    %v4855 = vunpack.c.h.bf16 %v4662
    %v4856 = vunpack.c.l.bf16 %v4663
    %v4857 = vunpack.c.h.bf16 %v4663
    %v4858 = vunpack.c.l.bf16 %v4664
    %v4859 = vunpack.c.h.bf16 %v4664
    %v4860 = vunpack.c.l.bf16 %v4665
    %v4861 = vunpack.c.h.bf16 %v4665
    %v4862 = vunpack.c.l.bf16 %v4666
    %v4863 = vunpack.c.h.bf16 %v4666
    %v4864 = vunpack.c.l.bf16 %v4667
    %v4865 = vunpack.c.h.bf16 %v4667
    %v4866 = vunpack.c.l.bf16 %v4668
    %v4867 = vunpack.c.h.bf16 %v4668
    %v4868 = vunpack.c.l.bf16 %v4669
    %v4869 = vunpack.c.h.bf16 %v4669
    %v4870 = vunpack.c.l.bf16 %v4670
    %v4871 = vunpack.c.h.bf16 %v4670
    %v4872 = vunpack.c.l.bf16 %v4671
    %v4873 = vunpack.c.h.bf16 %v4671
    %v4874 = vunpack.c.l.bf16 %v4672
    %v4875 = vunpack.c.h.bf16 %v4672
    %v4876 = vunpack.c.l.bf16 %v4673
    %v4877 = vunpack.c.h.bf16 %v4673
    %v4878 = vunpack.c.l.bf16 %v4674
    %v4879 = vunpack.c.h.bf16 %v4674
    %v4880 = vunpack.c.l.bf16 %v4675
    %v4881 = vunpack.c.h.bf16 %v4675
    %v4882 = vunpack.c.l.bf16 %v4676
    %v4883 = vunpack.c.h.bf16 %v4676
    %v4884 = vunpack.c.l.bf16 %v4677
    %v4885 = vunpack.c.h.bf16 %v4677
    %v4886 = vunpack.c.l.bf16 %v4678
    %v4887 = vunpack.c.h.bf16 %v4678
    %v4888 = vunpack.c.l.bf16 %v4679
    %v4889 = vunpack.c.h.bf16 %v4679
    %v4890 = vunpack.c.l.bf16 %v4680
    %v4891 = vunpack.c.h.bf16 %v4680
    %v4892 = vunpack.c.l.bf16 %v4681
    %v4893 = vunpack.c.h.bf16 %v4681
    %v4894 = vunpack.c.l.bf16 %v4682
    %v4895 = vunpack.c.h.bf16 %v4682
    %v4896 = vunpack.c.l.bf16 %v4683
    %v4897 = vunpack.c.h.bf16 %v4683
    %v4898 = vunpack.c.l.bf16 %v4684
    %v4899 = vunpack.c.h.bf16 %v4684
    %v4900 = vunpack.c.l.bf16 %v4685
    %v4901 = vunpack.c.h.bf16 %v4685
    %v4902 = vunpack.c.l.bf16 %v4686
    %v4903 = vunpack.c.h.bf16 %v4686
    %v4904 = vunpack.c.l.bf16 %v4687
    %v4905 = vunpack.c.h.bf16 %v4687
    %v4906 = vunpack.c.l.bf16 %v4688
    %v4907 = vunpack.c.h.bf16 %v4688
    %v4908 = vunpack.c.l.bf16 %v4689
    %v4909 = vunpack.c.h.bf16 %v4689
    %v4910 = vunpack.c.l.bf16 %v4690
    %v4911 = vunpack.c.h.bf16 %v4690
    %v4912 = vunpack.c.l.bf16 %v4691
    %v4913 = vunpack.c.h.bf16 %v4691
    %v4914 = vunpack.c.l.bf16 %v4692
    %v4915 = vunpack.c.h.bf16 %v4692
    %v4916 = vunpack.c.l.bf16 %v4693
    %v4917 = vunpack.c.h.bf16 %v4693
    %v4918 = vunpack.c.l.bf16 %v4694
    %v4919 = vunpack.c.h.bf16 %v4694
    %v4920 = vunpack.c.l.bf16 %v4695
    %v4921 = vunpack.c.h.bf16 %v4695
    %v4922 = vunpack.c.l.bf16 %v4696
    %v4923 = vunpack.c.h.bf16 %v4696
    %v4924 = vunpack.c.l.bf16 %v4697
    %v4925 = vunpack.c.h.bf16 %v4697
    %v4926 = vunpack.c.l.bf16 %v4698
    %v4927 = vunpack.c.h.bf16 %v4698
    %v4928 = vunpack.c.l.bf16 %v4699
    %v4929 = vunpack.c.h.bf16 %v4699
    %v4930 = vunpack.c.l.bf16 %v4700
    %v4931 = vunpack.c.h.bf16 %v4700
    %v4932 = vunpack.c.l.bf16 %v4701
    %v4933 = vunpack.c.h.bf16 %v4701
    %v4934 = vunpack.c.l.bf16 %v4702
    %v4935 = vunpack.c.h.bf16 %v4702
    %v4936 = vunpack.c.l.bf16 %v4703
    %v4937 = vunpack.c.h.bf16 %v4703
    %v4938 = vunpack.c.l.bf16 %v4704
    %v4939 = vunpack.c.h.bf16 %v4704
    %v4940 = vunpack.c.l.bf16 %v4705
    %v4941 = vunpack.c.h.bf16 %v4705
    %v4942 = vunpack.c.l.bf16 %v4706
    %v4943 = vunpack.c.h.bf16 %v4706
    %v4944 = vunpack.c.l.bf16 %v4707
    %v4945 = vunpack.c.h.bf16 %v4707
    %v4946 = vunpack.c.l.bf16 %v4708
    %v4947 = vunpack.c.h.bf16 %v4708
    %v4948 = vunpack.c.l.bf16 %v4709
    %v4949 = vstv %s4589
    %v4950 = vmul.f32 %v4949, %v4710
    %v4951 = vmul.f32 %v4949, %v4711
    %v4952 = vmul.f32 %v4949, %v4712
    %v4953 = vmul.f32 %v4949, %v4713
    %v4954 = vmul.f32 %v4949, %v4714
    %v4955 = vmul.f32 %v4949, %v4715
    %v4956 = vmul.f32 %v4949, %v4716
    %v4957 = vmul.f32 %v4949, %v4717
    %v4958 = vmul.f32 %v4949, %v4718
    %v4959 = vmul.f32 %v4949, %v4719
    %v4960 = vmul.f32 %v4949, %v4720
    %v4961 = vmul.f32 %v4949, %v4721
    %v4962 = vmul.f32 %v4949, %v4722
    %v4963 = vmul.f32 %v4949, %v4723
    %v4964 = vmul.f32 %v4949, %v4724
    %v4965 = vmul.f32 %v4949, %v4725
    %v4966 = vmul.f32 %v4949, %v4726
    %v4967 = vmul.f32 %v4949, %v4727
    %v4968 = vmul.f32 %v4949, %v4728
    %v4969 = vmul.f32 %v4949, %v4729
    %v4970 = vmul.f32 %v4949, %v4730
    %v4971 = vmul.f32 %v4949, %v4731
    %v4972 = vmul.f32 %v4949, %v4732
    %v4973 = vmul.f32 %v4949, %v4733
    %v4974 = vmul.f32 %v4949, %v4734
    %v4975 = vmul.f32 %v4949, %v4735
    %v4976 = vmul.f32 %v4949, %v4736
    %v4977 = vmul.f32 %v4949, %v4737
    %v4978 = vmul.f32 %v4949, %v4738
    %v4979 = vmul.f32 %v4949, %v4739
    %v4980 = vmul.f32 %v4949, %v4740
    %v4981 = vmul.f32 %v4949, %v4741
    %v4982 = vmul.f32 %v4949, %v4742
    %v4983 = vmul.f32 %v4949, %v4743
    %v4984 = vmul.f32 %v4949, %v4744
    %v4985 = vmul.f32 %v4949, %v4745
    %v4986 = vmul.f32 %v4949, %v4746
    %v4987 = vmul.f32 %v4949, %v4747
    %v4988 = vmul.f32 %v4949, %v4748
    %v4989 = vmul.f32 %v4949, %v4749
    %v4990 = vmul.f32 %v4949, %v4750
    %v4991 = vmul.f32 %v4949, %v4751
    %v4992 = vmul.f32 %v4949, %v4752
    %v4993 = vmul.f32 %v4949, %v4753
    %v4994 = vmul.f32 %v4949, %v4754
    %v4995 = vmul.f32 %v4949, %v4755
    %v4996 = vmul.f32 %v4949, %v4756
    %v4997 = vmul.f32 %v4949, %v4757
    %v4998 = vmul.f32 %v4949, %v4758
    %v4999 = vmul.f32 %v4949, %v4759
    %v5000 = vmul.f32 %v4949, %v4760
    %v5001 = vmul.f32 %v4949, %v4761
    %v5002 = vmul.f32 %v4949, %v4762
    %v5003 = vmul.f32 %v4949, %v4763
    %v5004 = vmul.f32 %v4949, %v4764
    %v5005 = vmul.f32 %v4949, %v4765
    %v5006 = vmul.f32 %v4949, %v4766
    %v5007 = vmul.f32 %v4949, %v4767
    %v5008 = vmul.f32 %v4949, %v4768
    %v5009 = vmul.f32 %v4949, %v4769
    %v5010 = vmul.f32 %v4949, %v4770
    %v5011 = vmul.f32 %v4949, %v4771
    %v5012 = vmul.f32 %v4949, %v4772
    %v5013 = vmul.f32 %v4949, %v4773
    %v5014 = vmul.f32 %v4949, %v4774
    %v5015 = vmul.f32 %v4949, %v4775
    %v5016 = vmul.f32 %v4949, %v4776
    %v5017 = vmul.f32 %v4949, %v4777
    %v5018 = vmul.f32 %v4949, %v4778
    %v5019 = vmul.f32 %v4949, %v4779
    %v5020 = vmul.f32 %v4949, %v4780
    %v5021 = vmul.f32 %v4949, %v4781
    %v5022 = vmul.f32 %v4949, %v4782
    %v5023 = vmul.f32 %v4949, %v4783
    %v5024 = vmul.f32 %v4949, %v4784
    %v5025 = vmul.f32 %v4949, %v4785
    %v5026 = vmul.f32 %v4949, %v4786
    %v5027 = vmul.f32 %v4949, %v4787
    %v5028 = vmul.f32 %v4949, %v4788
    %v5029 = vmul.f32 %v4949, %v4789
    %v5030 = vmul.f32 %v4949, %v4790
    %v5031 = vmul.f32 %v4949, %v4791
    %v5032 = vmul.f32 %v4949, %v4792
    %v5033 = vmul.f32 %v4949, %v4793
    %v5034 = vmul.f32 %v4949, %v4794
    %v5035 = vmul.f32 %v4949, %v4795
    %v5036 = vmul.f32 %v4949, %v4796
    %v5037 = vmul.f32 %v4949, %v4797
    %v5038 = vmul.f32 %v4949, %v4798
    %v5039 = vmul.f32 %v4949, %v4799
    %v5040 = vmul.f32 %v4949, %v4800
    %v5041 = vmul.f32 %v4949, %v4801
    %v5042 = vmul.f32 %v4949, %v4802
    %v5043 = vmul.f32 %v4949, %v4803
    %v5044 = vmul.f32 %v4949, %v4804
    %v5045 = vmul.f32 %v4949, %v4805
    %v5046 = vmul.f32 %v4949, %v4806
    %v5047 = vmul.f32 %v4949, %v4807
    %v5048 = vmul.f32 %v4949, %v4808
    %v5049 = vmul.f32 %v4949, %v4809
    %v5050 = vmul.f32 %v4949, %v4810
    %v5051 = vmul.f32 %v4949, %v4811
    %v5052 = vmul.f32 %v4949, %v4812
    %v5053 = vmul.f32 %v4949, %v4813
    %v5054 = vmul.f32 %v4949, %v4814
    %v5055 = vmul.f32 %v4949, %v4815
    %v5056 = vmul.f32 %v4949, %v4816
    %v5057 = vmul.f32 %v4949, %v4817
    %v5058 = vmul.f32 %v4949, %v4818
    %v5059 = vmul.f32 %v4949, %v4819
    %v5060 = vmul.f32 %v4949, %v4820
    %v5061 = vmul.f32 %v4949, %v4821
    %v5062 = vmul.f32 %v4949, %v4822
    %v5063 = vmul.f32 %v4949, %v4823
    %v5064 = vmul.f32 %v4949, %v4824
    %v5065 = vmul.f32 %v4949, %v4825
    %v5066 = vmul.f32 %v4949, %v4826
    %v5067 = vmul.f32 %v4949, %v4827
    %v5068 = vmul.f32 %v4949, %v4828
    %v5069 = vmul.f32 %v4949, %v4829
    %v5070 = vmul.f32 %v4949, %v4830
    %v5071 = vmul.f32 %v4949, %v4831
    %v5072 = vmul.f32 %v4949, %v4832
    %v5073 = vmul.f32 %v4949, %v4833
    %v5074 = vmul.f32 %v4949, %v4834
    %v5075 = vmul.f32 %v4949, %v4835
    %v5076 = vmul.f32 %v4949, %v4836
    %v5077 = vmul.f32 %v4949, %v4837
    %v5078 = vmul.f32 %v4949, %v4838
    %v5079 = vmul.f32 %v4949, %v4839
    %v5080 = vmul.f32 %v4949, %v4840
    %v5081 = vmul.f32 %v4949, %v4841
    %v5082 = vmul.f32 %v4949, %v4842
    %v5083 = vmul.f32 %v4949, %v4843
    %v5084 = vmul.f32 %v4949, %v4844
    %v5085 = vmul.f32 %v4949, %v4845
    %v5086 = vmul.f32 %v4949, %v4846
    %v5087 = vmul.f32 %v4949, %v4847
    %v5088 = vmul.f32 %v4949, %v4848
    %v5089 = vmul.f32 %v4949, %v4849
    %v5090 = vmul.f32 %v4949, %v4850
    %v5091 = vmul.f32 %v4949, %v4851
    %v5092 = vmul.f32 %v4949, %v4852
    %v5093 = vmul.f32 %v4949, %v4853
    %v5094 = vmul.f32 %v4949, %v4854
    %v5095 = vmul.f32 %v4949, %v4855
    %v5096 = vmul.f32 %v4949, %v4856
    %v5097 = vmul.f32 %v4949, %v4857
    %v5098 = vmul.f32 %v4949, %v4858
    %v5099 = vmul.f32 %v4949, %v4859
    %v5100 = vmul.f32 %v4949, %v4860
    %v5101 = vmul.f32 %v4949, %v4861
    %v5102 = vmul.f32 %v4949, %v4862
    %v5103 = vmul.f32 %v4949, %v4863
    %v5104 = vmul.f32 %v4949, %v4864
    %v5105 = vmul.f32 %v4949, %v4865
    %v5106 = vmul.f32 %v4949, %v4866
    %v5107 = vmul.f32 %v4949, %v4867
    %v5108 = vmul.f32 %v4949, %v4868
    %v5109 = vmul.f32 %v4949, %v4869
    %v5110 = vmul.f32 %v4949, %v4870
    %v5111 = vmul.f32 %v4949, %v4871
    %v5112 = vmul.f32 %v4949, %v4872
    %v5113 = vmul.f32 %v4949, %v4873
    %v5114 = vmul.f32 %v4949, %v4874
    %v5115 = vmul.f32 %v4949, %v4875
    %v5116 = vmul.f32 %v4949, %v4876
    %v5117 = vmul.f32 %v4949, %v4877
    %v5118 = vmul.f32 %v4949, %v4878
    %v5119 = vmul.f32 %v4949, %v4879
    %v5120 = vmul.f32 %v4949, %v4880
    %v5121 = vmul.f32 %v4949, %v4881
    %v5122 = vmul.f32 %v4949, %v4882
    %v5123 = vmul.f32 %v4949, %v4883
    %v5124 = vmul.f32 %v4949, %v4884
    %v5125 = vmul.f32 %v4949, %v4885
    %v5126 = vmul.f32 %v4949, %v4886
    %v5127 = vmul.f32 %v4949, %v4887
    %v5128 = vmul.f32 %v4949, %v4888
    %v5129 = vmul.f32 %v4949, %v4889
    %v5130 = vmul.f32 %v4949, %v4890
    %v5131 = vmul.f32 %v4949, %v4891
    %v5132 = vmul.f32 %v4949, %v4892
    %v5133 = vmul.f32 %v4949, %v4893
    %v5134 = vmul.f32 %v4949, %v4894
    %v5135 = vmul.f32 %v4949, %v4895
    %v5136 = vmul.f32 %v4949, %v4896
    %v5137 = vmul.f32 %v4949, %v4897
    %v5138 = vmul.f32 %v4949, %v4898
    %v5139 = vmul.f32 %v4949, %v4899
    %v5140 = vmul.f32 %v4949, %v4900
    %v5141 = vmul.f32 %v4949, %v4901
    %v5142 = vmul.f32 %v4949, %v4902
    %v5143 = vmul.f32 %v4949, %v4903
    %v5144 = vmul.f32 %v4949, %v4904
    %v5145 = vmul.f32 %v4949, %v4905
    %v5146 = vmul.f32 %v4949, %v4906
    %v5147 = vmul.f32 %v4949, %v4907
    %v5148 = vmul.f32 %v4949, %v4908
    %v5149 = vmul.f32 %v4949, %v4909
    %v5150 = vmul.f32 %v4949, %v4910
    %v5151 = vmul.f32 %v4949, %v4911
    %v5152 = vmul.f32 %v4949, %v4912
    %v5153 = vmul.f32 %v4949, %v4913
    %v5154 = vmul.f32 %v4949, %v4914
    %v5155 = vmul.f32 %v4949, %v4915
    %v5156 = vmul.f32 %v4949, %v4916
    %v5157 = vmul.f32 %v4949, %v4917
    %v5158 = vmul.f32 %v4949, %v4918
    %v5159 = vmul.f32 %v4949, %v4919
    %v5160 = vmul.f32 %v4949, %v4920
    %v5161 = vmul.f32 %v4949, %v4921
    %v5162 = vmul.f32 %v4949, %v4922
    %v5163 = vmul.f32 %v4949, %v4923
    %v5164 = vmul.f32 %v4949, %v4924
    %v5165 = vmul.f32 %v4949, %v4925
    %v5166 = vmul.f32 %v4949, %v4926
    %v5167 = vmul.f32 %v4949, %v4927
    %v5168 = vmul.f32 %v4949, %v4928
    %v5169 = vmul.f32 %v4949, %v4929
    %v5170 = vmul.f32 %v4949, %v4930
    %v5171 = vmul.f32 %v4949, %v4931
    %v5172 = vmul.f32 %v4949, %v4932
    %v5173 = vmul.f32 %v4949, %v4933
    %v5174 = vmul.f32 %v4949, %v4934
    %v5175 = vmul.f32 %v4949, %v4935
    %v5176 = vmul.f32 %v4949, %v4936
    %v5177 = vmul.f32 %v4949, %v4937
    %v5178 = vmul.f32 %v4949, %v4938
    %v5179 = vmul.f32 %v4949, %v4939
    %v5180 = vmul.f32 %v4949, %v4940
    %v5181 = vmul.f32 %v4949, %v4941
    %v5182 = vmul.f32 %v4949, %v4942
    %v5183 = vmul.f32 %v4949, %v4943
    %v5184 = vmul.f32 %v4949, %v4944
    %v5185 = vmul.f32 %v4949, %v4945
    %v5186 = vmul.f32 %v4949, %v4946
    %v5187 = vmul.f32 %v4949, %v4947
    %v5188 = vmul.f32 %v4949, %v4948
    %s5189 = sld [smem:[#allocation2 + $0x81]]
    %v5190 = vstv %s5189
    %v5191 = vmul.f32 %v5190, %v4710
    %v5192 = vmul.f32 %v5190, %v4711
    %v5193 = vmul.f32 %v5190, %v4712
    %v5194 = vmul.f32 %v5190, %v4713
    %v5195 = vmul.f32 %v5190, %v4714
    %v5196 = vmul.f32 %v5190, %v4715
    %v5197 = vmul.f32 %v5190, %v4716
    %v5198 = vmul.f32 %v5190, %v4717
    %v5199 = vmul.f32 %v5190, %v4718
    %v5200 = vmul.f32 %v5190, %v4719
    %v5201 = vmul.f32 %v5190, %v4720
    %v5202 = vmul.f32 %v5190, %v4721
    %v5203 = vmul.f32 %v5190, %v4722
    %v5204 = vmul.f32 %v5190, %v4723
    %v5205 = vmul.f32 %v5190, %v4724
    %v5206 = vmul.f32 %v5190, %v4725
    %v5207 = vmul.f32 %v5190, %v4726
    %v5208 = vmul.f32 %v5190, %v4727
    %v5209 = vmul.f32 %v5190, %v4728
    %v5210 = vmul.f32 %v5190, %v4729
    %v5211 = vmul.f32 %v5190, %v4730
    %v5212 = vmul.f32 %v5190, %v4731
    %v5213 = vmul.f32 %v5190, %v4732
    %v5214 = vmul.f32 %v5190, %v4733
    %v5215 = vmul.f32 %v5190, %v4734
    %v5216 = vmul.f32 %v5190, %v4735
    %v5217 = vmul.f32 %v5190, %v4736
    %v5218 = vmul.f32 %v5190, %v4737
    %v5219 = vmul.f32 %v5190, %v4738
    %v5220 = vmul.f32 %v5190, %v4739
    %v5221 = vmul.f32 %v5190, %v4740
    %v5222 = vmul.f32 %v5190, %v4741
    %v5223 = vmul.f32 %v5190, %v4742
    %v5224 = vmul.f32 %v5190, %v4743
    %v5225 = vmul.f32 %v5190, %v4744
    %v5226 = vmul.f32 %v5190, %v4745
    %v5227 = vmul.f32 %v5190, %v4746
    %v5228 = vmul.f32 %v5190, %v4747
    %v5229 = vmul.f32 %v5190, %v4748
    %v5230 = vmul.f32 %v5190, %v4749
    %v5231 = vmul.f32 %v5190, %v4750
    %v5232 = vmul.f32 %v5190, %v4751
    %v5233 = vmul.f32 %v5190, %v4752
    %v5234 = vmul.f32 %v5190, %v4753
    %v5235 = vmul.f32 %v5190, %v4754
    %v5236 = vmul.f32 %v5190, %v4755
    %v5237 = vmul.f32 %v5190, %v4756
    %v5238 = vmul.f32 %v5190, %v4757
    %v5239 = vmul.f32 %v5190, %v4758
    %v5240 = vmul.f32 %v5190, %v4759
    %v5241 = vmul.f32 %v5190, %v4760
    %v5242 = vmul.f32 %v5190, %v4761
    %v5243 = vmul.f32 %v5190, %v4762
    %v5244 = vmul.f32 %v5190, %v4763
    %v5245 = vmul.f32 %v5190, %v4764
    %v5246 = vmul.f32 %v5190, %v4765
    %v5247 = vmul.f32 %v5190, %v4766
    %v5248 = vmul.f32 %v5190, %v4767
    %v5249 = vmul.f32 %v5190, %v4768
    %v5250 = vmul.f32 %v5190, %v4769
    %v5251 = vmul.f32 %v5190, %v4770
    %v5252 = vmul.f32 %v5190, %v4771
    %v5253 = vmul.f32 %v5190, %v4772
    %v5254 = vmul.f32 %v5190, %v4773
    %v5255 = vmul.f32 %v5190, %v4774
    %v5256 = vmul.f32 %v5190, %v4775
    %v5257 = vmul.f32 %v5190, %v4776
    %v5258 = vmul.f32 %v5190, %v4777
    %v5259 = vmul.f32 %v5190, %v4778
    %v5260 = vmul.f32 %v5190, %v4779
    %v5261 = vmul.f32 %v5190, %v4780
    %v5262 = vmul.f32 %v5190, %v4781
    %v5263 = vmul.f32 %v5190, %v4782
    %v5264 = vmul.f32 %v5190, %v4783
    %v5265 = vmul.f32 %v5190, %v4784
    %v5266 = vmul.f32 %v5190, %v4785
    %v5267 = vmul.f32 %v5190, %v4786
    %v5268 = vmul.f32 %v5190, %v4787
    %v5269 = vmul.f32 %v5190, %v4788
    %v5270 = vmul.f32 %v5190, %v4789
    %v5271 = vmul.f32 %v5190, %v4790
    %v5272 = vmul.f32 %v5190, %v4791
    %v5273 = vmul.f32 %v5190, %v4792
    %v5274 = vmul.f32 %v5190, %v4793
    %v5275 = vmul.f32 %v5190, %v4794
    %v5276 = vmul.f32 %v5190, %v4795
    %v5277 = vmul.f32 %v5190, %v4796
    %v5278 = vmul.f32 %v5190, %v4797
    %v5279 = vmul.f32 %v5190, %v4798
    %v5280 = vmul.f32 %v5190, %v4799
    %v5281 = vmul.f32 %v5190, %v4800
    %v5282 = vmul.f32 %v5190, %v4801
    %v5283 = vmul.f32 %v5190, %v4802
    %v5284 = vmul.f32 %v5190, %v4803
    %v5285 = vmul.f32 %v5190, %v4804
    %v5286 = vmul.f32 %v5190, %v4805
    %v5287 = vmul.f32 %v5190, %v4806
    %v5288 = vmul.f32 %v5190, %v4807
    %v5289 = vmul.f32 %v5190, %v4808
    %v5290 = vmul.f32 %v5190, %v4809
    %v5291 = vmul.f32 %v5190, %v4810
    %v5292 = vmul.f32 %v5190, %v4811
    %v5293 = vmul.f32 %v5190, %v4812
    %v5294 = vmul.f32 %v5190, %v4813
    %v5295 = vmul.f32 %v5190, %v4814
    %v5296 = vmul.f32 %v5190, %v4815
    %v5297 = vmul.f32 %v5190, %v4816
    %v5298 = vmul.f32 %v5190, %v4817
    %v5299 = vmul.f32 %v5190, %v4818
    %v5300 = vmul.f32 %v5190, %v4819
    %v5301 = vmul.f32 %v5190, %v4820
    %v5302 = vmul.f32 %v5190, %v4821
    %v5303 = vmul.f32 %v5190, %v4822
    %v5304 = vmul.f32 %v5190, %v4823
    %v5305 = vmul.f32 %v5190, %v4824
    %v5306 = vmul.f32 %v5190, %v4825
    %v5307 = vmul.f32 %v5190, %v4826
    %v5308 = vmul.f32 %v5190, %v4827
    %v5309 = vmul.f32 %v5190, %v4828
    %v5310 = vmul.f32 %v5190, %v4829
    %v5311 = vmul.f32 %v5190, %v4830
    %v5312 = vmul.f32 %v5190, %v4831
    %v5313 = vmul.f32 %v5190, %v4832
    %v5314 = vmul.f32 %v5190, %v4833
    %v5315 = vmul.f32 %v5190, %v4834
    %v5316 = vmul.f32 %v5190, %v4835
    %v5317 = vmul.f32 %v5190, %v4836
    %v5318 = vmul.f32 %v5190, %v4837
    %v5319 = vmul.f32 %v5190, %v4838
    %v5320 = vmul.f32 %v5190, %v4839
    %v5321 = vmul.f32 %v5190, %v4840
    %v5322 = vmul.f32 %v5190, %v4841
    %v5323 = vmul.f32 %v5190, %v4842
    %v5324 = vmul.f32 %v5190, %v4843
    %v5325 = vmul.f32 %v5190, %v4844
    %v5326 = vmul.f32 %v5190, %v4845
    %v5327 = vmul.f32 %v5190, %v4846
    %v5328 = vmul.f32 %v5190, %v4847
    %v5329 = vmul.f32 %v5190, %v4848
    %v5330 = vmul.f32 %v5190, %v4849
    %v5331 = vmul.f32 %v5190, %v4850
    %v5332 = vmul.f32 %v5190, %v4851
    %v5333 = vmul.f32 %v5190, %v4852
    %v5334 = vmul.f32 %v5190, %v4853
    %v5335 = vmul.f32 %v5190, %v4854
    %v5336 = vmul.f32 %v5190, %v4855
    %v5337 = vmul.f32 %v5190, %v4856
    %v5338 = vmul.f32 %v5190, %v4857
    %v5339 = vmul.f32 %v5190, %v4858
    %v5340 = vmul.f32 %v5190, %v4859
    %v5341 = vmul.f32 %v5190, %v4860
    %v5342 = vmul.f32 %v5190, %v4861
    %v5343 = vmul.f32 %v5190, %v4862
    %v5344 = vmul.f32 %v5190, %v4863
    %v5345 = vmul.f32 %v5190, %v4864
    %v5346 = vmul.f32 %v5190, %v4865
    %v5347 = vmul.f32 %v5190, %v4866
    %v5348 = vmul.f32 %v5190, %v4867
    %v5349 = vmul.f32 %v5190, %v4868
    %v5350 = vmul.f32 %v5190, %v4869
    %v5351 = vmul.f32 %v5190, %v4870
    %v5352 = vmul.f32 %v5190, %v4871
    %v5353 = vmul.f32 %v5190, %v4872
    %v5354 = vmul.f32 %v5190, %v4873
    %v5355 = vmul.f32 %v5190, %v4874
    %v5356 = vmul.f32 %v5190, %v4875
    %v5357 = vmul.f32 %v5190, %v4876
    %v5358 = vmul.f32 %v5190, %v4877
    %v5359 = vmul.f32 %v5190, %v4878
    %v5360 = vmul.f32 %v5190, %v4879
    %v5361 = vmul.f32 %v5190, %v4880
    %v5362 = vmul.f32 %v5190, %v4881
    %v5363 = vmul.f32 %v5190, %v4882
    %v5364 = vmul.f32 %v5190, %v4883
    %v5365 = vmul.f32 %v5190, %v4884
    %v5366 = vmul.f32 %v5190, %v4885
    %v5367 = vmul.f32 %v5190, %v4886
    %v5368 = vmul.f32 %v5190, %v4887
    %v5369 = vmul.f32 %v5190, %v4888
    %v5370 = vmul.f32 %v5190, %v4889
    %v5371 = vmul.f32 %v5190, %v4890
    %v5372 = vmul.f32 %v5190, %v4891
    %v5373 = vmul.f32 %v5190, %v4892
    %v5374 = vmul.f32 %v5190, %v4893
    %v5375 = vmul.f32 %v5190, %v4894
    %v5376 = vmul.f32 %v5190, %v4895
    %v5377 = vmul.f32 %v5190, %v4896
    %v5378 = vmul.f32 %v5190, %v4897
    %v5379 = vmul.f32 %v5190, %v4898
    %v5380 = vmul.f32 %v5190, %v4899
    %v5381 = vmul.f32 %v5190, %v4900
    %v5382 = vmul.f32 %v5190, %v4901
    %v5383 = vmul.f32 %v5190, %v4902
    %v5384 = vmul.f32 %v5190, %v4903
    %v5385 = vmul.f32 %v5190, %v4904
    %v5386 = vmul.f32 %v5190, %v4905
    %v5387 = vmul.f32 %v5190, %v4906
    %v5388 = vmul.f32 %v5190, %v4907
    %v5389 = vmul.f32 %v5190, %v4908
    %v5390 = vmul.f32 %v5190, %v4909
    %v5391 = vmul.f32 %v5190, %v4910
    %v5392 = vmul.f32 %v5190, %v4911
    %v5393 = vmul.f32 %v5190, %v4912
    %v5394 = vmul.f32 %v5190, %v4913
    %v5395 = vmul.f32 %v5190, %v4914
    %v5396 = vmul.f32 %v5190, %v4915
    %v5397 = vmul.f32 %v5190, %v4916
    %v5398 = vmul.f32 %v5190, %v4917
    %v5399 = vmul.f32 %v5190, %v4918
    %v5400 = vmul.f32 %v5190, %v4919
    %v5401 = vmul.f32 %v5190, %v4920
    %v5402 = vmul.f32 %v5190, %v4921
    %v5403 = vmul.f32 %v5190, %v4922
    %v5404 = vmul.f32 %v5190, %v4923
    %v5405 = vmul.f32 %v5190, %v4924
    %v5406 = vmul.f32 %v5190, %v4925
    %v5407 = vmul.f32 %v5190, %v4926
    %v5408 = vmul.f32 %v5190, %v4927
    %v5409 = vmul.f32 %v5190, %v4928
    %v5410 = vmul.f32 %v5190, %v4929
    %v5411 = vmul.f32 %v5190, %v4930
    %v5412 = vmul.f32 %v5190, %v4931
    %v5413 = vmul.f32 %v5190, %v4932
    %v5414 = vmul.f32 %v5190, %v4933
    %v5415 = vmul.f32 %v5190, %v4934
    %v5416 = vmul.f32 %v5190, %v4935
    %v5417 = vmul.f32 %v5190, %v4936
    %v5418 = vmul.f32 %v5190, %v4937
    %v5419 = vmul.f32 %v5190, %v4938
    %v5420 = vmul.f32 %v5190, %v4939
    %v5421 = vmul.f32 %v5190, %v4940
    %v5422 = vmul.f32 %v5190, %v4941
    %v5423 = vmul.f32 %v5190, %v4942
    %v5424 = vmul.f32 %v5190, %v4943
    %v5425 = vmul.f32 %v5190, %v4944
    %v5426 = vmul.f32 %v5190, %v4945
    %v5427 = vmul.f32 %v5190, %v4946
    %v5428 = vmul.f32 %v5190, %v4947
    %v5429 = vmul.f32 %v5190, %v4948
    %v5669 = vrot.slane %v5191, 1
    %v5670 = vrot.slane %v5192, 1
    %v5671 = vrot.slane %v5193, 1
    %v5672 = vrot.slane %v5194, 1
    %v5673 = vrot.slane %v5195, 1
    %v5674 = vrot.slane %v5196, 1
    %v5675 = vrot.slane %v5197, 1
    %v5676 = vrot.slane %v5198, 1
    %v5677 = vrot.slane %v5199, 1
    %v5678 = vrot.slane %v5200, 1
    %v5679 = vrot.slane %v5201, 1
    %v5680 = vrot.slane %v5202, 1
    %v5681 = vrot.slane %v5203, 1
    %v5682 = vrot.slane %v5204, 1
    %v5683 = vrot.slane %v5205, 1
    %v5684 = vrot.slane %v5206, 1
    %v5685 = vrot.slane %v5207, 1
    %v5686 = vrot.slane %v5208, 1
    %v5687 = vrot.slane %v5209, 1
    %v5688 = vrot.slane %v5210, 1
    %v5689 = vrot.slane %v5211, 1
    %v5690 = vrot.slane %v5212, 1
    %v5691 = vrot.slane %v5213, 1
    %v5692 = vrot.slane %v5214, 1
    %v5693 = vrot.slane %v5215, 1
    %v5694 = vrot.slane %v5216, 1
    %v5695 = vrot.slane %v5217, 1
    %v5696 = vrot.slane %v5218, 1
    %v5697 = vrot.slane %v5219, 1
    %v5698 = vrot.slane %v5220, 1
    %v5699 = vrot.slane %v5221, 1
    %v5700 = vrot.slane %v5222, 1
    %v5701 = vrot.slane %v5223, 1
    %v5702 = vrot.slane %v5224, 1
    %v5703 = vrot.slane %v5225, 1
    %v5704 = vrot.slane %v5226, 1
    %v5705 = vrot.slane %v5227, 1
    %v5706 = vrot.slane %v5228, 1
    %v5707 = vrot.slane %v5229, 1
    %v5708 = vrot.slane %v5230, 1
    %v5709 = vrot.slane %v5231, 1
    %v5710 = vrot.slane %v5232, 1
    %v5711 = vrot.slane %v5233, 1
    %v5712 = vrot.slane %v5234, 1
    %v5713 = vrot.slane %v5235, 1
    %v5714 = vrot.slane %v5236, 1
    %v5715 = vrot.slane %v5237, 1
    %v5716 = vrot.slane %v5238, 1
    %v5717 = vrot.slane %v5239, 1
    %v5718 = vrot.slane %v5240, 1
    %v5719 = vrot.slane %v5241, 1
    %v5720 = vrot.slane %v5242, 1
    %v5721 = vrot.slane %v5243, 1
    %v5722 = vrot.slane %v5244, 1
    %v5723 = vrot.slane %v5245, 1
    %v5724 = vrot.slane %v5246, 1
    %v5725 = vrot.slane %v5247, 1
    %v5726 = vrot.slane %v5248, 1
    %v5727 = vrot.slane %v5249, 1
    %v5728 = vrot.slane %v5250, 1
    %v5729 = vrot.slane %v5251, 1
    %v5730 = vrot.slane %v5252, 1
    %v5731 = vrot.slane %v5253, 1
    %v5732 = vrot.slane %v5254, 1
    %v5733 = vrot.slane %v5255, 1
    %v5734 = vrot.slane %v5256, 1
    %v5735 = vrot.slane %v5257, 1
    %v5736 = vrot.slane %v5258, 1
    %v5737 = vrot.slane %v5259, 1
    %v5738 = vrot.slane %v5260, 1
    %v5739 = vrot.slane %v5261, 1
    %v5740 = vrot.slane %v5262, 1
    %v5741 = vrot.slane %v5263, 1
    %v5742 = vrot.slane %v5264, 1
    %v5743 = vrot.slane %v5265, 1
    %v5744 = vrot.slane %v5266, 1
    %v5745 = vrot.slane %v5267, 1
    %v5746 = vrot.slane %v5268, 1
    %v5747 = vrot.slane %v5269, 1
    %v5748 = vrot.slane %v5270, 1
    %v5749 = vrot.slane %v5271, 1
    %v5750 = vrot.slane %v5272, 1
    %v5751 = vrot.slane %v5273, 1
    %v5752 = vrot.slane %v5274, 1
    %v5753 = vrot.slane %v5275, 1
    %v5754 = vrot.slane %v5276, 1
    %v5755 = vrot.slane %v5277, 1
    %v5756 = vrot.slane %v5278, 1
    %v5757 = vrot.slane %v5279, 1
    %v5758 = vrot.slane %v5280, 1
    %v5759 = vrot.slane %v5281, 1
    %v5760 = vrot.slane %v5282, 1
    %v5761 = vrot.slane %v5283, 1
    %v5762 = vrot.slane %v5284, 1
    %v5763 = vrot.slane %v5285, 1
    %v5764 = vrot.slane %v5286, 1
    %v5765 = vrot.slane %v5287, 1
    %v5766 = vrot.slane %v5288, 1
    %v5767 = vrot.slane %v5289, 1
    %v5768 = vrot.slane %v5290, 1
    %v5769 = vrot.slane %v5291, 1
    %v5770 = vrot.slane %v5292, 1
    %v5771 = vrot.slane %v5293, 1
    %v5772 = vrot.slane %v5294, 1
    %v5773 = vrot.slane %v5295, 1
    %v5774 = vrot.slane %v5296, 1
    %v5775 = vrot.slane %v5297, 1
    %v5776 = vrot.slane %v5298, 1
    %v5777 = vrot.slane %v5299, 1
    %v5778 = vrot.slane %v5300, 1
    %v5779 = vrot.slane %v5301, 1
    %v5780 = vrot.slane %v5302, 1
    %v5781 = vrot.slane %v5303, 1
    %v5782 = vrot.slane %v5304, 1
    %v5783 = vrot.slane %v5305, 1
    %v5784 = vrot.slane %v5306, 1
    %v5785 = vrot.slane %v5307, 1
    %v5786 = vrot.slane %v5308, 1
    %v5787 = vrot.slane %v5309, 1
    %v5788 = vrot.slane %v5310, 1
    %v5789 = vrot.slane %v5311, 1
    %v5790 = vrot.slane %v5312, 1
    %v5791 = vrot.slane %v5313, 1
    %v5792 = vrot.slane %v5314, 1
    %v5793 = vrot.slane %v5315, 1
    %v5794 = vrot.slane %v5316, 1
    %v5795 = vrot.slane %v5317, 1
    %v5796 = vrot.slane %v5318, 1
    %v5797 = vrot.slane %v5319, 1
    %v5798 = vrot.slane %v5320, 1
    %v5799 = vrot.slane %v5321, 1
    %v5800 = vrot.slane %v5322, 1
    %v5801 = vrot.slane %v5323, 1
    %v5802 = vrot.slane %v5324, 1
    %v5803 = vrot.slane %v5325, 1
    %v5804 = vrot.slane %v5326, 1
    %v5805 = vrot.slane %v5327, 1
    %v5806 = vrot.slane %v5328, 1
    %v5807 = vrot.slane %v5329, 1
    %v5808 = vrot.slane %v5330, 1
    %v5809 = vrot.slane %v5331, 1
    %v5810 = vrot.slane %v5332, 1
    %v5811 = vrot.slane %v5333, 1
    %v5812 = vrot.slane %v5334, 1
    %v5813 = vrot.slane %v5335, 1
    %v5814 = vrot.slane %v5336, 1
    %v5815 = vrot.slane %v5337, 1
    %v5816 = vrot.slane %v5338, 1
    %v5817 = vrot.slane %v5339, 1
    %v5818 = vrot.slane %v5340, 1
    %v5819 = vrot.slane %v5341, 1
    %v5820 = vrot.slane %v5342, 1
    %v5821 = vrot.slane %v5343, 1
    %v5822 = vrot.slane %v5344, 1
    %v5823 = vrot.slane %v5345, 1
    %v5824 = vrot.slane %v5346, 1
    %v5825 = vrot.slane %v5347, 1
    %v5826 = vrot.slane %v5348, 1
    %v5827 = vrot.slane %v5349, 1
    %v5828 = vrot.slane %v5350, 1
    %v5829 = vrot.slane %v5351, 1
    %v5830 = vrot.slane %v5352, 1
    %v5831 = vrot.slane %v5353, 1
    %v5832 = vrot.slane %v5354, 1
    %v5833 = vrot.slane %v5355, 1
    %v5834 = vrot.slane %v5356, 1
    %v5835 = vrot.slane %v5357, 1
    %v5836 = vrot.slane %v5358, 1
    %v5837 = vrot.slane %v5359, 1
    %v5838 = vrot.slane %v5360, 1
    %v5839 = vrot.slane %v5361, 1
    %v5840 = vrot.slane %v5362, 1
    %v5841 = vrot.slane %v5363, 1
    %v5842 = vrot.slane %v5364, 1
    %v5843 = vrot.slane %v5365, 1
    %v5844 = vrot.slane %v5366, 1
    %v5845 = vrot.slane %v5367, 1
    %v5846 = vrot.slane %v5368, 1
    %v5847 = vrot.slane %v5369, 1
    %v5848 = vrot.slane %v5370, 1
    %v5849 = vrot.slane %v5371, 1
    %v5850 = vrot.slane %v5372, 1
    %v5851 = vrot.slane %v5373, 1
    %v5852 = vrot.slane %v5374, 1
    %v5853 = vrot.slane %v5375, 1
    %v5854 = vrot.slane %v5376, 1
    %v5855 = vrot.slane %v5377, 1
    %v5856 = vrot.slane %v5378, 1
    %v5857 = vrot.slane %v5379, 1
    %v5858 = vrot.slane %v5380, 1
    %v5859 = vrot.slane %v5381, 1
    %v5860 = vrot.slane %v5382, 1
    %v5861 = vrot.slane %v5383, 1
    %v5862 = vrot.slane %v5384, 1
    %v5863 = vrot.slane %v5385, 1
    %v5864 = vrot.slane %v5386, 1
    %v5865 = vrot.slane %v5387, 1
    %v5866 = vrot.slane %v5388, 1
    %v5867 = vrot.slane %v5389, 1
    %v5868 = vrot.slane %v5390, 1
    %v5869 = vrot.slane %v5391, 1
    %v5870 = vrot.slane %v5392, 1
    %v5871 = vrot.slane %v5393, 1
    %v5872 = vrot.slane %v5394, 1
    %v5873 = vrot.slane %v5395, 1
    %v5874 = vrot.slane %v5396, 1
    %v5875 = vrot.slane %v5397, 1
    %v5876 = vrot.slane %v5398, 1
    %v5877 = vrot.slane %v5399, 1
    %v5878 = vrot.slane %v5400, 1
    %v5879 = vrot.slane %v5401, 1
    %v5880 = vrot.slane %v5402, 1
    %v5881 = vrot.slane %v5403, 1
    %v5882 = vrot.slane %v5404, 1
    %v5883 = vrot.slane %v5405, 1
    %v5884 = vrot.slane %v5406, 1
    %v5885 = vrot.slane %v5407, 1
    %v5886 = vrot.slane %v5408, 1
    %v5887 = vrot.slane %v5409, 1
    %v5888 = vrot.slane %v5410, 1
    %v5889 = vrot.slane %v5411, 1
    %v5890 = vrot.slane %v5412, 1
    %v5891 = vrot.slane %v5413, 1
    %v5892 = vrot.slane %v5414, 1
    %v5893 = vrot.slane %v5415, 1
    %v5894 = vrot.slane %v5416, 1
    %v5895 = vrot.slane %v5417, 1
    %v5896 = vrot.slane %v5418, 1
    %v5897 = vrot.slane %v5419, 1
    %v5898 = vrot.slane %v5420, 1
    %v5899 = vrot.slane %v5421, 1
    %v5900 = vrot.slane %v5422, 1
    %v5901 = vrot.slane %v5423, 1
    %v5902 = vrot.slane %v5424, 1
    %v5903 = vrot.slane %v5425, 1
    %v5904 = vrot.slane %v5426, 1
    %v5905 = vrot.slane %v5427, 1
    %v5906 = vrot.slane %v5428, 1
    %v5907 = vrot.slane %v5429, 1
    %v6147 = vadd.f32 %v4950, %v5669
    %v6148 = vadd.f32 %v4951, %v5670
    %v6149 = vadd.f32 %v4952, %v5671
    %v6150 = vadd.f32 %v4953, %v5672
    %v6151 = vadd.f32 %v4954, %v5673
    %v6152 = vadd.f32 %v4955, %v5674
    %v6153 = vadd.f32 %v4956, %v5675
    %v6154 = vadd.f32 %v4957, %v5676
    %v6155 = vadd.f32 %v4958, %v5677
    %v6156 = vadd.f32 %v4959, %v5678
    %v6157 = vadd.f32 %v4960, %v5679
    %v6158 = vadd.f32 %v4961, %v5680
    %v6159 = vadd.f32 %v4962, %v5681
    %v6160 = vadd.f32 %v4963, %v5682
    %v6161 = vadd.f32 %v4964, %v5683
    %v6162 = vadd.f32 %v4965, %v5684
    %v6163 = vadd.f32 %v4966, %v5685
    %v6164 = vadd.f32 %v4967, %v5686
    %v6165 = vadd.f32 %v4968, %v5687
    %v6166 = vadd.f32 %v4969, %v5688
    %v6167 = vadd.f32 %v4970, %v5689
    %v6168 = vadd.f32 %v4971, %v5690
    %v6169 = vadd.f32 %v4972, %v5691
    %v6170 = vadd.f32 %v4973, %v5692
    %v6171 = vadd.f32 %v4974, %v5693
    %v6172 = vadd.f32 %v4975, %v5694
    %v6173 = vadd.f32 %v4976, %v5695
    %v6174 = vadd.f32 %v4977, %v5696
    %v6175 = vadd.f32 %v4978, %v5697
    %v6176 = vadd.f32 %v4979, %v5698
    %v6177 = vadd.f32 %v4980, %v5699
    %v6178 = vadd.f32 %v4981, %v5700
    %v6179 = vadd.f32 %v4982, %v5701
    %v6180 = vadd.f32 %v4983, %v5702
    %v6181 = vadd.f32 %v4984, %v5703
    %v6182 = vadd.f32 %v4985, %v5704
    %v6183 = vadd.f32 %v4986, %v5705
    %v6184 = vadd.f32 %v4987, %v5706
    %v6185 = vadd.f32 %v4988, %v5707
    %v6186 = vadd.f32 %v4989, %v5708
    %v6187 = vadd.f32 %v4990, %v5709
    %v6188 = vadd.f32 %v4991, %v5710
    %v6189 = vadd.f32 %v4992, %v5711
    %v6190 = vadd.f32 %v4993, %v5712
    %v6191 = vadd.f32 %v4994, %v5713
    %v6192 = vadd.f32 %v4995, %v5714
    %v6193 = vadd.f32 %v4996, %v5715
    %v6194 = vadd.f32 %v4997, %v5716
    %v6195 = vadd.f32 %v4998, %v5717
    %v6196 = vadd.f32 %v4999, %v5718
    %v6197 = vadd.f32 %v5000, %v5719
    %v6198 = vadd.f32 %v5001, %v5720
    %v6199 = vadd.f32 %v5002, %v5721
    %v6200 = vadd.f32 %v5003, %v5722
    %v6201 = vadd.f32 %v5004, %v5723
    %v6202 = vadd.f32 %v5005, %v5724
    %v6203 = vadd.f32 %v5006, %v5725
    %v6204 = vadd.f32 %v5007, %v5726
    %v6205 = vadd.f32 %v5008, %v5727
    %v6206 = vadd.f32 %v5009, %v5728
    %v6207 = vadd.f32 %v5010, %v5729
    %v6208 = vadd.f32 %v5011, %v5730
    %v6209 = vadd.f32 %v5012, %v5731
    %v6210 = vadd.f32 %v5013, %v5732
    %v6211 = vadd.f32 %v5014, %v5733
    %v6212 = vadd.f32 %v5015, %v5734
    %v6213 = vadd.f32 %v5016, %v5735
    %v6214 = vadd.f32 %v5017, %v5736
    %v6215 = vadd.f32 %v5018, %v5737
    %v6216 = vadd.f32 %v5019, %v5738
    %v6217 = vadd.f32 %v5020, %v5739
    %v6218 = vadd.f32 %v5021, %v5740
    %v6219 = vadd.f32 %v5022, %v5741
    %v6220 = vadd.f32 %v5023, %v5742
    %v6221 = vadd.f32 %v5024, %v5743
    %v6222 = vadd.f32 %v5025, %v5744
    %v6223 = vadd.f32 %v5026, %v5745
    %v6224 = vadd.f32 %v5027, %v5746
    %v6225 = vadd.f32 %v5028, %v5747
    %v6226 = vadd.f32 %v5029, %v5748
    %v6227 = vadd.f32 %v5030, %v5749
    %v6228 = vadd.f32 %v5031, %v5750
    %v6229 = vadd.f32 %v5032, %v5751
    %v6230 = vadd.f32 %v5033, %v5752
    %v6231 = vadd.f32 %v5034, %v5753
    %v6232 = vadd.f32 %v5035, %v5754
    %v6233 = vadd.f32 %v5036, %v5755
    %v6234 = vadd.f32 %v5037, %v5756
    %v6235 = vadd.f32 %v5038, %v5757
    %v6236 = vadd.f32 %v5039, %v5758
    %v6237 = vadd.f32 %v5040, %v5759
    %v6238 = vadd.f32 %v5041, %v5760
    %v6239 = vadd.f32 %v5042, %v5761
    %v6240 = vadd.f32 %v5043, %v5762
    %v6241 = vadd.f32 %v5044, %v5763
    %v6242 = vadd.f32 %v5045, %v5764
    %v6243 = vadd.f32 %v5046, %v5765
    %v6244 = vadd.f32 %v5047, %v5766
    %v6245 = vadd.f32 %v5048, %v5767
    %v6246 = vadd.f32 %v5049, %v5768
    %v6247 = vadd.f32 %v5050, %v5769
    %v6248 = vadd.f32 %v5051, %v5770
    %v6249 = vadd.f32 %v5052, %v5771
    %v6250 = vadd.f32 %v5053, %v5772
    %v6251 = vadd.f32 %v5054, %v5773
    %v6252 = vadd.f32 %v5055, %v5774
    %v6253 = vadd.f32 %v5056, %v5775
    %v6254 = vadd.f32 %v5057, %v5776
    %v6255 = vadd.f32 %v5058, %v5777
    %v6256 = vadd.f32 %v5059, %v5778
    %v6257 = vadd.f32 %v5060, %v5779
    %v6258 = vadd.f32 %v5061, %v5780
    %v6259 = vadd.f32 %v5062, %v5781
    %v6260 = vadd.f32 %v5063, %v5782
    %v6261 = vadd.f32 %v5064, %v5783
    %v6262 = vadd.f32 %v5065, %v5784
    %v6263 = vadd.f32 %v5066, %v5785
    %v6264 = vadd.f32 %v5067, %v5786
    %v6265 = vadd.f32 %v5068, %v5787
    %v6266 = vadd.f32 %v5069, %v5788
    %v6267 = vadd.f32 %v5070, %v5789
    %v6268 = vadd.f32 %v5071, %v5790
    %v6269 = vadd.f32 %v5072, %v5791
    %v6270 = vadd.f32 %v5073, %v5792
    %v6271 = vadd.f32 %v5074, %v5793
    %v6272 = vadd.f32 %v5075, %v5794
    %v6273 = vadd.f32 %v5076, %v5795
    %v6274 = vadd.f32 %v5077, %v5796
    %v6275 = vadd.f32 %v5078, %v5797
    %v6276 = vadd.f32 %v5079, %v5798
    %v6277 = vadd.f32 %v5080, %v5799
    %v6278 = vadd.f32 %v5081, %v5800
    %v6279 = vadd.f32 %v5082, %v5801
    %v6280 = vadd.f32 %v5083, %v5802
    %v6281 = vadd.f32 %v5084, %v5803
    %v6282 = vadd.f32 %v5085, %v5804
    %v6283 = vadd.f32 %v5086, %v5805
    %v6284 = vadd.f32 %v5087, %v5806
    %v6285 = vadd.f32 %v5088, %v5807
    %v6286 = vadd.f32 %v5089, %v5808
    %v6287 = vadd.f32 %v5090, %v5809
    %v6288 = vadd.f32 %v5091, %v5810
    %v6289 = vadd.f32 %v5092, %v5811
    %v6290 = vadd.f32 %v5093, %v5812
    %v6291 = vadd.f32 %v5094, %v5813
    %v6292 = vadd.f32 %v5095, %v5814
    %v6293 = vadd.f32 %v5096, %v5815
    %v6294 = vadd.f32 %v5097, %v5816
    %v6295 = vadd.f32 %v5098, %v5817
    %v6296 = vadd.f32 %v5099, %v5818
    %v6297 = vadd.f32 %v5100, %v5819
    %v6298 = vadd.f32 %v5101, %v5820
    %v6299 = vadd.f32 %v5102, %v5821
    %v6300 = vadd.f32 %v5103, %v5822
    %v6301 = vadd.f32 %v5104, %v5823
    %v6302 = vadd.f32 %v5105, %v5824
    %v6303 = vadd.f32 %v5106, %v5825
    %v6304 = vadd.f32 %v5107, %v5826
    %v6305 = vadd.f32 %v5108, %v5827
    %v6306 = vadd.f32 %v5109, %v5828
    %v6307 = vadd.f32 %v5110, %v5829
    %v6308 = vadd.f32 %v5111, %v5830
    %v6309 = vadd.f32 %v5112, %v5831
    %v6310 = vadd.f32 %v5113, %v5832
    %v6311 = vadd.f32 %v5114, %v5833
    %v6312 = vadd.f32 %v5115, %v5834
    %v6313 = vadd.f32 %v5116, %v5835
    %v6314 = vadd.f32 %v5117, %v5836
    %v6315 = vadd.f32 %v5118, %v5837
    %v6316 = vadd.f32 %v5119, %v5838
    %v6317 = vadd.f32 %v5120, %v5839
    %v6318 = vadd.f32 %v5121, %v5840
    %v6319 = vadd.f32 %v5122, %v5841
    %v6320 = vadd.f32 %v5123, %v5842
    %v6321 = vadd.f32 %v5124, %v5843
    %v6322 = vadd.f32 %v5125, %v5844
    %v6323 = vadd.f32 %v5126, %v5845
    %v6324 = vadd.f32 %v5127, %v5846
    %v6325 = vadd.f32 %v5128, %v5847
    %v6326 = vadd.f32 %v5129, %v5848
    %v6327 = vadd.f32 %v5130, %v5849
    %v6328 = vadd.f32 %v5131, %v5850
    %v6329 = vadd.f32 %v5132, %v5851
    %v6330 = vadd.f32 %v5133, %v5852
    %v6331 = vadd.f32 %v5134, %v5853
    %v6332 = vadd.f32 %v5135, %v5854
    %v6333 = vadd.f32 %v5136, %v5855
    %v6334 = vadd.f32 %v5137, %v5856
    %v6335 = vadd.f32 %v5138, %v5857
    %v6336 = vadd.f32 %v5139, %v5858
    %v6337 = vadd.f32 %v5140, %v5859
    %v6338 = vadd.f32 %v5141, %v5860
    %v6339 = vadd.f32 %v5142, %v5861
    %v6340 = vadd.f32 %v5143, %v5862
    %v6341 = vadd.f32 %v5144, %v5863
    %v6342 = vadd.f32 %v5145, %v5864
    %v6343 = vadd.f32 %v5146, %v5865
    %v6344 = vadd.f32 %v5147, %v5866
    %v6345 = vadd.f32 %v5148, %v5867
    %v6346 = vadd.f32 %v5149, %v5868
    %v6347 = vadd.f32 %v5150, %v5869
    %v6348 = vadd.f32 %v5151, %v5870
    %v6349 = vadd.f32 %v5152, %v5871
    %v6350 = vadd.f32 %v5153, %v5872
    %v6351 = vadd.f32 %v5154, %v5873
    %v6352 = vadd.f32 %v5155, %v5874
    %v6353 = vadd.f32 %v5156, %v5875
    %v6354 = vadd.f32 %v5157, %v5876
    %v6355 = vadd.f32 %v5158, %v5877
    %v6356 = vadd.f32 %v5159, %v5878
    %v6357 = vadd.f32 %v5160, %v5879
    %v6358 = vadd.f32 %v5161, %v5880
    %v6359 = vadd.f32 %v5162, %v5881
    %v6360 = vadd.f32 %v5163, %v5882
    %v6361 = vadd.f32 %v5164, %v5883
    %v6362 = vadd.f32 %v5165, %v5884
    %v6363 = vadd.f32 %v5166, %v5885
    %v6364 = vadd.f32 %v5167, %v5886
    %v6365 = vadd.f32 %v5168, %v5887
    %v6366 = vadd.f32 %v5169, %v5888
    %v6367 = vadd.f32 %v5170, %v5889
    %v6368 = vadd.f32 %v5171, %v5890
    %v6369 = vadd.f32 %v5172, %v5891
    %v6370 = vadd.f32 %v5173, %v5892
    %v6371 = vadd.f32 %v5174, %v5893
    %v6372 = vadd.f32 %v5175, %v5894
    %v6373 = vadd.f32 %v5176, %v5895
    %v6374 = vadd.f32 %v5177, %v5896
    %v6375 = vadd.f32 %v5178, %v5897
    %v6376 = vadd.f32 %v5179, %v5898
    %v6377 = vadd.f32 %v5180, %v5899
    %v6378 = vadd.f32 %v5181, %v5900
    %v6379 = vadd.f32 %v5182, %v5901
    %v6380 = vadd.f32 %v5183, %v5902
    %v6381 = vadd.f32 %v5184, %v5903
    %v6382 = vadd.f32 %v5185, %v5904
    %v6383 = vadd.f32 %v5186, %v5905
    %v6384 = vadd.f32 %v5187, %v5906
    %v6385 = vadd.f32 %v5188, %v5907
    %s6386 = sld [smem:[#allocation2 + $0x82]]
    %v6387 = vld [vmem:[#allocation6] sm:$0x88]
    %v6388 = vld [vmem:[#allocation6 + $0x8] sm:$0x88]
    %v6389 = vld [vmem:[#allocation6 + $0x10] sm:$0x88]
    %v6390 = vld [vmem:[#allocation6 + $0x18] sm:$0x88]
    %v6391 = vld [vmem:[#allocation6 + $0x20] sm:$0x88]
    %v6392 = vld [vmem:[#allocation6 + $0x28] sm:$0x88]
    %v6393 = vld [vmem:[#allocation6 + $0x30] sm:$0x88]
    %v6394 = vld [vmem:[#allocation6 + $0x38] sm:$0x88]
    %v6395 = vld [vmem:[#allocation6 + $0x40] sm:$0x88]
    %v6396 = vld [vmem:[#allocation6 + $0x48] sm:$0x88]
    %v6397 = vld [vmem:[#allocation6 + $0x50] sm:$0x88]
    %v6398 = vld [vmem:[#allocation6 + $0x58] sm:$0x88]
    %v6399 = vld [vmem:[#allocation6 + $0x60] sm:$0x88]
    %v6400 = vld [vmem:[#allocation6 + $0x68] sm:$0x88]
    %v6401 = vld [vmem:[#allocation6 + $0x70] sm:$0x88]
    %v6402 = vld [vmem:[#allocation6 + $0x78] sm:$0x88]
    %v6403 = vld [vmem:[#allocation6 + $0x80] sm:$0x88]
    %v6404 = vld [vmem:[#allocation6 + $0x88] sm:$0x88]
    %v6405 = vld [vmem:[#allocation6 + $0x90] sm:$0x88]
    %v6406 = vld [vmem:[#allocation6 + $0x98] sm:$0x88]
    %v6407 = vld [vmem:[#allocation6 + $0xa0] sm:$0x88]
    %v6408 = vld [vmem:[#allocation6 + $0xa8] sm:$0x88]
    %v6409 = vld [vmem:[#allocation6 + $0xb0] sm:$0x88]
    %v6410 = vld [vmem:[#allocation6 + $0xb8] sm:$0x88]
    %v6411 = vld [vmem:[#allocation6 + $0xc0] sm:$0x88]
    %v6412 = vld [vmem:[#allocation6 + $0xc8] sm:$0x88]
    %v6413 = vld [vmem:[#allocation6 + $0xd0] sm:$0x88]
    %v6414 = vld [vmem:[#allocation6 + $0xd8] sm:$0x88]
    %v6415 = vld [vmem:[#allocation6 + $0xe0] sm:$0x88]
    %v6416 = vld [vmem:[#allocation6 + $0xe8] sm:$0x88]
    %v6417 = vld [vmem:[#allocation6 + $0xf0] sm:$0x88]
    %v6418 = vld [vmem:[#allocation6 + $0xf8] sm:$0x88]
    %v6419 = vld [vmem:[#allocation6 + $0x100] sm:$0x88]
    %v6420 = vld [vmem:[#allocation6 + $0x108] sm:$0x88]
    %v6421 = vld [vmem:[#allocation6 + $0x110] sm:$0x88]
    %v6422 = vld [vmem:[#allocation6 + $0x118] sm:$0x88]
    %v6423 = vld [vmem:[#allocation6 + $0x120] sm:$0x88]
    %v6424 = vld [vmem:[#allocation6 + $0x128] sm:$0x88]
    %v6425 = vld [vmem:[#allocation6 + $0x130] sm:$0x88]
    %v6426 = vld [vmem:[#allocation6 + $0x138] sm:$0x88]
    %v6427 = vld [vmem:[#allocation6 + $0x140] sm:$0x88]
    %v6428 = vld [vmem:[#allocation6 + $0x148] sm:$0x88]
    %v6429 = vld [vmem:[#allocation6 + $0x150] sm:$0x88]
    %v6430 = vld [vmem:[#allocation6 + $0x158] sm:$0x88]
    %v6431 = vld [vmem:[#allocation6 + $0x160] sm:$0x88]
    %v6432 = vld [vmem:[#allocation6 + $0x168] sm:$0x88]
    %v6433 = vld [vmem:[#allocation6 + $0x170] sm:$0x88]
    %v6434 = vld [vmem:[#allocation6 + $0x178] sm:$0x88]
    %v6435 = vld [vmem:[#allocation6 + $0x180] sm:$0x88]
    %v6436 = vld [vmem:[#allocation6 + $0x188] sm:$0x88]
    %v6437 = vld [vmem:[#allocation6 + $0x190] sm:$0x88]
    %v6438 = vld [vmem:[#allocation6 + $0x198] sm:$0x88]
    %v6439 = vld [vmem:[#allocation6 + $0x1a0] sm:$0x88]
    %v6440 = vld [vmem:[#allocation6 + $0x1a8] sm:$0x88]
    %v6441 = vld [vmem:[#allocation6 + $0x1b0] sm:$0x88]
    %v6442 = vld [vmem:[#allocation6 + $0x1b8] sm:$0x88]
    %v6443 = vld [vmem:[#allocation6 + $0x1c0] sm:$0x88]
    %v6444 = vld [vmem:[#allocation6 + $0x1c8] sm:$0x88]
    %v6445 = vld [vmem:[#allocation6 + $0x1d0] sm:$0x88]
    %v6446 = vld [vmem:[#allocation6 + $0x1d8] sm:$0x88]
    %v6447 = vld [vmem:[#allocation6 + $0x1e0] sm:$0x88]
    %v6448 = vld [vmem:[#allocation6 + $0x1e8] sm:$0x88]
    %v6449 = vld [vmem:[#allocation6 + $0x1f0] sm:$0x88]
    %v6450 = vld [vmem:[#allocation6 + $0x1f8] sm:$0x88]
    %v6451 = vld [vmem:[#allocation6 + $0x200] sm:$0x88]
    %v6452 = vld [vmem:[#allocation6 + $0x208] sm:$0x88]
    %v6453 = vld [vmem:[#allocation6 + $0x210] sm:$0x88]
    %v6454 = vld [vmem:[#allocation6 + $0x218] sm:$0x88]
    %v6455 = vld [vmem:[#allocation6 + $0x220] sm:$0x88]
    %v6456 = vld [vmem:[#allocation6 + $0x228] sm:$0x88]
    %v6457 = vld [vmem:[#allocation6 + $0x230] sm:$0x88]
    %v6458 = vld [vmem:[#allocation6 + $0x238] sm:$0x88]
    %v6459 = vld [vmem:[#allocation6 + $0x240] sm:$0x88]
    %v6460 = vld [vmem:[#allocation6 + $0x248] sm:$0x88]
    %v6461 = vld [vmem:[#allocation6 + $0x250] sm:$0x88]
    %v6462 = vld [vmem:[#allocation6 + $0x258] sm:$0x88]
    %v6463 = vld [vmem:[#allocation6 + $0x260] sm:$0x88]
    %v6464 = vld [vmem:[#allocation6 + $0x268] sm:$0x88]
    %v6465 = vld [vmem:[#allocation6 + $0x270] sm:$0x88]
    %v6466 = vld [vmem:[#allocation6 + $0x278] sm:$0x88]
    %v6467 = vld [vmem:[#allocation6 + $0x280] sm:$0x88]
    %v6468 = vld [vmem:[#allocation6 + $0x288] sm:$0x88]
    %v6469 = vld [vmem:[#allocation6 + $0x290] sm:$0x88]
    %v6470 = vld [vmem:[#allocation6 + $0x298] sm:$0x88]
    %v6471 = vld [vmem:[#allocation6 + $0x2a0] sm:$0x88]
    %v6472 = vld [vmem:[#allocation6 + $0x2a8] sm:$0x88]
    %v6473 = vld [vmem:[#allocation6 + $0x2b0] sm:$0x88]
    %v6474 = vld [vmem:[#allocation6 + $0x2b8] sm:$0x88]
    %v6475 = vld [vmem:[#allocation6 + $0x2c0] sm:$0x88]
    %v6476 = vld [vmem:[#allocation6 + $0x2c8] sm:$0x88]
    %v6477 = vld [vmem:[#allocation6 + $0x2d0] sm:$0x88]
    %v6478 = vld [vmem:[#allocation6 + $0x2d8] sm:$0x88]
    %v6479 = vld [vmem:[#allocation6 + $0x2e0] sm:$0x88]
    %v6480 = vld [vmem:[#allocation6 + $0x2e8] sm:$0x88]
    %v6481 = vld [vmem:[#allocation6 + $0x2f0] sm:$0x88]
    %v6482 = vld [vmem:[#allocation6 + $0x2f8] sm:$0x88]
    %v6483 = vld [vmem:[#allocation6 + $0x300] sm:$0x88]
    %v6484 = vld [vmem:[#allocation6 + $0x308] sm:$0x88]
    %v6485 = vld [vmem:[#allocation6 + $0x310] sm:$0x88]
    %v6486 = vld [vmem:[#allocation6 + $0x318] sm:$0x88]
    %v6487 = vld [vmem:[#allocation6 + $0x320] sm:$0x88]
    %v6488 = vld [vmem:[#allocation6 + $0x328] sm:$0x88]
    %v6489 = vld [vmem:[#allocation6 + $0x330] sm:$0x88]
    %v6490 = vld [vmem:[#allocation6 + $0x338] sm:$0x88]
    %v6491 = vld [vmem:[#allocation6 + $0x340] sm:$0x88]
    %v6492 = vld [vmem:[#allocation6 + $0x348] sm:$0x88]
    %v6493 = vld [vmem:[#allocation6 + $0x350] sm:$0x88]
    %v6494 = vld [vmem:[#allocation6 + $0x358] sm:$0x88]
    %v6495 = vld [vmem:[#allocation6 + $0x360] sm:$0x88]
    %v6496 = vld [vmem:[#allocation6 + $0x368] sm:$0x88]
    %v6497 = vld [vmem:[#allocation6 + $0x370] sm:$0x88]
    %v6498 = vld [vmem:[#allocation6 + $0x378] sm:$0x88]
    %v6499 = vld [vmem:[#allocation6 + $0x380] sm:$0x88]
    %v6500 = vld [vmem:[#allocation6 + $0x388] sm:$0x88]
    %v6501 = vld [vmem:[#allocation6 + $0x390] sm:$0x88]
    %v6502 = vld [vmem:[#allocation6 + $0x398] sm:$0x88]
    %v6503 = vld [vmem:[#allocation6 + $0x3a0] sm:$0x88]
    %v6504 = vld [vmem:[#allocation6 + $0x3a8] sm:$0x88]
    %v6505 = vld [vmem:[#allocation6 + $0x3b0] sm:$0x88]
    %v6506 = vld [vmem:[#allocation6 + $0x3b8] sm:$0x8]
    %v6507 = vunpack.c.l.bf16 %v6387
    %v6508 = vunpack.c.h.bf16 %v6387
    %v6509 = vunpack.c.l.bf16 %v6388
    %v6510 = vunpack.c.h.bf16 %v6388
    %v6511 = vunpack.c.l.bf16 %v6389
    %v6512 = vunpack.c.h.bf16 %v6389
    %v6513 = vunpack.c.l.bf16 %v6390
    %v6514 = vunpack.c.h.bf16 %v6390
    %v6515 = vunpack.c.l.bf16 %v6391
    %v6516 = vunpack.c.h.bf16 %v6391
    %v6517 = vunpack.c.l.bf16 %v6392
    %v6518 = vunpack.c.h.bf16 %v6392
    %v6519 = vunpack.c.l.bf16 %v6393
    %v6520 = vunpack.c.h.bf16 %v6393
    %v6521 = vunpack.c.l.bf16 %v6394
    %v6522 = vunpack.c.h.bf16 %v6394
    %v6523 = vunpack.c.l.bf16 %v6395
    %v6524 = vunpack.c.h.bf16 %v6395
    %v6525 = vunpack.c.l.bf16 %v6396
    %v6526 = vunpack.c.h.bf16 %v6396
    %v6527 = vunpack.c.l.bf16 %v6397
    %v6528 = vunpack.c.h.bf16 %v6397
    %v6529 = vunpack.c.l.bf16 %v6398
    %v6530 = vunpack.c.h.bf16 %v6398
    %v6531 = vunpack.c.l.bf16 %v6399
    %v6532 = vunpack.c.h.bf16 %v6399
    %v6533 = vunpack.c.l.bf16 %v6400
    %v6534 = vunpack.c.h.bf16 %v6400
    %v6535 = vunpack.c.l.bf16 %v6401
    %v6536 = vunpack.c.h.bf16 %v6401
    %v6537 = vunpack.c.l.bf16 %v6402
    %v6538 = vunpack.c.h.bf16 %v6402
    %v6539 = vunpack.c.l.bf16 %v6403
    %v6540 = vunpack.c.h.bf16 %v6403
    %v6541 = vunpack.c.l.bf16 %v6404
    %v6542 = vunpack.c.h.bf16 %v6404
    %v6543 = vunpack.c.l.bf16 %v6405
    %v6544 = vunpack.c.h.bf16 %v6405
    %v6545 = vunpack.c.l.bf16 %v6406
    %v6546 = vunpack.c.h.bf16 %v6406
    %v6547 = vunpack.c.l.bf16 %v6407
    %v6548 = vunpack.c.h.bf16 %v6407
    %v6549 = vunpack.c.l.bf16 %v6408
    %v6550 = vunpack.c.h.bf16 %v6408
    %v6551 = vunpack.c.l.bf16 %v6409
    %v6552 = vunpack.c.h.bf16 %v6409
    %v6553 = vunpack.c.l.bf16 %v6410
    %v6554 = vunpack.c.h.bf16 %v6410
    %v6555 = vunpack.c.l.bf16 %v6411
    %v6556 = vunpack.c.h.bf16 %v6411
    %v6557 = vunpack.c.l.bf16 %v6412
    %v6558 = vunpack.c.h.bf16 %v6412
    %v6559 = vunpack.c.l.bf16 %v6413
    %v6560 = vunpack.c.h.bf16 %v6413
    %v6561 = vunpack.c.l.bf16 %v6414
    %v6562 = vunpack.c.h.bf16 %v6414
    %v6563 = vunpack.c.l.bf16 %v6415
    %v6564 = vunpack.c.h.bf16 %v6415
    %v6565 = vunpack.c.l.bf16 %v6416
    %v6566 = vunpack.c.h.bf16 %v6416
    %v6567 = vunpack.c.l.bf16 %v6417
    %v6568 = vunpack.c.h.bf16 %v6417
    %v6569 = vunpack.c.l.bf16 %v6418
    %v6570 = vunpack.c.h.bf16 %v6418
    %v6571 = vunpack.c.l.bf16 %v6419
    %v6572 = vunpack.c.h.bf16 %v6419
    %v6573 = vunpack.c.l.bf16 %v6420
    %v6574 = vunpack.c.h.bf16 %v6420
    %v6575 = vunpack.c.l.bf16 %v6421
    %v6576 = vunpack.c.h.bf16 %v6421
    %v6577 = vunpack.c.l.bf16 %v6422
    %v6578 = vunpack.c.h.bf16 %v6422
    %v6579 = vunpack.c.l.bf16 %v6423
    %v6580 = vunpack.c.h.bf16 %v6423
    %v6581 = vunpack.c.l.bf16 %v6424
    %v6582 = vunpack.c.h.bf16 %v6424
    %v6583 = vunpack.c.l.bf16 %v6425
    %v6584 = vunpack.c.h.bf16 %v6425
    %v6585 = vunpack.c.l.bf16 %v6426
    %v6586 = vunpack.c.h.bf16 %v6426
    %v6587 = vunpack.c.l.bf16 %v6427
    %v6588 = vunpack.c.h.bf16 %v6427
    %v6589 = vunpack.c.l.bf16 %v6428
    %v6590 = vunpack.c.h.bf16 %v6428
    %v6591 = vunpack.c.l.bf16 %v6429
    %v6592 = vunpack.c.h.bf16 %v6429
    %v6593 = vunpack.c.l.bf16 %v6430
    %v6594 = vunpack.c.h.bf16 %v6430
    %v6595 = vunpack.c.l.bf16 %v6431
    %v6596 = vunpack.c.h.bf16 %v6431
    %v6597 = vunpack.c.l.bf16 %v6432
    %v6598 = vunpack.c.h.bf16 %v6432
    %v6599 = vunpack.c.l.bf16 %v6433
    %v6600 = vunpack.c.h.bf16 %v6433
    %v6601 = vunpack.c.l.bf16 %v6434
    %v6602 = vunpack.c.h.bf16 %v6434
    %v6603 = vunpack.c.l.bf16 %v6435
    %v6604 = vunpack.c.h.bf16 %v6435
    %v6605 = vunpack.c.l.bf16 %v6436
    %v6606 = vunpack.c.h.bf16 %v6436
    %v6607 = vunpack.c.l.bf16 %v6437
    %v6608 = vunpack.c.h.bf16 %v6437
    %v6609 = vunpack.c.l.bf16 %v6438
    %v6610 = vunpack.c.h.bf16 %v6438
    %v6611 = vunpack.c.l.bf16 %v6439
    %v6612 = vunpack.c.h.bf16 %v6439
    %v6613 = vunpack.c.l.bf16 %v6440
    %v6614 = vunpack.c.h.bf16 %v6440
    %v6615 = vunpack.c.l.bf16 %v6441
    %v6616 = vunpack.c.h.bf16 %v6441
    %v6617 = vunpack.c.l.bf16 %v6442
    %v6618 = vunpack.c.h.bf16 %v6442
    %v6619 = vunpack.c.l.bf16 %v6443
    %v6620 = vunpack.c.h.bf16 %v6443
    %v6621 = vunpack.c.l.bf16 %v6444
    %v6622 = vunpack.c.h.bf16 %v6444
    %v6623 = vunpack.c.l.bf16 %v6445
    %v6624 = vunpack.c.h.bf16 %v6445
    %v6625 = vunpack.c.l.bf16 %v6446
    %v6626 = vunpack.c.h.bf16 %v6446
    %v6627 = vunpack.c.l.bf16 %v6447
    %v6628 = vunpack.c.h.bf16 %v6447
    %v6629 = vunpack.c.l.bf16 %v6448
    %v6630 = vunpack.c.h.bf16 %v6448
    %v6631 = vunpack.c.l.bf16 %v6449
    %v6632 = vunpack.c.h.bf16 %v6449
    %v6633 = vunpack.c.l.bf16 %v6450
    %v6634 = vunpack.c.h.bf16 %v6450
    %v6635 = vunpack.c.l.bf16 %v6451
    %v6636 = vunpack.c.h.bf16 %v6451
    %v6637 = vunpack.c.l.bf16 %v6452
    %v6638 = vunpack.c.h.bf16 %v6452
    %v6639 = vunpack.c.l.bf16 %v6453
    %v6640 = vunpack.c.h.bf16 %v6453
    %v6641 = vunpack.c.l.bf16 %v6454
    %v6642 = vunpack.c.h.bf16 %v6454
    %v6643 = vunpack.c.l.bf16 %v6455
    %v6644 = vunpack.c.h.bf16 %v6455
    %v6645 = vunpack.c.l.bf16 %v6456
    %v6646 = vunpack.c.h.bf16 %v6456
    %v6647 = vunpack.c.l.bf16 %v6457
    %v6648 = vunpack.c.h.bf16 %v6457
    %v6649 = vunpack.c.l.bf16 %v6458
    %v6650 = vunpack.c.h.bf16 %v6458
    %v6651 = vunpack.c.l.bf16 %v6459
    %v6652 = vunpack.c.h.bf16 %v6459
    %v6653 = vunpack.c.l.bf16 %v6460
    %v6654 = vunpack.c.h.bf16 %v6460
    %v6655 = vunpack.c.l.bf16 %v6461
    %v6656 = vunpack.c.h.bf16 %v6461
    %v6657 = vunpack.c.l.bf16 %v6462
    %v6658 = vunpack.c.h.bf16 %v6462
    %v6659 = vunpack.c.l.bf16 %v6463
    %v6660 = vunpack.c.h.bf16 %v6463
    %v6661 = vunpack.c.l.bf16 %v6464
    %v6662 = vunpack.c.h.bf16 %v6464
    %v6663 = vunpack.c.l.bf16 %v6465
    %v6664 = vunpack.c.h.bf16 %v6465
    %v6665 = vunpack.c.l.bf16 %v6466
    %v6666 = vunpack.c.h.bf16 %v6466
    %v6667 = vunpack.c.l.bf16 %v6467
    %v6668 = vunpack.c.h.bf16 %v6467
    %v6669 = vunpack.c.l.bf16 %v6468
    %v6670 = vunpack.c.h.bf16 %v6468
    %v6671 = vunpack.c.l.bf16 %v6469
    %v6672 = vunpack.c.h.bf16 %v6469
    %v6673 = vunpack.c.l.bf16 %v6470
    %v6674 = vunpack.c.h.bf16 %v6470
    %v6675 = vunpack.c.l.bf16 %v6471
    %v6676 = vunpack.c.h.bf16 %v6471
    %v6677 = vunpack.c.l.bf16 %v6472
    %v6678 = vunpack.c.h.bf16 %v6472
    %v6679 = vunpack.c.l.bf16 %v6473
    %v6680 = vunpack.c.h.bf16 %v6473
    %v6681 = vunpack.c.l.bf16 %v6474
    %v6682 = vunpack.c.h.bf16 %v6474
    %v6683 = vunpack.c.l.bf16 %v6475
    %v6684 = vunpack.c.h.bf16 %v6475
    %v6685 = vunpack.c.l.bf16 %v6476
    %v6686 = vunpack.c.h.bf16 %v6476
    %v6687 = vunpack.c.l.bf16 %v6477
    %v6688 = vunpack.c.h.bf16 %v6477
    %v6689 = vunpack.c.l.bf16 %v6478
    %v6690 = vunpack.c.h.bf16 %v6478
    %v6691 = vunpack.c.l.bf16 %v6479
    %v6692 = vunpack.c.h.bf16 %v6479
    %v6693 = vunpack.c.l.bf16 %v6480
    %v6694 = vunpack.c.h.bf16 %v6480
    %v6695 = vunpack.c.l.bf16 %v6481
    %v6696 = vunpack.c.h.bf16 %v6481
    %v6697 = vunpack.c.l.bf16 %v6482
    %v6698 = vunpack.c.h.bf16 %v6482
    %v6699 = vunpack.c.l.bf16 %v6483
    %v6700 = vunpack.c.h.bf16 %v6483
    %v6701 = vunpack.c.l.bf16 %v6484
    %v6702 = vunpack.c.h.bf16 %v6484
    %v6703 = vunpack.c.l.bf16 %v6485
    %v6704 = vunpack.c.h.bf16 %v6485
    %v6705 = vunpack.c.l.bf16 %v6486
    %v6706 = vunpack.c.h.bf16 %v6486
    %v6707 = vunpack.c.l.bf16 %v6487
    %v6708 = vunpack.c.h.bf16 %v6487
    %v6709 = vunpack.c.l.bf16 %v6488
    %v6710 = vunpack.c.h.bf16 %v6488
    %v6711 = vunpack.c.l.bf16 %v6489
    %v6712 = vunpack.c.h.bf16 %v6489
    %v6713 = vunpack.c.l.bf16 %v6490
    %v6714 = vunpack.c.h.bf16 %v6490
    %v6715 = vunpack.c.l.bf16 %v6491
    %v6716 = vunpack.c.h.bf16 %v6491
    %v6717 = vunpack.c.l.bf16 %v6492
    %v6718 = vunpack.c.h.bf16 %v6492
    %v6719 = vunpack.c.l.bf16 %v6493
    %v6720 = vunpack.c.h.bf16 %v6493
    %v6721 = vunpack.c.l.bf16 %v6494
    %v6722 = vunpack.c.h.bf16 %v6494
    %v6723 = vunpack.c.l.bf16 %v6495
    %v6724 = vunpack.c.h.bf16 %v6495
    %v6725 = vunpack.c.l.bf16 %v6496
    %v6726 = vunpack.c.h.bf16 %v6496
    %v6727 = vunpack.c.l.bf16 %v6497
    %v6728 = vunpack.c.h.bf16 %v6497
    %v6729 = vunpack.c.l.bf16 %v6498
    %v6730 = vunpack.c.h.bf16 %v6498
    %v6731 = vunpack.c.l.bf16 %v6499
    %v6732 = vunpack.c.h.bf16 %v6499
    %v6733 = vunpack.c.l.bf16 %v6500
    %v6734 = vunpack.c.h.bf16 %v6500
    %v6735 = vunpack.c.l.bf16 %v6501
    %v6736 = vunpack.c.h.bf16 %v6501
    %v6737 = vunpack.c.l.bf16 %v6502
    %v6738 = vunpack.c.h.bf16 %v6502
    %v6739 = vunpack.c.l.bf16 %v6503
    %v6740 = vunpack.c.h.bf16 %v6503
    %v6741 = vunpack.c.l.bf16 %v6504
    %v6742 = vunpack.c.h.bf16 %v6504
    %v6743 = vunpack.c.l.bf16 %v6505
    %v6744 = vunpack.c.h.bf16 %v6505
    %v6745 = vunpack.c.l.bf16 %v6506
    %v6746 = vstv %s6386
    %v6747 = vmul.f32 %v6746, %v6507
    %v6748 = vmul.f32 %v6746, %v6508
    %v6749 = vmul.f32 %v6746, %v6509
    %v6750 = vmul.f32 %v6746, %v6510
    %v6751 = vmul.f32 %v6746, %v6511
    %v6752 = vmul.f32 %v6746, %v6512
    %v6753 = vmul.f32 %v6746, %v6513
    %v6754 = vmul.f32 %v6746, %v6514
    %v6755 = vmul.f32 %v6746, %v6515
    %v6756 = vmul.f32 %v6746, %v6516
    %v6757 = vmul.f32 %v6746, %v6517
    %v6758 = vmul.f32 %v6746, %v6518
    %v6759 = vmul.f32 %v6746, %v6519
    %v6760 = vmul.f32 %v6746, %v6520
    %v6761 = vmul.f32 %v6746, %v6521
    %v6762 = vmul.f32 %v6746, %v6522
    %v6763 = vmul.f32 %v6746, %v6523
    %v6764 = vmul.f32 %v6746, %v6524
    %v6765 = vmul.f32 %v6746, %v6525
    %v6766 = vmul.f32 %v6746, %v6526
    %v6767 = vmul.f32 %v6746, %v6527
    %v6768 = vmul.f32 %v6746, %v6528
    %v6769 = vmul.f32 %v6746, %v6529
    %v6770 = vmul.f32 %v6746, %v6530
    %v6771 = vmul.f32 %v6746, %v6531
    %v6772 = vmul.f32 %v6746, %v6532
    %v6773 = vmul.f32 %v6746, %v6533
    %v6774 = vmul.f32 %v6746, %v6534
    %v6775 = vmul.f32 %v6746, %v6535
    %v6776 = vmul.f32 %v6746, %v6536
    %v6777 = vmul.f32 %v6746, %v6537
    %v6778 = vmul.f32 %v6746, %v6538
    %v6779 = vmul.f32 %v6746, %v6539
    %v6780 = vmul.f32 %v6746, %v6540
    %v6781 = vmul.f32 %v6746, %v6541
    %v6782 = vmul.f32 %v6746, %v6542
    %v6783 = vmul.f32 %v6746, %v6543
    %v6784 = vmul.f32 %v6746, %v6544
    %v6785 = vmul.f32 %v6746, %v6545
    %v6786 = vmul.f32 %v6746, %v6546
    %v6787 = vmul.f32 %v6746, %v6547
    %v6788 = vmul.f32 %v6746, %v6548
    %v6789 = vmul.f32 %v6746, %v6549
    %v6790 = vmul.f32 %v6746, %v6550
    %v6791 = vmul.f32 %v6746, %v6551
    %v6792 = vmul.f32 %v6746, %v6552
    %v6793 = vmul.f32 %v6746, %v6553
    %v6794 = vmul.f32 %v6746, %v6554
    %v6795 = vmul.f32 %v6746, %v6555
    %v6796 = vmul.f32 %v6746, %v6556
    %v6797 = vmul.f32 %v6746, %v6557
    %v6798 = vmul.f32 %v6746, %v6558
    %v6799 = vmul.f32 %v6746, %v6559
    %v6800 = vmul.f32 %v6746, %v6560
    %v6801 = vmul.f32 %v6746, %v6561
    %v6802 = vmul.f32 %v6746, %v6562
    %v6803 = vmul.f32 %v6746, %v6563
    %v6804 = vmul.f32 %v6746, %v6564
    %v6805 = vmul.f32 %v6746, %v6565
    %v6806 = vmul.f32 %v6746, %v6566
    %v6807 = vmul.f32 %v6746, %v6567
    %v6808 = vmul.f32 %v6746, %v6568
    %v6809 = vmul.f32 %v6746, %v6569
    %v6810 = vmul.f32 %v6746, %v6570
    %v6811 = vmul.f32 %v6746, %v6571
    %v6812 = vmul.f32 %v6746, %v6572
    %v6813 = vmul.f32 %v6746, %v6573
    %v6814 = vmul.f32 %v6746, %v6574
    %v6815 = vmul.f32 %v6746, %v6575
    %v6816 = vmul.f32 %v6746, %v6576
    %v6817 = vmul.f32 %v6746, %v6577
    %v6818 = vmul.f32 %v6746, %v6578
    %v6819 = vmul.f32 %v6746, %v6579
    %v6820 = vmul.f32 %v6746, %v6580
    %v6821 = vmul.f32 %v6746, %v6581
    %v6822 = vmul.f32 %v6746, %v6582
    %v6823 = vmul.f32 %v6746, %v6583
    %v6824 = vmul.f32 %v6746, %v6584
    %v6825 = vmul.f32 %v6746, %v6585
    %v6826 = vmul.f32 %v6746, %v6586
    %v6827 = vmul.f32 %v6746, %v6587
    %v6828 = vmul.f32 %v6746, %v6588
    %v6829 = vmul.f32 %v6746, %v6589
    %v6830 = vmul.f32 %v6746, %v6590
    %v6831 = vmul.f32 %v6746, %v6591
    %v6832 = vmul.f32 %v6746, %v6592
    %v6833 = vmul.f32 %v6746, %v6593
    %v6834 = vmul.f32 %v6746, %v6594
    %v6835 = vmul.f32 %v6746, %v6595
    %v6836 = vmul.f32 %v6746, %v6596
    %v6837 = vmul.f32 %v6746, %v6597
    %v6838 = vmul.f32 %v6746, %v6598
    %v6839 = vmul.f32 %v6746, %v6599
    %v6840 = vmul.f32 %v6746, %v6600
    %v6841 = vmul.f32 %v6746, %v6601
    %v6842 = vmul.f32 %v6746, %v6602
    %v6843 = vmul.f32 %v6746, %v6603
    %v6844 = vmul.f32 %v6746, %v6604
    %v6845 = vmul.f32 %v6746, %v6605
    %v6846 = vmul.f32 %v6746, %v6606
    %v6847 = vmul.f32 %v6746, %v6607
    %v6848 = vmul.f32 %v6746, %v6608
    %v6849 = vmul.f32 %v6746, %v6609
    %v6850 = vmul.f32 %v6746, %v6610
    %v6851 = vmul.f32 %v6746, %v6611
    %v6852 = vmul.f32 %v6746, %v6612
    %v6853 = vmul.f32 %v6746, %v6613
    %v6854 = vmul.f32 %v6746, %v6614
    %v6855 = vmul.f32 %v6746, %v6615
    %v6856 = vmul.f32 %v6746, %v6616
    %v6857 = vmul.f32 %v6746, %v6617
    %v6858 = vmul.f32 %v6746, %v6618
    %v6859 = vmul.f32 %v6746, %v6619
    %v6860 = vmul.f32 %v6746, %v6620
    %v6861 = vmul.f32 %v6746, %v6621
    %v6862 = vmul.f32 %v6746, %v6622
    %v6863 = vmul.f32 %v6746, %v6623
    %v6864 = vmul.f32 %v6746, %v6624
    %v6865 = vmul.f32 %v6746, %v6625
    %v6866 = vmul.f32 %v6746, %v6626
    %v6867 = vmul.f32 %v6746, %v6627
    %v6868 = vmul.f32 %v6746, %v6628
    %v6869 = vmul.f32 %v6746, %v6629
    %v6870 = vmul.f32 %v6746, %v6630
    %v6871 = vmul.f32 %v6746, %v6631
    %v6872 = vmul.f32 %v6746, %v6632
    %v6873 = vmul.f32 %v6746, %v6633
    %v6874 = vmul.f32 %v6746, %v6634
    %v6875 = vmul.f32 %v6746, %v6635
    %v6876 = vmul.f32 %v6746, %v6636
    %v6877 = vmul.f32 %v6746, %v6637
    %v6878 = vmul.f32 %v6746, %v6638
    %v6879 = vmul.f32 %v6746, %v6639
    %v6880 = vmul.f32 %v6746, %v6640
    %v6881 = vmul.f32 %v6746, %v6641
    %v6882 = vmul.f32 %v6746, %v6642
    %v6883 = vmul.f32 %v6746, %v6643
    %v6884 = vmul.f32 %v6746, %v6644
    %v6885 = vmul.f32 %v6746, %v6645
    %v6886 = vmul.f32 %v6746, %v6646
    %v6887 = vmul.f32 %v6746, %v6647
    %v6888 = vmul.f32 %v6746, %v6648
    %v6889 = vmul.f32 %v6746, %v6649
    %v6890 = vmul.f32 %v6746, %v6650
    %v6891 = vmul.f32 %v6746, %v6651
    %v6892 = vmul.f32 %v6746, %v6652
    %v6893 = vmul.f32 %v6746, %v6653
    %v6894 = vmul.f32 %v6746, %v6654
    %v6895 = vmul.f32 %v6746, %v6655
    %v6896 = vmul.f32 %v6746, %v6656
    %v6897 = vmul.f32 %v6746, %v6657
    %v6898 = vmul.f32 %v6746, %v6658
    %v6899 = vmul.f32 %v6746, %v6659
    %v6900 = vmul.f32 %v6746, %v6660
    %v6901 = vmul.f32 %v6746, %v6661
    %v6902 = vmul.f32 %v6746, %v6662
    %v6903 = vmul.f32 %v6746, %v6663
    %v6904 = vmul.f32 %v6746, %v6664
    %v6905 = vmul.f32 %v6746, %v6665
    %v6906 = vmul.f32 %v6746, %v6666
    %v6907 = vmul.f32 %v6746, %v6667
    %v6908 = vmul.f32 %v6746, %v6668
    %v6909 = vmul.f32 %v6746, %v6669
    %v6910 = vmul.f32 %v6746, %v6670
    %v6911 = vmul.f32 %v6746, %v6671
    %v6912 = vmul.f32 %v6746, %v6672
    %v6913 = vmul.f32 %v6746, %v6673
    %v6914 = vmul.f32 %v6746, %v6674
    %v6915 = vmul.f32 %v6746, %v6675
    %v6916 = vmul.f32 %v6746, %v6676
    %v6917 = vmul.f32 %v6746, %v6677
    %v6918 = vmul.f32 %v6746, %v6678
    %v6919 = vmul.f32 %v6746, %v6679
    %v6920 = vmul.f32 %v6746, %v6680
    %v6921 = vmul.f32 %v6746, %v6681
    %v6922 = vmul.f32 %v6746, %v6682
    %v6923 = vmul.f32 %v6746, %v6683
    %v6924 = vmul.f32 %v6746, %v6684
    %v6925 = vmul.f32 %v6746, %v6685
    %v6926 = vmul.f32 %v6746, %v6686
    %v6927 = vmul.f32 %v6746, %v6687
    %v6928 = vmul.f32 %v6746, %v6688
    %v6929 = vmul.f32 %v6746, %v6689
    %v6930 = vmul.f32 %v6746, %v6690
    %v6931 = vmul.f32 %v6746, %v6691
    %v6932 = vmul.f32 %v6746, %v6692
    %v6933 = vmul.f32 %v6746, %v6693
    %v6934 = vmul.f32 %v6746, %v6694
    %v6935 = vmul.f32 %v6746, %v6695
    %v6936 = vmul.f32 %v6746, %v6696
    %v6937 = vmul.f32 %v6746, %v6697
    %v6938 = vmul.f32 %v6746, %v6698
    %v6939 = vmul.f32 %v6746, %v6699
    %v6940 = vmul.f32 %v6746, %v6700
    %v6941 = vmul.f32 %v6746, %v6701
    %v6942 = vmul.f32 %v6746, %v6702
    %v6943 = vmul.f32 %v6746, %v6703
    %v6944 = vmul.f32 %v6746, %v6704
    %v6945 = vmul.f32 %v6746, %v6705
    %v6946 = vmul.f32 %v6746, %v6706
    %v6947 = vmul.f32 %v6746, %v6707
    %v6948 = vmul.f32 %v6746, %v6708
    %v6949 = vmul.f32 %v6746, %v6709
    %v6950 = vmul.f32 %v6746, %v6710
    %v6951 = vmul.f32 %v6746, %v6711
    %v6952 = vmul.f32 %v6746, %v6712
    %v6953 = vmul.f32 %v6746, %v6713
    %v6954 = vmul.f32 %v6746, %v6714
    %v6955 = vmul.f32 %v6746, %v6715
    %v6956 = vmul.f32 %v6746, %v6716
    %v6957 = vmul.f32 %v6746, %v6717
    %v6958 = vmul.f32 %v6746, %v6718
    %v6959 = vmul.f32 %v6746, %v6719
    %v6960 = vmul.f32 %v6746, %v6720
    %v6961 = vmul.f32 %v6746, %v6721
    %v6962 = vmul.f32 %v6746, %v6722
    %v6963 = vmul.f32 %v6746, %v6723
    %v6964 = vmul.f32 %v6746, %v6724
    %v6965 = vmul.f32 %v6746, %v6725
    %v6966 = vmul.f32 %v6746, %v6726
    %v6967 = vmul.f32 %v6746, %v6727
    %v6968 = vmul.f32 %v6746, %v6728
    %v6969 = vmul.f32 %v6746, %v6729
    %v6970 = vmul.f32 %v6746, %v6730
    %v6971 = vmul.f32 %v6746, %v6731
    %v6972 = vmul.f32 %v6746, %v6732
    %v6973 = vmul.f32 %v6746, %v6733
    %v6974 = vmul.f32 %v6746, %v6734
    %v6975 = vmul.f32 %v6746, %v6735
    %v6976 = vmul.f32 %v6746, %v6736
    %v6977 = vmul.f32 %v6746, %v6737
    %v6978 = vmul.f32 %v6746, %v6738
    %v6979 = vmul.f32 %v6746, %v6739
    %v6980 = vmul.f32 %v6746, %v6740
    %v6981 = vmul.f32 %v6746, %v6741
    %v6982 = vmul.f32 %v6746, %v6742
    %v6983 = vmul.f32 %v6746, %v6743
    %v6984 = vmul.f32 %v6746, %v6744
    %v6985 = vmul.f32 %v6746, %v6745
    %v7225 = vrot.slane %v6747, 2
    %v7226 = vrot.slane %v6748, 2
    %v7227 = vrot.slane %v6749, 2
    %v7228 = vrot.slane %v6750, 2
    %v7229 = vrot.slane %v6751, 2
    %v7230 = vrot.slane %v6752, 2
    %v7231 = vrot.slane %v6753, 2
    %v7232 = vrot.slane %v6754, 2
    %v7233 = vrot.slane %v6755, 2
    %v7234 = vrot.slane %v6756, 2
    %v7235 = vrot.slane %v6757, 2
    %v7236 = vrot.slane %v6758, 2
    %v7237 = vrot.slane %v6759, 2
    %v7238 = vrot.slane %v6760, 2
    %v7239 = vrot.slane %v6761, 2
    %v7240 = vrot.slane %v6762, 2
    %v7241 = vrot.slane %v6763, 2
    %v7242 = vrot.slane %v6764, 2
    %v7243 = vrot.slane %v6765, 2
    %v7244 = vrot.slane %v6766, 2
    %v7245 = vrot.slane %v6767, 2
    %v7246 = vrot.slane %v6768, 2
    %v7247 = vrot.slane %v6769, 2
    %v7248 = vrot.slane %v6770, 2
    %v7249 = vrot.slane %v6771, 2
    %v7250 = vrot.slane %v6772, 2
    %v7251 = vrot.slane %v6773, 2
    %v7252 = vrot.slane %v6774, 2
    %v7253 = vrot.slane %v6775, 2
    %v7254 = vrot.slane %v6776, 2
    %v7255 = vrot.slane %v6777, 2
    %v7256 = vrot.slane %v6778, 2
    %v7257 = vrot.slane %v6779, 2
    %v7258 = vrot.slane %v6780, 2
    %v7259 = vrot.slane %v6781, 2
    %v7260 = vrot.slane %v6782, 2
    %v7261 = vrot.slane %v6783, 2
    %v7262 = vrot.slane %v6784, 2
    %v7263 = vrot.slane %v6785, 2
    %v7264 = vrot.slane %v6786, 2
    %v7265 = vrot.slane %v6787, 2
    %v7266 = vrot.slane %v6788, 2
    %v7267 = vrot.slane %v6789, 2
    %v7268 = vrot.slane %v6790, 2
    %v7269 = vrot.slane %v6791, 2
    %v7270 = vrot.slane %v6792, 2
    %v7271 = vrot.slane %v6793, 2
    %v7272 = vrot.slane %v6794, 2
    %v7273 = vrot.slane %v6795, 2
    %v7274 = vrot.slane %v6796, 2
    %v7275 = vrot.slane %v6797, 2
    %v7276 = vrot.slane %v6798, 2
    %v7277 = vrot.slane %v6799, 2
    %v7278 = vrot.slane %v6800, 2
    %v7279 = vrot.slane %v6801, 2
    %v7280 = vrot.slane %v6802, 2
    %v7281 = vrot.slane %v6803, 2
    %v7282 = vrot.slane %v6804, 2
    %v7283 = vrot.slane %v6805, 2
    %v7284 = vrot.slane %v6806, 2
    %v7285 = vrot.slane %v6807, 2
    %v7286 = vrot.slane %v6808, 2
    %v7287 = vrot.slane %v6809, 2
    %v7288 = vrot.slane %v6810, 2
    %v7289 = vrot.slane %v6811, 2
    %v7290 = vrot.slane %v6812, 2
    %v7291 = vrot.slane %v6813, 2
    %v7292 = vrot.slane %v6814, 2
    %v7293 = vrot.slane %v6815, 2
    %v7294 = vrot.slane %v6816, 2
    %v7295 = vrot.slane %v6817, 2
    %v7296 = vrot.slane %v6818, 2
    %v7297 = vrot.slane %v6819, 2
    %v7298 = vrot.slane %v6820, 2
    %v7299 = vrot.slane %v6821, 2
    %v7300 = vrot.slane %v6822, 2
    %v7301 = vrot.slane %v6823, 2
    %v7302 = vrot.slane %v6824, 2
    %v7303 = vrot.slane %v6825, 2
    %v7304 = vrot.slane %v6826, 2
    %v7305 = vrot.slane %v6827, 2
    %v7306 = vrot.slane %v6828, 2
    %v7307 = vrot.slane %v6829, 2
    %v7308 = vrot.slane %v6830, 2
    %v7309 = vrot.slane %v6831, 2
    %v7310 = vrot.slane %v6832, 2
    %v7311 = vrot.slane %v6833, 2
    %v7312 = vrot.slane %v6834, 2
    %v7313 = vrot.slane %v6835, 2
    %v7314 = vrot.slane %v6836, 2
    %v7315 = vrot.slane %v6837, 2
    %v7316 = vrot.slane %v6838, 2
    %v7317 = vrot.slane %v6839, 2
    %v7318 = vrot.slane %v6840, 2
    %v7319 = vrot.slane %v6841, 2
    %v7320 = vrot.slane %v6842, 2
    %v7321 = vrot.slane %v6843, 2
    %v7322 = vrot.slane %v6844, 2
    %v7323 = vrot.slane %v6845, 2
    %v7324 = vrot.slane %v6846, 2
    %v7325 = vrot.slane %v6847, 2
    %v7326 = vrot.slane %v6848, 2
    %v7327 = vrot.slane %v6849, 2
    %v7328 = vrot.slane %v6850, 2
    %v7329 = vrot.slane %v6851, 2
    %v7330 = vrot.slane %v6852, 2
    %v7331 = vrot.slane %v6853, 2
    %v7332 = vrot.slane %v6854, 2
    %v7333 = vrot.slane %v6855, 2
    %v7334 = vrot.slane %v6856, 2
    %v7335 = vrot.slane %v6857, 2
    %v7336 = vrot.slane %v6858, 2
    %v7337 = vrot.slane %v6859, 2
    %v7338 = vrot.slane %v6860, 2
    %v7339 = vrot.slane %v6861, 2
    %v7340 = vrot.slane %v6862, 2
    %v7341 = vrot.slane %v6863, 2
    %v7342 = vrot.slane %v6864, 2
    %v7343 = vrot.slane %v6865, 2
    %v7344 = vrot.slane %v6866, 2
    %v7345 = vrot.slane %v6867, 2
    %v7346 = vrot.slane %v6868, 2
    %v7347 = vrot.slane %v6869, 2
    %v7348 = vrot.slane %v6870, 2
    %v7349 = vrot.slane %v6871, 2
    %v7350 = vrot.slane %v6872, 2
    %v7351 = vrot.slane %v6873, 2
    %v7352 = vrot.slane %v6874, 2
    %v7353 = vrot.slane %v6875, 2
    %v7354 = vrot.slane %v6876, 2
    %v7355 = vrot.slane %v6877, 2
    %v7356 = vrot.slane %v6878, 2
    %v7357 = vrot.slane %v6879, 2
    %v7358 = vrot.slane %v6880, 2
    %v7359 = vrot.slane %v6881, 2
    %v7360 = vrot.slane %v6882, 2
    %v7361 = vrot.slane %v6883, 2
    %v7362 = vrot.slane %v6884, 2
    %v7363 = vrot.slane %v6885, 2
    %v7364 = vrot.slane %v6886, 2
    %v7365 = vrot.slane %v6887, 2
    %v7366 = vrot.slane %v6888, 2
    %v7367 = vrot.slane %v6889, 2
    %v7368 = vrot.slane %v6890, 2
    %v7369 = vrot.slane %v6891, 2
    %v7370 = vrot.slane %v6892, 2
    %v7371 = vrot.slane %v6893, 2
    %v7372 = vrot.slane %v6894, 2
    %v7373 = vrot.slane %v6895, 2
    %v7374 = vrot.slane %v6896, 2
    %v7375 = vrot.slane %v6897, 2
    %v7376 = vrot.slane %v6898, 2
    %v7377 = vrot.slane %v6899, 2
    %v7378 = vrot.slane %v6900, 2
    %v7379 = vrot.slane %v6901, 2
    %v7380 = vrot.slane %v6902, 2
    %v7381 = vrot.slane %v6903, 2
    %v7382 = vrot.slane %v6904, 2
    %v7383 = vrot.slane %v6905, 2
    %v7384 = vrot.slane %v6906, 2
    %v7385 = vrot.slane %v6907, 2
    %v7386 = vrot.slane %v6908, 2
    %v7387 = vrot.slane %v6909, 2
    %v7388 = vrot.slane %v6910, 2
    %v7389 = vrot.slane %v6911, 2
    %v7390 = vrot.slane %v6912, 2
    %v7391 = vrot.slane %v6913, 2
    %v7392 = vrot.slane %v6914, 2
    %v7393 = vrot.slane %v6915, 2
    %v7394 = vrot.slane %v6916, 2
    %v7395 = vrot.slane %v6917, 2
    %v7396 = vrot.slane %v6918, 2
    %v7397 = vrot.slane %v6919, 2
    %v7398 = vrot.slane %v6920, 2
    %v7399 = vrot.slane %v6921, 2
    %v7400 = vrot.slane %v6922, 2
    %v7401 = vrot.slane %v6923, 2
    %v7402 = vrot.slane %v6924, 2
    %v7403 = vrot.slane %v6925, 2
    %v7404 = vrot.slane %v6926, 2
    %v7405 = vrot.slane %v6927, 2
    %v7406 = vrot.slane %v6928, 2
    %v7407 = vrot.slane %v6929, 2
    %v7408 = vrot.slane %v6930, 2
    %v7409 = vrot.slane %v6931, 2
    %v7410 = vrot.slane %v6932, 2
    %v7411 = vrot.slane %v6933, 2
    %v7412 = vrot.slane %v6934, 2
    %v7413 = vrot.slane %v6935, 2
    %v7414 = vrot.slane %v6936, 2
    %v7415 = vrot.slane %v6937, 2
    %v7416 = vrot.slane %v6938, 2
    %v7417 = vrot.slane %v6939, 2
    %v7418 = vrot.slane %v6940, 2
    %v7419 = vrot.slane %v6941, 2
    %v7420 = vrot.slane %v6942, 2
    %v7421 = vrot.slane %v6943, 2
    %v7422 = vrot.slane %v6944, 2
    %v7423 = vrot.slane %v6945, 2
    %v7424 = vrot.slane %v6946, 2
    %v7425 = vrot.slane %v6947, 2
    %v7426 = vrot.slane %v6948, 2
    %v7427 = vrot.slane %v6949, 2
    %v7428 = vrot.slane %v6950, 2
    %v7429 = vrot.slane %v6951, 2
    %v7430 = vrot.slane %v6952, 2
    %v7431 = vrot.slane %v6953, 2
    %v7432 = vrot.slane %v6954, 2
    %v7433 = vrot.slane %v6955, 2
    %v7434 = vrot.slane %v6956, 2
    %v7435 = vrot.slane %v6957, 2
    %v7436 = vrot.slane %v6958, 2
    %v7437 = vrot.slane %v6959, 2
    %v7438 = vrot.slane %v6960, 2
    %v7439 = vrot.slane %v6961, 2
    %v7440 = vrot.slane %v6962, 2
    %v7441 = vrot.slane %v6963, 2
    %v7442 = vrot.slane %v6964, 2
    %v7443 = vrot.slane %v6965, 2
    %v7444 = vrot.slane %v6966, 2
    %v7445 = vrot.slane %v6967, 2
    %v7446 = vrot.slane %v6968, 2
    %v7447 = vrot.slane %v6969, 2
    %v7448 = vrot.slane %v6970, 2
    %v7449 = vrot.slane %v6971, 2
    %v7450 = vrot.slane %v6972, 2
    %v7451 = vrot.slane %v6973, 2
    %v7452 = vrot.slane %v6974, 2
    %v7453 = vrot.slane %v6975, 2
    %v7454 = vrot.slane %v6976, 2
    %v7455 = vrot.slane %v6977, 2
    %v7456 = vrot.slane %v6978, 2
    %v7457 = vrot.slane %v6979, 2
    %v7458 = vrot.slane %v6980, 2
    %v7459 = vrot.slane %v6981, 2
    %v7460 = vrot.slane %v6982, 2
    %v7461 = vrot.slane %v6983, 2
    %v7462 = vrot.slane %v6984, 2
    %v7463 = vrot.slane %v6985, 2
    %v7703 = vadd.f32 %v6147, %v7225
    %v7704 = vadd.f32 %v6148, %v7226
    %v7705 = vadd.f32 %v6149, %v7227
    %v7706 = vadd.f32 %v6150, %v7228
    %v7707 = vadd.f32 %v6151, %v7229
    %v7708 = vadd.f32 %v6152, %v7230
    %v7709 = vadd.f32 %v6153, %v7231
    %v7710 = vadd.f32 %v6154, %v7232
    %v7711 = vadd.f32 %v6155, %v7233
    %v7712 = vadd.f32 %v6156, %v7234
    %v7713 = vadd.f32 %v6157, %v7235
    %v7714 = vadd.f32 %v6158, %v7236
    %v7715 = vadd.f32 %v6159, %v7237
    %v7716 = vadd.f32 %v6160, %v7238
    %v7717 = vadd.f32 %v6161, %v7239
    %v7718 = vadd.f32 %v6162, %v7240
    %v7719 = vadd.f32 %v6163, %v7241
    %v7720 = vadd.f32 %v6164, %v7242
    %v7721 = vadd.f32 %v6165, %v7243
    %v7722 = vadd.f32 %v6166, %v7244
    %v7723 = vadd.f32 %v6167, %v7245
    %v7724 = vadd.f32 %v6168, %v7246
    %v7725 = vadd.f32 %v6169, %v7247
    %v7726 = vadd.f32 %v6170, %v7248
    %v7727 = vadd.f32 %v6171, %v7249
    %v7728 = vadd.f32 %v6172, %v7250
    %v7729 = vadd.f32 %v6173, %v7251
    %v7730 = vadd.f32 %v6174, %v7252
    %v7731 = vadd.f32 %v6175, %v7253
    %v7732 = vadd.f32 %v6176, %v7254
    %v7733 = vadd.f32 %v6177, %v7255
    %v7734 = vadd.f32 %v6178, %v7256
    %v7735 = vadd.f32 %v6179, %v7257
    %v7736 = vadd.f32 %v6180, %v7258
    %v7737 = vadd.f32 %v6181, %v7259
    %v7738 = vadd.f32 %v6182, %v7260
    %v7739 = vadd.f32 %v6183, %v7261
    %v7740 = vadd.f32 %v6184, %v7262
    %v7741 = vadd.f32 %v6185, %v7263
    %v7742 = vadd.f32 %v6186, %v7264
    %v7743 = vadd.f32 %v6187, %v7265
    %v7744 = vadd.f32 %v6188, %v7266
    %v7745 = vadd.f32 %v6189, %v7267
    %v7746 = vadd.f32 %v6190, %v7268
    %v7747 = vadd.f32 %v6191, %v7269
    %v7748 = vadd.f32 %v6192, %v7270
    %v7749 = vadd.f32 %v6193, %v7271
    %v7750 = vadd.f32 %v6194, %v7272
    %v7751 = vadd.f32 %v6195, %v7273
    %v7752 = vadd.f32 %v6196, %v7274
    %v7753 = vadd.f32 %v6197, %v7275
    %v7754 = vadd.f32 %v6198, %v7276
    %v7755 = vadd.f32 %v6199, %v7277
    %v7756 = vadd.f32 %v6200, %v7278
    %v7757 = vadd.f32 %v6201, %v7279
    %v7758 = vadd.f32 %v6202, %v7280
    %v7759 = vadd.f32 %v6203, %v7281
    %v7760 = vadd.f32 %v6204, %v7282
    %v7761 = vadd.f32 %v6205, %v7283
    %v7762 = vadd.f32 %v6206, %v7284
    %v7763 = vadd.f32 %v6207, %v7285
    %v7764 = vadd.f32 %v6208, %v7286
    %v7765 = vadd.f32 %v6209, %v7287
    %v7766 = vadd.f32 %v6210, %v7288
    %v7767 = vadd.f32 %v6211, %v7289
    %v7768 = vadd.f32 %v6212, %v7290
    %v7769 = vadd.f32 %v6213, %v7291
    %v7770 = vadd.f32 %v6214, %v7292
    %v7771 = vadd.f32 %v6215, %v7293
    %v7772 = vadd.f32 %v6216, %v7294
    %v7773 = vadd.f32 %v6217, %v7295
    %v7774 = vadd.f32 %v6218, %v7296
    %v7775 = vadd.f32 %v6219, %v7297
    %v7776 = vadd.f32 %v6220, %v7298
    %v7777 = vadd.f32 %v6221, %v7299
    %v7778 = vadd.f32 %v6222, %v7300
    %v7779 = vadd.f32 %v6223, %v7301
    %v7780 = vadd.f32 %v6224, %v7302
    %v7781 = vadd.f32 %v6225, %v7303
    %v7782 = vadd.f32 %v6226, %v7304
    %v7783 = vadd.f32 %v6227, %v7305
    %v7784 = vadd.f32 %v6228, %v7306
    %v7785 = vadd.f32 %v6229, %v7307
    %v7786 = vadd.f32 %v6230, %v7308
    %v7787 = vadd.f32 %v6231, %v7309
    %v7788 = vadd.f32 %v6232, %v7310
    %v7789 = vadd.f32 %v6233, %v7311
    %v7790 = vadd.f32 %v6234, %v7312
    %v7791 = vadd.f32 %v6235, %v7313
    %v7792 = vadd.f32 %v6236, %v7314
    %v7793 = vadd.f32 %v6237, %v7315
    %v7794 = vadd.f32 %v6238, %v7316
    %v7795 = vadd.f32 %v6239, %v7317
    %v7796 = vadd.f32 %v6240, %v7318
    %v7797 = vadd.f32 %v6241, %v7319
    %v7798 = vadd.f32 %v6242, %v7320
    %v7799 = vadd.f32 %v6243, %v7321
    %v7800 = vadd.f32 %v6244, %v7322
    %v7801 = vadd.f32 %v6245, %v7323
    %v7802 = vadd.f32 %v6246, %v7324
    %v7803 = vadd.f32 %v6247, %v7325
    %v7804 = vadd.f32 %v6248, %v7326
    %v7805 = vadd.f32 %v6249, %v7327
    %v7806 = vadd.f32 %v6250, %v7328
    %v7807 = vadd.f32 %v6251, %v7329
    %v7808 = vadd.f32 %v6252, %v7330
    %v7809 = vadd.f32 %v6253, %v7331
    %v7810 = vadd.f32 %v6254, %v7332
    %v7811 = vadd.f32 %v6255, %v7333
    %v7812 = vadd.f32 %v6256, %v7334
    %v7813 = vadd.f32 %v6257, %v7335
    %v7814 = vadd.f32 %v6258, %v7336
    %v7815 = vadd.f32 %v6259, %v7337
    %v7816 = vadd.f32 %v6260, %v7338
    %v7817 = vadd.f32 %v6261, %v7339
    %v7818 = vadd.f32 %v6262, %v7340
    %v7819 = vadd.f32 %v6263, %v7341
    %v7820 = vadd.f32 %v6264, %v7342
    %v7821 = vadd.f32 %v6265, %v7343
    %v7822 = vadd.f32 %v6266, %v7344
    %v7823 = vadd.f32 %v6267, %v7345
    %v7824 = vadd.f32 %v6268, %v7346
    %v7825 = vadd.f32 %v6269, %v7347
    %v7826 = vadd.f32 %v6270, %v7348
    %v7827 = vadd.f32 %v6271, %v7349
    %v7828 = vadd.f32 %v6272, %v7350
    %v7829 = vadd.f32 %v6273, %v7351
    %v7830 = vadd.f32 %v6274, %v7352
    %v7831 = vadd.f32 %v6275, %v7353
    %v7832 = vadd.f32 %v6276, %v7354
    %v7833 = vadd.f32 %v6277, %v7355
    %v7834 = vadd.f32 %v6278, %v7356
    %v7835 = vadd.f32 %v6279, %v7357
    %v7836 = vadd.f32 %v6280, %v7358
    %v7837 = vadd.f32 %v6281, %v7359
    %v7838 = vadd.f32 %v6282, %v7360
    %v7839 = vadd.f32 %v6283, %v7361
    %v7840 = vadd.f32 %v6284, %v7362
    %v7841 = vadd.f32 %v6285, %v7363
    %v7842 = vadd.f32 %v6286, %v7364
    %v7843 = vadd.f32 %v6287, %v7365
    %v7844 = vadd.f32 %v6288, %v7366
    %v7845 = vadd.f32 %v6289, %v7367
    %v7846 = vadd.f32 %v6290, %v7368
    %v7847 = vadd.f32 %v6291, %v7369
    %v7848 = vadd.f32 %v6292, %v7370
    %v7849 = vadd.f32 %v6293, %v7371
    %v7850 = vadd.f32 %v6294, %v7372
    %v7851 = vadd.f32 %v6295, %v7373
    %v7852 = vadd.f32 %v6296, %v7374
    %v7853 = vadd.f32 %v6297, %v7375
    %v7854 = vadd.f32 %v6298, %v7376
    %v7855 = vadd.f32 %v6299, %v7377
    %v7856 = vadd.f32 %v6300, %v7378
    %v7857 = vadd.f32 %v6301, %v7379
    %v7858 = vadd.f32 %v6302, %v7380
    %v7859 = vadd.f32 %v6303, %v7381
    %v7860 = vadd.f32 %v6304, %v7382
    %v7861 = vadd.f32 %v6305, %v7383
    %v7862 = vadd.f32 %v6306, %v7384
    %v7863 = vadd.f32 %v6307, %v7385
    %v7864 = vadd.f32 %v6308, %v7386
    %v7865 = vadd.f32 %v6309, %v7387
    %v7866 = vadd.f32 %v6310, %v7388
    %v7867 = vadd.f32 %v6311, %v7389
    %v7868 = vadd.f32 %v6312, %v7390
    %v7869 = vadd.f32 %v6313, %v7391
    %v7870 = vadd.f32 %v6314, %v7392
    %v7871 = vadd.f32 %v6315, %v7393
    %v7872 = vadd.f32 %v6316, %v7394
    %v7873 = vadd.f32 %v6317, %v7395
    %v7874 = vadd.f32 %v6318, %v7396
    %v7875 = vadd.f32 %v6319, %v7397
    %v7876 = vadd.f32 %v6320, %v7398
    %v7877 = vadd.f32 %v6321, %v7399
    %v7878 = vadd.f32 %v6322, %v7400
    %v7879 = vadd.f32 %v6323, %v7401
    %v7880 = vadd.f32 %v6324, %v7402
    %v7881 = vadd.f32 %v6325, %v7403
    %v7882 = vadd.f32 %v6326, %v7404
    %v7883 = vadd.f32 %v6327, %v7405
    %v7884 = vadd.f32 %v6328, %v7406
    %v7885 = vadd.f32 %v6329, %v7407
    %v7886 = vadd.f32 %v6330, %v7408
    %v7887 = vadd.f32 %v6331, %v7409
    %v7888 = vadd.f32 %v6332, %v7410
    %v7889 = vadd.f32 %v6333, %v7411
    %v7890 = vadd.f32 %v6334, %v7412
    %v7891 = vadd.f32 %v6335, %v7413
    %v7892 = vadd.f32 %v6336, %v7414
    %v7893 = vadd.f32 %v6337, %v7415
    %v7894 = vadd.f32 %v6338, %v7416
    %v7895 = vadd.f32 %v6339, %v7417
    %v7896 = vadd.f32 %v6340, %v7418
    %v7897 = vadd.f32 %v6341, %v7419
    %v7898 = vadd.f32 %v6342, %v7420
    %v7899 = vadd.f32 %v6343, %v7421
    %v7900 = vadd.f32 %v6344, %v7422
    %v7901 = vadd.f32 %v6345, %v7423
    %v7902 = vadd.f32 %v6346, %v7424
    %v7903 = vadd.f32 %v6347, %v7425
    %v7904 = vadd.f32 %v6348, %v7426
    %v7905 = vadd.f32 %v6349, %v7427
    %v7906 = vadd.f32 %v6350, %v7428
    %v7907 = vadd.f32 %v6351, %v7429
    %v7908 = vadd.f32 %v6352, %v7430
    %v7909 = vadd.f32 %v6353, %v7431
    %v7910 = vadd.f32 %v6354, %v7432
    %v7911 = vadd.f32 %v6355, %v7433
    %v7912 = vadd.f32 %v6356, %v7434
    %v7913 = vadd.f32 %v6357, %v7435
    %v7914 = vadd.f32 %v6358, %v7436
    %v7915 = vadd.f32 %v6359, %v7437
    %v7916 = vadd.f32 %v6360, %v7438
    %v7917 = vadd.f32 %v6361, %v7439
    %v7918 = vadd.f32 %v6362, %v7440
    %v7919 = vadd.f32 %v6363, %v7441
    %v7920 = vadd.f32 %v6364, %v7442
    %v7921 = vadd.f32 %v6365, %v7443
    %v7922 = vadd.f32 %v6366, %v7444
    %v7923 = vadd.f32 %v6367, %v7445
    %v7924 = vadd.f32 %v6368, %v7446
    %v7925 = vadd.f32 %v6369, %v7447
    %v7926 = vadd.f32 %v6370, %v7448
    %v7927 = vadd.f32 %v6371, %v7449
    %v7928 = vadd.f32 %v6372, %v7450
    %v7929 = vadd.f32 %v6373, %v7451
    %v7930 = vadd.f32 %v6374, %v7452
    %v7931 = vadd.f32 %v6375, %v7453
    %v7932 = vadd.f32 %v6376, %v7454
    %v7933 = vadd.f32 %v6377, %v7455
    %v7934 = vadd.f32 %v6378, %v7456
    %v7935 = vadd.f32 %v6379, %v7457
    %v7936 = vadd.f32 %v6380, %v7458
    %v7937 = vadd.f32 %v6381, %v7459
    %v7938 = vadd.f32 %v6382, %v7460
    %v7939 = vadd.f32 %v6383, %v7461
    %v7940 = vadd.f32 %v6384, %v7462
    %v7941 = vadd.f32 %v6385, %v7463
    %s7942 = sld [smem:[#allocation2 + $0x83]]
    %v7943 = vstv %s7942
    %v7944 = vmul.f32 %v7943, %v6507
    %v7945 = vmul.f32 %v7943, %v6508
    %v7946 = vmul.f32 %v7943, %v6509
    %v7947 = vmul.f32 %v7943, %v6510
    %v7948 = vmul.f32 %v7943, %v6511
    %v7949 = vmul.f32 %v7943, %v6512
    %v7950 = vmul.f32 %v7943, %v6513
    %v7951 = vmul.f32 %v7943, %v6514
    %v7952 = vmul.f32 %v7943, %v6515
    %v7953 = vmul.f32 %v7943, %v6516
    %v7954 = vmul.f32 %v7943, %v6517
    %v7955 = vmul.f32 %v7943, %v6518
    %v7956 = vmul.f32 %v7943, %v6519
    %v7957 = vmul.f32 %v7943, %v6520
    %v7958 = vmul.f32 %v7943, %v6521
    %v7959 = vmul.f32 %v7943, %v6522
    %v7960 = vmul.f32 %v7943, %v6523
    %v7961 = vmul.f32 %v7943, %v6524
    %v7962 = vmul.f32 %v7943, %v6525
    %v7963 = vmul.f32 %v7943, %v6526
    %v7964 = vmul.f32 %v7943, %v6527
    %v7965 = vmul.f32 %v7943, %v6528
    %v7966 = vmul.f32 %v7943, %v6529
    %v7967 = vmul.f32 %v7943, %v6530
    %v7968 = vmul.f32 %v7943, %v6531
    %v7969 = vmul.f32 %v7943, %v6532
    %v7970 = vmul.f32 %v7943, %v6533
    %v7971 = vmul.f32 %v7943, %v6534
    %v7972 = vmul.f32 %v7943, %v6535
    %v7973 = vmul.f32 %v7943, %v6536
    %v7974 = vmul.f32 %v7943, %v6537
    %v7975 = vmul.f32 %v7943, %v6538
    %v7976 = vmul.f32 %v7943, %v6539
    %v7977 = vmul.f32 %v7943, %v6540
    %v7978 = vmul.f32 %v7943, %v6541
    %v7979 = vmul.f32 %v7943, %v6542
    %v7980 = vmul.f32 %v7943, %v6543
    %v7981 = vmul.f32 %v7943, %v6544
    %v7982 = vmul.f32 %v7943, %v6545
    %v7983 = vmul.f32 %v7943, %v6546
    %v7984 = vmul.f32 %v7943, %v6547
    %v7985 = vmul.f32 %v7943, %v6548
    %v7986 = vmul.f32 %v7943, %v6549
    %v7987 = vmul.f32 %v7943, %v6550
    %v7988 = vmul.f32 %v7943, %v6551
    %v7989 = vmul.f32 %v7943, %v6552
    %v7990 = vmul.f32 %v7943, %v6553
    %v7991 = vmul.f32 %v7943, %v6554
    %v7992 = vmul.f32 %v7943, %v6555
    %v7993 = vmul.f32 %v7943, %v6556
    %v7994 = vmul.f32 %v7943, %v6557
    %v7995 = vmul.f32 %v7943, %v6558
    %v7996 = vmul.f32 %v7943, %v6559
    %v7997 = vmul.f32 %v7943, %v6560
    %v7998 = vmul.f32 %v7943, %v6561
    %v7999 = vmul.f32 %v7943, %v6562
    %v8000 = vmul.f32 %v7943, %v6563
    %v8001 = vmul.f32 %v7943, %v6564
    %v8002 = vmul.f32 %v7943, %v6565
    %v8003 = vmul.f32 %v7943, %v6566
    %v8004 = vmul.f32 %v7943, %v6567
    %v8005 = vmul.f32 %v7943, %v6568
    %v8006 = vmul.f32 %v7943, %v6569
    %v8007 = vmul.f32 %v7943, %v6570
    %v8008 = vmul.f32 %v7943, %v6571
    %v8009 = vmul.f32 %v7943, %v6572
    %v8010 = vmul.f32 %v7943, %v6573
    %v8011 = vmul.f32 %v7943, %v6574
    %v8012 = vmul.f32 %v7943, %v6575
    %v8013 = vmul.f32 %v7943, %v6576
    %v8014 = vmul.f32 %v7943, %v6577
    %v8015 = vmul.f32 %v7943, %v6578
    %v8016 = vmul.f32 %v7943, %v6579
    %v8017 = vmul.f32 %v7943, %v6580
    %v8018 = vmul.f32 %v7943, %v6581
    %v8019 = vmul.f32 %v7943, %v6582
    %v8020 = vmul.f32 %v7943, %v6583
    %v8021 = vmul.f32 %v7943, %v6584
    %v8022 = vmul.f32 %v7943, %v6585
    %v8023 = vmul.f32 %v7943, %v6586
    %v8024 = vmul.f32 %v7943, %v6587
    %v8025 = vmul.f32 %v7943, %v6588
    %v8026 = vmul.f32 %v7943, %v6589
    %v8027 = vmul.f32 %v7943, %v6590
    %v8028 = vmul.f32 %v7943, %v6591
    %v8029 = vmul.f32 %v7943, %v6592
    %v8030 = vmul.f32 %v7943, %v6593
    %v8031 = vmul.f32 %v7943, %v6594
    %v8032 = vmul.f32 %v7943, %v6595
    %v8033 = vmul.f32 %v7943, %v6596
    %v8034 = vmul.f32 %v7943, %v6597
    %v8035 = vmul.f32 %v7943, %v6598
    %v8036 = vmul.f32 %v7943, %v6599
    %v8037 = vmul.f32 %v7943, %v6600
    %v8038 = vmul.f32 %v7943, %v6601
    %v8039 = vmul.f32 %v7943, %v6602
    %v8040 = vmul.f32 %v7943, %v6603
    %v8041 = vmul.f32 %v7943, %v6604
    %v8042 = vmul.f32 %v7943, %v6605
    %v8043 = vmul.f32 %v7943, %v6606
    %v8044 = vmul.f32 %v7943, %v6607
    %v8045 = vmul.f32 %v7943, %v6608
    %v8046 = vmul.f32 %v7943, %v6609
    %v8047 = vmul.f32 %v7943, %v6610
    %v8048 = vmul.f32 %v7943, %v6611
    %v8049 = vmul.f32 %v7943, %v6612
    %v8050 = vmul.f32 %v7943, %v6613
    %v8051 = vmul.f32 %v7943, %v6614
    %v8052 = vmul.f32 %v7943, %v6615
    %v8053 = vmul.f32 %v7943, %v6616
    %v8054 = vmul.f32 %v7943, %v6617
    %v8055 = vmul.f32 %v7943, %v6618
    %v8056 = vmul.f32 %v7943, %v6619
    %v8057 = vmul.f32 %v7943, %v6620
    %v8058 = vmul.f32 %v7943, %v6621
    %v8059 = vmul.f32 %v7943, %v6622
    %v8060 = vmul.f32 %v7943, %v6623
    %v8061 = vmul.f32 %v7943, %v6624
    %v8062 = vmul.f32 %v7943, %v6625
    %v8063 = vmul.f32 %v7943, %v6626
    %v8064 = vmul.f32 %v7943, %v6627
    %v8065 = vmul.f32 %v7943, %v6628
    %v8066 = vmul.f32 %v7943, %v6629
    %v8067 = vmul.f32 %v7943, %v6630
    %v8068 = vmul.f32 %v7943, %v6631
    %v8069 = vmul.f32 %v7943, %v6632
    %v8070 = vmul.f32 %v7943, %v6633
    %v8071 = vmul.f32 %v7943, %v6634
    %v8072 = vmul.f32 %v7943, %v6635
    %v8073 = vmul.f32 %v7943, %v6636
    %v8074 = vmul.f32 %v7943, %v6637
    %v8075 = vmul.f32 %v7943, %v6638
    %v8076 = vmul.f32 %v7943, %v6639
    %v8077 = vmul.f32 %v7943, %v6640
    %v8078 = vmul.f32 %v7943, %v6641
    %v8079 = vmul.f32 %v7943, %v6642
    %v8080 = vmul.f32 %v7943, %v6643
    %v8081 = vmul.f32 %v7943, %v6644
    %v8082 = vmul.f32 %v7943, %v6645
    %v8083 = vmul.f32 %v7943, %v6646
    %v8084 = vmul.f32 %v7943, %v6647
    %v8085 = vmul.f32 %v7943, %v6648
    %v8086 = vmul.f32 %v7943, %v6649
    %v8087 = vmul.f32 %v7943, %v6650
    %v8088 = vmul.f32 %v7943, %v6651
    %v8089 = vmul.f32 %v7943, %v6652
    %v8090 = vmul.f32 %v7943, %v6653
    %v8091 = vmul.f32 %v7943, %v6654
    %v8092 = vmul.f32 %v7943, %v6655
    %v8093 = vmul.f32 %v7943, %v6656
    %v8094 = vmul.f32 %v7943, %v6657
    %v8095 = vmul.f32 %v7943, %v6658
    %v8096 = vmul.f32 %v7943, %v6659
    %v8097 = vmul.f32 %v7943, %v6660
    %v8098 = vmul.f32 %v7943, %v6661
    %v8099 = vmul.f32 %v7943, %v6662
    %v8100 = vmul.f32 %v7943, %v6663
    %v8101 = vmul.f32 %v7943, %v6664
    %v8102 = vmul.f32 %v7943, %v6665
    %v8103 = vmul.f32 %v7943, %v6666
    %v8104 = vmul.f32 %v7943, %v6667
    %v8105 = vmul.f32 %v7943, %v6668
    %v8106 = vmul.f32 %v7943, %v6669
    %v8107 = vmul.f32 %v7943, %v6670
    %v8108 = vmul.f32 %v7943, %v6671
    %v8109 = vmul.f32 %v7943, %v6672
    %v8110 = vmul.f32 %v7943, %v6673
    %v8111 = vmul.f32 %v7943, %v6674
    %v8112 = vmul.f32 %v7943, %v6675
    %v8113 = vmul.f32 %v7943, %v6676
    %v8114 = vmul.f32 %v7943, %v6677
    %v8115 = vmul.f32 %v7943, %v6678
    %v8116 = vmul.f32 %v7943, %v6679
    %v8117 = vmul.f32 %v7943, %v6680
    %v8118 = vmul.f32 %v7943, %v6681
    %v8119 = vmul.f32 %v7943, %v6682
    %v8120 = vmul.f32 %v7943, %v6683
    %v8121 = vmul.f32 %v7943, %v6684
    %v8122 = vmul.f32 %v7943, %v6685
    %v8123 = vmul.f32 %v7943, %v6686
    %v8124 = vmul.f32 %v7943, %v6687
    %v8125 = vmul.f32 %v7943, %v6688
    %v8126 = vmul.f32 %v7943, %v6689
    %v8127 = vmul.f32 %v7943, %v6690
    %v8128 = vmul.f32 %v7943, %v6691
    %v8129 = vmul.f32 %v7943, %v6692
    %v8130 = vmul.f32 %v7943, %v6693
    %v8131 = vmul.f32 %v7943, %v6694
    %v8132 = vmul.f32 %v7943, %v6695
    %v8133 = vmul.f32 %v7943, %v6696
    %v8134 = vmul.f32 %v7943, %v6697
    %v8135 = vmul.f32 %v7943, %v6698
    %v8136 = vmul.f32 %v7943, %v6699
    %v8137 = vmul.f32 %v7943, %v6700
    %v8138 = vmul.f32 %v7943, %v6701
    %v8139 = vmul.f32 %v7943, %v6702
    %v8140 = vmul.f32 %v7943, %v6703
    %v8141 = vmul.f32 %v7943, %v6704
    %v8142 = vmul.f32 %v7943, %v6705
    %v8143 = vmul.f32 %v7943, %v6706
    %v8144 = vmul.f32 %v7943, %v6707
    %v8145 = vmul.f32 %v7943, %v6708
    %v8146 = vmul.f32 %v7943, %v6709
    %v8147 = vmul.f32 %v7943, %v6710
    %v8148 = vmul.f32 %v7943, %v6711
    %v8149 = vmul.f32 %v7943, %v6712
    %v8150 = vmul.f32 %v7943, %v6713
    %v8151 = vmul.f32 %v7943, %v6714
    %v8152 = vmul.f32 %v7943, %v6715
    %v8153 = vmul.f32 %v7943, %v6716
    %v8154 = vmul.f32 %v7943, %v6717
    %v8155 = vmul.f32 %v7943, %v6718
    %v8156 = vmul.f32 %v7943, %v6719
    %v8157 = vmul.f32 %v7943, %v6720
    %v8158 = vmul.f32 %v7943, %v6721
    %v8159 = vmul.f32 %v7943, %v6722
    %v8160 = vmul.f32 %v7943, %v6723
    %v8161 = vmul.f32 %v7943, %v6724
    %v8162 = vmul.f32 %v7943, %v6725
    %v8163 = vmul.f32 %v7943, %v6726
    %v8164 = vmul.f32 %v7943, %v6727
    %v8165 = vmul.f32 %v7943, %v6728
    %v8166 = vmul.f32 %v7943, %v6729
    %v8167 = vmul.f32 %v7943, %v6730
    %v8168 = vmul.f32 %v7943, %v6731
    %v8169 = vmul.f32 %v7943, %v6732
    %v8170 = vmul.f32 %v7943, %v6733
    %v8171 = vmul.f32 %v7943, %v6734
    %v8172 = vmul.f32 %v7943, %v6735
    %v8173 = vmul.f32 %v7943, %v6736
    %v8174 = vmul.f32 %v7943, %v6737
    %v8175 = vmul.f32 %v7943, %v6738
    %v8176 = vmul.f32 %v7943, %v6739
    %v8177 = vmul.f32 %v7943, %v6740
    %v8178 = vmul.f32 %v7943, %v6741
    %v8179 = vmul.f32 %v7943, %v6742
    %v8180 = vmul.f32 %v7943, %v6743
    %v8181 = vmul.f32 %v7943, %v6744
    %v8182 = vmul.f32 %v7943, %v6745
    %v8422 = vrot.slane %v7944, 3
    %v8423 = vrot.slane %v7945, 3
    %v8424 = vrot.slane %v7946, 3
    %v8425 = vrot.slane %v7947, 3
    %v8426 = vrot.slane %v7948, 3
    %v8427 = vrot.slane %v7949, 3
    %v8428 = vrot.slane %v7950, 3
    %v8429 = vrot.slane %v7951, 3
    %v8430 = vrot.slane %v7952, 3
    %v8431 = vrot.slane %v7953, 3
    %v8432 = vrot.slane %v7954, 3
    %v8433 = vrot.slane %v7955, 3
    %v8434 = vrot.slane %v7956, 3
    %v8435 = vrot.slane %v7957, 3
    %v8436 = vrot.slane %v7958, 3
    %v8437 = vrot.slane %v7959, 3
    %v8438 = vrot.slane %v7960, 3
    %v8439 = vrot.slane %v7961, 3
    %v8440 = vrot.slane %v7962, 3
    %v8441 = vrot.slane %v7963, 3
    %v8442 = vrot.slane %v7964, 3
    %v8443 = vrot.slane %v7965, 3
    %v8444 = vrot.slane %v7966, 3
    %v8445 = vrot.slane %v7967, 3
    %v8446 = vrot.slane %v7968, 3
    %v8447 = vrot.slane %v7969, 3
    %v8448 = vrot.slane %v7970, 3
    %v8449 = vrot.slane %v7971, 3
    %v8450 = vrot.slane %v7972, 3
    %v8451 = vrot.slane %v7973, 3
    %v8452 = vrot.slane %v7974, 3
    %v8453 = vrot.slane %v7975, 3
    %v8454 = vrot.slane %v7976, 3
    %v8455 = vrot.slane %v7977, 3
    %v8456 = vrot.slane %v7978, 3
    %v8457 = vrot.slane %v7979, 3
    %v8458 = vrot.slane %v7980, 3
    %v8459 = vrot.slane %v7981, 3
    %v8460 = vrot.slane %v7982, 3
    %v8461 = vrot.slane %v7983, 3
    %v8462 = vrot.slane %v7984, 3
    %v8463 = vrot.slane %v7985, 3
    %v8464 = vrot.slane %v7986, 3
    %v8465 = vrot.slane %v7987, 3
    %v8466 = vrot.slane %v7988, 3
    %v8467 = vrot.slane %v7989, 3
    %v8468 = vrot.slane %v7990, 3
    %v8469 = vrot.slane %v7991, 3
    %v8470 = vrot.slane %v7992, 3
    %v8471 = vrot.slane %v7993, 3
    %v8472 = vrot.slane %v7994, 3
    %v8473 = vrot.slane %v7995, 3
    %v8474 = vrot.slane %v7996, 3
    %v8475 = vrot.slane %v7997, 3
    %v8476 = vrot.slane %v7998, 3
    %v8477 = vrot.slane %v7999, 3
    %v8478 = vrot.slane %v8000, 3
    %v8479 = vrot.slane %v8001, 3
    %v8480 = vrot.slane %v8002, 3
    %v8481 = vrot.slane %v8003, 3
    %v8482 = vrot.slane %v8004, 3
    %v8483 = vrot.slane %v8005, 3
    %v8484 = vrot.slane %v8006, 3
    %v8485 = vrot.slane %v8007, 3
    %v8486 = vrot.slane %v8008, 3
    %v8487 = vrot.slane %v8009, 3
    %v8488 = vrot.slane %v8010, 3
    %v8489 = vrot.slane %v8011, 3
    %v8490 = vrot.slane %v8012, 3
    %v8491 = vrot.slane %v8013, 3
    %v8492 = vrot.slane %v8014, 3
    %v8493 = vrot.slane %v8015, 3
    %v8494 = vrot.slane %v8016, 3
    %v8495 = vrot.slane %v8017, 3
    %v8496 = vrot.slane %v8018, 3
    %v8497 = vrot.slane %v8019, 3
    %v8498 = vrot.slane %v8020, 3
    %v8499 = vrot.slane %v8021, 3
    %v8500 = vrot.slane %v8022, 3
    %v8501 = vrot.slane %v8023, 3
    %v8502 = vrot.slane %v8024, 3
    %v8503 = vrot.slane %v8025, 3
    %v8504 = vrot.slane %v8026, 3
    %v8505 = vrot.slane %v8027, 3
    %v8506 = vrot.slane %v8028, 3
    %v8507 = vrot.slane %v8029, 3
    %v8508 = vrot.slane %v8030, 3
    %v8509 = vrot.slane %v8031, 3
    %v8510 = vrot.slane %v8032, 3
    %v8511 = vrot.slane %v8033, 3
    %v8512 = vrot.slane %v8034, 3
    %v8513 = vrot.slane %v8035, 3
    %v8514 = vrot.slane %v8036, 3
    %v8515 = vrot.slane %v8037, 3
    %v8516 = vrot.slane %v8038, 3
    %v8517 = vrot.slane %v8039, 3
    %v8518 = vrot.slane %v8040, 3
    %v8519 = vrot.slane %v8041, 3
    %v8520 = vrot.slane %v8042, 3
    %v8521 = vrot.slane %v8043, 3
    %v8522 = vrot.slane %v8044, 3
    %v8523 = vrot.slane %v8045, 3
    %v8524 = vrot.slane %v8046, 3
    %v8525 = vrot.slane %v8047, 3
    %v8526 = vrot.slane %v8048, 3
    %v8527 = vrot.slane %v8049, 3
    %v8528 = vrot.slane %v8050, 3
    %v8529 = vrot.slane %v8051, 3
    %v8530 = vrot.slane %v8052, 3
    %v8531 = vrot.slane %v8053, 3
    %v8532 = vrot.slane %v8054, 3
    %v8533 = vrot.slane %v8055, 3
    %v8534 = vrot.slane %v8056, 3
    %v8535 = vrot.slane %v8057, 3
    %v8536 = vrot.slane %v8058, 3
    %v8537 = vrot.slane %v8059, 3
    %v8538 = vrot.slane %v8060, 3
    %v8539 = vrot.slane %v8061, 3
    %v8540 = vrot.slane %v8062, 3
    %v8541 = vrot.slane %v8063, 3
    %v8542 = vrot.slane %v8064, 3
    %v8543 = vrot.slane %v8065, 3
    %v8544 = vrot.slane %v8066, 3
    %v8545 = vrot.slane %v8067, 3
    %v8546 = vrot.slane %v8068, 3
    %v8547 = vrot.slane %v8069, 3
    %v8548 = vrot.slane %v8070, 3
    %v8549 = vrot.slane %v8071, 3
    %v8550 = vrot.slane %v8072, 3
    %v8551 = vrot.slane %v8073, 3
    %v8552 = vrot.slane %v8074, 3
    %v8553 = vrot.slane %v8075, 3
    %v8554 = vrot.slane %v8076, 3
    %v8555 = vrot.slane %v8077, 3
    %v8556 = vrot.slane %v8078, 3
    %v8557 = vrot.slane %v8079, 3
    %v8558 = vrot.slane %v8080, 3
    %v8559 = vrot.slane %v8081, 3
    %v8560 = vrot.slane %v8082, 3
    %v8561 = vrot.slane %v8083, 3
    %v8562 = vrot.slane %v8084, 3
    %v8563 = vrot.slane %v8085, 3
    %v8564 = vrot.slane %v8086, 3
    %v8565 = vrot.slane %v8087, 3
    %v8566 = vrot.slane %v8088, 3
    %v8567 = vrot.slane %v8089, 3
    %v8568 = vrot.slane %v8090, 3
    %v8569 = vrot.slane %v8091, 3
    %v8570 = vrot.slane %v8092, 3
    %v8571 = vrot.slane %v8093, 3
    %v8572 = vrot.slane %v8094, 3
    %v8573 = vrot.slane %v8095, 3
    %v8574 = vrot.slane %v8096, 3
    %v8575 = vrot.slane %v8097, 3
    %v8576 = vrot.slane %v8098, 3
    %v8577 = vrot.slane %v8099, 3
    %v8578 = vrot.slane %v8100, 3
    %v8579 = vrot.slane %v8101, 3
    %v8580 = vrot.slane %v8102, 3
    %v8581 = vrot.slane %v8103, 3
    %v8582 = vrot.slane %v8104, 3
    %v8583 = vrot.slane %v8105, 3
    %v8584 = vrot.slane %v8106, 3
    %v8585 = vrot.slane %v8107, 3
    %v8586 = vrot.slane %v8108, 3
    %v8587 = vrot.slane %v8109, 3
    %v8588 = vrot.slane %v8110, 3
    %v8589 = vrot.slane %v8111, 3
    %v8590 = vrot.slane %v8112, 3
    %v8591 = vrot.slane %v8113, 3
    %v8592 = vrot.slane %v8114, 3
    %v8593 = vrot.slane %v8115, 3
    %v8594 = vrot.slane %v8116, 3
    %v8595 = vrot.slane %v8117, 3
    %v8596 = vrot.slane %v8118, 3
    %v8597 = vrot.slane %v8119, 3
    %v8598 = vrot.slane %v8120, 3
    %v8599 = vrot.slane %v8121, 3
    %v8600 = vrot.slane %v8122, 3
    %v8601 = vrot.slane %v8123, 3
    %v8602 = vrot.slane %v8124, 3
    %v8603 = vrot.slane %v8125, 3
    %v8604 = vrot.slane %v8126, 3
    %v8605 = vrot.slane %v8127, 3
    %v8606 = vrot.slane %v8128, 3
    %v8607 = vrot.slane %v8129, 3
    %v8608 = vrot.slane %v8130, 3
    %v8609 = vrot.slane %v8131, 3
    %v8610 = vrot.slane %v8132, 3
    %v8611 = vrot.slane %v8133, 3
    %v8612 = vrot.slane %v8134, 3
    %v8613 = vrot.slane %v8135, 3
    %v8614 = vrot.slane %v8136, 3
    %v8615 = vrot.slane %v8137, 3
    %v8616 = vrot.slane %v8138, 3
    %v8617 = vrot.slane %v8139, 3
    %v8618 = vrot.slane %v8140, 3
    %v8619 = vrot.slane %v8141, 3
    %v8620 = vrot.slane %v8142, 3
    %v8621 = vrot.slane %v8143, 3
    %v8622 = vrot.slane %v8144, 3
    %v8623 = vrot.slane %v8145, 3
    %v8624 = vrot.slane %v8146, 3
    %v8625 = vrot.slane %v8147, 3
    %v8626 = vrot.slane %v8148, 3
    %v8627 = vrot.slane %v8149, 3
    %v8628 = vrot.slane %v8150, 3
    %v8629 = vrot.slane %v8151, 3
    %v8630 = vrot.slane %v8152, 3
    %v8631 = vrot.slane %v8153, 3
    %v8632 = vrot.slane %v8154, 3
    %v8633 = vrot.slane %v8155, 3
    %v8634 = vrot.slane %v8156, 3
    %v8635 = vrot.slane %v8157, 3
    %v8636 = vrot.slane %v8158, 3
    %v8637 = vrot.slane %v8159, 3
    %v8638 = vrot.slane %v8160, 3
    %v8639 = vrot.slane %v8161, 3
    %v8640 = vrot.slane %v8162, 3
    %v8641 = vrot.slane %v8163, 3
    %v8642 = vrot.slane %v8164, 3
    %v8643 = vrot.slane %v8165, 3
    %v8644 = vrot.slane %v8166, 3
    %v8645 = vrot.slane %v8167, 3
    %v8646 = vrot.slane %v8168, 3
    %v8647 = vrot.slane %v8169, 3
    %v8648 = vrot.slane %v8170, 3
    %v8649 = vrot.slane %v8171, 3
    %v8650 = vrot.slane %v8172, 3
    %v8651 = vrot.slane %v8173, 3
    %v8652 = vrot.slane %v8174, 3
    %v8653 = vrot.slane %v8175, 3
    %v8654 = vrot.slane %v8176, 3
    %v8655 = vrot.slane %v8177, 3
    %v8656 = vrot.slane %v8178, 3
    %v8657 = vrot.slane %v8179, 3
    %v8658 = vrot.slane %v8180, 3
    %v8659 = vrot.slane %v8181, 3
    %v8660 = vrot.slane %v8182, 3
    %v8900 = vadd.f32 %v7703, %v8422
    %v8901 = vadd.f32 %v7704, %v8423
    %v8902 = vadd.f32 %v7705, %v8424
    %v8903 = vadd.f32 %v7706, %v8425
    %v8904 = vadd.f32 %v7707, %v8426
    %v8905 = vadd.f32 %v7708, %v8427
    %v8906 = vadd.f32 %v7709, %v8428
    %v8907 = vadd.f32 %v7710, %v8429
    %v8908 = vadd.f32 %v7711, %v8430
    %v8909 = vadd.f32 %v7712, %v8431
    %v8910 = vadd.f32 %v7713, %v8432
    %v8911 = vadd.f32 %v7714, %v8433
    %v8912 = vadd.f32 %v7715, %v8434
    %v8913 = vadd.f32 %v7716, %v8435
    %v8914 = vadd.f32 %v7717, %v8436
    %v8915 = vadd.f32 %v7718, %v8437
    %v8916 = vadd.f32 %v7719, %v8438
    %v8917 = vadd.f32 %v7720, %v8439
    %v8918 = vadd.f32 %v7721, %v8440
    %v8919 = vadd.f32 %v7722, %v8441
    %v8920 = vadd.f32 %v7723, %v8442
    %v8921 = vadd.f32 %v7724, %v8443
    %v8922 = vadd.f32 %v7725, %v8444
    %v8923 = vadd.f32 %v7726, %v8445
    %v8924 = vadd.f32 %v7727, %v8446
    %v8925 = vadd.f32 %v7728, %v8447
    %v8926 = vadd.f32 %v7729, %v8448
    %v8927 = vadd.f32 %v7730, %v8449
    %v8928 = vadd.f32 %v7731, %v8450
    %v8929 = vadd.f32 %v7732, %v8451
    %v8930 = vadd.f32 %v7733, %v8452
    %v8931 = vadd.f32 %v7734, %v8453
    %v8932 = vadd.f32 %v7735, %v8454
    %v8933 = vadd.f32 %v7736, %v8455
    %v8934 = vadd.f32 %v7737, %v8456
    %v8935 = vadd.f32 %v7738, %v8457
    %v8936 = vadd.f32 %v7739, %v8458
    %v8937 = vadd.f32 %v7740, %v8459
    %v8938 = vadd.f32 %v7741, %v8460
    %v8939 = vadd.f32 %v7742, %v8461
    %v8940 = vadd.f32 %v7743, %v8462
    %v8941 = vadd.f32 %v7744, %v8463
    %v8942 = vadd.f32 %v7745, %v8464
    %v8943 = vadd.f32 %v7746, %v8465
    %v8944 = vadd.f32 %v7747, %v8466
    %v8945 = vadd.f32 %v7748, %v8467
    %v8946 = vadd.f32 %v7749, %v8468
    %v8947 = vadd.f32 %v7750, %v8469
    %v8948 = vadd.f32 %v7751, %v8470
    %v8949 = vadd.f32 %v7752, %v8471
    %v8950 = vadd.f32 %v7753, %v8472
    %v8951 = vadd.f32 %v7754, %v8473
    %v8952 = vadd.f32 %v7755, %v8474
    %v8953 = vadd.f32 %v7756, %v8475
    %v8954 = vadd.f32 %v7757, %v8476
    %v8955 = vadd.f32 %v7758, %v8477
    %v8956 = vadd.f32 %v7759, %v8478
    %v8957 = vadd.f32 %v7760, %v8479
    %v8958 = vadd.f32 %v7761, %v8480
    %v8959 = vadd.f32 %v7762, %v8481
    %v8960 = vadd.f32 %v7763, %v8482
    %v8961 = vadd.f32 %v7764, %v8483
    %v8962 = vadd.f32 %v7765, %v8484
    %v8963 = vadd.f32 %v7766, %v8485
    %v8964 = vadd.f32 %v7767, %v8486
    %v8965 = vadd.f32 %v7768, %v8487
    %v8966 = vadd.f32 %v7769, %v8488
    %v8967 = vadd.f32 %v7770, %v8489
    %v8968 = vadd.f32 %v7771, %v8490
    %v8969 = vadd.f32 %v7772, %v8491
    %v8970 = vadd.f32 %v7773, %v8492
    %v8971 = vadd.f32 %v7774, %v8493
    %v8972 = vadd.f32 %v7775, %v8494
    %v8973 = vadd.f32 %v7776, %v8495
    %v8974 = vadd.f32 %v7777, %v8496
    %v8975 = vadd.f32 %v7778, %v8497
    %v8976 = vadd.f32 %v7779, %v8498
    %v8977 = vadd.f32 %v7780, %v8499
    %v8978 = vadd.f32 %v7781, %v8500
    %v8979 = vadd.f32 %v7782, %v8501
    %v8980 = vadd.f32 %v7783, %v8502
    %v8981 = vadd.f32 %v7784, %v8503
    %v8982 = vadd.f32 %v7785, %v8504
    %v8983 = vadd.f32 %v7786, %v8505
    %v8984 = vadd.f32 %v7787, %v8506
    %v8985 = vadd.f32 %v7788, %v8507
    %v8986 = vadd.f32 %v7789, %v8508
    %v8987 = vadd.f32 %v7790, %v8509
    %v8988 = vadd.f32 %v7791, %v8510
    %v8989 = vadd.f32 %v7792, %v8511
    %v8990 = vadd.f32 %v7793, %v8512
    %v8991 = vadd.f32 %v7794, %v8513
    %v8992 = vadd.f32 %v7795, %v8514
    %v8993 = vadd.f32 %v7796, %v8515
    %v8994 = vadd.f32 %v7797, %v8516
    %v8995 = vadd.f32 %v7798, %v8517
    %v8996 = vadd.f32 %v7799, %v8518
    %v8997 = vadd.f32 %v7800, %v8519
    %v8998 = vadd.f32 %v7801, %v8520
    %v8999 = vadd.f32 %v7802, %v8521
    %v9000 = vadd.f32 %v7803, %v8522
    %v9001 = vadd.f32 %v7804, %v8523
    %v9002 = vadd.f32 %v7805, %v8524
    %v9003 = vadd.f32 %v7806, %v8525
    %v9004 = vadd.f32 %v7807, %v8526
    %v9005 = vadd.f32 %v7808, %v8527
    %v9006 = vadd.f32 %v7809, %v8528
    %v9007 = vadd.f32 %v7810, %v8529
    %v9008 = vadd.f32 %v7811, %v8530
    %v9009 = vadd.f32 %v7812, %v8531
    %v9010 = vadd.f32 %v7813, %v8532
    %v9011 = vadd.f32 %v7814, %v8533
    %v9012 = vadd.f32 %v7815, %v8534
    %v9013 = vadd.f32 %v7816, %v8535
    %v9014 = vadd.f32 %v7817, %v8536
    %v9015 = vadd.f32 %v7818, %v8537
    %v9016 = vadd.f32 %v7819, %v8538
    %v9017 = vadd.f32 %v7820, %v8539
    %v9018 = vadd.f32 %v7821, %v8540
    %v9019 = vadd.f32 %v7822, %v8541
    %v9020 = vadd.f32 %v7823, %v8542
    %v9021 = vadd.f32 %v7824, %v8543
    %v9022 = vadd.f32 %v7825, %v8544
    %v9023 = vadd.f32 %v7826, %v8545
    %v9024 = vadd.f32 %v7827, %v8546
    %v9025 = vadd.f32 %v7828, %v8547
    %v9026 = vadd.f32 %v7829, %v8548
    %v9027 = vadd.f32 %v7830, %v8549
    %v9028 = vadd.f32 %v7831, %v8550
    %v9029 = vadd.f32 %v7832, %v8551
    %v9030 = vadd.f32 %v7833, %v8552
    %v9031 = vadd.f32 %v7834, %v8553
    %v9032 = vadd.f32 %v7835, %v8554
    %v9033 = vadd.f32 %v7836, %v8555
    %v9034 = vadd.f32 %v7837, %v8556
    %v9035 = vadd.f32 %v7838, %v8557
    %v9036 = vadd.f32 %v7839, %v8558
    %v9037 = vadd.f32 %v7840, %v8559
    %v9038 = vadd.f32 %v7841, %v8560
    %v9039 = vadd.f32 %v7842, %v8561
    %v9040 = vadd.f32 %v7843, %v8562
    %v9041 = vadd.f32 %v7844, %v8563
    %v9042 = vadd.f32 %v7845, %v8564
    %v9043 = vadd.f32 %v7846, %v8565
    %v9044 = vadd.f32 %v7847, %v8566
    %v9045 = vadd.f32 %v7848, %v8567
    %v9046 = vadd.f32 %v7849, %v8568
    %v9047 = vadd.f32 %v7850, %v8569
    %v9048 = vadd.f32 %v7851, %v8570
    %v9049 = vadd.f32 %v7852, %v8571
    %v9050 = vadd.f32 %v7853, %v8572
    %v9051 = vadd.f32 %v7854, %v8573
    %v9052 = vadd.f32 %v7855, %v8574
    %v9053 = vadd.f32 %v7856, %v8575
    %v9054 = vadd.f32 %v7857, %v8576
    %v9055 = vadd.f32 %v7858, %v8577
    %v9056 = vadd.f32 %v7859, %v8578
    %v9057 = vadd.f32 %v7860, %v8579
    %v9058 = vadd.f32 %v7861, %v8580
    %v9059 = vadd.f32 %v7862, %v8581
    %v9060 = vadd.f32 %v7863, %v8582
    %v9061 = vadd.f32 %v7864, %v8583
    %v9062 = vadd.f32 %v7865, %v8584
    %v9063 = vadd.f32 %v7866, %v8585
    %v9064 = vadd.f32 %v7867, %v8586
    %v9065 = vadd.f32 %v7868, %v8587
    %v9066 = vadd.f32 %v7869, %v8588
    %v9067 = vadd.f32 %v7870, %v8589
    %v9068 = vadd.f32 %v7871, %v8590
    %v9069 = vadd.f32 %v7872, %v8591
    %v9070 = vadd.f32 %v7873, %v8592
    %v9071 = vadd.f32 %v7874, %v8593
    %v9072 = vadd.f32 %v7875, %v8594
    %v9073 = vadd.f32 %v7876, %v8595
    %v9074 = vadd.f32 %v7877, %v8596
    %v9075 = vadd.f32 %v7878, %v8597
    %v9076 = vadd.f32 %v7879, %v8598
    %v9077 = vadd.f32 %v7880, %v8599
    %v9078 = vadd.f32 %v7881, %v8600
    %v9079 = vadd.f32 %v7882, %v8601
    %v9080 = vadd.f32 %v7883, %v8602
    %v9081 = vadd.f32 %v7884, %v8603
    %v9082 = vadd.f32 %v7885, %v8604
    %v9083 = vadd.f32 %v7886, %v8605
    %v9084 = vadd.f32 %v7887, %v8606
    %v9085 = vadd.f32 %v7888, %v8607
    %v9086 = vadd.f32 %v7889, %v8608
    %v9087 = vadd.f32 %v7890, %v8609
    %v9088 = vadd.f32 %v7891, %v8610
    %v9089 = vadd.f32 %v7892, %v8611
    %v9090 = vadd.f32 %v7893, %v8612
    %v9091 = vadd.f32 %v7894, %v8613
    %v9092 = vadd.f32 %v7895, %v8614
    %v9093 = vadd.f32 %v7896, %v8615
    %v9094 = vadd.f32 %v7897, %v8616
    %v9095 = vadd.f32 %v7898, %v8617
    %v9096 = vadd.f32 %v7899, %v8618
    %v9097 = vadd.f32 %v7900, %v8619
    %v9098 = vadd.f32 %v7901, %v8620
    %v9099 = vadd.f32 %v7902, %v8621
    %v9100 = vadd.f32 %v7903, %v8622
    %v9101 = vadd.f32 %v7904, %v8623
    %v9102 = vadd.f32 %v7905, %v8624
    %v9103 = vadd.f32 %v7906, %v8625
    %v9104 = vadd.f32 %v7907, %v8626
    %v9105 = vadd.f32 %v7908, %v8627
    %v9106 = vadd.f32 %v7909, %v8628
    %v9107 = vadd.f32 %v7910, %v8629
    %v9108 = vadd.f32 %v7911, %v8630
    %v9109 = vadd.f32 %v7912, %v8631
    %v9110 = vadd.f32 %v7913, %v8632
    %v9111 = vadd.f32 %v7914, %v8633
    %v9112 = vadd.f32 %v7915, %v8634
    %v9113 = vadd.f32 %v7916, %v8635
    %v9114 = vadd.f32 %v7917, %v8636
    %v9115 = vadd.f32 %v7918, %v8637
    %v9116 = vadd.f32 %v7919, %v8638
    %v9117 = vadd.f32 %v7920, %v8639
    %v9118 = vadd.f32 %v7921, %v8640
    %v9119 = vadd.f32 %v7922, %v8641
    %v9120 = vadd.f32 %v7923, %v8642
    %v9121 = vadd.f32 %v7924, %v8643
    %v9122 = vadd.f32 %v7925, %v8644
    %v9123 = vadd.f32 %v7926, %v8645
    %v9124 = vadd.f32 %v7927, %v8646
    %v9125 = vadd.f32 %v7928, %v8647
    %v9126 = vadd.f32 %v7929, %v8648
    %v9127 = vadd.f32 %v7930, %v8649
    %v9128 = vadd.f32 %v7931, %v8650
    %v9129 = vadd.f32 %v7932, %v8651
    %v9130 = vadd.f32 %v7933, %v8652
    %v9131 = vadd.f32 %v7934, %v8653
    %v9132 = vadd.f32 %v7935, %v8654
    %v9133 = vadd.f32 %v7936, %v8655
    %v9134 = vadd.f32 %v7937, %v8656
    %v9135 = vadd.f32 %v7938, %v8657
    %v9136 = vadd.f32 %v7939, %v8658
    %v9137 = vadd.f32 %v7940, %v8659
    %v9138 = vadd.f32 %v7941, %v8660
    %v9378 = vrot.slane %v8900, 3
    %v9379 = vrot.slane %v8901, 3
    %v9380 = vrot.slane %v8902, 3
    %v9381 = vrot.slane %v8903, 3
    %v9382 = vrot.slane %v8904, 3
    %v9383 = vrot.slane %v8905, 3
    %v9384 = vrot.slane %v8906, 3
    %v9385 = vrot.slane %v8907, 3
    %v9386 = vrot.slane %v8908, 3
    %v9387 = vrot.slane %v8909, 3
    %v9388 = vrot.slane %v8910, 3
    %v9389 = vrot.slane %v8911, 3
    %v9390 = vrot.slane %v8912, 3
    %v9391 = vrot.slane %v8913, 3
    %v9392 = vrot.slane %v8914, 3
    %v9393 = vrot.slane %v8915, 3
    %v9394 = vrot.slane %v8916, 3
    %v9395 = vrot.slane %v8917, 3
    %v9396 = vrot.slane %v8918, 3
    %v9397 = vrot.slane %v8919, 3
    %v9398 = vrot.slane %v8920, 3
    %v9399 = vrot.slane %v8921, 3
    %v9400 = vrot.slane %v8922, 3
    %v9401 = vrot.slane %v8923, 3
    %v9402 = vrot.slane %v8924, 3
    %v9403 = vrot.slane %v8925, 3
    %v9404 = vrot.slane %v8926, 3
    %v9405 = vrot.slane %v8927, 3
    %v9406 = vrot.slane %v8928, 3
    %v9407 = vrot.slane %v8929, 3
    %v9408 = vrot.slane %v8930, 3
    %v9409 = vrot.slane %v8931, 3
    %v9410 = vrot.slane %v8932, 3
    %v9411 = vrot.slane %v8933, 3
    %v9412 = vrot.slane %v8934, 3
    %v9413 = vrot.slane %v8935, 3
    %v9414 = vrot.slane %v8936, 3
    %v9415 = vrot.slane %v8937, 3
    %v9416 = vrot.slane %v8938, 3
    %v9417 = vrot.slane %v8939, 3
    %v9418 = vrot.slane %v8940, 3
    %v9419 = vrot.slane %v8941, 3
    %v9420 = vrot.slane %v8942, 3
    %v9421 = vrot.slane %v8943, 3
    %v9422 = vrot.slane %v8944, 3
    %v9423 = vrot.slane %v8945, 3
    %v9424 = vrot.slane %v8946, 3
    %v9425 = vrot.slane %v8947, 3
    %v9426 = vrot.slane %v8948, 3
    %v9427 = vrot.slane %v8949, 3
    %v9428 = vrot.slane %v8950, 3
    %v9429 = vrot.slane %v8951, 3
    %v9430 = vrot.slane %v8952, 3
    %v9431 = vrot.slane %v8953, 3
    %v9432 = vrot.slane %v8954, 3
    %v9433 = vrot.slane %v8955, 3
    %v9434 = vrot.slane %v8956, 3
    %v9435 = vrot.slane %v8957, 3
    %v9436 = vrot.slane %v8958, 3
    %v9437 = vrot.slane %v8959, 3
    %v9438 = vrot.slane %v8960, 3
    %v9439 = vrot.slane %v8961, 3
    %v9440 = vrot.slane %v8962, 3
    %v9441 = vrot.slane %v8963, 3
    %v9442 = vrot.slane %v8964, 3
    %v9443 = vrot.slane %v8965, 3
    %v9444 = vrot.slane %v8966, 3
    %v9445 = vrot.slane %v8967, 3
    %v9446 = vrot.slane %v8968, 3
    %v9447 = vrot.slane %v8969, 3
    %v9448 = vrot.slane %v8970, 3
    %v9449 = vrot.slane %v8971, 3
    %v9450 = vrot.slane %v8972, 3
    %v9451 = vrot.slane %v8973, 3
    %v9452 = vrot.slane %v8974, 3
    %v9453 = vrot.slane %v8975, 3
    %v9454 = vrot.slane %v8976, 3
    %v9455 = vrot.slane %v8977, 3
    %v9456 = vrot.slane %v8978, 3
    %v9457 = vrot.slane %v8979, 3
    %v9458 = vrot.slane %v8980, 3
    %v9459 = vrot.slane %v8981, 3
    %v9460 = vrot.slane %v8982, 3
    %v9461 = vrot.slane %v8983, 3
    %v9462 = vrot.slane %v8984, 3
    %v9463 = vrot.slane %v8985, 3
    %v9464 = vrot.slane %v8986, 3
    %v9465 = vrot.slane %v8987, 3
    %v9466 = vrot.slane %v8988, 3
    %v9467 = vrot.slane %v8989, 3
    %v9468 = vrot.slane %v8990, 3
    %v9469 = vrot.slane %v8991, 3
    %v9470 = vrot.slane %v8992, 3
    %v9471 = vrot.slane %v8993, 3
    %v9472 = vrot.slane %v8994, 3
    %v9473 = vrot.slane %v8995, 3
    %v9474 = vrot.slane %v8996, 3
    %v9475 = vrot.slane %v8997, 3
    %v9476 = vrot.slane %v8998, 3
    %v9477 = vrot.slane %v8999, 3
    %v9478 = vrot.slane %v9000, 3
    %v9479 = vrot.slane %v9001, 3
    %v9480 = vrot.slane %v9002, 3
    %v9481 = vrot.slane %v9003, 3
    %v9482 = vrot.slane %v9004, 3
    %v9483 = vrot.slane %v9005, 3
    %v9484 = vrot.slane %v9006, 3
    %v9485 = vrot.slane %v9007, 3
    %v9486 = vrot.slane %v9008, 3
    %v9487 = vrot.slane %v9009, 3
    %v9488 = vrot.slane %v9010, 3
    %v9489 = vrot.slane %v9011, 3
    %v9490 = vrot.slane %v9012, 3
    %v9491 = vrot.slane %v9013, 3
    %v9492 = vrot.slane %v9014, 3
    %v9493 = vrot.slane %v9015, 3
    %v9494 = vrot.slane %v9016, 3
    %v9495 = vrot.slane %v9017, 3
    %v9496 = vrot.slane %v9018, 3
    %v9497 = vrot.slane %v9019, 3
    %v9498 = vrot.slane %v9020, 3
    %v9499 = vrot.slane %v9021, 3
    %v9500 = vrot.slane %v9022, 3
    %v9501 = vrot.slane %v9023, 3
    %v9502 = vrot.slane %v9024, 3
    %v9503 = vrot.slane %v9025, 3
    %v9504 = vrot.slane %v9026, 3
    %v9505 = vrot.slane %v9027, 3
    %v9506 = vrot.slane %v9028, 3
    %v9507 = vrot.slane %v9029, 3
    %v9508 = vrot.slane %v9030, 3
    %v9509 = vrot.slane %v9031, 3
    %v9510 = vrot.slane %v9032, 3
    %v9511 = vrot.slane %v9033, 3
    %v9512 = vrot.slane %v9034, 3
    %v9513 = vrot.slane %v9035, 3
    %v9514 = vrot.slane %v9036, 3
    %v9515 = vrot.slane %v9037, 3
    %v9516 = vrot.slane %v9038, 3
    %v9517 = vrot.slane %v9039, 3
    %v9518 = vrot.slane %v9040, 3
    %v9519 = vrot.slane %v9041, 3
    %v9520 = vrot.slane %v9042, 3
    %v9521 = vrot.slane %v9043, 3
    %v9522 = vrot.slane %v9044, 3
    %v9523 = vrot.slane %v9045, 3
    %v9524 = vrot.slane %v9046, 3
    %v9525 = vrot.slane %v9047, 3
    %v9526 = vrot.slane %v9048, 3
    %v9527 = vrot.slane %v9049, 3
    %v9528 = vrot.slane %v9050, 3
    %v9529 = vrot.slane %v9051, 3
    %v9530 = vrot.slane %v9052, 3
    %v9531 = vrot.slane %v9053, 3
    %v9532 = vrot.slane %v9054, 3
    %v9533 = vrot.slane %v9055, 3
    %v9534 = vrot.slane %v9056, 3
    %v9535 = vrot.slane %v9057, 3
    %v9536 = vrot.slane %v9058, 3
    %v9537 = vrot.slane %v9059, 3
    %v9538 = vrot.slane %v9060, 3
    %v9539 = vrot.slane %v9061, 3
    %v9540 = vrot.slane %v9062, 3
    %v9541 = vrot.slane %v9063, 3
    %v9542 = vrot.slane %v9064, 3
    %v9543 = vrot.slane %v9065, 3
    %v9544 = vrot.slane %v9066, 3
    %v9545 = vrot.slane %v9067, 3
    %v9546 = vrot.slane %v9068, 3
    %v9547 = vrot.slane %v9069, 3
    %v9548 = vrot.slane %v9070, 3
    %v9549 = vrot.slane %v9071, 3
    %v9550 = vrot.slane %v9072, 3
    %v9551 = vrot.slane %v9073, 3
    %v9552 = vrot.slane %v9074, 3
    %v9553 = vrot.slane %v9075, 3
    %v9554 = vrot.slane %v9076, 3
    %v9555 = vrot.slane %v9077, 3
    %v9556 = vrot.slane %v9078, 3
    %v9557 = vrot.slane %v9079, 3
    %v9558 = vrot.slane %v9080, 3
    %v9559 = vrot.slane %v9081, 3
    %v9560 = vrot.slane %v9082, 3
    %v9561 = vrot.slane %v9083, 3
    %v9562 = vrot.slane %v9084, 3
    %v9563 = vrot.slane %v9085, 3
    %v9564 = vrot.slane %v9086, 3
    %v9565 = vrot.slane %v9087, 3
    %v9566 = vrot.slane %v9088, 3
    %v9567 = vrot.slane %v9089, 3
    %v9568 = vrot.slane %v9090, 3
    %v9569 = vrot.slane %v9091, 3
    %v9570 = vrot.slane %v9092, 3
    %v9571 = vrot.slane %v9093, 3
    %v9572 = vrot.slane %v9094, 3
    %v9573 = vrot.slane %v9095, 3
    %v9574 = vrot.slane %v9096, 3
    %v9575 = vrot.slane %v9097, 3
    %v9576 = vrot.slane %v9098, 3
    %v9577 = vrot.slane %v9099, 3
    %v9578 = vrot.slane %v9100, 3
    %v9579 = vrot.slane %v9101, 3
    %v9580 = vrot.slane %v9102, 3
    %v9581 = vrot.slane %v9103, 3
    %v9582 = vrot.slane %v9104, 3
    %v9583 = vrot.slane %v9105, 3
    %v9584 = vrot.slane %v9106, 3
    %v9585 = vrot.slane %v9107, 3
    %v9586 = vrot.slane %v9108, 3
    %v9587 = vrot.slane %v9109, 3
    %v9588 = vrot.slane %v9110, 3
    %v9589 = vrot.slane %v9111, 3
    %v9590 = vrot.slane %v9112, 3
    %v9591 = vrot.slane %v9113, 3
    %v9592 = vrot.slane %v9114, 3
    %v9593 = vrot.slane %v9115, 3
    %v9594 = vrot.slane %v9116, 3
    %v9595 = vrot.slane %v9117, 3
    %v9596 = vrot.slane %v9118, 3
    %v9597 = vrot.slane %v9119, 3
    %v9598 = vrot.slane %v9120, 3
    %v9599 = vrot.slane %v9121, 3
    %v9600 = vrot.slane %v9122, 3
    %v9601 = vrot.slane %v9123, 3
    %v9602 = vrot.slane %v9124, 3
    %v9603 = vrot.slane %v9125, 3
    %v9604 = vrot.slane %v9126, 3
    %v9605 = vrot.slane %v9127, 3
    %v9606 = vrot.slane %v9128, 3
    %v9607 = vrot.slane %v9129, 3
    %v9608 = vrot.slane %v9130, 3
    %v9609 = vrot.slane %v9131, 3
    %v9610 = vrot.slane %v9132, 3
    %v9611 = vrot.slane %v9133, 3
    %v9612 = vrot.slane %v9134, 3
    %v9613 = vrot.slane %v9135, 3
    %v9614 = vrot.slane %v9136, 3
    %v9615 = vrot.slane %v9137, 3
    %v9616 = vrot.slane %v9138, 3
    %vm9856 = vcmask 1040384
    %v9857 = vsel %vm9856, %v4350, %v9378
    %v9858 = vsel %vm9856, %v4351, %v9379
    %v9859 = vsel %vm9856, %v4352, %v9380
    %v9860 = vsel %vm9856, %v4353, %v9381
    %v9861 = vsel %vm9856, %v4354, %v9382
    %v9862 = vsel %vm9856, %v4355, %v9383
    %v9863 = vsel %vm9856, %v4356, %v9384
    %v9864 = vsel %vm9856, %v4357, %v9385
    %v9865 = vsel %vm9856, %v4358, %v9386
    %v9866 = vsel %vm9856, %v4359, %v9387
    %v9867 = vsel %vm9856, %v4360, %v9388
    %v9868 = vsel %vm9856, %v4361, %v9389
    %v9869 = vsel %vm9856, %v4362, %v9390
    %v9870 = vsel %vm9856, %v4363, %v9391
    %v9871 = vsel %vm9856, %v4364, %v9392
    %v9872 = vsel %vm9856, %v4365, %v9393
    %v9873 = vsel %vm9856, %v4366, %v9394
    %v9874 = vsel %vm9856, %v4367, %v9395
    %v9875 = vsel %vm9856, %v4368, %v9396
    %v9876 = vsel %vm9856, %v4369, %v9397
    %v9877 = vsel %vm9856, %v4370, %v9398
    %v9878 = vsel %vm9856, %v4371, %v9399
    %v9879 = vsel %vm9856, %v4372, %v9400
    %v9880 = vsel %vm9856, %v4373, %v9401
    %v9881 = vsel %vm9856, %v4374, %v9402
    %v9882 = vsel %vm9856, %v4375, %v9403
    %v9883 = vsel %vm9856, %v4376, %v9404
    %v9884 = vsel %vm9856, %v4377, %v9405
    %v9885 = vsel %vm9856, %v4378, %v9406
    %v9886 = vsel %vm9856, %v4379, %v9407
    %v9887 = vsel %vm9856, %v4380, %v9408
    %v9888 = vsel %vm9856, %v4381, %v9409
    %v9889 = vsel %vm9856, %v4382, %v9410
    %v9890 = vsel %vm9856, %v4383, %v9411
    %v9891 = vsel %vm9856, %v4384, %v9412
    %v9892 = vsel %vm9856, %v4385, %v9413
    %v9893 = vsel %vm9856, %v4386, %v9414
    %v9894 = vsel %vm9856, %v4387, %v9415
    %v9895 = vsel %vm9856, %v4388, %v9416
    %v9896 = vsel %vm9856, %v4389, %v9417
    %v9897 = vsel %vm9856, %v4390, %v9418
    %v9898 = vsel %vm9856, %v4391, %v9419
    %v9899 = vsel %vm9856, %v4392, %v9420
    %v9900 = vsel %vm9856, %v4393, %v9421
    %v9901 = vsel %vm9856, %v4394, %v9422
    %v9902 = vsel %vm9856, %v4395, %v9423
    %v9903 = vsel %vm9856, %v4396, %v9424
    %v9904 = vsel %vm9856, %v4397, %v9425
    %v9905 = vsel %vm9856, %v4398, %v9426
    %v9906 = vsel %vm9856, %v4399, %v9427
    %v9907 = vsel %vm9856, %v4400, %v9428
    %v9908 = vsel %vm9856, %v4401, %v9429
    %v9909 = vsel %vm9856, %v4402, %v9430
    %v9910 = vsel %vm9856, %v4403, %v9431
    %v9911 = vsel %vm9856, %v4404, %v9432
    %v9912 = vsel %vm9856, %v4405, %v9433
    %v9913 = vsel %vm9856, %v4406, %v9434
    %v9914 = vsel %vm9856, %v4407, %v9435
    %v9915 = vsel %vm9856, %v4408, %v9436
    %v9916 = vsel %vm9856, %v4409, %v9437
    %v9917 = vsel %vm9856, %v4410, %v9438
    %v9918 = vsel %vm9856, %v4411, %v9439
    %v9919 = vsel %vm9856, %v4412, %v9440
    %v9920 = vsel %vm9856, %v4413, %v9441
    %v9921 = vsel %vm9856, %v4414, %v9442
    %v9922 = vsel %vm9856, %v4415, %v9443
    %v9923 = vsel %vm9856, %v4416, %v9444
    %v9924 = vsel %vm9856, %v4417, %v9445
    %v9925 = vsel %vm9856, %v4418, %v9446
    %v9926 = vsel %vm9856, %v4419, %v9447
    %v9927 = vsel %vm9856, %v4420, %v9448
    %v9928 = vsel %vm9856, %v4421, %v9449
    %v9929 = vsel %vm9856, %v4422, %v9450
    %v9930 = vsel %vm9856, %v4423, %v9451
    %v9931 = vsel %vm9856, %v4424, %v9452
    %v9932 = vsel %vm9856, %v4425, %v9453
    %v9933 = vsel %vm9856, %v4426, %v9454
    %v9934 = vsel %vm9856, %v4427, %v9455
    %v9935 = vsel %vm9856, %v4428, %v9456
    %v9936 = vsel %vm9856, %v4429, %v9457
    %v9937 = vsel %vm9856, %v4430, %v9458
    %v9938 = vsel %vm9856, %v4431, %v9459
    %v9939 = vsel %vm9856, %v4432, %v9460
    %v9940 = vsel %vm9856, %v4433, %v9461
    %v9941 = vsel %vm9856, %v4434, %v9462
    %v9942 = vsel %vm9856, %v4435, %v9463
    %v9943 = vsel %vm9856, %v4436, %v9464
    %v9944 = vsel %vm9856, %v4437, %v9465
    %v9945 = vsel %vm9856, %v4438, %v9466
    %v9946 = vsel %vm9856, %v4439, %v9467
    %v9947 = vsel %vm9856, %v4440, %v9468
    %v9948 = vsel %vm9856, %v4441, %v9469
    %v9949 = vsel %vm9856, %v4442, %v9470
    %v9950 = vsel %vm9856, %v4443, %v9471
    %v9951 = vsel %vm9856, %v4444, %v9472
    %v9952 = vsel %vm9856, %v4445, %v9473
    %v9953 = vsel %vm9856, %v4446, %v9474
    %v9954 = vsel %vm9856, %v4447, %v9475
    %v9955 = vsel %vm9856, %v4448, %v9476
    %v9956 = vsel %vm9856, %v4449, %v9477
    %v9957 = vsel %vm9856, %v4450, %v9478
    %v9958 = vsel %vm9856, %v4451, %v9479
    %v9959 = vsel %vm9856, %v4452, %v9480
    %v9960 = vsel %vm9856, %v4453, %v9481
    %v9961 = vsel %vm9856, %v4454, %v9482
    %v9962 = vsel %vm9856, %v4455, %v9483
    %v9963 = vsel %vm9856, %v4456, %v9484
    %v9964 = vsel %vm9856, %v4457, %v9485
    %v9965 = vsel %vm9856, %v4458, %v9486
    %v9966 = vsel %vm9856, %v4459, %v9487
    %v9967 = vsel %vm9856, %v4460, %v9488
    %v9968 = vsel %vm9856, %v4461, %v9489
    %v9969 = vsel %vm9856, %v4462, %v9490
    %v9970 = vsel %vm9856, %v4463, %v9491
    %v9971 = vsel %vm9856, %v4464, %v9492
    %v9972 = vsel %vm9856, %v4465, %v9493
    %v9973 = vsel %vm9856, %v4466, %v9494
    %v9974 = vsel %vm9856, %v4467, %v9495
    %v9975 = vsel %vm9856, %v4468, %v9496
    %v9976 = vsel %vm9856, %v4469, %v9497
    %v9977 = vsel %vm9856, %v4470, %v9498
    %v9978 = vsel %vm9856, %v4471, %v9499
    %v9979 = vsel %vm9856, %v4472, %v9500
    %v9980 = vsel %vm9856, %v4473, %v9501
    %v9981 = vsel %vm9856, %v4474, %v9502
    %v9982 = vsel %vm9856, %v4475, %v9503
    %v9983 = vsel %vm9856, %v4476, %v9504
    %v9984 = vsel %vm9856, %v4477, %v9505
    %v9985 = vsel %vm9856, %v4478, %v9506
    %v9986 = vsel %vm9856, %v4479, %v9507
    %v9987 = vsel %vm9856, %v4480, %v9508
    %v9988 = vsel %vm9856, %v4481, %v9509
    %v9989 = vsel %vm9856, %v4482, %v9510
    %v9990 = vsel %vm9856, %v4483, %v9511
    %v9991 = vsel %vm9856, %v4484, %v9512
    %v9992 = vsel %vm9856, %v4485, %v9513
    %v9993 = vsel %vm9856, %v4486, %v9514
    %v9994 = vsel %vm9856, %v4487, %v9515
    %v9995 = vsel %vm9856, %v4488, %v9516
    %v9996 = vsel %vm9856, %v4489, %v9517
    %v9997 = vsel %vm9856, %v4490, %v9518
    %v9998 = vsel %vm9856, %v4491, %v9519
    %v9999 = vsel %vm9856, %v4492, %v9520
    %v10000 = vsel %vm9856, %v4493, %v9521
    %v10001 = vsel %vm9856, %v4494, %v9522
    %v10002 = vsel %vm9856, %v4495, %v9523
    %v10003 = vsel %vm9856, %v4496, %v9524
    %v10004 = vsel %vm9856, %v4497, %v9525
    %v10005 = vsel %vm9856, %v4498, %v9526
    %v10006 = vsel %vm9856, %v4499, %v9527
    %v10007 = vsel %vm9856, %v4500, %v9528
    %v10008 = vsel %vm9856, %v4501, %v9529
    %v10009 = vsel %vm9856, %v4502, %v9530
    %v10010 = vsel %vm9856, %v4503, %v9531
    %v10011 = vsel %vm9856, %v4504, %v9532
    %v10012 = vsel %vm9856, %v4505, %v9533
    %v10013 = vsel %vm9856, %v4506, %v9534
    %v10014 = vsel %vm9856, %v4507, %v9535
    %v10015 = vsel %vm9856, %v4508, %v9536
    %v10016 = vsel %vm9856, %v4509, %v9537
    %v10017 = vsel %vm9856, %v4510, %v9538
    %v10018 = vsel %vm9856, %v4511, %v9539
    %v10019 = vsel %vm9856, %v4512, %v9540
    %v10020 = vsel %vm9856, %v4513, %v9541
    %v10021 = vsel %vm9856, %v4514, %v9542
    %v10022 = vsel %vm9856, %v4515, %v9543
    %v10023 = vsel %vm9856, %v4516, %v9544
    %v10024 = vsel %vm9856, %v4517, %v9545
    %v10025 = vsel %vm9856, %v4518, %v9546
    %v10026 = vsel %vm9856, %v4519, %v9547
    %v10027 = vsel %vm9856, %v4520, %v9548
    %v10028 = vsel %vm9856, %v4521, %v9549
    %v10029 = vsel %vm9856, %v4522, %v9550
    %v10030 = vsel %vm9856, %v4523, %v9551
    %v10031 = vsel %vm9856, %v4524, %v9552
    %v10032 = vsel %vm9856, %v4525, %v9553
    %v10033 = vsel %vm9856, %v4526, %v9554
    %v10034 = vsel %vm9856, %v4527, %v9555
    %v10035 = vsel %vm9856, %v4528, %v9556
    %v10036 = vsel %vm9856, %v4529, %v9557
    %v10037 = vsel %vm9856, %v4530, %v9558
    %v10038 = vsel %vm9856, %v4531, %v9559
    %v10039 = vsel %vm9856, %v4532, %v9560
    %v10040 = vsel %vm9856, %v4533, %v9561
    %v10041 = vsel %vm9856, %v4534, %v9562
    %v10042 = vsel %vm9856, %v4535, %v9563
    %v10043 = vsel %vm9856, %v4536, %v9564
    %v10044 = vsel %vm9856, %v4537, %v9565
    %v10045 = vsel %vm9856, %v4538, %v9566
    %v10046 = vsel %vm9856, %v4539, %v9567
    %v10047 = vsel %vm9856, %v4540, %v9568
    %v10048 = vsel %vm9856, %v4541, %v9569
    %v10049 = vsel %vm9856, %v4542, %v9570
    %v10050 = vsel %vm9856, %v4543, %v9571
    %v10051 = vsel %vm9856, %v4544, %v9572
    %v10052 = vsel %vm9856, %v4545, %v9573
    %v10053 = vsel %vm9856, %v4546, %v9574
    %v10054 = vsel %vm9856, %v4547, %v9575
    %v10055 = vsel %vm9856, %v4548, %v9576
    %v10056 = vsel %vm9856, %v4549, %v9577
    %v10057 = vsel %vm9856, %v4550, %v9578
    %v10058 = vsel %vm9856, %v4551, %v9579
    %v10059 = vsel %vm9856, %v4552, %v9580
    %v10060 = vsel %vm9856, %v4553, %v9581
    %v10061 = vsel %vm9856, %v4554, %v9582
    %v10062 = vsel %vm9856, %v4555, %v9583
    %v10063 = vsel %vm9856, %v4556, %v9584
    %v10064 = vsel %vm9856, %v4557, %v9585
    %v10065 = vsel %vm9856, %v4558, %v9586
    %v10066 = vsel %vm9856, %v4559, %v9587
    %v10067 = vsel %vm9856, %v4560, %v9588
    %v10068 = vsel %vm9856, %v4561, %v9589
    %v10069 = vsel %vm9856, %v4562, %v9590
    %v10070 = vsel %vm9856, %v4563, %v9591
    %v10071 = vsel %vm9856, %v4564, %v9592
    %v10072 = vsel %vm9856, %v4565, %v9593
    %v10073 = vsel %vm9856, %v4566, %v9594
    %v10074 = vsel %vm9856, %v4567, %v9595
    %v10075 = vsel %vm9856, %v4568, %v9596
    %v10076 = vsel %vm9856, %v4569, %v9597
    %v10077 = vsel %vm9856, %v4570, %v9598
    %v10078 = vsel %vm9856, %v4571, %v9599
    %v10079 = vsel %vm9856, %v4572, %v9600
    %v10080 = vsel %vm9856, %v4573, %v9601
    %v10081 = vsel %vm9856, %v4574, %v9602
    %v10082 = vsel %vm9856, %v4575, %v9603
    %v10083 = vsel %vm9856, %v4576, %v9604
    %v10084 = vsel %vm9856, %v4577, %v9605
    %v10085 = vsel %vm9856, %v4578, %v9606
    %v10086 = vsel %vm9856, %v4579, %v9607
    %v10087 = vsel %vm9856, %v4580, %v9608
    %v10088 = vsel %vm9856, %v4581, %v9609
    %v10089 = vsel %vm9856, %v4582, %v9610
    %v10090 = vsel %vm9856, %v4583, %v9611
    %v10091 = vsel %vm9856, %v4584, %v9612
    %v10092 = vsel %vm9856, %v4585, %v9613
    %v10093 = vsel %vm9856, %v4586, %v9614
    %v10094 = vsel %vm9856, %v4587, %v9615
    %v10095 = vsel %vm9856, %v4588, %v9616
    %v10335 = vrot.slane %v9858, 6
    %v10336 = vrot.slane %v9859, 4
    %v10337 = vrot.slane %v9860, 2
    %v10338 = vrot.slane %v9862, 6
    %v10339 = vrot.slane %v9863, 4
    %v10340 = vrot.slane %v9864, 2
    %v10341 = vrot.slane %v9866, 6
    %v10342 = vrot.slane %v9867, 4
    %v10343 = vrot.slane %v9868, 2
    %v10344 = vrot.slane %v9870, 6
    %v10345 = vrot.slane %v9871, 4
    %v10346 = vrot.slane %v9872, 2
    %v10347 = vrot.slane %v9874, 6
    %v10348 = vrot.slane %v9875, 4
    %v10349 = vrot.slane %v9876, 2
    %v10350 = vrot.slane %v9878, 6
    %v10351 = vrot.slane %v9879, 4
    %v10352 = vrot.slane %v9880, 2
    %v10353 = vrot.slane %v9882, 6
    %v10354 = vrot.slane %v9883, 4
    %v10355 = vrot.slane %v9884, 2
    %v10356 = vrot.slane %v9886, 6
    %v10357 = vrot.slane %v9887, 4
    %v10358 = vrot.slane %v9888, 2
    %v10359 = vrot.slane %v9890, 6
    %v10360 = vrot.slane %v9891, 4
    %v10361 = vrot.slane %v9892, 2
    %v10362 = vrot.slane %v9894, 6
    %v10363 = vrot.slane %v9895, 4
    %v10364 = vrot.slane %v9896, 2
    %v10365 = vrot.slane %v9898, 6
    %v10366 = vrot.slane %v9899, 4
    %v10367 = vrot.slane %v9900, 2
    %v10368 = vrot.slane %v9902, 6
    %v10369 = vrot.slane %v9903, 4
    %v10370 = vrot.slane %v9904, 2
    %v10371 = vrot.slane %v9906, 6
    %v10372 = vrot.slane %v9907, 4
    %v10373 = vrot.slane %v9908, 2
    %v10374 = vrot.slane %v9910, 6
    %v10375 = vrot.slane %v9911, 4
    %v10376 = vrot.slane %v9912, 2
    %v10377 = vrot.slane %v9914, 6
    %v10378 = vrot.slane %v9915, 4
    %v10379 = vrot.slane %v9916, 2
    %v10380 = vrot.slane %v9918, 6
    %v10381 = vrot.slane %v9919, 4
    %v10382 = vrot.slane %v9920, 2
    %v10383 = vrot.slane %v9922, 6
    %v10384 = vrot.slane %v9923, 4
    %v10385 = vrot.slane %v9924, 2
    %v10386 = vrot.slane %v9926, 6
    %v10387 = vrot.slane %v9927, 4
    %v10388 = vrot.slane %v9928, 2
    %v10389 = vrot.slane %v9930, 6
    %v10390 = vrot.slane %v9931, 4
    %v10391 = vrot.slane %v9932, 2
    %v10392 = vrot.slane %v9934, 6
    %v10393 = vrot.slane %v9935, 4
    %v10394 = vrot.slane %v9936, 2
    %v10395 = vrot.slane %v9938, 6
    %v10396 = vrot.slane %v9939, 4
    %v10397 = vrot.slane %v9940, 2
    %v10398 = vrot.slane %v9942, 6
    %v10399 = vrot.slane %v9943, 4
    %v10400 = vrot.slane %v9944, 2
    %v10401 = vrot.slane %v9946, 6
    %v10402 = vrot.slane %v9947, 4
    %v10403 = vrot.slane %v9948, 2
    %v10404 = vrot.slane %v9950, 6
    %v10405 = vrot.slane %v9951, 4
    %v10406 = vrot.slane %v9952, 2
    %v10407 = vrot.slane %v9954, 6
    %v10408 = vrot.slane %v9955, 4
    %v10409 = vrot.slane %v9956, 2
    %v10410 = vrot.slane %v9958, 6
    %v10411 = vrot.slane %v9959, 4
    %v10412 = vrot.slane %v9960, 2
    %v10413 = vrot.slane %v9962, 6
    %v10414 = vrot.slane %v9963, 4
    %v10415 = vrot.slane %v9964, 2
    %v10416 = vrot.slane %v9966, 6
    %v10417 = vrot.slane %v9967, 4
    %v10418 = vrot.slane %v9968, 2
    %v10419 = vrot.slane %v9970, 6
    %v10420 = vrot.slane %v9971, 4
    %v10421 = vrot.slane %v9972, 2
    %v10422 = vrot.slane %v9974, 6
    %v10423 = vrot.slane %v9975, 4
    %v10424 = vrot.slane %v9976, 2
    %v10425 = vrot.slane %v9978, 6
    %v10426 = vrot.slane %v9979, 4
    %v10427 = vrot.slane %v9980, 2
    %v10428 = vrot.slane %v9982, 6
    %v10429 = vrot.slane %v9983, 4
    %v10430 = vrot.slane %v9984, 2
    %v10431 = vrot.slane %v9986, 6
    %v10432 = vrot.slane %v9987, 4
    %v10433 = vrot.slane %v9988, 2
    %v10434 = vrot.slane %v9990, 6
    %v10435 = vrot.slane %v9991, 4
    %v10436 = vrot.slane %v9992, 2
    %v10437 = vrot.slane %v9994, 6
    %v10438 = vrot.slane %v9995, 4
    %v10439 = vrot.slane %v9996, 2
    %v10440 = vrot.slane %v9998, 6
    %v10441 = vrot.slane %v9999, 4
    %v10442 = vrot.slane %v10000, 2
    %v10443 = vrot.slane %v10002, 6
    %v10444 = vrot.slane %v10003, 4
    %v10445 = vrot.slane %v10004, 2
    %v10446 = vrot.slane %v10006, 6
    %v10447 = vrot.slane %v10007, 4
    %v10448 = vrot.slane %v10008, 2
    %v10449 = vrot.slane %v10010, 6
    %v10450 = vrot.slane %v10011, 4
    %v10451 = vrot.slane %v10012, 2
    %v10452 = vrot.slane %v10014, 6
    %v10453 = vrot.slane %v10015, 4
    %v10454 = vrot.slane %v10016, 2
    %v10455 = vrot.slane %v10018, 6
    %v10456 = vrot.slane %v10019, 4
    %v10457 = vrot.slane %v10020, 2
    %v10458 = vrot.slane %v10022, 6
    %v10459 = vrot.slane %v10023, 4
    %v10460 = vrot.slane %v10024, 2
    %v10461 = vrot.slane %v10026, 6
    %v10462 = vrot.slane %v10027, 4
    %v10463 = vrot.slane %v10028, 2
    %v10464 = vrot.slane %v10030, 6
    %v10465 = vrot.slane %v10031, 4
    %v10466 = vrot.slane %v10032, 2
    %v10467 = vrot.slane %v10034, 6
    %v10468 = vrot.slane %v10035, 4
    %v10469 = vrot.slane %v10036, 2
    %v10470 = vrot.slane %v10038, 6
    %v10471 = vrot.slane %v10039, 4
    %v10472 = vrot.slane %v10040, 2
    %v10473 = vrot.slane %v10042, 6
    %v10474 = vrot.slane %v10043, 4
    %v10475 = vrot.slane %v10044, 2
    %v10476 = vrot.slane %v10046, 6
    %v10477 = vrot.slane %v10047, 4
    %v10478 = vrot.slane %v10048, 2
    %v10479 = vrot.slane %v10050, 6
    %v10480 = vrot.slane %v10051, 4
    %v10481 = vrot.slane %v10052, 2
    %v10482 = vrot.slane %v10054, 6
    %v10483 = vrot.slane %v10055, 4
    %v10484 = vrot.slane %v10056, 2
    %v10485 = vrot.slane %v10058, 6
    %v10486 = vrot.slane %v10059, 4
    %v10487 = vrot.slane %v10060, 2
    %v10488 = vrot.slane %v10062, 6
    %v10489 = vrot.slane %v10063, 4
    %v10490 = vrot.slane %v10064, 2
    %v10491 = vrot.slane %v10066, 6
    %v10492 = vrot.slane %v10067, 4
    %v10493 = vrot.slane %v10068, 2
    %v10494 = vrot.slane %v10070, 6
    %v10495 = vrot.slane %v10071, 4
    %v10496 = vrot.slane %v10072, 2
    %v10497 = vrot.slane %v10074, 6
    %v10498 = vrot.slane %v10075, 4
    %v10499 = vrot.slane %v10076, 2
    %v10500 = vrot.slane %v10078, 6
    %v10501 = vrot.slane %v10079, 4
    %v10502 = vrot.slane %v10080, 2
    %v10503 = vrot.slane %v10082, 6
    %v10504 = vrot.slane %v10083, 4
    %v10505 = vrot.slane %v10084, 2
    %v10506 = vrot.slane %v10086, 6
    %v10507 = vrot.slane %v10087, 4
    %v10508 = vrot.slane %v10088, 2
    %v10509 = vrot.slane %v10090, 6
    %v10510 = vrot.slane %v10091, 4
    %v10511 = vrot.slane %v10092, 2
    %v10512 = vrot.slane %v10094, 6
    %v10513 = vrot.slane %v10095, 4
    %vm10514 = vcmask 1041408
    %v10515 = vsel %vm10514, %v9857, %v10335
    %vm10516 = vcmask 1045508
    %v10517 = vsel %vm10516, %v10336, %v10337
    %vm10518 = vcmask 1043456
    %v10519 = vsel %vm10518, %v10515, %v10517
    %v10520 = vsel %vm10514, %v9861, %v10338
    %v10521 = vsel %vm10516, %v10339, %v10340
    %v10522 = vsel %vm10518, %v10520, %v10521
    %v10523 = vsel %vm10514, %v9865, %v10341
    %v10524 = vsel %vm10516, %v10342, %v10343
    %v10525 = vsel %vm10518, %v10523, %v10524
    %v10526 = vsel %vm10514, %v9869, %v10344
    %v10527 = vsel %vm10516, %v10345, %v10346
    %v10528 = vsel %vm10518, %v10526, %v10527
    %v10529 = vsel %vm10514, %v9873, %v10347
    %v10530 = vsel %vm10516, %v10348, %v10349
    %v10531 = vsel %vm10518, %v10529, %v10530
    %v10532 = vsel %vm10514, %v9877, %v10350
    %v10533 = vsel %vm10516, %v10351, %v10352
    %v10534 = vsel %vm10518, %v10532, %v10533
    %v10535 = vsel %vm10514, %v9881, %v10353
    %v10536 = vsel %vm10516, %v10354, %v10355
    %v10537 = vsel %vm10518, %v10535, %v10536
    %v10538 = vsel %vm10514, %v9885, %v10356
    %v10539 = vsel %vm10516, %v10357, %v10358
    %v10540 = vsel %vm10518, %v10538, %v10539
    %v10541 = vsel %vm10514, %v9889, %v10359
    %v10542 = vsel %vm10516, %v10360, %v10361
    %v10543 = vsel %vm10518, %v10541, %v10542
    %v10544 = vsel %vm10514, %v9893, %v10362
    %v10545 = vsel %vm10516, %v10363, %v10364
    %v10546 = vsel %vm10518, %v10544, %v10545
    %v10547 = vsel %vm10514, %v9897, %v10365
    %v10548 = vsel %vm10516, %v10366, %v10367
    %v10549 = vsel %vm10518, %v10547, %v10548
    %v10550 = vsel %vm10514, %v9901, %v10368
    %v10551 = vsel %vm10516, %v10369, %v10370
    %v10552 = vsel %vm10518, %v10550, %v10551
    %v10553 = vsel %vm10514, %v9905, %v10371
    %v10554 = vsel %vm10516, %v10372, %v10373
    %v10555 = vsel %vm10518, %v10553, %v10554
    %v10556 = vsel %vm10514, %v9909, %v10374
    %v10557 = vsel %vm10516, %v10375, %v10376
    %v10558 = vsel %vm10518, %v10556, %v10557
    %v10559 = vsel %vm10514, %v9913, %v10377
    %v10560 = vsel %vm10516, %v10378, %v10379
    %v10561 = vsel %vm10518, %v10559, %v10560
    %v10562 = vsel %vm10514, %v9917, %v10380
    %v10563 = vsel %vm10516, %v10381, %v10382
    %v10564 = vsel %vm10518, %v10562, %v10563
    %v10565 = vsel %vm10514, %v9921, %v10383
    %v10566 = vsel %vm10516, %v10384, %v10385
    %v10567 = vsel %vm10518, %v10565, %v10566
    %v10568 = vsel %vm10514, %v9925, %v10386
    %v10569 = vsel %vm10516, %v10387, %v10388
    %v10570 = vsel %vm10518, %v10568, %v10569
    %v10571 = vsel %vm10514, %v9929, %v10389
    %v10572 = vsel %vm10516, %v10390, %v10391
    %v10573 = vsel %vm10518, %v10571, %v10572
    %v10574 = vsel %vm10514, %v9933, %v10392
    %v10575 = vsel %vm10516, %v10393, %v10394
    %v10576 = vsel %vm10518, %v10574, %v10575
    %v10577 = vsel %vm10514, %v9937, %v10395
    %v10578 = vsel %vm10516, %v10396, %v10397
    %v10579 = vsel %vm10518, %v10577, %v10578
    %v10580 = vsel %vm10514, %v9941, %v10398
    %v10581 = vsel %vm10516, %v10399, %v10400
    %v10582 = vsel %vm10518, %v10580, %v10581
    %v10583 = vsel %vm10514, %v9945, %v10401
    %v10584 = vsel %vm10516, %v10402, %v10403
    %v10585 = vsel %vm10518, %v10583, %v10584
    %v10586 = vsel %vm10514, %v9949, %v10404
    %v10587 = vsel %vm10516, %v10405, %v10406
    %v10588 = vsel %vm10518, %v10586, %v10587
    %v10589 = vsel %vm10514, %v9953, %v10407
    %v10590 = vsel %vm10516, %v10408, %v10409
    %v10591 = vsel %vm10518, %v10589, %v10590
    %v10592 = vsel %vm10514, %v9957, %v10410
    %v10593 = vsel %vm10516, %v10411, %v10412
    %v10594 = vsel %vm10518, %v10592, %v10593
    %v10595 = vsel %vm10514, %v9961, %v10413
    %v10596 = vsel %vm10516, %v10414, %v10415
    %v10597 = vsel %vm10518, %v10595, %v10596
    %v10598 = vsel %vm10514, %v9965, %v10416
    %v10599 = vsel %vm10516, %v10417, %v10418
    %v10600 = vsel %vm10518, %v10598, %v10599
    %v10601 = vsel %vm10514, %v9969, %v10419
    %v10602 = vsel %vm10516, %v10420, %v10421
    %v10603 = vsel %vm10518, %v10601, %v10602
    %v10604 = vsel %vm10514, %v9973, %v10422
    %v10605 = vsel %vm10516, %v10423, %v10424
    %v10606 = vsel %vm10518, %v10604, %v10605
    %v10607 = vsel %vm10514, %v9977, %v10425
    %v10608 = vsel %vm10516, %v10426, %v10427
    %v10609 = vsel %vm10518, %v10607, %v10608
    %v10610 = vsel %vm10514, %v9981, %v10428
    %v10611 = vsel %vm10516, %v10429, %v10430
    %v10612 = vsel %vm10518, %v10610, %v10611
    %v10613 = vsel %vm10514, %v9985, %v10431
    %v10614 = vsel %vm10516, %v10432, %v10433
    %v10615 = vsel %vm10518, %v10613, %v10614
    %v10616 = vsel %vm10514, %v9989, %v10434
    %v10617 = vsel %vm10516, %v10435, %v10436
    %v10618 = vsel %vm10518, %v10616, %v10617
    %v10619 = vsel %vm10514, %v9993, %v10437
    %v10620 = vsel %vm10516, %v10438, %v10439
    %v10621 = vsel %vm10518, %v10619, %v10620
    %v10622 = vsel %vm10514, %v9997, %v10440
    %v10623 = vsel %vm10516, %v10441, %v10442
    %v10624 = vsel %vm10518, %v10622, %v10623
    %v10625 = vsel %vm10514, %v10001, %v10443
    %v10626 = vsel %vm10516, %v10444, %v10445
    %v10627 = vsel %vm10518, %v10625, %v10626
    %v10628 = vsel %vm10514, %v10005, %v10446
    %v10629 = vsel %vm10516, %v10447, %v10448
    %v10630 = vsel %vm10518, %v10628, %v10629
    %v10631 = vsel %vm10514, %v10009, %v10449
    %v10632 = vsel %vm10516, %v10450, %v10451
    %v10633 = vsel %vm10518, %v10631, %v10632
    %v10634 = vsel %vm10514, %v10013, %v10452
    %v10635 = vsel %vm10516, %v10453, %v10454
    %v10636 = vsel %vm10518, %v10634, %v10635
    %v10637 = vsel %vm10514, %v10017, %v10455
    %v10638 = vsel %vm10516, %v10456, %v10457
    %v10639 = vsel %vm10518, %v10637, %v10638
    %v10640 = vsel %vm10514, %v10021, %v10458
    %v10641 = vsel %vm10516, %v10459, %v10460
    %v10642 = vsel %vm10518, %v10640, %v10641
    %v10643 = vsel %vm10514, %v10025, %v10461
    %v10644 = vsel %vm10516, %v10462, %v10463
    %v10645 = vsel %vm10518, %v10643, %v10644
    %v10646 = vsel %vm10514, %v10029, %v10464
    %v10647 = vsel %vm10516, %v10465, %v10466
    %v10648 = vsel %vm10518, %v10646, %v10647
    %v10649 = vsel %vm10514, %v10033, %v10467
    %v10650 = vsel %vm10516, %v10468, %v10469
    %v10651 = vsel %vm10518, %v10649, %v10650
    %v10652 = vsel %vm10514, %v10037, %v10470
    %v10653 = vsel %vm10516, %v10471, %v10472
    %v10654 = vsel %vm10518, %v10652, %v10653
    %v10655 = vsel %vm10514, %v10041, %v10473
    %v10656 = vsel %vm10516, %v10474, %v10475
    %v10657 = vsel %vm10518, %v10655, %v10656
    %v10658 = vsel %vm10514, %v10045, %v10476
    %v10659 = vsel %vm10516, %v10477, %v10478
    %v10660 = vsel %vm10518, %v10658, %v10659
    %v10661 = vsel %vm10514, %v10049, %v10479
    %v10662 = vsel %vm10516, %v10480, %v10481
    %v10663 = vsel %vm10518, %v10661, %v10662
    %v10664 = vsel %vm10514, %v10053, %v10482
    %v10665 = vsel %vm10516, %v10483, %v10484
    %v10666 = vsel %vm10518, %v10664, %v10665
    %v10667 = vsel %vm10514, %v10057, %v10485
    %v10668 = vsel %vm10516, %v10486, %v10487
    %v10669 = vsel %vm10518, %v10667, %v10668
    %v10670 = vsel %vm10514, %v10061, %v10488
    %v10671 = vsel %vm10516, %v10489, %v10490
    %v10672 = vsel %vm10518, %v10670, %v10671
    %v10673 = vsel %vm10514, %v10065, %v10491
    %v10674 = vsel %vm10516, %v10492, %v10493
    %v10675 = vsel %vm10518, %v10673, %v10674
    %v10676 = vsel %vm10514, %v10069, %v10494
    %v10677 = vsel %vm10516, %v10495, %v10496
    %v10678 = vsel %vm10518, %v10676, %v10677
    %v10679 = vsel %vm10514, %v10073, %v10497
    %v10680 = vsel %vm10516, %v10498, %v10499
    %v10681 = vsel %vm10518, %v10679, %v10680
    %v10682 = vsel %vm10514, %v10077, %v10500
    %v10683 = vsel %vm10516, %v10501, %v10502
    %v10684 = vsel %vm10518, %v10682, %v10683
    %v10685 = vsel %vm10514, %v10081, %v10503
    %v10686 = vsel %vm10516, %v10504, %v10505
    %v10687 = vsel %vm10518, %v10685, %v10686
    %v10688 = vsel %vm10514, %v10085, %v10506
    %v10689 = vsel %vm10516, %v10507, %v10508
    %v10690 = vsel %vm10518, %v10688, %v10689
    %v10691 = vsel %vm10514, %v10089, %v10509
    %v10692 = vsel %vm10516, %v10510, %v10511
    %v10693 = vsel %vm10518, %v10691, %v10692
    %v10694 = vsel %vm10514, %v10093, %v10512
    %v10695 = vsel %vm10518, %v10694, %v10513
    %10756 = vst [vmem:[#allocation7] sm:$0xff] %v10519
    %10757 = vst [vmem:[#allocation7 + $0x8] sm:$0xff] %v10522
    %10758 = vst [vmem:[#allocation7 + $0x10] sm:$0xff] %v10525
    %10759 = vst [vmem:[#allocation7 + $0x18] sm:$0xff] %v10528
    %10760 = vst [vmem:[#allocation7 + $0x20] sm:$0xff] %v10531
    %10761 = vst [vmem:[#allocation7 + $0x28] sm:$0xff] %v10534
    %10762 = vst [vmem:[#allocation7 + $0x30] sm:$0xff] %v10537
    %10763 = vst [vmem:[#allocation7 + $0x38] sm:$0xff] %v10540
    %10764 = vst [vmem:[#allocation7 + $0x40] sm:$0xff] %v10543
    %10765 = vst [vmem:[#allocation7 + $0x48] sm:$0xff] %v10546
    %10766 = vst [vmem:[#allocation7 + $0x50] sm:$0xff] %v10549
    %10767 = vst [vmem:[#allocation7 + $0x58] sm:$0xff] %v10552
    %10768 = vst [vmem:[#allocation7 + $0x60] sm:$0xff] %v10555
    %10769 = vst [vmem:[#allocation7 + $0x68] sm:$0xff] %v10558
    %10770 = vst [vmem:[#allocation7 + $0x70] sm:$0xff] %v10561
    %10771 = vst [vmem:[#allocation7 + $0x78] sm:$0xff] %v10564
    %10772 = vst [vmem:[#allocation7 + $0x80] sm:$0xff] %v10567
    %10773 = vst [vmem:[#allocation7 + $0x88] sm:$0xff] %v10570
    %10774 = vst [vmem:[#allocation7 + $0x90] sm:$0xff] %v10573
    %10775 = vst [vmem:[#allocation7 + $0x98] sm:$0xff] %v10576
    %10776 = vst [vmem:[#allocation7 + $0xa0] sm:$0xff] %v10579
    %10777 = vst [vmem:[#allocation7 + $0xa8] sm:$0xff] %v10582
    %10778 = vst [vmem:[#allocation7 + $0xb0] sm:$0xff] %v10585
    %10779 = vst [vmem:[#allocation7 + $0xb8] sm:$0xff] %v10588
    %10780 = vst [vmem:[#allocation7 + $0xc0] sm:$0xff] %v10591
    %10781 = vst [vmem:[#allocation7 + $0xc8] sm:$0xff] %v10594
    %10782 = vst [vmem:[#allocation7 + $0xd0] sm:$0xff] %v10597
    %10783 = vst [vmem:[#allocation7 + $0xd8] sm:$0xff] %v10600
    %10784 = vst [vmem:[#allocation7 + $0xe0] sm:$0xff] %v10603
    %10785 = vst [vmem:[#allocation7 + $0xe8] sm:$0xff] %v10606
    %10786 = vst [vmem:[#allocation7 + $0xf0] sm:$0xff] %v10609
    %10787 = vst [vmem:[#allocation7 + $0xf8] sm:$0xff] %v10612
    %10788 = vst [vmem:[#allocation7 + $0x100] sm:$0xff] %v10615
    %10789 = vst [vmem:[#allocation7 + $0x108] sm:$0xff] %v10618
    %10790 = vst [vmem:[#allocation7 + $0x110] sm:$0xff] %v10621
    %10791 = vst [vmem:[#allocation7 + $0x118] sm:$0xff] %v10624
    %10792 = vst [vmem:[#allocation7 + $0x120] sm:$0xff] %v10627
    %10793 = vst [vmem:[#allocation7 + $0x128] sm:$0xff] %v10630
    %10794 = vst [vmem:[#allocation7 + $0x130] sm:$0xff] %v10633
    %10795 = vst [vmem:[#allocation7 + $0x138] sm:$0xff] %v10636
    %10796 = vst [vmem:[#allocation7 + $0x140] sm:$0xff] %v10639
    %10797 = vst [vmem:[#allocation7 + $0x148] sm:$0xff] %v10642
    %10798 = vst [vmem:[#allocation7 + $0x150] sm:$0xff] %v10645
    %10799 = vst [vmem:[#allocation7 + $0x158] sm:$0xff] %v10648
    %10800 = vst [vmem:[#allocation7 + $0x160] sm:$0xff] %v10651
    %10801 = vst [vmem:[#allocation7 + $0x168] sm:$0xff] %v10654
    %10802 = vst [vmem:[#allocation7 + $0x170] sm:$0xff] %v10657
    %10803 = vst [vmem:[#allocation7 + $0x178] sm:$0xff] %v10660
    %10804 = vst [vmem:[#allocation7 + $0x180] sm:$0xff] %v10663
    %10805 = vst [vmem:[#allocation7 + $0x188] sm:$0xff] %v10666
    %10806 = vst [vmem:[#allocation7 + $0x190] sm:$0xff] %v10669
    %10807 = vst [vmem:[#allocation7 + $0x198] sm:$0xff] %v10672
    %10808 = vst [vmem:[#allocation7 + $0x1a0] sm:$0xff] %v10675
    %10809 = vst [vmem:[#allocation7 + $0x1a8] sm:$0xff] %v10678
    %10810 = vst [vmem:[#allocation7 + $0x1b0] sm:$0xff] %v10681
    %10811 = vst [vmem:[#allocation7 + $0x1b8] sm:$0xff] %v10684
    %10812 = vst [vmem:[#allocation7 + $0x1c0] sm:$0xff] %v10687
    %10813 = vst [vmem:[#allocation7 + $0x1c8] sm:$0xff] %v10690
    %10814 = vst [vmem:[#allocation7 + $0x1d0] sm:$0xff] %v10693
    %vm10815 = vcmask 1043458
    %vm10816 = vmor %vm10815, %vm10514
    %vm10817 = vcmask 472068
    %vm10818 = vmor %vm10817, %vm10816
    %10819 = vst.msk [vmem:[#allocation7 + $0x1d8] sm:$0x3f] %vm10818, %v10695
    // Predicated region
    $region18: #{tpu_custom_call.1} parent=1 // pred_check
      _
    $region19: #{tpu_custom_call.1} parent=1 // pred_check_branch
      %10821 = sbr.rel (0) target = $region21
    $region20: #{tpu_custom_call.1} parent=1 // pred_region
      %10823 = vsyncadd [#allocation4], 0
      %s10825 = sshll.u32 [#allocation7], 4
      %s10826 = int_to_ptr.vmem [resolvable:$true] %s10825
      %s10827 = sshll.u32 %s2, 4
      %s10828 = int_to_ptr.hbm [resolvable:$true] %s10827
      %10830 = dma.vmem_to_hbm [thread:$0]  %s10826, 7648, %s10828, [#allocation4]
    $region21: #{tpu_custom_call.1} parent=1 // pred_fallthru
      _
    // Predicated region
    $region22: #{tpu_custom_call.1} parent=1 // pred_check
      _
    $region23: #{tpu_custom_call.1} parent=1 // pred_check_branch
      %10832 = sbr.rel (0) target = $region25
    $region24: #{tpu_custom_call.1} parent=1 // pred_region
      %10834 = dma.done [#allocation4], 7648
    $region25: #{tpu_custom_call.1} parent=1 // pred_fallthru
      _
    %10835 = vsyncpa [#allocation3], 1
    %10836 = vsyncpa [#allocation4], 1
    %10837 = vsyncpa [#allocation5], 1

</llo_original>
